<compile_context>
chip_gen: v5e
topology: v5e:2x2
jax: 0.10.0
libtpu: 0.0.40
codegen_flags: <defaults>
</compile_context>

<pallas_src>
import numpy as np

import jax
import jax.numpy as jnp
from jax.experimental import pallas as pl
from jax.experimental.pallas import tpu as pltpu


def _leaky_relu(x):
    return jnp.where(x > 0, x, 0.01 * x)


def _layernorm(x, gamma, beta, eps=1e-5):
    mu = jnp.mean(x, axis=-1, keepdims=True)
    var = jnp.mean((x - mu) ** 2, axis=-1, keepdims=True)
    return (x - mu) * jax.lax.rsqrt(var + eps) * gamma + beta


def _qal_kernel(
    doc_ref, q_ref, qb_ref, qt_ref,
    w1_ref, b1_ref, w2_ref, b2_ref, w3_ref, b3_ref,
    wvo_ref, bvo_ref,
    ffw1_ref, ffb1_ref, ffw2_ref, ffb2_ref, ffw3_ref, ffb3_ref,
    g1_ref, be1_ref, g2_ref, be2_ref,
    out_ref,
):
    f32 = jnp.float32
    cdt = w2_ref.dtype  # MXU feed dtype (bf16 by default); accumulation is f32

    def dense(x, w_ref, b_ref):
        # y = x @ W + b, bf16 MXU inputs, f32 accumulation, f32 bias add.
        return (
            jnp.dot(x.astype(w_ref.dtype), w_ref[...], preferred_element_type=f32)
            + b_ref[...]
        )

    q = q_ref[...]
    qb = qb_ref[...]
    qt = qt_ref[...]

    # first_layer: Linear(T -> E) + LeakyReLU   (Dropout = identity, eval mode)
    h_tfidf = _leaky_relu(dense(qt, w1_ref, b1_ref))

    # second_layer on cat([tfidf_h, bert]): one K=2E matmul (lane concat).
    h2 = _leaky_relu(
        dense(jnp.concatenate([h_tfidf.astype(cdt), qb.astype(cdt)], axis=-1),
              w2_ref, b2_ref)
    )

    # third_layer on cat([h2, query]): one K=2E matmul.
    q_comb = _leaky_relu(
        dense(jnp.concatenate([h2.astype(cdt), q.astype(cdt)], axis=-1),
              w3_ref, b3_ref)
    )

    # Multi-head attention with seq_len == 1 on query and key/value:
    # softmax over a single key == 1.0, so output == out_linear(v_linear(kv)).
    # Wv @ Wo and bv @ Wo + bo are pre-folded in the wrapper -> one matmul.
    attn = dense(q_comb, wvo_ref, bvo_ref)

    # norm1(doc + attention)
    x1 = _layernorm(doc_ref[...].astype(f32) + attn, g1_ref[...], be1_ref[...])

    # ff_network: Linear(E,H)+LeakyReLU -> Linear(H,H)+LeakyReLU -> Linear(H,E)
    h = _leaky_relu(dense(x1, ffw1_ref, ffb1_ref))
    h = _leaky_relu(dense(h, ffw2_ref, ffb2_ref))
    ff = dense(h, ffw3_ref, ffb3_ref)

    # norm2(x1 + ff)
    out_ref[...] = _layernorm(x1 + ff, g2_ref[...], be2_ref[...]).astype(out_ref.dtype)


def _choose_tile_b(B, requested):
    """Largest batch tile <= requested that divides B, is sublane-aligned (or == B),
    preferring a tile that leaves >= 2 grid steps (v7x has 2 TensorCores)."""
    requested = max(1, min(requested, B))
    candidates = [d for d in range(1, B + 1)
                  if B % d == 0 and d <= requested and (d % 8 == 0 or d == B)]
    if not candidates:
        return B
    best = max(candidates)
    if B // best < 2:
        multi = [d for d in candidates if B // d >= 2]
        if multi:
            best = max(multi)
    return best


def multi_embeddings_query_adaptive_layer(
    doc_emb, query_emb, query_emb_bert, query_emb_tfidf, params,
    *, tile_b=128, weight_dtype=jnp.bfloat16,
):
    B, E = doc_emb.shape
    T = query_emb_tfidf.shape[1]
    H = params["ffw1"].shape[1]
    f32 = jnp.float32

    tile_b = _choose_tile_b(B, tile_b)
    grid = (B // tile_b,)

    # Exact algebraic fold of attention v/out projections (no nonlinearity
    # between them; softmax over one key is identically 1.0).
    wvo = params["wv"].astype(f32) @ params["wo"].astype(f32)
    bvo = params["bv"].astype(f32) @ params["wo"].astype(f32) + params["bo"].astype(f32)

    wcast = lambda w: w.astype(weight_dtype)
    # TODO(synk): for very large tfidf_dim, w1 (T x E) should be streamed via a
    # K-reduction grid axis / manual DMA instead of being held resident in VMEM.
    weight_args = [
        wcast(params["w1"]), params["b1"].astype(f32),
        wcast(params["w2"]), params["b2"].astype(f32),
        wcast(params["w3"]), params["b3"].astype(f32),
        wcast(wvo), bvo.astype(f32),
        wcast(params["ffw1"]), params["ffb1"].astype(f32),
        wcast(params["ffw2"]), params["ffb2"].astype(f32),
        wcast(params["ffw3"]), params["ffb3"].astype(f32),
        params["g1"].astype(f32), params["be1"].astype(f32),
        params["g2"].astype(f32), params["be2"].astype(f32),
    ]

    nbytes = lambda x: int(x.size) * x.dtype.itemsize
    weight_vmem = sum(nbytes(w) for w in weight_args)
    act_vmem = 2 * tile_b * (3 * E + T) * 4 + 2 * tile_b * E * 4   # double-buffered I/O tiles
    scratch_vmem = 10 * tile_b * max(2 * E, T, H) * 4              # in-kernel temporaries
    # 2x weights: conservative in case the single-buffer request is ignored.
    vmem_limit = int(min(2 * weight_vmem + act_vmem + scratch_vmem + (8 << 20), 64 << 20))

    flops = 2 * B * (T * E + 2 * ((2 * E) * E) + E * E + E * H + H * H + H * E)
    bytes_accessed = (nbytes(doc_emb) + nbytes(query_emb) + nbytes(query_emb_bert)
                      + nbytes(query_emb_tfidf) + weight_vmem + B * E * 4)
    cost = pl.CostEstimate(flops=int(flops), transcendentals=int(2 * B),
                           bytes_accessed=int(bytes_accessed))

    out_shape = jax.ShapeDtypeStruct((B, E), jnp.float32)

    def build(single_buffer_weights):
        pm = {"pipeline_mode": pl.Buffered(1)} if single_buffer_weights else {}
        batched = lambda feat: pl.BlockSpec((tile_b, feat), lambda i: (i, 0))
        full = lambda arr: pl.BlockSpec(arr.shape, lambda i: (0, 0), **pm)
        in_specs = (
            [batched(E), batched(E), batched(E), batched(T)]
            + [full(w) for w in weight_args]
        )
        return pl.pallas_call(
            _qal_kernel,
            out_shape=out_shape,
            grid=grid,
            in_specs=in_specs,
            out_specs=pl.BlockSpec((tile_b, E), lambda i: (i, 0)),
            compiler_params=pltpu.CompilerParams(
                dimension_semantics=("parallel",),
                vmem_limit_bytes=vmem_limit,
            ),
            cost_estimate=cost,
        )

    args = (doc_emb, query_emb, query_emb_bert, query_emb_tfidf, *weight_args)
    try:
        return build(single_buffer_weights=True)(*args)
    except Exception:
        # pl.Buffered(1) not supported by this jax version: fall back to the
        # default double-buffered weight blocks (correctness identical).
        return build(single_buffer_weights=False)(*args)


def init_params(key, embedding_dim, hidden_dim, tfidf_dim):
    """Deterministic synthetic params, Linear weights stored as (in, out), f32."""
    E, H, T = embedding_dim, hidden_dim, tfidf_dim
    keys = iter(jax.random.split(key, 16))

    def lin(in_f, out_f):
        w = jax.random.normal(next(keys), (in_f, out_f), jnp.float32) * 0.05
        b = jax.random.normal(next(keys), (1, out_f), jnp.float32) * 0.05
        return w, b

    p = {}
    p["w1"], p["b1"] = lin(T, E)              # first_layer
    p["w2"], p["b2"] = lin(2 * E, E)          # second_layer (cat [tfidf_h, bert])
    p["w3"], p["b3"] = lin(2 * E, E)          # third_layer  (cat [h2, query])
    p["wv"], p["bv"] = lin(E, E)              # attention v_linear
    p["wo"], p["bo"] = lin(E, E)              # attention out_linear
    p["ffw1"], p["ffb1"] = lin(E, H)          # ff_network
    p["ffw2"], p["ffb2"] = lin(H, H)
    p["ffw3"], p["ffb3"] = lin(H, E)
    p["g1"] = jnp.ones((1, E), jnp.float32)   # norm1
    p["be1"] = jnp.zeros((1, E), jnp.float32)
    p["g2"] = jnp.ones((1, E), jnp.float32)   # norm2
    p["be2"] = jnp.zeros((1, E), jnp.float32)
    # NOTE: attention q_linear / k_linear weights are omitted — with seq_len == 1
    # they provably do not affect the output (softmax over one key == 1.0).
    return p


def reference_forward(doc, q, qb, qt, p):
    """Pure-JAX reference of the PyTorch module (eval mode), f32 math."""
    f32 = jnp.float32
    hi = jax.lax.Precision.HIGHEST
    lin = lambda x, w, b: jnp.dot(x, w.astype(f32), precision=hi) + b.astype(f32)
    lrelu = lambda x: jnp.where(x > 0, x, 0.01 * x)

    def ln(x, g, b, eps=1e-5):
        mu = jnp.mean(x, axis=-1, keepdims=True)
        var = jnp.mean((x - mu) ** 2, axis=-1, keepdims=True)
        return (x - mu) * jax.lax.rsqrt(var + eps) * g + b

    h = lrelu(lin(qt, p["w1"], p["b1"]))
    h2 = lrelu(lin(jnp.concatenate([h, qb], axis=-1), p["w2"], p["b2"]))
    qc = lrelu(lin(jnp.concatenate([h2, q], axis=-1), p["w3"], p["b3"]))
    attn = lin(lin(qc, p["wv"], p["bv"]), p["wo"], p["bo"])   # seq_len==1 attention
    x1 = ln(doc + attn, p["g1"], p["be1"])
    f = lrelu(lin(x1, p["ffw1"], p["ffb1"]))
    f = lrelu(lin(f, p["ffw2"], p["ffb2"]))
    f = lin(f, p["ffw3"], p["ffb3"])
    return ln(x1 + f, p["g2"], p["be2"])


if __name__ == "__main__":
    # Lane-aligned small shapes: features are multiples of 128 so every VPU op,
    # LayerNorm reduce and the output store are lane-dense; B/tile_b = 2 grid
    # steps keep both v7x TensorCores busy.
    B, E, H, T = 256, 128, 128, 256
    num_heads = 4
    assert E % num_heads == 0

    key = jax.random.PRNGKey(0)
    k_doc, k_q, k_qb, k_qt, k_p = jax.random.split(key, 5)

    doc = jax.random.normal(k_doc, (B, E), jnp.float32)
    q = jax.random.normal(k_q, (B, E), jnp.float32)
    q_bert = jax.random.normal(k_qb, (B, E), jnp.float32)
    q_tfidf = jax.random.normal(k_qt, (B, T), jnp.float32)

    params = init_params(k_p, E, H, T)

    out = multi_embeddings_query_adaptive_layer(
        doc, q, q_bert, q_tfidf, params, tile_b=128
    )
    out = jax.block_until_ready(out)
    assert out.shape == (B, E)

    # Sanity check against a pure-JAX reference that sees the same bf16-quantized
    # weights (kernel additionally feeds bf16 activations to the MXU -> loose tol).
    mat_keys = {"w1", "w2", "w3", "wv", "wo", "ffw1", "ffw2", "ffw3"}
    params_q = {k: (v.astype(jnp.bfloat16).astype(jnp.float32) if k in mat_keys else v)
                for k, v in params.items()}
    ref = reference_forward(doc, q, q_bert, q_tfidf, params_q)
    np.testing.assert_allclose(np.asarray(out), np.asarray(ref), rtol=5e-2, atol=5e-2)

    print("KERNEL_OK")
</pallas_src>

<mosaic_0001>
module attributes {stable_mosaic.version = 11 : i64} {
  func.func @_qal_kernel(%arg0: i32, %arg1: memref<128x128xf32, #tpu.memory_space<vmem>>, %arg2: memref<128x128xf32, #tpu.memory_space<vmem>>, %arg3: memref<128x128xf32, #tpu.memory_space<vmem>>, %arg4: memref<128x256xf32, #tpu.memory_space<vmem>>, %arg5: memref<256x128xbf16, #tpu.memory_space<vmem>>, %arg6: memref<1x128xf32, #tpu.memory_space<vmem>>, %arg7: memref<256x128xbf16, #tpu.memory_space<vmem>>, %arg8: memref<1x128xf32, #tpu.memory_space<vmem>>, %arg9: memref<256x128xbf16, #tpu.memory_space<vmem>>, %arg10: memref<1x128xf32, #tpu.memory_space<vmem>>, %arg11: memref<128x128xbf16, #tpu.memory_space<vmem>>, %arg12: memref<1x128xf32, #tpu.memory_space<vmem>>, %arg13: memref<128x128xbf16, #tpu.memory_space<vmem>>, %arg14: memref<1x128xf32, #tpu.memory_space<vmem>>, %arg15: memref<128x128xbf16, #tpu.memory_space<vmem>>, %arg16: memref<1x128xf32, #tpu.memory_space<vmem>>, %arg17: memref<128x128xbf16, #tpu.memory_space<vmem>>, %arg18: memref<1x128xf32, #tpu.memory_space<vmem>>, %arg19: memref<1x128xf32, #tpu.memory_space<vmem>>, %arg20: memref<1x128xf32, #tpu.memory_space<vmem>>, %arg21: memref<1x128xf32, #tpu.memory_space<vmem>>, %arg22: memref<1x128xf32, #tpu.memory_space<vmem>>, %arg23: memref<128x128xf32, #tpu.memory_space<vmem>>) attributes {dimension_semantics = [#tpu.dimension_semantics<parallel>], iteration_bounds = array<i64: 2>, scalar_prefetch = 0 : i64, scratch_operands = 0 : i64, tpu.core_type = #tpu.core_type<tc>, window_params = [{transform_indices = @transform_0, window_bounds = array<i64: 128, 128>}, {transform_indices = @transform_1, window_bounds = array<i64: 128, 128>}, {transform_indices = @transform_2, window_bounds = array<i64: 128, 128>}, {transform_indices = @transform_3, window_bounds = array<i64: 128, 256>}, {pipeline_mode = #tpu.pipeline_mode<synchronous>, transform_indices = @transform_4, window_bounds = array<i64: 256, 128>}, {pipeline_mode = #tpu.pipeline_mode<synchronous>, transform_indices = @transform_5, window_bounds = array<i64: 1, 128>}, {pipeline_mode = #tpu.pipeline_mode<synchronous>, transform_indices = @transform_6, window_bounds = array<i64: 256, 128>}, {pipeline_mode = #tpu.pipeline_mode<synchronous>, transform_indices = @transform_7, window_bounds = array<i64: 1, 128>}, {pipeline_mode = #tpu.pipeline_mode<synchronous>, transform_indices = @transform_8, window_bounds = array<i64: 256, 128>}, {pipeline_mode = #tpu.pipeline_mode<synchronous>, transform_indices = @transform_9, window_bounds = array<i64: 1, 128>}, {pipeline_mode = #tpu.pipeline_mode<synchronous>, transform_indices = @transform_10, window_bounds = array<i64: 128, 128>}, {pipeline_mode = #tpu.pipeline_mode<synchronous>, transform_indices = @transform_11, window_bounds = array<i64: 1, 128>}, {pipeline_mode = #tpu.pipeline_mode<synchronous>, transform_indices = @transform_12, window_bounds = array<i64: 128, 128>}, {pipeline_mode = #tpu.pipeline_mode<synchronous>, transform_indices = @transform_13, window_bounds = array<i64: 1, 128>}, {pipeline_mode = #tpu.pipeline_mode<synchronous>, transform_indices = @transform_14, window_bounds = array<i64: 128, 128>}, {pipeline_mode = #tpu.pipeline_mode<synchronous>, transform_indices = @transform_15, window_bounds = array<i64: 1, 128>}, {pipeline_mode = #tpu.pipeline_mode<synchronous>, transform_indices = @transform_16, window_bounds = array<i64: 128, 128>}, {pipeline_mode = #tpu.pipeline_mode<synchronous>, transform_indices = @transform_17, window_bounds = array<i64: 1, 128>}, {pipeline_mode = #tpu.pipeline_mode<synchronous>, transform_indices = @transform_18, window_bounds = array<i64: 1, 128>}, {pipeline_mode = #tpu.pipeline_mode<synchronous>, transform_indices = @transform_19, window_bounds = array<i64: 1, 128>}, {pipeline_mode = #tpu.pipeline_mode<synchronous>, transform_indices = @transform_20, window_bounds = array<i64: 1, 128>}, {pipeline_mode = #tpu.pipeline_mode<synchronous>, transform_indices = @transform_21, window_bounds = array<i64: 1, 128>}, {transform_indices = @transform_22, window_bounds = array<i64: 128, 128>}]} {
    %c0 = arith.constant 0 : index
    %c0_0 = arith.constant 0 : index
    %0 = vector.load %arg2[%c0, %c0_0] : memref<128x128xf32, #tpu.memory_space<vmem>>, vector<128x128xf32>
    %c0_1 = arith.constant 0 : index
    %c0_2 = arith.constant 0 : index
    %1 = vector.load %arg3[%c0_1, %c0_2] : memref<128x128xf32, #tpu.memory_space<vmem>>, vector<128x128xf32>
    %c0_3 = arith.constant 0 : index
    %c0_4 = arith.constant 0 : index
    %2 = vector.load %arg4[%c0_3, %c0_4] : memref<128x256xf32, #tpu.memory_space<vmem>>, vector<128x256xf32>
    %3 = arith.truncf %2 : vector<128x256xf32> to vector<128x256xbf16>
    %c0_5 = arith.constant 0 : index
    %c0_6 = arith.constant 0 : index
    %4 = vector.load %arg5[%c0_5, %c0_6] : memref<256x128xbf16, #tpu.memory_space<vmem>>, vector<256x128xbf16>
    %cst = arith.constant dense<0.000000e+00> : vector<128x128xf32>
    %5 = tpu.matmul %3, %4, %cst {dimension_numbers = #tpu.dot_dimension_numbers<[1], [0], [0], [1], [0, 0, 1, 1], [], []>} : vector<128x256xbf16>, vector<256x128xbf16>, vector<128x128xf32> -> vector<128x128xf32>
    %c0_7 = arith.constant 0 : index
    %c0_8 = arith.constant 0 : index
    %6 = vector.load %arg6[%c0_7, %c0_8] : memref<1x128xf32, #tpu.memory_space<vmem>>, vector<1x128xf32>
    %7 = vector.broadcast %6 : vector<1x128xf32> to vector<128x128xf32>
    %8 = arith.addf %5, %7 : vector<128x128xf32>
    %cst_9 = arith.constant 0.000000e+00 : f32
    %9 = vector.broadcast %cst_9 : f32 to vector<128x128xf32>
    %10 = arith.cmpf ogt, %8, %9 : vector<128x128xf32>
    %cst_10 = arith.constant 0.00999999977 : f32
    %11 = vector.broadcast %cst_10 : f32 to vector<128x128xf32>
    %12 = arith.mulf %11, %8 : vector<128x128xf32>
    %13 = arith.select %10, %8, %12 : vector<128x128xi1>, vector<128x128xf32>
    %14 = arith.truncf %13 : vector<128x128xf32> to vector<128x128xbf16>
    %15 = arith.truncf %1 : vector<128x128xf32> to vector<128x128xbf16>
    %16 = tpu.concatenate %14, %15 in 1 : vector<128x128xbf16>, vector<128x128xbf16> -> vector<128x256xbf16>
    %c0_11 = arith.constant 0 : index
    %c0_12 = arith.constant 0 : index
    %17 = vector.load %arg7[%c0_11, %c0_12] : memref<256x128xbf16, #tpu.memory_space<vmem>>, vector<256x128xbf16>
    %cst_13 = arith.constant dense<0.000000e+00> : vector<128x128xf32>
    %18 = tpu.matmul %16, %17, %cst_13 {dimension_numbers = #tpu.dot_dimension_numbers<[1], [0], [0], [1], [0, 0, 1, 1], [], []>} : vector<128x256xbf16>, vector<256x128xbf16>, vector<128x128xf32> -> vector<128x128xf32>
    %c0_14 = arith.constant 0 : index
    %c0_15 = arith.constant 0 : index
    %19 = vector.load %arg8[%c0_14, %c0_15] : memref<1x128xf32, #tpu.memory_space<vmem>>, vector<1x128xf32>
    %20 = vector.broadcast %19 : vector<1x128xf32> to vector<128x128xf32>
    %21 = arith.addf %18, %20 : vector<128x128xf32>
    %cst_16 = arith.constant 0.000000e+00 : f32
    %22 = vector.broadcast %cst_16 : f32 to vector<128x128xf32>
    %23 = arith.cmpf ogt, %21, %22 : vector<128x128xf32>
    %cst_17 = arith.constant 0.00999999977 : f32
    %24 = vector.broadcast %cst_17 : f32 to vector<128x128xf32>
    %25 = arith.mulf %24, %21 : vector<128x128xf32>
    %26 = arith.select %23, %21, %25 : vector<128x128xi1>, vector<128x128xf32>
    %27 = arith.truncf %26 : vector<128x128xf32> to vector<128x128xbf16>
    %28 = arith.truncf %0 : vector<128x128xf32> to vector<128x128xbf16>
    %29 = tpu.concatenate %27, %28 in 1 : vector<128x128xbf16>, vector<128x128xbf16> -> vector<128x256xbf16>
    %c0_18 = arith.constant 0 : index
    %c0_19 = arith.constant 0 : index
    %30 = vector.load %arg9[%c0_18, %c0_19] : memref<256x128xbf16, #tpu.memory_space<vmem>>, vector<256x128xbf16>
    %cst_20 = arith.constant dense<0.000000e+00> : vector<128x128xf32>
    %31 = tpu.matmul %29, %30, %cst_20 {dimension_numbers = #tpu.dot_dimension_numbers<[1], [0], [0], [1], [0, 0, 1, 1], [], []>} : vector<128x256xbf16>, vector<256x128xbf16>, vector<128x128xf32> -> vector<128x128xf32>
    %c0_21 = arith.constant 0 : index
    %c0_22 = arith.constant 0 : index
    %32 = vector.load %arg10[%c0_21, %c0_22] : memref<1x128xf32, #tpu.memory_space<vmem>>, vector<1x128xf32>
    %33 = vector.broadcast %32 : vector<1x128xf32> to vector<128x128xf32>
    %34 = arith.addf %31, %33 : vector<128x128xf32>
    %cst_23 = arith.constant 0.000000e+00 : f32
    %35 = vector.broadcast %cst_23 : f32 to vector<128x128xf32>
    %36 = arith.cmpf ogt, %34, %35 : vector<128x128xf32>
    %cst_24 = arith.constant 0.00999999977 : f32
    %37 = vector.broadcast %cst_24 : f32 to vector<128x128xf32>
    %38 = arith.mulf %37, %34 : vector<128x128xf32>
    %39 = arith.select %36, %34, %38 : vector<128x128xi1>, vector<128x128xf32>
    %40 = arith.truncf %39 : vector<128x128xf32> to vector<128x128xbf16>
    %c0_25 = arith.constant 0 : index
    %c0_26 = arith.constant 0 : index
    %41 = vector.load %arg11[%c0_25, %c0_26] : memref<128x128xbf16, #tpu.memory_space<vmem>>, vector<128x128xbf16>
    %cst_27 = arith.constant dense<0.000000e+00> : vector<128x128xf32>
    %42 = tpu.matmul %40, %41, %cst_27 {dimension_numbers = #tpu.dot_dimension_numbers<[1], [0], [0], [1], [0, 0, 1, 1], [], []>} : vector<128x128xbf16>, vector<128x128xbf16>, vector<128x128xf32> -> vector<128x128xf32>
    %c0_28 = arith.constant 0 : index
    %c0_29 = arith.constant 0 : index
    %43 = vector.load %arg12[%c0_28, %c0_29] : memref<1x128xf32, #tpu.memory_space<vmem>>, vector<1x128xf32>
    %44 = vector.broadcast %43 : vector<1x128xf32> to vector<128x128xf32>
    %45 = arith.addf %42, %44 : vector<128x128xf32>
    %c0_30 = arith.constant 0 : index
    %c0_31 = arith.constant 0 : index
    %46 = vector.load %arg1[%c0_30, %c0_31] : memref<128x128xf32, #tpu.memory_space<vmem>>, vector<128x128xf32>
    %47 = arith.addf %46, %45 : vector<128x128xf32>
    %c0_32 = arith.constant 0 : index
    %c0_33 = arith.constant 0 : index
    %48 = vector.load %arg19[%c0_32, %c0_33] : memref<1x128xf32, #tpu.memory_space<vmem>>, vector<1x128xf32>
    %c0_34 = arith.constant 0 : index
    %c0_35 = arith.constant 0 : index
    %49 = vector.load %arg20[%c0_34, %c0_35] : memref<1x128xf32, #tpu.memory_space<vmem>>, vector<1x128xf32>
    %cst_36 = arith.constant dense<0.000000e+00> : vector<128xf32>
    %50 = vector.multi_reduction <add>, %47, %cst_36 [1] : vector<128x128xf32> to vector<128xf32>
    %51 = vector.shape_cast %50 : vector<128xf32> to vector<128x1xf32>
    %cst_37 = arith.constant 1.280000e+02 : f32
    %52 = vector.broadcast %cst_37 : f32 to vector<128x1xf32>
    %53 = arith.divf %51, %52 : vector<128x1xf32>
    %54 = vector.broadcast %53 : vector<128x1xf32> to vector<128x128xf32>
    %55 = arith.subf %47, %54 : vector<128x128xf32>
    %56 = arith.mulf %55, %55 : vector<128x128xf32>
    %cst_38 = arith.constant dense<0.000000e+00> : vector<128xf32>
    %57 = vector.multi_reduction <add>, %56, %cst_38 [1] : vector<128x128xf32> to vector<128xf32>
    %58 = vector.shape_cast %57 : vector<128xf32> to vector<128x1xf32>
    %cst_39 = arith.constant 1.280000e+02 : f32
    %59 = vector.broadcast %cst_39 : f32 to vector<128x1xf32>
    %60 = arith.divf %58, %59 : vector<128x1xf32>
    %61 = vector.broadcast %53 : vector<128x1xf32> to vector<128x128xf32>
    %62 = arith.subf %47, %61 : vector<128x128xf32>
    %cst_40 = arith.constant 9.99999974E-6 : f32
    %63 = vector.broadcast %cst_40 : f32 to vector<128x1xf32>
    %64 = arith.addf %60, %63 : vector<128x1xf32>
    %65 = math.rsqrt %64 : vector<128x1xf32>
    %66 = vector.broadcast %65 : vector<128x1xf32> to vector<128x128xf32>
    %67 = arith.mulf %62, %66 : vector<128x128xf32>
    %68 = vector.broadcast %48 : vector<1x128xf32> to vector<128x128xf32>
    %69 = arith.mulf %67, %68 : vector<128x128xf32>
    %70 = vector.broadcast %49 : vector<1x128xf32> to vector<128x128xf32>
    %71 = arith.addf %69, %70 : vector<128x128xf32>
    %72 = arith.truncf %71 : vector<128x128xf32> to vector<128x128xbf16>
    %c0_41 = arith.constant 0 : index
    %c0_42 = arith.constant 0 : index
    %73 = vector.load %arg13[%c0_41, %c0_42] : memref<128x128xbf16, #tpu.memory_space<vmem>>, vector<128x128xbf16>
    %cst_43 = arith.constant dense<0.000000e+00> : vector<128x128xf32>
    %74 = tpu.matmul %72, %73, %cst_43 {dimension_numbers = #tpu.dot_dimension_numbers<[1], [0], [0], [1], [0, 0, 1, 1], [], []>} : vector<128x128xbf16>, vector<128x128xbf16>, vector<128x128xf32> -> vector<128x128xf32>
    %c0_44 = arith.constant 0 : index
    %c0_45 = arith.constant 0 : index
    %75 = vector.load %arg14[%c0_44, %c0_45] : memref<1x128xf32, #tpu.memory_space<vmem>>, vector<1x128xf32>
    %76 = vector.broadcast %75 : vector<1x128xf32> to vector<128x128xf32>
    %77 = arith.addf %74, %76 : vector<128x128xf32>
    %cst_46 = arith.constant 0.000000e+00 : f32
    %78 = vector.broadcast %cst_46 : f32 to vector<128x128xf32>
    %79 = arith.cmpf ogt, %77, %78 : vector<128x128xf32>
    %cst_47 = arith.constant 0.00999999977 : f32
    %80 = vector.broadcast %cst_47 : f32 to vector<128x128xf32>
    %81 = arith.mulf %80, %77 : vector<128x128xf32>
    %82 = arith.select %79, %77, %81 : vector<128x128xi1>, vector<128x128xf32>
    %83 = arith.truncf %82 : vector<128x128xf32> to vector<128x128xbf16>
    %c0_48 = arith.constant 0 : index
    %c0_49 = arith.constant 0 : index
    %84 = vector.load %arg15[%c0_48, %c0_49] : memref<128x128xbf16, #tpu.memory_space<vmem>>, vector<128x128xbf16>
    %cst_50 = arith.constant dense<0.000000e+00> : vector<128x128xf32>
    %85 = tpu.matmul %83, %84, %cst_50 {dimension_numbers = #tpu.dot_dimension_numbers<[1], [0], [0], [1], [0, 0, 1, 1], [], []>} : vector<128x128xbf16>, vector<128x128xbf16>, vector<128x128xf32> -> vector<128x128xf32>
    %c0_51 = arith.constant 0 : index
    %c0_52 = arith.constant 0 : index
    %86 = vector.load %arg16[%c0_51, %c0_52] : memref<1x128xf32, #tpu.memory_space<vmem>>, vector<1x128xf32>
    %87 = vector.broadcast %86 : vector<1x128xf32> to vector<128x128xf32>
    %88 = arith.addf %85, %87 : vector<128x128xf32>
    %cst_53 = arith.constant 0.000000e+00 : f32
    %89 = vector.broadcast %cst_53 : f32 to vector<128x128xf32>
    %90 = arith.cmpf ogt, %88, %89 : vector<128x128xf32>
    %cst_54 = arith.constant 0.00999999977 : f32
    %91 = vector.broadcast %cst_54 : f32 to vector<128x128xf32>
    %92 = arith.mulf %91, %88 : vector<128x128xf32>
    %93 = arith.select %90, %88, %92 : vector<128x128xi1>, vector<128x128xf32>
    %94 = arith.truncf %93 : vector<128x128xf32> to vector<128x128xbf16>
    %c0_55 = arith.constant 0 : index
    %c0_56 = arith.constant 0 : index
    %95 = vector.load %arg17[%c0_55, %c0_56] : memref<128x128xbf16, #tpu.memory_space<vmem>>, vector<128x128xbf16>
    %cst_57 = arith.constant dense<0.000000e+00> : vector<128x128xf32>
    %96 = tpu.matmul %94, %95, %cst_57 {dimension_numbers = #tpu.dot_dimension_numbers<[1], [0], [0], [1], [0, 0, 1, 1], [], []>} : vector<128x128xbf16>, vector<128x128xbf16>, vector<128x128xf32> -> vector<128x128xf32>
    %c0_58 = arith.constant 0 : index
    %c0_59 = arith.constant 0 : index
    %97 = vector.load %arg18[%c0_58, %c0_59] : memref<1x128xf32, #tpu.memory_space<vmem>>, vector<1x128xf32>
    %98 = vector.broadcast %97 : vector<1x128xf32> to vector<128x128xf32>
    %99 = arith.addf %96, %98 : vector<128x128xf32>
    %100 = arith.addf %71, %99 : vector<128x128xf32>
    %c0_60 = arith.constant 0 : index
    %c0_61 = arith.constant 0 : index
    %101 = vector.load %arg21[%c0_60, %c0_61] : memref<1x128xf32, #tpu.memory_space<vmem>>, vector<1x128xf32>
    %c0_62 = arith.constant 0 : index
    %c0_63 = arith.constant 0 : index
    %102 = vector.load %arg22[%c0_62, %c0_63] : memref<1x128xf32, #tpu.memory_space<vmem>>, vector<1x128xf32>
    %cst_64 = arith.constant dense<0.000000e+00> : vector<128xf32>
    %103 = vector.multi_reduction <add>, %100, %cst_64 [1] : vector<128x128xf32> to vector<128xf32>
    %104 = vector.shape_cast %103 : vector<128xf32> to vector<128x1xf32>
    %cst_65 = arith.constant 1.280000e+02 : f32
    %105 = vector.broadcast %cst_65 : f32 to vector<128x1xf32>
    %106 = arith.divf %104, %105 : vector<128x1xf32>
    %107 = vector.broadcast %106 : vector<128x1xf32> to vector<128x128xf32>
    %108 = arith.subf %100, %107 : vector<128x128xf32>
    %109 = arith.mulf %108, %108 : vector<128x128xf32>
    %cst_66 = arith.constant dense<0.000000e+00> : vector<128xf32>
    %110 = vector.multi_reduction <add>, %109, %cst_66 [1] : vector<128x128xf32> to vector<128xf32>
    %111 = vector.shape_cast %110 : vector<128xf32> to vector<128x1xf32>
    %cst_67 = arith.constant 1.280000e+02 : f32
    %112 = vector.broadcast %cst_67 : f32 to vector<128x1xf32>
    %113 = arith.divf %111, %112 : vector<128x1xf32>
    %114 = vector.broadcast %106 : vector<128x1xf32> to vector<128x128xf32>
    %115 = arith.subf %100, %114 : vector<128x128xf32>
    %cst_68 = arith.constant 9.99999974E-6 : f32
    %116 = vector.broadcast %cst_68 : f32 to vector<128x1xf32>
    %117 = arith.addf %113, %116 : vector<128x1xf32>
    %118 = math.rsqrt %117 : vector<128x1xf32>
    %119 = vector.broadcast %118 : vector<128x1xf32> to vector<128x128xf32>
    %120 = arith.mulf %115, %119 : vector<128x128xf32>
    %121 = vector.broadcast %101 : vector<1x128xf32> to vector<128x128xf32>
    %122 = arith.mulf %120, %121 : vector<128x128xf32>
    %123 = vector.broadcast %102 : vector<1x128xf32> to vector<128x128xf32>
    %124 = arith.addf %122, %123 : vector<128x128xf32>
    %c0_69 = arith.constant 0 : index
    %c0_70 = arith.constant 0 : index
    %125 = vector.load %arg23[%c0_69, %c0_70] : memref<128x128xf32, #tpu.memory_space<vmem>>, vector<128x128xf32>
    tpu.vector_store %arg23[%c0_69, %c0_70], %124 {strides = array<i32>} : memref<128x128xf32, #tpu.memory_space<vmem>>, vector<128x128xf32>,
    return
  }
  func.func @transform_0(%arg0: i32) -> (i32, i32) {
    %c0_i32 = arith.constant 0 : i32
    %c0_i32_0 = arith.constant 0 : i32
    return %arg0, %c0_i32 : i32, i32
  }
  func.func @transform_1(%arg0: i32) -> (i32, i32) {
    %c0_i32 = arith.constant 0 : i32
    %c0_i32_0 = arith.constant 0 : i32
    return %arg0, %c0_i32 : i32, i32
  }
  func.func @transform_2(%arg0: i32) -> (i32, i32) {
    %c0_i32 = arith.constant 0 : i32
    %c0_i32_0 = arith.constant 0 : i32
    return %arg0, %c0_i32 : i32, i32
  }
  func.func @transform_3(%arg0: i32) -> (i32, i32) {
    %c0_i32 = arith.constant 0 : i32
    %c0_i32_0 = arith.constant 0 : i32
    return %arg0, %c0_i32 : i32, i32
  }
  func.func @transform_4(%arg0: i32) -> (i32, i32) {
    %c0_i32 = arith.constant 0 : i32
    %c0_i32_0 = arith.constant 0 : i32
    %c0_i32_1 = arith.constant 0 : i32
    return %c0_i32, %c0_i32_0 : i32, i32
  }
  func.func @transform_5(%arg0: i32) -> (i32, i32) {
    %c0_i32 = arith.constant 0 : i32
    %c0_i32_0 = arith.constant 0 : i32
    %c0_i32_1 = arith.constant 0 : i32
    return %c0_i32, %c0_i32_0 : i32, i32
  }
  func.func @transform_6(%arg0: i32) -> (i32, i32) {
    %c0_i32 = arith.constant 0 : i32
    %c0_i32_0 = arith.constant 0 : i32
    %c0_i32_1 = arith.constant 0 : i32
    return %c0_i32, %c0_i32_0 : i32, i32
  }
  func.func @transform_7(%arg0: i32) -> (i32, i32) {
    %c0_i32 = arith.constant 0 : i32
    %c0_i32_0 = arith.constant 0 : i32
    %c0_i32_1 = arith.constant 0 : i32
    return %c0_i32, %c0_i32_0 : i32, i32
  }
  func.func @transform_8(%arg0: i32) -> (i32, i32) {
    %c0_i32 = arith.constant 0 : i32
    %c0_i32_0 = arith.constant 0 : i32
    %c0_i32_1 = arith.constant 0 : i32
    return %c0_i32, %c0_i32_0 : i32, i32
  }
  func.func @transform_9(%arg0: i32) -> (i32, i32) {
    %c0_i32 = arith.constant 0 : i32
    %c0_i32_0 = arith.constant 0 : i32
    %c0_i32_1 = arith.constant 0 : i32
    return %c0_i32, %c0_i32_0 : i32, i32
  }
  func.func @transform_10(%arg0: i32) -> (i32, i32) {
    %c0_i32 = arith.constant 0 : i32
    %c0_i32_0 = arith.constant 0 : i32
    %c0_i32_1 = arith.constant 0 : i32
    return %c0_i32, %c0_i32_0 : i32, i32
  }
  func.func @transform_11(%arg0: i32) -> (i32, i32) {
    %c0_i32 = arith.constant 0 : i32
    %c0_i32_0 = arith.constant 0 : i32
    %c0_i32_1 = arith.constant 0 : i32
    return %c0_i32, %c0_i32_0 : i32, i32
  }
  func.func @transform_12(%arg0: i32) -> (i32, i32) {
    %c0_i32 = arith.constant 0 : i32
    %c0_i32_0 = arith.constant 0 : i32
    %c0_i32_1 = arith.constant 0 : i32
    return %c0_i32, %c0_i32_0 : i32, i32
  }
  func.func @transform_13(%arg0: i32) -> (i32, i32) {
    %c0_i32 = arith.constant 0 : i32
    %c0_i32_0 = arith.constant 0 : i32
    %c0_i32_1 = arith.constant 0 : i32
    return %c0_i32, %c0_i32_0 : i32, i32
  }
  func.func @transform_14(%arg0: i32) -> (i32, i32) {
    %c0_i32 = arith.constant 0 : i32
    %c0_i32_0 = arith.constant 0 : i32
    %c0_i32_1 = arith.constant 0 : i32
    return %c0_i32, %c0_i32_0 : i32, i32
  }
  func.func @transform_15(%arg0: i32) -> (i32, i32) {
    %c0_i32 = arith.constant 0 : i32
    %c0_i32_0 = arith.constant 0 : i32
    %c0_i32_1 = arith.constant 0 : i32
    return %c0_i32, %c0_i32_0 : i32, i32
  }
  func.func @transform_16(%arg0: i32) -> (i32, i32) {
    %c0_i32 = arith.constant 0 : i32
    %c0_i32_0 = arith.constant 0 : i32
    %c0_i32_1 = arith.constant 0 : i32
    return %c0_i32, %c0_i32_0 : i32, i32
  }
  func.func @transform_17(%arg0: i32) -> (i32, i32) {
    %c0_i32 = arith.constant 0 : i32
    %c0_i32_0 = arith.constant 0 : i32
    %c0_i32_1 = arith.constant 0 : i32
    return %c0_i32, %c0_i32_0 : i32, i32
  }
  func.func @transform_18(%arg0: i32) -> (i32, i32) {
    %c0_i32 = arith.constant 0 : i32
    %c0_i32_0 = arith.constant 0 : i32
    %c0_i32_1 = arith.constant 0 : i32
    return %c0_i32, %c0_i32_0 : i32, i32
  }
  func.func @transform_19(%arg0: i32) -> (i32, i32) {
    %c0_i32 = arith.constant 0 : i32
    %c0_i32_0 = arith.constant 0 : i32
    %c0_i32_1 = arith.constant 0 : i32
    return %c0_i32, %c0_i32_0 : i32, i32
  }
  func.func @transform_20(%arg0: i32) -> (i32, i32) {
    %c0_i32 = arith.constant 0 : i32
    %c0_i32_0 = arith.constant 0 : i32
    %c0_i32_1 = arith.constant 0 : i32
    return %c0_i32, %c0_i32_0 : i32, i32
  }
  func.func @transform_21(%arg0: i32) -> (i32, i32) {
    %c0_i32 = arith.constant 0 : i32
    %c0_i32_0 = arith.constant 0 : i32
    %c0_i32_1 = arith.constant 0 : i32
    return %c0_i32, %c0_i32_0 : i32, i32
  }
  func.func @transform_22(%arg0: i32) -> (i32, i32) {
    %c0_i32 = arith.constant 0 : i32
    %c0_i32_0 = arith.constant 0 : i32
    return %arg0, %c0_i32 : i32, i32
  }
}

module attributes {stable_mosaic.version = 11 : i64} {
  func.func @_qal_kernel(%arg0: i32, %arg1: memref<128x128xf32, #tpu.memory_space<vmem>>, %arg2: memref<128x128xf32, #tpu.memory_space<vmem>>, %arg3: memref<128x128xf32, #tpu.memory_space<vmem>>, %arg4: memref<128x256xf32, #tpu.memory_space<vmem>>, %arg5: memref<256x128xbf16, #tpu.memory_space<vmem>>, %arg6: memref<1x128xf32, #tpu.memory_space<vmem>>, %arg7: memref<256x128xbf16, #tpu.memory_space<vmem>>, %arg8: memref<1x128xf32, #tpu.memory_space<vmem>>, %arg9: memref<256x128xbf16, #tpu.memory_space<vmem>>, %arg10: memref<1x128xf32, #tpu.memory_space<vmem>>, %arg11: memref<128x128xbf16, #tpu.memory_space<vmem>>, %arg12: memref<1x128xf32, #tpu.memory_space<vmem>>, %arg13: memref<128x128xbf16, #tpu.memory_space<vmem>>, %arg14: memref<1x128xf32, #tpu.memory_space<vmem>>, %arg15: memref<128x128xbf16, #tpu.memory_space<vmem>>, %arg16: memref<1x128xf32, #tpu.memory_space<vmem>>, %arg17: memref<128x128xbf16, #tpu.memory_space<vmem>>, %arg18: memref<1x128xf32, #tpu.memory_space<vmem>>, %arg19: memref<1x128xf32, #tpu.memory_space<vmem>>, %arg20: memref<1x128xf32, #tpu.memory_space<vmem>>, %arg21: memref<1x128xf32, #tpu.memory_space<vmem>>, %arg22: memref<1x128xf32, #tpu.memory_space<vmem>>, %arg23: memref<128x128xf32, #tpu.memory_space<vmem>>) attributes {dimension_semantics = [#tpu.dimension_semantics<parallel>], iteration_bounds = array<i64: 2>, scalar_prefetch = 0 : i64, scratch_operands = 0 : i64, tpu.core_type = #tpu.core_type<tc>, window_params = [{transform_indices = @transform_0, window_bounds = array<i64: 128, 128>}, {transform_indices = @transform_1, window_bounds = array<i64: 128, 128>}, {transform_indices = @transform_2, window_bounds = array<i64: 128, 128>}, {transform_indices = @transform_3, window_bounds = array<i64: 128, 256>}, {pipeline_mode = #tpu.pipeline_mode<synchronous>, transform_indices = @transform_4, window_bounds = array<i64: 256, 128>}, {pipeline_mode = #tpu.pipeline_mode<synchronous>, transform_indices = @transform_5, window_bounds = array<i64: 1, 128>}, {pipeline_mode = #tpu.pipeline_mode<synchronous>, transform_indices = @transform_6, window_bounds = array<i64: 256, 128>}, {pipeline_mode = #tpu.pipeline_mode<synchronous>, transform_indices = @transform_7, window_bounds = array<i64: 1, 128>}, {pipeline_mode = #tpu.pipeline_mode<synchronous>, transform_indices = @transform_8, window_bounds = array<i64: 256, 128>}, {pipeline_mode = #tpu.pipeline_mode<synchronous>, transform_indices = @transform_9, window_bounds = array<i64: 1, 128>}, {pipeline_mode = #tpu.pipeline_mode<synchronous>, transform_indices = @transform_10, window_bounds = array<i64: 128, 128>}, {pipeline_mode = #tpu.pipeline_mode<synchronous>, transform_indices = @transform_11, window_bounds = array<i64: 1, 128>}, {pipeline_mode = #tpu.pipeline_mode<synchronous>, transform_indices = @transform_12, window_bounds = array<i64: 128, 128>}, {pipeline_mode = #tpu.pipeline_mode<synchronous>, transform_indices = @transform_13, window_bounds = array<i64: 1, 128>}, {pipeline_mode = #tpu.pipeline_mode<synchronous>, transform_indices = @transform_14, window_bounds = array<i64: 128, 128>}, {pipeline_mode = #tpu.pipeline_mode<synchronous>, transform_indices = @transform_15, window_bounds = array<i64: 1, 128>}, {pipeline_mode = #tpu.pipeline_mode<synchronous>, transform_indices = @transform_16, window_bounds = array<i64: 128, 128>}, {pipeline_mode = #tpu.pipeline_mode<synchronous>, transform_indices = @transform_17, window_bounds = array<i64: 1, 128>}, {pipeline_mode = #tpu.pipeline_mode<synchronous>, transform_indices = @transform_18, window_bounds = array<i64: 1, 128>}, {pipeline_mode = #tpu.pipeline_mode<synchronous>, transform_indices = @transform_19, window_bounds = array<i64: 1, 128>}, {pipeline_mode = #tpu.pipeline_mode<synchronous>, transform_indices = @transform_20, window_bounds = array<i64: 1, 128>}, {pipeline_mode = #tpu.pipeline_mode<synchronous>, transform_indices = @transform_21, window_bounds = array<i64: 1, 128>}, {transform_indices = @transform_22, window_bounds = array<i64: 128, 128>}]} {
    %c0 = arith.constant 0 : index
    %c0_0 = arith.constant 0 : index
    %0 = vector.load %arg2[%c0, %c0_0] : memref<128x128xf32, #tpu.memory_space<vmem>>, vector<128x128xf32>
    %c0_1 = arith.constant 0 : index
    %c0_2 = arith.constant 0 : index
    %1 = vector.load %arg3[%c0_1, %c0_2] : memref<128x128xf32, #tpu.memory_space<vmem>>, vector<128x128xf32>
    %c0_3 = arith.constant 0 : index
    %c0_4 = arith.constant 0 : index
    %2 = vector.load %arg4[%c0_3, %c0_4] : memref<128x256xf32, #tpu.memory_space<vmem>>, vector<128x256xf32>
    %3 = arith.truncf %2 : vector<128x256xf32> to vector<128x256xbf16>
    %c0_5 = arith.constant 0 : index
    %c0_6 = arith.constant 0 : index
    %4 = vector.load %arg5[%c0_5, %c0_6] : memref<256x128xbf16, #tpu.memory_space<vmem>>, vector<256x128xbf16>
    %cst = arith.constant dense<0.000000e+00> : vector<128x128xf32>
    %5 = tpu.matmul %3, %4, %cst {dimension_numbers = #tpu.dot_dimension_numbers<[1], [0], [0], [1], [0, 0, 1, 1], [], []>} : vector<128x256xbf16>, vector<256x128xbf16>, vector<128x128xf32> -> vector<128x128xf32>
    %c0_7 = arith.constant 0 : index
    %c0_8 = arith.constant 0 : index
    %6 = vector.load %arg6[%c0_7, %c0_8] : memref<1x128xf32, #tpu.memory_space<vmem>>, vector<1x128xf32>
    %7 = vector.broadcast %6 : vector<1x128xf32> to vector<128x128xf32>
    %8 = arith.addf %5, %7 : vector<128x128xf32>
    %cst_9 = arith.constant 0.000000e+00 : f32
    %9 = vector.broadcast %cst_9 : f32 to vector<128x128xf32>
    %10 = arith.cmpf ogt, %8, %9 : vector<128x128xf32>
    %cst_10 = arith.constant 0.00999999977 : f32
    %11 = vector.broadcast %cst_10 : f32 to vector<128x128xf32>
    %12 = arith.mulf %11, %8 : vector<128x128xf32>
    %13 = arith.select %10, %8, %12 : vector<128x128xi1>, vector<128x128xf32>
    %14 = arith.truncf %13 : vector<128x128xf32> to vector<128x128xbf16>
    %15 = arith.truncf %1 : vector<128x128xf32> to vector<128x128xbf16>
    %16 = tpu.concatenate %14, %15 in 1 : vector<128x128xbf16>, vector<128x128xbf16> -> vector<128x256xbf16>
    %c0_11 = arith.constant 0 : index
    %c0_12 = arith.constant 0 : index
    %17 = vector.load %arg7[%c0_11, %c0_12] : memref<256x128xbf16, #tpu.memory_space<vmem>>, vector<256x128xbf16>
    %cst_13 = arith.constant dense<0.000000e+00> : vector<128x128xf32>
    %18 = tpu.matmul %16, %17, %cst_13 {dimension_numbers = #tpu.dot_dimension_numbers<[1], [0], [0], [1], [0, 0, 1, 1], [], []>} : vector<128x256xbf16>, vector<256x128xbf16>, vector<128x128xf32> -> vector<128x128xf32>
    %c0_14 = arith.constant 0 : index
    %c0_15 = arith.constant 0 : index
    %19 = vector.load %arg8[%c0_14, %c0_15] : memref<1x128xf32, #tpu.memory_space<vmem>>, vector<1x128xf32>
    %20 = vector.broadcast %19 : vector<1x128xf32> to vector<128x128xf32>
    %21 = arith.addf %18, %20 : vector<128x128xf32>
    %cst_16 = arith.constant 0.000000e+00 : f32
    %22 = vector.broadcast %cst_16 : f32 to vector<128x128xf32>
    %23 = arith.cmpf ogt, %21, %22 : vector<128x128xf32>
    %cst_17 = arith.constant 0.00999999977 : f32
    %24 = vector.broadcast %cst_17 : f32 to vector<128x128xf32>
    %25 = arith.mulf %24, %21 : vector<128x128xf32>
    %26 = arith.select %23, %21, %25 : vector<128x128xi1>, vector<128x128xf32>
    %27 = arith.truncf %26 : vector<128x128xf32> to vector<128x128xbf16>
    %28 = arith.truncf %0 : vector<128x128xf32> to vector<128x128xbf16>
    %29 = tpu.concatenate %27, %28 in 1 : vector<128x128xbf16>, vector<128x128xbf16> -> vector<128x256xbf16>
    %c0_18 = arith.constant 0 : index
    %c0_19 = arith.constant 0 : index
    %30 = vector.load %arg9[%c0_18, %c0_19] : memref<256x128xbf16, #tpu.memory_space<vmem>>, vector<256x128xbf16>
    %cst_20 = arith.constant dense<0.000000e+00> : vector<128x128xf32>
    %31 = tpu.matmul %29, %30, %cst_20 {dimension_numbers = #tpu.dot_dimension_numbers<[1], [0], [0], [1], [0, 0, 1, 1], [], []>} : vector<128x256xbf16>, vector<256x128xbf16>, vector<128x128xf32> -> vector<128x128xf32>
    %c0_21 = arith.constant 0 : index
    %c0_22 = arith.constant 0 : index
    %32 = vector.load %arg10[%c0_21, %c0_22] : memref<1x128xf32, #tpu.memory_space<vmem>>, vector<1x128xf32>
    %33 = vector.broadcast %32 : vector<1x128xf32> to vector<128x128xf32>
    %34 = arith.addf %31, %33 : vector<128x128xf32>
    %cst_23 = arith.constant 0.000000e+00 : f32
    %35 = vector.broadcast %cst_23 : f32 to vector<128x128xf32>
    %36 = arith.cmpf ogt, %34, %35 : vector<128x128xf32>
    %cst_24 = arith.constant 0.00999999977 : f32
    %37 = vector.broadcast %cst_24 : f32 to vector<128x128xf32>
    %38 = arith.mulf %37, %34 : vector<128x128xf32>
    %39 = arith.select %36, %34, %38 : vector<128x128xi1>, vector<128x128xf32>
    %40 = arith.truncf %39 : vector<128x128xf32> to vector<128x128xbf16>
    %c0_25 = arith.constant 0 : index
    %c0_26 = arith.constant 0 : index
    %41 = vector.load %arg11[%c0_25, %c0_26] : memref<128x128xbf16, #tpu.memory_space<vmem>>, vector<128x128xbf16>
    %cst_27 = arith.constant dense<0.000000e+00> : vector<128x128xf32>
    %42 = tpu.matmul %40, %41, %cst_27 {dimension_numbers = #tpu.dot_dimension_numbers<[1], [0], [0], [1], [0, 0, 1, 1], [], []>} : vector<128x128xbf16>, vector<128x128xbf16>, vector<128x128xf32> -> vector<128x128xf32>
    %c0_28 = arith.constant 0 : index
    %c0_29 = arith.constant 0 : index
    %43 = vector.load %arg12[%c0_28, %c0_29] : memref<1x128xf32, #tpu.memory_space<vmem>>, vector<1x128xf32>
    %44 = vector.broadcast %43 : vector<1x128xf32> to vector<128x128xf32>
    %45 = arith.addf %42, %44 : vector<128x128xf32>
    %c0_30 = arith.constant 0 : index
    %c0_31 = arith.constant 0 : index
    %46 = vector.load %arg1[%c0_30, %c0_31] : memref<128x128xf32, #tpu.memory_space<vmem>>, vector<128x128xf32>
    %47 = arith.addf %46, %45 : vector<128x128xf32>
    %c0_32 = arith.constant 0 : index
    %c0_33 = arith.constant 0 : index
    %48 = vector.load %arg19[%c0_32, %c0_33] : memref<1x128xf32, #tpu.memory_space<vmem>>, vector<1x128xf32>
    %c0_34 = arith.constant 0 : index
    %c0_35 = arith.constant 0 : index
    %49 = vector.load %arg20[%c0_34, %c0_35] : memref<1x128xf32, #tpu.memory_space<vmem>>, vector<1x128xf32>
    %cst_36 = arith.constant dense<0.000000e+00> : vector<128xf32>
    %50 = vector.multi_reduction <add>, %47, %cst_36 [1] : vector<128x128xf32> to vector<128xf32>
    %51 = vector.shape_cast %50 : vector<128xf32> to vector<128x1xf32>
    %cst_37 = arith.constant 1.280000e+02 : f32
    %52 = vector.broadcast %cst_37 : f32 to vector<128x1xf32>
    %53 = arith.divf %51, %52 : vector<128x1xf32>
    %54 = vector.broadcast %53 : vector<128x1xf32> to vector<128x128xf32>
    %55 = arith.subf %47, %54 : vector<128x128xf32>
    %56 = arith.mulf %55, %55 : vector<128x128xf32>
    %cst_38 = arith.constant dense<0.000000e+00> : vector<128xf32>
    %57 = vector.multi_reduction <add>, %56, %cst_38 [1] : vector<128x128xf32> to vector<128xf32>
    %58 = vector.shape_cast %57 : vector<128xf32> to vector<128x1xf32>
    %cst_39 = arith.constant 1.280000e+02 : f32
    %59 = vector.broadcast %cst_39 : f32 to vector<128x1xf32>
    %60 = arith.divf %58, %59 : vector<128x1xf32>
    %61 = vector.broadcast %53 : vector<128x1xf32> to vector<128x128xf32>
    %62 = arith.subf %47, %61 : vector<128x128xf32>
    %cst_40 = arith.constant 9.99999974E-6 : f32
    %63 = vector.broadcast %cst_40 : f32 to vector<128x1xf32>
    %64 = arith.addf %60, %63 : vector<128x1xf32>
    %65 = math.rsqrt %64 : vector<128x1xf32>
    %66 = vector.broadcast %65 : vector<128x1xf32> to vector<128x128xf32>
    %67 = arith.mulf %62, %66 : vector<128x128xf32>
    %68 = vector.broadcast %48 : vector<1x128xf32> to vector<128x128xf32>
    %69 = arith.mulf %67, %68 : vector<128x128xf32>
    %70 = vector.broadcast %49 : vector<1x128xf32> to vector<128x128xf32>
    %71 = arith.addf %69, %70 : vector<128x128xf32>
    %72 = arith.truncf %71 : vector<128x128xf32> to vector<128x128xbf16>
    %c0_41 = arith.constant 0 : index
    %c0_42 = arith.constant 0 : index
    %73 = vector.load %arg13[%c0_41, %c0_42] : memref<128x128xbf16, #tpu.memory_space<vmem>>, vector<128x128xbf16>
    %cst_43 = arith.constant dense<0.000000e+00> : vector<128x128xf32>
    %74 = tpu.matmul %72, %73, %cst_43 {dimension_numbers = #tpu.dot_dimension_numbers<[1], [0], [0], [1], [0, 0, 1, 1], [], []>} : vector<128x128xbf16>, vector<128x128xbf16>, vector<128x128xf32> -> vector<128x128xf32>
    %c0_44 = arith.constant 0 : index
    %c0_45 = arith.constant 0 : index
    %75 = vector.load %arg14[%c0_44, %c0_45] : memref<1x128xf32, #tpu.memory_space<vmem>>, vector<1x128xf32>
    %76 = vector.broadcast %75 : vector<1x128xf32> to vector<128x128xf32>
    %77 = arith.addf %74, %76 : vector<128x128xf32>
    %cst_46 = arith.constant 0.000000e+00 : f32
    %78 = vector.broadcast %cst_46 : f32 to vector<128x128xf32>
    %79 = arith.cmpf ogt, %77, %78 : vector<128x128xf32>
    %cst_47 = arith.constant 0.00999999977 : f32
    %80 = vector.broadcast %cst_47 : f32 to vector<128x128xf32>
    %81 = arith.mulf %80, %77 : vector<128x128xf32>
    %82 = arith.select %79, %77, %81 : vector<128x128xi1>, vector<128x128xf32>
    %83 = arith.truncf %82 : vector<128x128xf32> to vector<128x128xbf16>
    %c0_48 = arith.constant 0 : index
    %c0_49 = arith.constant 0 : index
    %84 = vector.load %arg15[%c0_48, %c0_49] : memref<128x128xbf16, #tpu.memory_space<vmem>>, vector<128x128xbf16>
    %cst_50 = arith.constant dense<0.000000e+00> : vector<128x128xf32>
    %85 = tpu.matmul %83, %84, %cst_50 {dimension_numbers = #tpu.dot_dimension_numbers<[1], [0], [0], [1], [0, 0, 1, 1], [], []>} : vector<128x128xbf16>, vector<128x128xbf16>, vector<128x128xf32> -> vector<128x128xf32>
    %c0_51 = arith.constant 0 : index
    %c0_52 = arith.constant 0 : index
    %86 = vector.load %arg16[%c0_51, %c0_52] : memref<1x128xf32, #tpu.memory_space<vmem>>, vector<1x128xf32>
    %87 = vector.broadcast %86 : vector<1x128xf32> to vector<128x128xf32>
    %88 = arith.addf %85, %87 : vector<128x128xf32>
    %cst_53 = arith.constant 0.000000e+00 : f32
    %89 = vector.broadcast %cst_53 : f32 to vector<128x128xf32>
    %90 = arith.cmpf ogt, %88, %89 : vector<128x128xf32>
    %cst_54 = arith.constant 0.00999999977 : f32
    %91 = vector.broadcast %cst_54 : f32 to vector<128x128xf32>
    %92 = arith.mulf %91, %88 : vector<128x128xf32>
    %93 = arith.select %90, %88, %92 : vector<128x128xi1>, vector<128x128xf32>
    %94 = arith.truncf %93 : vector<128x128xf32> to vector<128x128xbf16>
    %c0_55 = arith.constant 0 : index
    %c0_56 = arith.constant 0 : index
    %95 = vector.load %arg17[%c0_55, %c0_56] : memref<128x128xbf16, #tpu.memory_space<vmem>>, vector<128x128xbf16>
    %cst_57 = arith.constant dense<0.000000e+00> : vector<128x128xf32>
    %96 = tpu.matmul %94, %95, %cst_57 {dimension_numbers = #tpu.dot_dimension_numbers<[1], [0], [0], [1], [0, 0, 1, 1], [], []>} : vector<128x128xbf16>, vector<128x128xbf16>, vector<128x128xf32> -> vector<128x128xf32>
    %c0_58 = arith.constant 0 : index
    %c0_59 = arith.constant 0 : index
    %97 = vector.load %arg18[%c0_58, %c0_59] : memref<1x128xf32, #tpu.memory_space<vmem>>, vector<1x128xf32>
    %98 = vector.broadcast %97 : vector<1x128xf32> to vector<128x128xf32>
    %99 = arith.addf %96, %98 : vector<128x128xf32>
    %100 = arith.addf %71, %99 : vector<128x128xf32>
    %c0_60 = arith.constant 0 : index
    %c0_61 = arith.constant 0 : index
    %101 = vector.load %arg21[%c0_60, %c0_61] : memref<1x128xf32, #tpu.memory_space<vmem>>, vector<1x128xf32>
    %c0_62 = arith.constant 0 : index
    %c0_63 = arith.constant 0 : index
    %102 = vector.load %arg22[%c0_62, %c0_63] : memref<1x128xf32, #tpu.memory_space<vmem>>, vector<1x128xf32>
    %cst_64 = arith.constant dense<0.000000e+00> : vector<128xf32>
    %103 = vector.multi_reduction <add>, %100, %cst_64 [1] : vector<128x128xf32> to vector<128xf32>
    %104 = vector.shape_cast %103 : vector<128xf32> to vector<128x1xf32>
    %cst_65 = arith.constant 1.280000e+02 : f32
    %105 = vector.broadcast %cst_65 : f32 to vector<128x1xf32>
    %106 = arith.divf %104, %105 : vector<128x1xf32>
    %107 = vector.broadcast %106 : vector<128x1xf32> to vector<128x128xf32>
    %108 = arith.subf %100, %107 : vector<128x128xf32>
    %109 = arith.mulf %108, %108 : vector<128x128xf32>
    %cst_66 = arith.constant dense<0.000000e+00> : vector<128xf32>
    %110 = vector.multi_reduction <add>, %109, %cst_66 [1] : vector<128x128xf32> to vector<128xf32>
    %111 = vector.shape_cast %110 : vector<128xf32> to vector<128x1xf32>
    %cst_67 = arith.constant 1.280000e+02 : f32
    %112 = vector.broadcast %cst_67 : f32 to vector<128x1xf32>
    %113 = arith.divf %111, %112 : vector<128x1xf32>
    %114 = vector.broadcast %106 : vector<128x1xf32> to vector<128x128xf32>
    %115 = arith.subf %100, %114 : vector<128x128xf32>
    %cst_68 = arith.constant 9.99999974E-6 : f32
    %116 = vector.broadcast %cst_68 : f32 to vector<128x1xf32>
    %117 = arith.addf %113, %116 : vector<128x1xf32>
    %118 = math.rsqrt %117 : vector<128x1xf32>
    %119 = vector.broadcast %118 : vector<128x1xf32> to vector<128x128xf32>
    %120 = arith.mulf %115, %119 : vector<128x128xf32>
    %121 = vector.broadcast %101 : vector<1x128xf32> to vector<128x128xf32>
    %122 = arith.mulf %120, %121 : vector<128x128xf32>
    %123 = vector.broadcast %102 : vector<1x128xf32> to vector<128x128xf32>
    %124 = arith.addf %122, %123 : vector<128x128xf32>
    %c0_69 = arith.constant 0 : index
    %c0_70 = arith.constant 0 : index
    %125 = vector.load %arg23[%c0_69, %c0_70] : memref<128x128xf32, #tpu.memory_space<vmem>>, vector<128x128xf32>
    tpu.vector_store %arg23[%c0_69, %c0_70], %124 {strides = array<i32>} : memref<128x128xf32, #tpu.memory_space<vmem>>, vector<128x128xf32>,
    return
  }
  func.func @transform_0(%arg0: i32) -> (i32, i32) {
    %c0_i32 = arith.constant 0 : i32
    %c0_i32_0 = arith.constant 0 : i32
    return %arg0, %c0_i32 : i32, i32
  }
  func.func @transform_1(%arg0: i32) -> (i32, i32) {
    %c0_i32 = arith.constant 0 : i32
    %c0_i32_0 = arith.constant 0 : i32
    return %arg0, %c0_i32 : i32, i32
  }
  func.func @transform_2(%arg0: i32) -> (i32, i32) {
    %c0_i32 = arith.constant 0 : i32
    %c0_i32_0 = arith.constant 0 : i32
    return %arg0, %c0_i32 : i32, i32
  }
  func.func @transform_3(%arg0: i32) -> (i32, i32) {
    %c0_i32 = arith.constant 0 : i32
    %c0_i32_0 = arith.constant 0 : i32
    return %arg0, %c0_i32 : i32, i32
  }
  func.func @transform_4(%arg0: i32) -> (i32, i32) {
    %c0_i32 = arith.constant 0 : i32
    %c0_i32_0 = arith.constant 0 : i32
    %c0_i32_1 = arith.constant 0 : i32
    return %c0_i32, %c0_i32_0 : i32, i32
  }
  func.func @transform_5(%arg0: i32) -> (i32, i32) {
    %c0_i32 = arith.constant 0 : i32
    %c0_i32_0 = arith.constant 0 : i32
    %c0_i32_1 = arith.constant 0 : i32
    return %c0_i32, %c0_i32_0 : i32, i32
  }
  func.func @transform_6(%arg0: i32) -> (i32, i32) {
    %c0_i32 = arith.constant 0 : i32
    %c0_i32_0 = arith.constant 0 : i32
    %c0_i32_1 = arith.constant 0 : i32
    return %c0_i32, %c0_i32_0 : i32, i32
  }
  func.func @transform_7(%arg0: i32) -> (i32, i32) {
    %c0_i32 = arith.constant 0 : i32
    %c0_i32_0 = arith.constant 0 : i32
    %c0_i32_1 = arith.constant 0 : i32
    return %c0_i32, %c0_i32_0 : i32, i32
  }
  func.func @transform_8(%arg0: i32) -> (i32, i32) {
    %c0_i32 = arith.constant 0 : i32
    %c0_i32_0 = arith.constant 0 : i32
    %c0_i32_1 = arith.constant 0 : i32
    return %c0_i32, %c0_i32_0 : i32, i32
  }
  func.func @transform_9(%arg0: i32) -> (i32, i32) {
    %c0_i32 = arith.constant 0 : i32
    %c0_i32_0 = arith.constant 0 : i32
    %c0_i32_1 = arith.constant 0 : i32
    return %c0_i32, %c0_i32_0 : i32, i32
  }
  func.func @transform_10(%arg0: i32) -> (i32, i32) {
    %c0_i32 = arith.constant 0 : i32
    %c0_i32_0 = arith.constant 0 : i32
    %c0_i32_1 = arith.constant 0 : i32
    return %c0_i32, %c0_i32_0 : i32, i32
  }
  func.func @transform_11(%arg0: i32) -> (i32, i32) {
    %c0_i32 = arith.constant 0 : i32
    %c0_i32_0 = arith.constant 0 : i32
    %c0_i32_1 = arith.constant 0 : i32
    return %c0_i32, %c0_i32_0 : i32, i32
  }
  func.func @transform_12(%arg0: i32) -> (i32, i32) {
    %c0_i32 = arith.constant 0 : i32
    %c0_i32_0 = arith.constant 0 : i32
    %c0_i32_1 = arith.constant 0 : i32
    return %c0_i32, %c0_i32_0 : i32, i32
  }
  func.func @transform_13(%arg0: i32) -> (i32, i32) {
    %c0_i32 = arith.constant 0 : i32
    %c0_i32_0 = arith.constant 0 : i32
    %c0_i32_1 = arith.constant 0 : i32
    return %c0_i32, %c0_i32_0 : i32, i32
  }
  func.func @transform_14(%arg0: i32) -> (i32, i32) {
    %c0_i32 = arith.constant 0 : i32
    %c0_i32_0 = arith.constant 0 : i32
    %c0_i32_1 = arith.constant 0 : i32
    return %c0_i32, %c0_i32_0 : i32, i32
  }
  func.func @transform_15(%arg0: i32) -> (i32, i32) {
    %c0_i32 = arith.constant 0 : i32
    %c0_i32_0 = arith.constant 0 : i32
    %c0_i32_1 = arith.constant 0 : i32
    return %c0_i32, %c0_i32_0 : i32, i32
  }
  func.func @transform_16(%arg0: i32) -> (i32, i32) {
    %c0_i32 = arith.constant 0 : i32
    %c0_i32_0 = arith.constant 0 : i32
    %c0_i32_1 = arith.constant 0 : i32
    return %c0_i32, %c0_i32_0 : i32, i32
  }
  func.func @transform_17(%arg0: i32) -> (i32, i32) {
    %c0_i32 = arith.constant 0 : i32
    %c0_i32_0 = arith.constant 0 : i32
    %c0_i32_1 = arith.constant 0 : i32
    return %c0_i32, %c0_i32_0 : i32, i32
  }
  func.func @transform_18(%arg0: i32) -> (i32, i32) {
    %c0_i32 = arith.constant 0 : i32
    %c0_i32_0 = arith.constant 0 : i32
    %c0_i32_1 = arith.constant 0 : i32
    return %c0_i32, %c0_i32_0 : i32, i32
  }
  func.func @transform_19(%arg0: i32) -> (i32, i32) {
    %c0_i32 = arith.constant 0 : i32
    %c0_i32_0 = arith.constant 0 : i32
    %c0_i32_1 = arith.constant 0 : i32
    return %c0_i32, %c0_i32_0 : i32, i32
  }
  func.func @transform_20(%arg0: i32) -> (i32, i32) {
    %c0_i32 = arith.constant 0 : i32
    %c0_i32_0 = arith.constant 0 : i32
    %c0_i32_1 = arith.constant 0 : i32
    return %c0_i32, %c0_i32_0 : i32, i32
  }
  func.func @transform_21(%arg0: i32) -> (i32, i32) {
    %c0_i32 = arith.constant 0 : i32
    %c0_i32_0 = arith.constant 0 : i32
    %c0_i32_1 = arith.constant 0 : i32
    return %c0_i32, %c0_i32_0 : i32, i32
  }
  func.func @transform_22(%arg0: i32) -> (i32, i32) {
    %c0_i32 = arith.constant 0 : i32
    %c0_i32_0 = arith.constant 0 : i32
    return %arg0, %c0_i32 : i32, i32
  }
}

</mosaic_0001>

<llo_original>
// kernel: tpu_custom_call.1
$region0: #{tpu_custom_call.1}
  #allocation0 [shape = 'u32[]', space=smem, size = 0x4, offset = 0x4, fixed_abs, tag = 'smem constant byte address 0x4 - core index']
  #allocation1 [shape = 'u32[72,128]{1,0:T(1,128)}', space=vmem, size = 0x9000, scoped, tag = 'internal scratch']
  %s0 = inlined_call_operand.hbm [shape: f32[256,128], index: 0, kind: input, shape index: {}]
  %s1 = inlined_call_operand.hbm [shape: f32[256,128], index: 1, kind: input, shape index: {}]
  %s2 = inlined_call_operand.hbm [shape: f32[256,128], index: 2, kind: input, shape index: {}]
  %s3 = inlined_call_operand.hbm [shape: f32[256,256], index: 3, kind: input, shape index: {}]
  %s4 = inlined_call_operand.hbm [shape: bf16[256,128], index: 4, kind: input, shape index: {}]
  %s5 = inlined_call_operand.vmem [shape: f32[1,128], index: 5, kind: input, shape index: {}]
  %s6 = inlined_call_operand.hbm [shape: bf16[256,128], index: 6, kind: input, shape index: {}]
  %s7 = inlined_call_operand.vmem [shape: f32[1,128], index: 7, kind: input, shape index: {}]
  %s8 = inlined_call_operand.hbm [shape: bf16[256,128], index: 8, kind: input, shape index: {}]
  %s9 = inlined_call_operand.vmem [shape: f32[1,128], index: 9, kind: input, shape index: {}]
  %s10 = inlined_call_operand.hbm [shape: bf16[128,128], index: 10, kind: input, shape index: {}]
  %s11 = inlined_call_operand.vmem [shape: f32[1,128], index: 11, kind: input, shape index: {}]
  %s12 = inlined_call_operand.hbm [shape: bf16[128,128], index: 12, kind: input, shape index: {}]
  %s13 = inlined_call_operand.vmem [shape: f32[1,128], index: 13, kind: input, shape index: {}]
  %s14 = inlined_call_operand.hbm [shape: bf16[128,128], index: 14, kind: input, shape index: {}]
  %s15 = inlined_call_operand.vmem [shape: f32[1,128], index: 15, kind: input, shape index: {}]
  %s16 = inlined_call_operand.hbm [shape: bf16[128,128], index: 16, kind: input, shape index: {}]
  %s17 = inlined_call_operand.vmem [shape: f32[1,128], index: 17, kind: input, shape index: {}]
  %s18 = inlined_call_operand.vmem [shape: f32[1,128], index: 18, kind: input, shape index: {}]
  %s19 = inlined_call_operand.vmem [shape: f32[1,128], index: 19, kind: input, shape index: {}]
  %s20 = inlined_call_operand.vmem [shape: f32[1,128], index: 20, kind: input, shape index: {}]
  %s21 = inlined_call_operand.vmem [shape: f32[1,128], index: 21, kind: input, shape index: {}]
  %s22 = inlined_call_operand.hbm [shape: f32[256,128], index: 22, kind: output, shape index: {}]
  %s23 = sld [smem:[#allocation0]]
  $region165: #{tpu_custom_call.1} parent=0
    _
  %s25 = ssub.s32 1, %s23
  %s26 = scalar_select 0, %s25, %s23
  $region1: #{tpu_custom_call.1} parent=0
    #allocation2 [shape = 'u8[131072]{0}', space=vmem, size = 0x20000, scoped, tag = 'input window, operand 0']
    #allocation3 [shape = 's32[2]{0}', space=sflag, size = 0x8, scoped, tag = 'scoped memory for tpu_custom_call.1']
    #allocation4 [shape = 's32[2]{0}', space=sflag, size = 0x8, scoped, tag = 'scoped memory for tpu_custom_call.1']
    #allocation5 [shape = 'u8[131072]{0}', space=vmem, size = 0x20000, scoped, tag = 'input window, operand 1']
    #allocation6 [shape = 's32[2]{0}', space=sflag, size = 0x8, scoped, tag = 'scoped memory for tpu_custom_call.1']
    #allocation7 [shape = 'u8[131072]{0}', space=vmem, size = 0x20000, scoped, tag = 'input window, operand 2']
    #allocation8 [shape = 'u8[262144]{0}', space=vmem, size = 0x40000, scoped, tag = 'input window, operand 3']
    #allocation9 [shape = 's32[2]{0}', space=sflag, size = 0x8, scoped, tag = 'scoped memory for tpu_custom_call.1']
    #allocation10 [shape = 'u8[65536]{0}', space=vmem, size = 0x10000, scoped, tag = 'input window, operand 4, single buffered']
    #allocation11 [shape = 'u8[65536]{0}', space=vmem, size = 0x10000, scoped, tag = 'input window, operand 6, single buffered']
    #allocation12 [shape = 's32[1]{0}', space=sflag, size = 0x4, scoped, tag = 'scoped memory for tpu_custom_call.1']
    #allocation13 [shape = 'u8[65536]{0}', space=vmem, size = 0x10000, scoped, tag = 'input window, operand 8, single buffered']
    #allocation14 [shape = 'u8[32768]{0}', space=vmem, size = 0x8000, scoped, tag = 'input window, operand 10, single buffered']
    #allocation15 [shape = 's32[1]{0}', space=sflag, size = 0x4, scoped, tag = 'scoped memory for tpu_custom_call.1']
    #allocation16 [shape = 'u8[32768]{0}', space=vmem, size = 0x8000, scoped, tag = 'input window, operand 12, single buffered']
    #allocation17 [shape = 'u8[32768]{0}', space=vmem, size = 0x8000, scoped, tag = 'input window, operand 14, single buffered']
    #allocation18 [shape = 's32[1]{0}', space=sflag, size = 0x4, scoped, tag = 'scoped memory for tpu_custom_call.1']
    #allocation19 [shape = 'u8[32768]{0}', space=vmem, size = 0x8000, scoped, tag = 'input window, operand 16, single buffered']
    #allocation20 [shape = 'u8[131072]{0}', space=vmem, size = 0x20000, scoped, tag = 'output window, operand 0']
    %27 = vsyncpa [#allocation3], 0
    %s28 = scalar_lea.sflag [#allocation3], 1
    %29 = vsyncpa %s28, 0
    %30 = vsyncpa [#allocation6], 0
    %s31 = scalar_lea.sflag [#allocation6], 1
    %32 = vsyncpa %s31, 0
    %33 = vsyncpa [#allocation9], 0
    %s34 = scalar_lea.sflag [#allocation9], 1
    %35 = vsyncpa %s34, 0
    %36 = vsyncpa [#allocation12], 0
    %37 = vsyncpa [#allocation15], 0
    %38 = vsyncpa [#allocation18], 0
    %39 = vsyncpa [#allocation4], 0
    %s40 = scalar_lea.sflag [#allocation4], 1
    %41 = vsyncpa %s40, 0
    loop: start=0, step=1, limit=4
    $region2: #{tpu_custom_call.1} parent=1 // loop_pre_header
      _
    $region3: #{tpu_custom_call.1} parent=1 // loop_header
      %s43 = sphi 0, %s47
      %p44 = scmp.ge.s32.totalorder %s43, 4
      %s53 = sphi 0, %s55
      %s56 = sphi 0, %s53
      %s57 = sphi 0, %s56
      %s73 = sphi 0, %s57
      %s79 = sphi 0, %s81
      %s82 = sphi 0, %s79
      %s83 = sphi 0, %s82
      %s99 = sphi 0, %s83
      %s105 = sphi 0, %s107
      %s108 = sphi 0, %s105
      %s109 = sphi 0, %s108
      %s125 = sphi 0, %s109
      %s131 = sphi 0, %s133
      %s134 = sphi 0, %s131
      %s135 = sphi 0, %s134
      %s151 = sphi 0, %s135
      %s155 = sphi 0, %s155
      %s157 = sphi 0, %s155
      %s158 = sphi 0, %s157
      %s172 = sphi 0, %s158
      %s176 = sphi 0, %s176
      %s178 = sphi 0, %s176
      %s179 = sphi 0, %s178
      %s193 = sphi 0, %s179
      %s197 = sphi 0, %s197
      %s199 = sphi 0, %s197
      %s200 = sphi 0, %s199
      %s214 = sphi 0, %s200
      %s218 = sphi 0, %s218
      %s220 = sphi 0, %s218
      %s221 = sphi 0, %s220
      %s235 = sphi 0, %s221
      %s239 = sphi 0, %s239
      %s241 = sphi 0, %s239
      %s242 = sphi 0, %s241
      %s256 = sphi 0, %s242
      %s260 = sphi 0, %s260
      %s262 = sphi 0, %s260
      %s263 = sphi 0, %s262
      %s277 = sphi 0, %s263
      %s281 = sphi 0, %s281
      %s283 = sphi 0, %s281
      %s284 = sphi 0, %s283
      %s298 = sphi 0, %s284
      %s302 = sphi 0, %s302
      %s304 = sphi 0, %s302
      %s305 = sphi 0, %s304
      %s319 = sphi 0, %s305
      %s323 = sphi 0, %s323
      %s325 = sphi 0, %s323
      %s326 = sphi 0, %s325
      %s340 = sphi 0, %s326
      %s344 = sphi 0, %s344
      %s346 = sphi 0, %s344
      %s347 = sphi 0, %s346
      %s361 = sphi 0, %s347
      %s365 = sphi 0, %s365
      %s367 = sphi 0, %s365
      %s368 = sphi 0, %s367
      %s382 = sphi 0, %s368
      %s386 = sphi 0, %s386
      %s388 = sphi 0, %s386
      %s389 = sphi 0, %s388
      %s403 = sphi 0, %s389
      %s407 = sphi 0, %s407
      %s409 = sphi 0, %s407
      %s410 = sphi 0, %s409
      %s424 = sphi 0, %s410
      %s428 = sphi 0, %s428
      %s430 = sphi 0, %s428
      %s431 = sphi 0, %s430
      %s445 = sphi 0, %s431
      %s449 = sphi 0, %s449
      %s451 = sphi 0, %s449
      %s452 = sphi 0, %s451
      %s466 = sphi 0, %s452
      %s470 = sphi 0, %s470
      %s472 = sphi 0, %s470
      %s473 = sphi 0, %s472
      %s487 = sphi 0, %s473
      %s491 = sphi 0, %s491
      %s493 = sphi 0, %s491
      %s494 = sphi 0, %s493
      %s508 = sphi 0, %s494
      %s512 = sphi 0, %s512
      %s514 = sphi 0, %s512
      %s515 = sphi 0, %s514
      %s529 = sphi 0, %s515
      %s535 = sphi 0, %s537
      %s538 = sphi 0, %s535
      %s539 = sphi 0, %s538
      %s555 = sphi 0, %s539
    $region4: #{tpu_custom_call.1} parent=1 // loop_header_branch
      %46 = sbr.rel (%p44) target = $region8
    $region5: #{tpu_custom_call.1} parent=1 // loop_body
      %s48 = ssub.s32 %s43, 1
      %s49 = ssub.s32 %s43, 2
      %s50 = sadd.s32 %s43, 1
      %s51 = ssub.s32 %s43, %s50
      %p52 = scmp.eq.s32.totalorder %s51, 0
      %s54 = sadd.s32 %s53, 1
      %s55 = scalar_select %p52, %s53, %s54
      %p58 = pneg %p52
      %p59 = scmp.eq.s32.totalorder %s43, 1
      %p60 = por %p58, %p59
      %p61 = scmp.ne.s32.totalorder %s53, %s56
      %p62 = scmp.eq.s32.totalorder %s43, 0
      %p63 = por %p61, %p62
      %p64 = scmp.ne.s32.totalorder %s53, %s56
      %p65 = scmp.eq.s32.totalorder %s48, 1
      %p66 = por %p64, %p65
      %p67 = scmp.ne.s32.totalorder %s56, %s57
      %p68 = scmp.eq.s32.totalorder %s48, 0
      %p69 = por %p67, %p68
      %p70 = scmp.ne.s32.totalorder %s56, %s57
      %p71 = scmp.eq.s32.totalorder %s49, 1
      %p72 = por %p70, %p71
      %p74 = scmp.ne.s32.totalorder %s57, %s73
      %p75 = scmp.eq.s32.totalorder %s49, 0
      %p76 = por %p74, %p75
      %s77 = ssub.s32 %s43, %s50
      %p78 = scmp.eq.s32.totalorder %s77, 0
      %s80 = sadd.s32 %s79, 1
      %s81 = scalar_select %p78, %s79, %s80
      %p84 = pneg %p78
      %p85 = scmp.eq.s32.totalorder %s43, 1
      %p86 = por %p84, %p85
      %p87 = scmp.ne.s32.totalorder %s79, %s82
      %p88 = scmp.eq.s32.totalorder %s43, 0
      %p89 = por %p87, %p88
      %p90 = scmp.ne.s32.totalorder %s79, %s82
      %p91 = scmp.eq.s32.totalorder %s48, 1
      %p92 = por %p90, %p91
      %p93 = scmp.ne.s32.totalorder %s82, %s83
      %p94 = scmp.eq.s32.totalorder %s48, 0
      %p95 = por %p93, %p94
      %p96 = scmp.ne.s32.totalorder %s82, %s83
      %p97 = scmp.eq.s32.totalorder %s49, 1
      %p98 = por %p96, %p97
      %p100 = scmp.ne.s32.totalorder %s83, %s99
      %p101 = scmp.eq.s32.totalorder %s49, 0
      %p102 = por %p100, %p101
      %s103 = ssub.s32 %s43, %s50
      %p104 = scmp.eq.s32.totalorder %s103, 0
      %s106 = sadd.s32 %s105, 1
      %s107 = scalar_select %p104, %s105, %s106
      %p110 = pneg %p104
      %p111 = scmp.eq.s32.totalorder %s43, 1
      %p112 = por %p110, %p111
      %p113 = scmp.ne.s32.totalorder %s105, %s108
      %p114 = scmp.eq.s32.totalorder %s43, 0
      %p115 = por %p113, %p114
      %p116 = scmp.ne.s32.totalorder %s105, %s108
      %p117 = scmp.eq.s32.totalorder %s48, 1
      %p118 = por %p116, %p117
      %p119 = scmp.ne.s32.totalorder %s108, %s109
      %p120 = scmp.eq.s32.totalorder %s48, 0
      %p121 = por %p119, %p120
      %p122 = scmp.ne.s32.totalorder %s108, %s109
      %p123 = scmp.eq.s32.totalorder %s49, 1
      %p124 = por %p122, %p123
      %p126 = scmp.ne.s32.totalorder %s109, %s125
      %p127 = scmp.eq.s32.totalorder %s49, 0
      %p128 = por %p126, %p127
      %s129 = ssub.s32 %s43, %s50
      %p130 = scmp.eq.s32.totalorder %s129, 0
      %s132 = sadd.s32 %s131, 1
      %s133 = scalar_select %p130, %s131, %s132
      %p136 = pneg %p130
      %p137 = scmp.eq.s32.totalorder %s43, 1
      %p138 = por %p136, %p137
      %p139 = scmp.ne.s32.totalorder %s131, %s134
      %p140 = scmp.eq.s32.totalorder %s43, 0
      %p141 = por %p139, %p140
      %p142 = scmp.ne.s32.totalorder %s131, %s134
      %p143 = scmp.eq.s32.totalorder %s48, 1
      %p144 = por %p142, %p143
      %p145 = scmp.ne.s32.totalorder %s134, %s135
      %p146 = scmp.eq.s32.totalorder %s48, 0
      %p147 = por %p145, %p146
      %p148 = scmp.ne.s32.totalorder %s134, %s135
      %p149 = scmp.eq.s32.totalorder %s49, 1
      %p150 = por %p148, %p149
      %p152 = scmp.ne.s32.totalorder %s135, %s151
      %p153 = scmp.eq.s32.totalorder %s49, 0
      %p154 = por %p152, %p153
      %s156 = sadd.s32 %s155, 1
      %p159 = scmp.eq.s32.totalorder %s43, 1
      %p160 = scmp.ne.s32.totalorder %s155, %s157
      %p161 = scmp.eq.s32.totalorder %s43, 0
      %p162 = por %p160, %p161
      %p163 = scmp.ne.s32.totalorder %s155, %s157
      %p164 = scmp.eq.s32.totalorder %s48, 1
      %p165 = por %p163, %p164
      %p166 = scmp.ne.s32.totalorder %s157, %s158
      %p167 = scmp.eq.s32.totalorder %s48, 0
      %p168 = por %p166, %p167
      %p169 = scmp.ne.s32.totalorder %s157, %s158
      %p170 = scmp.eq.s32.totalorder %s49, 1
      %p171 = por %p169, %p170
      %p173 = scmp.ne.s32.totalorder %s158, %s172
      %p174 = scmp.eq.s32.totalorder %s49, 0
      %p175 = por %p173, %p174
      %s177 = sadd.s32 %s176, 1
      %p180 = scmp.eq.s32.totalorder %s43, 1
      %p181 = scmp.ne.s32.totalorder %s176, %s178
      %p182 = scmp.eq.s32.totalorder %s43, 0
      %p183 = por %p181, %p182
      %p184 = scmp.ne.s32.totalorder %s176, %s178
      %p185 = scmp.eq.s32.totalorder %s48, 1
      %p186 = por %p184, %p185
      %p187 = scmp.ne.s32.totalorder %s178, %s179
      %p188 = scmp.eq.s32.totalorder %s48, 0
      %p189 = por %p187, %p188
      %p190 = scmp.ne.s32.totalorder %s178, %s179
      %p191 = scmp.eq.s32.totalorder %s49, 1
      %p192 = por %p190, %p191
      %p194 = scmp.ne.s32.totalorder %s179, %s193
      %p195 = scmp.eq.s32.totalorder %s49, 0
      %p196 = por %p194, %p195
      %s198 = sadd.s32 %s197, 1
      %p201 = scmp.eq.s32.totalorder %s43, 1
      %p202 = scmp.ne.s32.totalorder %s197, %s199
      %p203 = scmp.eq.s32.totalorder %s43, 0
      %p204 = por %p202, %p203
      %p205 = scmp.ne.s32.totalorder %s197, %s199
      %p206 = scmp.eq.s32.totalorder %s48, 1
      %p207 = por %p205, %p206
      %p208 = scmp.ne.s32.totalorder %s199, %s200
      %p209 = scmp.eq.s32.totalorder %s48, 0
      %p210 = por %p208, %p209
      %p211 = scmp.ne.s32.totalorder %s199, %s200
      %p212 = scmp.eq.s32.totalorder %s49, 1
      %p213 = por %p211, %p212
      %p215 = scmp.ne.s32.totalorder %s200, %s214
      %p216 = scmp.eq.s32.totalorder %s49, 0
      %p217 = por %p215, %p216
      %s219 = sadd.s32 %s218, 1
      %p222 = scmp.eq.s32.totalorder %s43, 1
      %p223 = scmp.ne.s32.totalorder %s218, %s220
      %p224 = scmp.eq.s32.totalorder %s43, 0
      %p225 = por %p223, %p224
      %p226 = scmp.ne.s32.totalorder %s218, %s220
      %p227 = scmp.eq.s32.totalorder %s48, 1
      %p228 = por %p226, %p227
      %p229 = scmp.ne.s32.totalorder %s220, %s221
      %p230 = scmp.eq.s32.totalorder %s48, 0
      %p231 = por %p229, %p230
      %p232 = scmp.ne.s32.totalorder %s220, %s221
      %p233 = scmp.eq.s32.totalorder %s49, 1
      %p234 = por %p232, %p233
      %p236 = scmp.ne.s32.totalorder %s221, %s235
      %p237 = scmp.eq.s32.totalorder %s49, 0
      %p238 = por %p236, %p237
      %s240 = sadd.s32 %s239, 1
      %p243 = scmp.eq.s32.totalorder %s43, 1
      %p244 = scmp.ne.s32.totalorder %s239, %s241
      %p245 = scmp.eq.s32.totalorder %s43, 0
      %p246 = por %p244, %p245
      %p247 = scmp.ne.s32.totalorder %s239, %s241
      %p248 = scmp.eq.s32.totalorder %s48, 1
      %p249 = por %p247, %p248
      %p250 = scmp.ne.s32.totalorder %s241, %s242
      %p251 = scmp.eq.s32.totalorder %s48, 0
      %p252 = por %p250, %p251
      %p253 = scmp.ne.s32.totalorder %s241, %s242
      %p254 = scmp.eq.s32.totalorder %s49, 1
      %p255 = por %p253, %p254
      %p257 = scmp.ne.s32.totalorder %s242, %s256
      %p258 = scmp.eq.s32.totalorder %s49, 0
      %p259 = por %p257, %p258
      %s261 = sadd.s32 %s260, 1
      %p264 = scmp.eq.s32.totalorder %s43, 1
      %p265 = scmp.ne.s32.totalorder %s260, %s262
      %p266 = scmp.eq.s32.totalorder %s43, 0
      %p267 = por %p265, %p266
      %p268 = scmp.ne.s32.totalorder %s260, %s262
      %p269 = scmp.eq.s32.totalorder %s48, 1
      %p270 = por %p268, %p269
      %p271 = scmp.ne.s32.totalorder %s262, %s263
      %p272 = scmp.eq.s32.totalorder %s48, 0
      %p273 = por %p271, %p272
      %p274 = scmp.ne.s32.totalorder %s262, %s263
      %p275 = scmp.eq.s32.totalorder %s49, 1
      %p276 = por %p274, %p275
      %p278 = scmp.ne.s32.totalorder %s263, %s277
      %p279 = scmp.eq.s32.totalorder %s49, 0
      %p280 = por %p278, %p279
      %s282 = sadd.s32 %s281, 1
      %p285 = scmp.eq.s32.totalorder %s43, 1
      %p286 = scmp.ne.s32.totalorder %s281, %s283
      %p287 = scmp.eq.s32.totalorder %s43, 0
      %p288 = por %p286, %p287
      %p289 = scmp.ne.s32.totalorder %s281, %s283
      %p290 = scmp.eq.s32.totalorder %s48, 1
      %p291 = por %p289, %p290
      %p292 = scmp.ne.s32.totalorder %s283, %s284
      %p293 = scmp.eq.s32.totalorder %s48, 0
      %p294 = por %p292, %p293
      %p295 = scmp.ne.s32.totalorder %s283, %s284
      %p296 = scmp.eq.s32.totalorder %s49, 1
      %p297 = por %p295, %p296
      %p299 = scmp.ne.s32.totalorder %s284, %s298
      %p300 = scmp.eq.s32.totalorder %s49, 0
      %p301 = por %p299, %p300
      %s303 = sadd.s32 %s302, 1
      %p306 = scmp.eq.s32.totalorder %s43, 1
      %p307 = scmp.ne.s32.totalorder %s302, %s304
      %p308 = scmp.eq.s32.totalorder %s43, 0
      %p309 = por %p307, %p308
      %p310 = scmp.ne.s32.totalorder %s302, %s304
      %p311 = scmp.eq.s32.totalorder %s48, 1
      %p312 = por %p310, %p311
      %p313 = scmp.ne.s32.totalorder %s304, %s305
      %p314 = scmp.eq.s32.totalorder %s48, 0
      %p315 = por %p313, %p314
      %p316 = scmp.ne.s32.totalorder %s304, %s305
      %p317 = scmp.eq.s32.totalorder %s49, 1
      %p318 = por %p316, %p317
      %p320 = scmp.ne.s32.totalorder %s305, %s319
      %p321 = scmp.eq.s32.totalorder %s49, 0
      %p322 = por %p320, %p321
      %s324 = sadd.s32 %s323, 1
      %p327 = scmp.eq.s32.totalorder %s43, 1
      %p328 = scmp.ne.s32.totalorder %s323, %s325
      %p329 = scmp.eq.s32.totalorder %s43, 0
      %p330 = por %p328, %p329
      %p331 = scmp.ne.s32.totalorder %s323, %s325
      %p332 = scmp.eq.s32.totalorder %s48, 1
      %p333 = por %p331, %p332
      %p334 = scmp.ne.s32.totalorder %s325, %s326
      %p335 = scmp.eq.s32.totalorder %s48, 0
      %p336 = por %p334, %p335
      %p337 = scmp.ne.s32.totalorder %s325, %s326
      %p338 = scmp.eq.s32.totalorder %s49, 1
      %p339 = por %p337, %p338
      %p341 = scmp.ne.s32.totalorder %s326, %s340
      %p342 = scmp.eq.s32.totalorder %s49, 0
      %p343 = por %p341, %p342
      %s345 = sadd.s32 %s344, 1
      %p348 = scmp.eq.s32.totalorder %s43, 1
      %p349 = scmp.ne.s32.totalorder %s344, %s346
      %p350 = scmp.eq.s32.totalorder %s43, 0
      %p351 = por %p349, %p350
      %p352 = scmp.ne.s32.totalorder %s344, %s346
      %p353 = scmp.eq.s32.totalorder %s48, 1
      %p354 = por %p352, %p353
      %p355 = scmp.ne.s32.totalorder %s346, %s347
      %p356 = scmp.eq.s32.totalorder %s48, 0
      %p357 = por %p355, %p356
      %p358 = scmp.ne.s32.totalorder %s346, %s347
      %p359 = scmp.eq.s32.totalorder %s49, 1
      %p360 = por %p358, %p359
      %p362 = scmp.ne.s32.totalorder %s347, %s361
      %p363 = scmp.eq.s32.totalorder %s49, 0
      %p364 = por %p362, %p363
      %s366 = sadd.s32 %s365, 1
      %p369 = scmp.eq.s32.totalorder %s43, 1
      %p370 = scmp.ne.s32.totalorder %s365, %s367
      %p371 = scmp.eq.s32.totalorder %s43, 0
      %p372 = por %p370, %p371
      %p373 = scmp.ne.s32.totalorder %s365, %s367
      %p374 = scmp.eq.s32.totalorder %s48, 1
      %p375 = por %p373, %p374
      %p376 = scmp.ne.s32.totalorder %s367, %s368
      %p377 = scmp.eq.s32.totalorder %s48, 0
      %p378 = por %p376, %p377
      %p379 = scmp.ne.s32.totalorder %s367, %s368
      %p380 = scmp.eq.s32.totalorder %s49, 1
      %p381 = por %p379, %p380
      %p383 = scmp.ne.s32.totalorder %s368, %s382
      %p384 = scmp.eq.s32.totalorder %s49, 0
      %p385 = por %p383, %p384
      %s387 = sadd.s32 %s386, 1
      %p390 = scmp.eq.s32.totalorder %s43, 1
      %p391 = scmp.ne.s32.totalorder %s386, %s388
      %p392 = scmp.eq.s32.totalorder %s43, 0
      %p393 = por %p391, %p392
      %p394 = scmp.ne.s32.totalorder %s386, %s388
      %p395 = scmp.eq.s32.totalorder %s48, 1
      %p396 = por %p394, %p395
      %p397 = scmp.ne.s32.totalorder %s388, %s389
      %p398 = scmp.eq.s32.totalorder %s48, 0
      %p399 = por %p397, %p398
      %p400 = scmp.ne.s32.totalorder %s388, %s389
      %p401 = scmp.eq.s32.totalorder %s49, 1
      %p402 = por %p400, %p401
      %p404 = scmp.ne.s32.totalorder %s389, %s403
      %p405 = scmp.eq.s32.totalorder %s49, 0
      %p406 = por %p404, %p405
      %s408 = sadd.s32 %s407, 1
      %p411 = scmp.eq.s32.totalorder %s43, 1
      %p412 = scmp.ne.s32.totalorder %s407, %s409
      %p413 = scmp.eq.s32.totalorder %s43, 0
      %p414 = por %p412, %p413
      %p415 = scmp.ne.s32.totalorder %s407, %s409
      %p416 = scmp.eq.s32.totalorder %s48, 1
      %p417 = por %p415, %p416
      %p418 = scmp.ne.s32.totalorder %s409, %s410
      %p419 = scmp.eq.s32.totalorder %s48, 0
      %p420 = por %p418, %p419
      %p421 = scmp.ne.s32.totalorder %s409, %s410
      %p422 = scmp.eq.s32.totalorder %s49, 1
      %p423 = por %p421, %p422
      %p425 = scmp.ne.s32.totalorder %s410, %s424
      %p426 = scmp.eq.s32.totalorder %s49, 0
      %p427 = por %p425, %p426
      %s429 = sadd.s32 %s428, 1
      %p432 = scmp.eq.s32.totalorder %s43, 1
      %p433 = scmp.ne.s32.totalorder %s428, %s430
      %p434 = scmp.eq.s32.totalorder %s43, 0
      %p435 = por %p433, %p434
      %p436 = scmp.ne.s32.totalorder %s428, %s430
      %p437 = scmp.eq.s32.totalorder %s48, 1
      %p438 = por %p436, %p437
      %p439 = scmp.ne.s32.totalorder %s430, %s431
      %p440 = scmp.eq.s32.totalorder %s48, 0
      %p441 = por %p439, %p440
      %p442 = scmp.ne.s32.totalorder %s430, %s431
      %p443 = scmp.eq.s32.totalorder %s49, 1
      %p444 = por %p442, %p443
      %p446 = scmp.ne.s32.totalorder %s431, %s445
      %p447 = scmp.eq.s32.totalorder %s49, 0
      %p448 = por %p446, %p447
      %s450 = sadd.s32 %s449, 1
      %p453 = scmp.eq.s32.totalorder %s43, 1
      %p454 = scmp.ne.s32.totalorder %s449, %s451
      %p455 = scmp.eq.s32.totalorder %s43, 0
      %p456 = por %p454, %p455
      %p457 = scmp.ne.s32.totalorder %s449, %s451
      %p458 = scmp.eq.s32.totalorder %s48, 1
      %p459 = por %p457, %p458
      %p460 = scmp.ne.s32.totalorder %s451, %s452
      %p461 = scmp.eq.s32.totalorder %s48, 0
      %p462 = por %p460, %p461
      %p463 = scmp.ne.s32.totalorder %s451, %s452
      %p464 = scmp.eq.s32.totalorder %s49, 1
      %p465 = por %p463, %p464
      %p467 = scmp.ne.s32.totalorder %s452, %s466
      %p468 = scmp.eq.s32.totalorder %s49, 0
      %p469 = por %p467, %p468
      %s471 = sadd.s32 %s470, 1
      %p474 = scmp.eq.s32.totalorder %s43, 1
      %p475 = scmp.ne.s32.totalorder %s470, %s472
      %p476 = scmp.eq.s32.totalorder %s43, 0
      %p477 = por %p475, %p476
      %p478 = scmp.ne.s32.totalorder %s470, %s472
      %p479 = scmp.eq.s32.totalorder %s48, 1
      %p480 = por %p478, %p479
      %p481 = scmp.ne.s32.totalorder %s472, %s473
      %p482 = scmp.eq.s32.totalorder %s48, 0
      %p483 = por %p481, %p482
      %p484 = scmp.ne.s32.totalorder %s472, %s473
      %p485 = scmp.eq.s32.totalorder %s49, 1
      %p486 = por %p484, %p485
      %p488 = scmp.ne.s32.totalorder %s473, %s487
      %p489 = scmp.eq.s32.totalorder %s49, 0
      %p490 = por %p488, %p489
      %s492 = sadd.s32 %s491, 1
      %p495 = scmp.eq.s32.totalorder %s43, 1
      %p496 = scmp.ne.s32.totalorder %s491, %s493
      %p497 = scmp.eq.s32.totalorder %s43, 0
      %p498 = por %p496, %p497
      %p499 = scmp.ne.s32.totalorder %s491, %s493
      %p500 = scmp.eq.s32.totalorder %s48, 1
      %p501 = por %p499, %p500
      %p502 = scmp.ne.s32.totalorder %s493, %s494
      %p503 = scmp.eq.s32.totalorder %s48, 0
      %p504 = por %p502, %p503
      %p505 = scmp.ne.s32.totalorder %s493, %s494
      %p506 = scmp.eq.s32.totalorder %s49, 1
      %p507 = por %p505, %p506
      %p509 = scmp.ne.s32.totalorder %s494, %s508
      %p510 = scmp.eq.s32.totalorder %s49, 0
      %p511 = por %p509, %p510
      %s513 = sadd.s32 %s512, 1
      %p516 = scmp.eq.s32.totalorder %s43, 1
      %p517 = scmp.ne.s32.totalorder %s512, %s514
      %p518 = scmp.eq.s32.totalorder %s43, 0
      %p519 = por %p517, %p518
      %p520 = scmp.ne.s32.totalorder %s512, %s514
      %p521 = scmp.eq.s32.totalorder %s48, 1
      %p522 = por %p520, %p521
      %p523 = scmp.ne.s32.totalorder %s514, %s515
      %p524 = scmp.eq.s32.totalorder %s48, 0
      %p525 = por %p523, %p524
      %p526 = scmp.ne.s32.totalorder %s514, %s515
      %p527 = scmp.eq.s32.totalorder %s49, 1
      %p528 = por %p526, %p527
      %p530 = scmp.ne.s32.totalorder %s515, %s529
      %p531 = scmp.eq.s32.totalorder %s49, 0
      %p532 = por %p530, %p531
      %s533 = ssub.s32 %s43, %s50
      %p534 = scmp.eq.s32.totalorder %s533, 0
      %s536 = sadd.s32 %s535, 1
      %s537 = scalar_select %p534, %s535, %s536
      %p540 = pneg %p534
      %p541 = scmp.eq.s32.totalorder %s43, 1
      %p542 = por %p540, %p541
      %p543 = scmp.ne.s32.totalorder %s535, %s538
      %p544 = scmp.eq.s32.totalorder %s43, 0
      %p545 = por %p543, %p544
      %p546 = scmp.ne.s32.totalorder %s535, %s538
      %p547 = scmp.eq.s32.totalorder %s48, 1
      %p548 = por %p546, %p547
      %p549 = scmp.ne.s32.totalorder %s538, %s539
      %p550 = scmp.eq.s32.totalorder %s48, 0
      %p551 = por %p549, %p550
      %p552 = scmp.ne.s32.totalorder %s538, %s539
      %p553 = scmp.eq.s32.totalorder %s49, 1
      %p554 = por %p552, %p553
      %p556 = scmp.ne.s32.totalorder %s539, %s555
      %p557 = scmp.eq.s32.totalorder %s49, 0
      %p558 = por %p556, %p557
      %p559 = scmp.le.s32.totalorder 1, %s43
      %p560 = scmp.lt.s32.totalorder %s43, 3
      %p561 = pnand %p559, %p560
      %p562 = pneg %p561
      // Predicated region
      $region9: #{tpu_custom_call.1} parent=5 // pred_check
        _
      $region10: #{tpu_custom_call.1} parent=5 // pred_check_branch
        %564 = sbr.rel (%p561) target = $region12
      $region11: #{tpu_custom_call.1} parent=5 // pred_region
        %s565 = ssub.s32 %s43, 1
        // Predicated region
        $region13: #{tpu_custom_call.1} parent=11 // pred_check
          %p566 = pneg %p168
        $region14: #{tpu_custom_call.1} parent=11 // pred_check_branch
          %568 = sbr.rel (%p566) target = $region16
        $region15: #{tpu_custom_call.1} parent=11 // pred_region
          %570 = vsyncadd [#allocation9], 0
          %s571 = sshll.u32 %s4, 4
          %s572 = int_to_ptr.hbm [resolvable:$true] %s571
          %s573 = sshll.u32 [#allocation10], 4
          %s574 = int_to_ptr.vmem [resolvable:$true] %s573
          %579 = dma.hbm_to_vmem [thread:$0]  %s572, 2048, %s574, [#allocation9], 64, 64, 4
        $region16: #{tpu_custom_call.1} parent=11 // pred_fallthru
          _
        // Predicated region
        $region17: #{tpu_custom_call.1} parent=11 // pred_check
          %p580 = pneg %p189
        $region18: #{tpu_custom_call.1} parent=11 // pred_check_branch
          %582 = sbr.rel (%p580) target = $region20
        $region19: #{tpu_custom_call.1} parent=11 // pred_region
          _
        $region20: #{tpu_custom_call.1} parent=11 // pred_fallthru
          _
        // Predicated region
        $region21: #{tpu_custom_call.1} parent=11 // pred_check
          %p583 = pneg %p210
        $region22: #{tpu_custom_call.1} parent=11 // pred_check_branch
          %585 = sbr.rel (%p583) target = $region24
        $region23: #{tpu_custom_call.1} parent=11 // pred_region
          %587 = vsyncadd [#allocation12], 0
          %s588 = sshll.u32 %s6, 4
          %s589 = int_to_ptr.hbm [resolvable:$true] %s588
          %s590 = sshll.u32 [#allocation11], 4
          %s591 = int_to_ptr.vmem [resolvable:$true] %s590
          %596 = dma.hbm_to_vmem [thread:$0]  %s589, 2048, %s591, [#allocation12], 64, 64, 4
        $region24: #{tpu_custom_call.1} parent=11 // pred_fallthru
          _
        // Predicated region
        $region25: #{tpu_custom_call.1} parent=11 // pred_check
          %p597 = pneg %p231
        $region26: #{tpu_custom_call.1} parent=11 // pred_check_branch
          %599 = sbr.rel (%p597) target = $region28
        $region27: #{tpu_custom_call.1} parent=11 // pred_region
          _
        $region28: #{tpu_custom_call.1} parent=11 // pred_fallthru
          _
        // Predicated region
        $region29: #{tpu_custom_call.1} parent=11 // pred_check
          %p600 = pneg %p252
        $region30: #{tpu_custom_call.1} parent=11 // pred_check_branch
          %602 = sbr.rel (%p600) target = $region32
        $region31: #{tpu_custom_call.1} parent=11 // pred_region
          %604 = vsyncadd [#allocation12], 0
          %s605 = sshll.u32 %s8, 4
          %s606 = int_to_ptr.hbm [resolvable:$true] %s605
          %s607 = sshll.u32 [#allocation13], 4
          %s608 = int_to_ptr.vmem [resolvable:$true] %s607
          %613 = dma.hbm_to_vmem [thread:$0]  %s606, 2048, %s608, [#allocation12], 64, 64, 4
        $region32: #{tpu_custom_call.1} parent=11 // pred_fallthru
          _
        // Predicated region
        $region33: #{tpu_custom_call.1} parent=11 // pred_check
          %p614 = pneg %p273
        $region34: #{tpu_custom_call.1} parent=11 // pred_check_branch
          %616 = sbr.rel (%p614) target = $region36
        $region35: #{tpu_custom_call.1} parent=11 // pred_region
          _
        $region36: #{tpu_custom_call.1} parent=11 // pred_fallthru
          _
        // Predicated region
        $region37: #{tpu_custom_call.1} parent=11 // pred_check
          %p617 = pneg %p294
        $region38: #{tpu_custom_call.1} parent=11 // pred_check_branch
          %619 = sbr.rel (%p617) target = $region40
        $region39: #{tpu_custom_call.1} parent=11 // pred_region
          %621 = vsyncadd [#allocation15], 0
          %s622 = sshll.u32 %s10, 4
          %s623 = int_to_ptr.hbm [resolvable:$true] %s622
          %s624 = sshll.u32 [#allocation14], 4
          %s625 = int_to_ptr.vmem [resolvable:$true] %s624
          %630 = dma.hbm_to_vmem [thread:$0]  %s623, 1024, %s625, [#allocation15], 64, 64, 4
        $region40: #{tpu_custom_call.1} parent=11 // pred_fallthru
          _
        // Predicated region
        $region41: #{tpu_custom_call.1} parent=11 // pred_check
          %p631 = pneg %p315
        $region42: #{tpu_custom_call.1} parent=11 // pred_check_branch
          %633 = sbr.rel (%p631) target = $region44
        $region43: #{tpu_custom_call.1} parent=11 // pred_region
          _
        $region44: #{tpu_custom_call.1} parent=11 // pred_fallthru
          _
        // Predicated region
        $region45: #{tpu_custom_call.1} parent=11 // pred_check
          %p634 = pneg %p336
        $region46: #{tpu_custom_call.1} parent=11 // pred_check_branch
          %636 = sbr.rel (%p634) target = $region48
        $region47: #{tpu_custom_call.1} parent=11 // pred_region
          %638 = vsyncadd [#allocation15], 0
          %s639 = sshll.u32 %s12, 4
          %s640 = int_to_ptr.hbm [resolvable:$true] %s639
          %s641 = sshll.u32 [#allocation16], 4
          %s642 = int_to_ptr.vmem [resolvable:$true] %s641
          %647 = dma.hbm_to_vmem [thread:$0]  %s640, 1024, %s642, [#allocation15], 64, 64, 4
        $region48: #{tpu_custom_call.1} parent=11 // pred_fallthru
          _
        // Predicated region
        $region49: #{tpu_custom_call.1} parent=11 // pred_check
          %p648 = pneg %p357
        $region50: #{tpu_custom_call.1} parent=11 // pred_check_branch
          %650 = sbr.rel (%p648) target = $region52
        $region51: #{tpu_custom_call.1} parent=11 // pred_region
          _
        $region52: #{tpu_custom_call.1} parent=11 // pred_fallthru
          _
        // Predicated region
        $region53: #{tpu_custom_call.1} parent=11 // pred_check
          %p651 = pneg %p378
        $region54: #{tpu_custom_call.1} parent=11 // pred_check_branch
          %653 = sbr.rel (%p651) target = $region56
        $region55: #{tpu_custom_call.1} parent=11 // pred_region
          %655 = vsyncadd [#allocation18], 0
          %s656 = sshll.u32 %s14, 4
          %s657 = int_to_ptr.hbm [resolvable:$true] %s656
          %s658 = sshll.u32 [#allocation17], 4
          %s659 = int_to_ptr.vmem [resolvable:$true] %s658
          %664 = dma.hbm_to_vmem [thread:$0]  %s657, 1024, %s659, [#allocation18], 64, 64, 4
        $region56: #{tpu_custom_call.1} parent=11 // pred_fallthru
          _
        // Predicated region
        $region57: #{tpu_custom_call.1} parent=11 // pred_check
          %p665 = pneg %p399
        $region58: #{tpu_custom_call.1} parent=11 // pred_check_branch
          %667 = sbr.rel (%p665) target = $region60
        $region59: #{tpu_custom_call.1} parent=11 // pred_region
          _
        $region60: #{tpu_custom_call.1} parent=11 // pred_fallthru
          _
        // Predicated region
        $region61: #{tpu_custom_call.1} parent=11 // pred_check
          %p668 = pneg %p420
        $region62: #{tpu_custom_call.1} parent=11 // pred_check_branch
          %670 = sbr.rel (%p668) target = $region64
        $region63: #{tpu_custom_call.1} parent=11 // pred_region
          %672 = vsyncadd [#allocation18], 0
          %s673 = sshll.u32 %s16, 4
          %s674 = int_to_ptr.hbm [resolvable:$true] %s673
          %s675 = sshll.u32 [#allocation19], 4
          %s676 = int_to_ptr.vmem [resolvable:$true] %s675
          %681 = dma.hbm_to_vmem [thread:$0]  %s674, 1024, %s676, [#allocation18], 64, 64, 4
        $region64: #{tpu_custom_call.1} parent=11 // pred_fallthru
          _
        // Predicated region
        $region65: #{tpu_custom_call.1} parent=11 // pred_check
          %p682 = pneg %p441
        $region66: #{tpu_custom_call.1} parent=11 // pred_check_branch
          %684 = sbr.rel (%p682) target = $region68
        $region67: #{tpu_custom_call.1} parent=11 // pred_region
          _
        $region68: #{tpu_custom_call.1} parent=11 // pred_fallthru
          _
        // Predicated region
        $region69: #{tpu_custom_call.1} parent=11 // pred_check
          %p685 = pneg %p462
        $region70: #{tpu_custom_call.1} parent=11 // pred_check_branch
          %687 = sbr.rel (%p685) target = $region72
        $region71: #{tpu_custom_call.1} parent=11 // pred_region
          _
        $region72: #{tpu_custom_call.1} parent=11 // pred_fallthru
          _
        // Predicated region
        $region73: #{tpu_custom_call.1} parent=11 // pred_check
          %p688 = pneg %p483
        $region74: #{tpu_custom_call.1} parent=11 // pred_check_branch
          %690 = sbr.rel (%p688) target = $region76
        $region75: #{tpu_custom_call.1} parent=11 // pred_region
          _
        $region76: #{tpu_custom_call.1} parent=11 // pred_fallthru
          _
        // Predicated region
        $region77: #{tpu_custom_call.1} parent=11 // pred_check
          %p691 = pneg %p504
        $region78: #{tpu_custom_call.1} parent=11 // pred_check_branch
          %693 = sbr.rel (%p691) target = $region80
        $region79: #{tpu_custom_call.1} parent=11 // pred_region
          _
        $region80: #{tpu_custom_call.1} parent=11 // pred_fallthru
          _
        // Predicated region
        $region81: #{tpu_custom_call.1} parent=11 // pred_check
          %p694 = pneg %p525
        $region82: #{tpu_custom_call.1} parent=11 // pred_check_branch
          %696 = sbr.rel (%p694) target = $region84
        $region83: #{tpu_custom_call.1} parent=11 // pred_region
          _
        $region84: #{tpu_custom_call.1} parent=11 // pred_fallthru
          _
      $region12: #{tpu_custom_call.1} parent=5 // pred_fallthru
        _
      %p697 = scmp.lt.s32.totalorder %s43, 2
      // Predicated region
      $region85: #{tpu_custom_call.1} parent=5 // pred_check
        %p698 = pneg %p697
      $region86: #{tpu_custom_call.1} parent=5 // pred_check_branch
        %700 = sbr.rel (%p698) target = $region88
      $region87: #{tpu_custom_call.1} parent=5 // pred_region
        // Predicated region
        $region89: #{tpu_custom_call.1} parent=87 // pred_check
          %p701 = pneg %p63
        $region90: #{tpu_custom_call.1} parent=87 // pred_check_branch
          %703 = sbr.rel (%p701) target = $region92
        $region91: #{tpu_custom_call.1} parent=87 // pred_region
          %s704 = sand.u32 %s53, 1
          %s705 = scalar_lea.sflag [#allocation3], %s704
          %s706 = sand.u32 %s53, 1
          %s707 = smul.addr %s706, 128
          %s708 = scalar_lea.vmem [#allocation2], %s707
          %s709 = smul.u32 16, %s43
          %711 = vsyncadd %s705, 0
          %s712 = smul.addr %s709, 8
          %s713 = scalar_lea.hbm %s0, %s712
          %s714 = sshll.u32 %s713, 4
          %s715 = int_to_ptr.hbm [resolvable:$true] %s714
          %s716 = sshll.u32 %s708, 4
          %s717 = int_to_ptr.vmem [resolvable:$true] %s716
          %722 = dma.hbm_to_vmem [thread:$0]  %s715, 2048, %s717, %s705, 128, 128, 8
        $region92: #{tpu_custom_call.1} parent=87 // pred_fallthru
          _
        // Predicated region
        $region93: #{tpu_custom_call.1} parent=87 // pred_check
          %p723 = pneg %p89
        $region94: #{tpu_custom_call.1} parent=87 // pred_check_branch
          %725 = sbr.rel (%p723) target = $region96
        $region95: #{tpu_custom_call.1} parent=87 // pred_region
          %s726 = sand.u32 %s43, 1
          %s727 = scalar_lea.sflag [#allocation6], %s726
          %s728 = sand.u32 %s79, 1
          %s729 = smul.addr %s728, 128
          %s730 = scalar_lea.vmem [#allocation5], %s729
          %s731 = smul.u32 16, %s43
          %733 = vsyncadd %s727, 0
          %s734 = smul.addr %s731, 8
          %s735 = scalar_lea.hbm %s1, %s734
          %s736 = sshll.u32 %s735, 4
          %s737 = int_to_ptr.hbm [resolvable:$true] %s736
          %s738 = sshll.u32 %s730, 4
          %s739 = int_to_ptr.vmem [resolvable:$true] %s738
          %744 = dma.hbm_to_vmem [thread:$0]  %s737, 2048, %s739, %s727, 128, 128, 8
        $region96: #{tpu_custom_call.1} parent=87 // pred_fallthru
          _
        // Predicated region
        $region97: #{tpu_custom_call.1} parent=87 // pred_check
          %p745 = pneg %p115
        $region98: #{tpu_custom_call.1} parent=87 // pred_check_branch
          %747 = sbr.rel (%p745) target = $region100
        $region99: #{tpu_custom_call.1} parent=87 // pred_region
          %s748 = sand.u32 %s43, 1
          %s749 = scalar_lea.sflag [#allocation6], %s748
          %s750 = sand.u32 %s105, 1
          %s751 = smul.addr %s750, 128
          %s752 = scalar_lea.vmem [#allocation7], %s751
          %s753 = smul.u32 16, %s43
          %755 = vsyncadd %s749, 0
          %s756 = smul.addr %s753, 8
          %s757 = scalar_lea.hbm %s2, %s756
          %s758 = sshll.u32 %s757, 4
          %s759 = int_to_ptr.hbm [resolvable:$true] %s758
          %s760 = sshll.u32 %s752, 4
          %s761 = int_to_ptr.vmem [resolvable:$true] %s760
          %766 = dma.hbm_to_vmem [thread:$0]  %s759, 2048, %s761, %s749, 128, 128, 8
        $region100: #{tpu_custom_call.1} parent=87 // pred_fallthru
          _
        // Predicated region
        $region101: #{tpu_custom_call.1} parent=87 // pred_check
          %p767 = pneg %p141
        $region102: #{tpu_custom_call.1} parent=87 // pred_check_branch
          %769 = sbr.rel (%p767) target = $region104
        $region103: #{tpu_custom_call.1} parent=87 // pred_region
          %s770 = sand.u32 %s43, 1
          %s771 = scalar_lea.sflag [#allocation9], %s770
          %s772 = sand.u32 %s131, 1
          %s773 = smul.addr %s772, 256
          %s774 = scalar_lea.vmem [#allocation8], %s773
          %s775 = smul.u32 16, %s43
          %777 = vsyncadd %s771, 0
          %s778 = smul.addr %s775, 2
          %s779 = smul.addr %s778, 8
          %s780 = scalar_lea.hbm %s3, %s779
          %s781 = sshll.u32 %s780, 4
          %s782 = int_to_ptr.hbm [resolvable:$true] %s781
          %s783 = sshll.u32 %s774, 4
          %s784 = int_to_ptr.vmem [resolvable:$true] %s783
          %789 = dma.hbm_to_vmem [thread:$0]  %s782, 4096, %s784, %s771, 256, 256, 16
        $region104: #{tpu_custom_call.1} parent=87 // pred_fallthru
          _
      $region88: #{tpu_custom_call.1} parent=5 // pred_fallthru
        _
      %p790 = scmp.le.s32.totalorder 1, %s43
      %p791 = scmp.lt.s32.totalorder %s43, 3
      %p792 = pnand %p790, %p791
      %p793 = pneg %p792
      // Predicated region
      $region105: #{tpu_custom_call.1} parent=5 // pred_check
        _
      $region106: #{tpu_custom_call.1} parent=5 // pred_check_branch
        %795 = sbr.rel (%p792) target = $region108
      $region107: #{tpu_custom_call.1} parent=5 // pred_region
        %s796 = ssub.s32 %s43, 1
        %s797 = sand.u32 %s56, 1
        %s798 = scalar_lea.sflag [#allocation3], %s797
        %s799 = sand.u32 %s56, 1
        %s800 = smul.addr %s799, 128
        %s801 = scalar_lea.vmem [#allocation2], %s800
        // Predicated region
        $region109: #{tpu_custom_call.1} parent=107 // pred_check
          %p802 = pneg %p69
        $region110: #{tpu_custom_call.1} parent=107 // pred_check_branch
          %804 = sbr.rel (%p802) target = $region112
        $region111: #{tpu_custom_call.1} parent=107 // pred_region
          %806 = dma.done %s798, 2048
        $region112: #{tpu_custom_call.1} parent=107 // pred_fallthru
          _
        %s807 = sand.u32 %s48, 1
        %s808 = scalar_lea.sflag [#allocation6], %s807
        %s809 = sand.u32 %s82, 1
        %s810 = smul.addr %s809, 128
        %s811 = scalar_lea.vmem [#allocation5], %s810
        // Predicated region
        $region113: #{tpu_custom_call.1} parent=107 // pred_check
          %p812 = pneg %p95
        $region114: #{tpu_custom_call.1} parent=107 // pred_check_branch
          %814 = sbr.rel (%p812) target = $region116
        $region115: #{tpu_custom_call.1} parent=107 // pred_region
          %816 = dma.done %s808, 2048
        $region116: #{tpu_custom_call.1} parent=107 // pred_fallthru
          _
        %s817 = sand.u32 %s48, 1
        %s818 = scalar_lea.sflag [#allocation6], %s817
        %s819 = sand.u32 %s108, 1
        %s820 = smul.addr %s819, 128
        %s821 = scalar_lea.vmem [#allocation7], %s820
        // Predicated region
        $region117: #{tpu_custom_call.1} parent=107 // pred_check
          %p822 = pneg %p121
        $region118: #{tpu_custom_call.1} parent=107 // pred_check_branch
          %824 = sbr.rel (%p822) target = $region120
        $region119: #{tpu_custom_call.1} parent=107 // pred_region
          %826 = dma.done %s818, 2048
        $region120: #{tpu_custom_call.1} parent=107 // pred_fallthru
          _
        %s827 = sand.u32 %s48, 1
        %s828 = scalar_lea.sflag [#allocation9], %s827
        %s829 = sand.u32 %s134, 1
        %s830 = smul.addr %s829, 256
        %s831 = scalar_lea.vmem [#allocation8], %s830
        // Predicated region
        $region121: #{tpu_custom_call.1} parent=107 // pred_check
          %p832 = pneg %p147
        $region122: #{tpu_custom_call.1} parent=107 // pred_check_branch
          %834 = sbr.rel (%p832) target = $region124
        $region123: #{tpu_custom_call.1} parent=107 // pred_region
          %836 = dma.done %s828, 4096
        $region124: #{tpu_custom_call.1} parent=107 // pred_fallthru
          _
        // Predicated region
        $region125: #{tpu_custom_call.1} parent=107 // pred_check
          %p837 = pneg %p168
        $region126: #{tpu_custom_call.1} parent=107 // pred_check_branch
          %839 = sbr.rel (%p837) target = $region128
        $region127: #{tpu_custom_call.1} parent=107 // pred_region
          %841 = dma.done [#allocation9], 2048
        $region128: #{tpu_custom_call.1} parent=107 // pred_fallthru
          _
        // Predicated region
        $region129: #{tpu_custom_call.1} parent=107 // pred_check
          %p842 = pneg %p210
        $region130: #{tpu_custom_call.1} parent=107 // pred_check_branch
          %844 = sbr.rel (%p842) target = $region132
        $region131: #{tpu_custom_call.1} parent=107 // pred_region
          %846 = dma.done [#allocation12], 2048
        $region132: #{tpu_custom_call.1} parent=107 // pred_fallthru
          _
        // Predicated region
        $region133: #{tpu_custom_call.1} parent=107 // pred_check
          %p847 = pneg %p252
        $region134: #{tpu_custom_call.1} parent=107 // pred_check_branch
          %849 = sbr.rel (%p847) target = $region136
        $region135: #{tpu_custom_call.1} parent=107 // pred_region
          %851 = dma.done [#allocation12], 2048
        $region136: #{tpu_custom_call.1} parent=107 // pred_fallthru
          _
        // Predicated region
        $region137: #{tpu_custom_call.1} parent=107 // pred_check
          %p852 = pneg %p294
        $region138: #{tpu_custom_call.1} parent=107 // pred_check_branch
          %854 = sbr.rel (%p852) target = $region140
        $region139: #{tpu_custom_call.1} parent=107 // pred_region
          %856 = dma.done [#allocation15], 1024
        $region140: #{tpu_custom_call.1} parent=107 // pred_fallthru
          _
        // Predicated region
        $region141: #{tpu_custom_call.1} parent=107 // pred_check
          %p857 = pneg %p336
        $region142: #{tpu_custom_call.1} parent=107 // pred_check_branch
          %859 = sbr.rel (%p857) target = $region144
        $region143: #{tpu_custom_call.1} parent=107 // pred_region
          %861 = dma.done [#allocation15], 1024
        $region144: #{tpu_custom_call.1} parent=107 // pred_fallthru
          _
        // Predicated region
        $region145: #{tpu_custom_call.1} parent=107 // pred_check
          %p862 = pneg %p378
        $region146: #{tpu_custom_call.1} parent=107 // pred_check_branch
          %864 = sbr.rel (%p862) target = $region148
        $region147: #{tpu_custom_call.1} parent=107 // pred_region
          %866 = dma.done [#allocation18], 1024
        $region148: #{tpu_custom_call.1} parent=107 // pred_fallthru
          _
        // Predicated region
        $region149: #{tpu_custom_call.1} parent=107 // pred_check
          %p867 = pneg %p420
        $region150: #{tpu_custom_call.1} parent=107 // pred_check_branch
          %869 = sbr.rel (%p867) target = $region152
        $region151: #{tpu_custom_call.1} parent=107 // pred_region
          %871 = dma.done [#allocation18], 1024
        $region152: #{tpu_custom_call.1} parent=107 // pred_fallthru
          _
        %s872 = sand.u32 %s56, 1
        %s873 = scalar_lea.sflag [#allocation3], %s872
        %s874 = sand.u32 %s56, 1
        %s875 = smul.addr %s874, 128
        %s876 = scalar_lea.vmem [#allocation2], %s875
        %p877 = pneg %p69
        %p878 = pneg %p66
        %s879 = sand.u32 %s48, 1
        %s880 = scalar_lea.sflag [#allocation6], %s879
        %s881 = sand.u32 %s82, 1
        %s882 = smul.addr %s881, 128
        %s883 = scalar_lea.vmem [#allocation5], %s882
        %p884 = pneg %p95
        %p885 = pneg %p92
        %s886 = sand.u32 %s48, 1
        %s887 = scalar_lea.sflag [#allocation6], %s886
        %s888 = sand.u32 %s108, 1
        %s889 = smul.addr %s888, 128
        %s890 = scalar_lea.vmem [#allocation7], %s889
        %p891 = pneg %p121
        %p892 = pneg %p118
        %s893 = sand.u32 %s48, 1
        %s894 = scalar_lea.sflag [#allocation9], %s893
        %s895 = sand.u32 %s134, 1
        %s896 = smul.addr %s895, 256
        %s897 = scalar_lea.vmem [#allocation8], %s896
        %p898 = pneg %p147
        %p899 = pneg %p144
        %p900 = pneg %p168
        %p901 = pneg %p165
        %p902 = pneg %p189
        %p903 = pneg %p186
        %p904 = pneg %p210
        %p905 = pneg %p207
        %p906 = pneg %p231
        %p907 = pneg %p228
        %p908 = pneg %p252
        %p909 = pneg %p249
        %p910 = pneg %p273
        %p911 = pneg %p270
        %p912 = pneg %p294
        %p913 = pneg %p291
        %p914 = pneg %p315
        %p915 = pneg %p312
        %p916 = pneg %p336
        %p917 = pneg %p333
        %p918 = pneg %p357
        %p919 = pneg %p354
        %p920 = pneg %p378
        %p921 = pneg %p375
        %p922 = pneg %p399
        %p923 = pneg %p396
        %p924 = pneg %p420
        %p925 = pneg %p417
        %p926 = pneg %p441
        %p927 = pneg %p438
        %p928 = pneg %p462
        %p929 = pneg %p459
        %p930 = pneg %p483
        %p931 = pneg %p480
        %p932 = pneg %p504
        %p933 = pneg %p501
        %p934 = pneg %p525
        %p935 = pneg %p522
        %p936 = pneg %p551
        %p937 = pneg %p548
        %s938 = sand.u32 %s538, 1
        %s939 = scalar_lea.sflag [#allocation4], %s938
        %s940 = sand.u32 %s538, 1
        %s941 = smul.addr %s940, 128
        %s942 = scalar_lea.vmem [#allocation20], %s941
        %s943 = smul.u32 16, %s48
        %s944 = smul.u32 16, %s48
        %s945 = smul.u32 16, %s48
        %s946 = smul.u32 16, %s48
        %s947 = smul.u32 16, %s48
        %v948 = vld [vmem:[%s811] sm:$0xff]
        %v949 = vld [vmem:[%s811 + $0x8] sm:$0xff]
        %v950 = vld [vmem:[%s811 + $0x10] sm:$0xff]
        %v951 = vld [vmem:[%s811 + $0x18] sm:$0xff]
        %v952 = vld [vmem:[%s811 + $0x20] sm:$0xff]
        %v953 = vld [vmem:[%s811 + $0x28] sm:$0xff]
        %v954 = vld [vmem:[%s811 + $0x30] sm:$0xff]
        %v955 = vld [vmem:[%s811 + $0x38] sm:$0xff]
        %v956 = vld [vmem:[%s811 + $0x40] sm:$0xff]
        %v957 = vld [vmem:[%s811 + $0x48] sm:$0xff]
        %v958 = vld [vmem:[%s811 + $0x50] sm:$0xff]
        %v959 = vld [vmem:[%s811 + $0x58] sm:$0xff]
        %v960 = vld [vmem:[%s811 + $0x60] sm:$0xff]
        %v961 = vld [vmem:[%s811 + $0x68] sm:$0xff]
        %v962 = vld [vmem:[%s811 + $0x70] sm:$0xff]
        %v963 = vld [vmem:[%s811 + $0x78] sm:$0xff]
        %v964 = vld [vmem:[%s821] sm:$0xff]
        %v965 = vld [vmem:[%s821 + $0x8] sm:$0xff]
        %v966 = vld [vmem:[%s821 + $0x10] sm:$0xff]
        %v967 = vld [vmem:[%s821 + $0x18] sm:$0xff]
        %v968 = vld [vmem:[%s821 + $0x20] sm:$0xff]
        %v969 = vld [vmem:[%s821 + $0x28] sm:$0xff]
        %v970 = vld [vmem:[%s821 + $0x30] sm:$0xff]
        %v971 = vld [vmem:[%s821 + $0x38] sm:$0xff]
        %v972 = vld [vmem:[%s821 + $0x40] sm:$0xff]
        %v973 = vld [vmem:[%s821 + $0x48] sm:$0xff]
        %v974 = vld [vmem:[%s821 + $0x50] sm:$0xff]
        %v975 = vld [vmem:[%s821 + $0x58] sm:$0xff]
        %v976 = vld [vmem:[%s821 + $0x60] sm:$0xff]
        %v977 = vld [vmem:[%s821 + $0x68] sm:$0xff]
        %v978 = vld [vmem:[%s821 + $0x70] sm:$0xff]
        %v979 = vld [vmem:[%s821 + $0x78] sm:$0xff]
        %v980 = vld [vmem:[%s831] sm:$0xff]
        %v981 = vld [vmem:[%s831 + $0x8] sm:$0xff]
        %v982 = vld [vmem:[%s831 + $0x10] sm:$0xff]
        %v983 = vld [vmem:[%s831 + $0x18] sm:$0xff]
        %v984 = vld [vmem:[%s831 + $0x20] sm:$0xff]
        %v985 = vld [vmem:[%s831 + $0x28] sm:$0xff]
        %v986 = vld [vmem:[%s831 + $0x30] sm:$0xff]
        %v987 = vld [vmem:[%s831 + $0x38] sm:$0xff]
        %v988 = vld [vmem:[%s831 + $0x40] sm:$0xff]
        %v989 = vld [vmem:[%s831 + $0x48] sm:$0xff]
        %v990 = vld [vmem:[%s831 + $0x50] sm:$0xff]
        %v991 = vld [vmem:[%s831 + $0x58] sm:$0xff]
        %v992 = vld [vmem:[%s831 + $0x60] sm:$0xff]
        %v993 = vld [vmem:[%s831 + $0x68] sm:$0xff]
        %v994 = vld [vmem:[%s831 + $0x70] sm:$0xff]
        %v995 = vld [vmem:[%s831 + $0x78] sm:$0xff]
        %v996 = vld [vmem:[%s831 + $0x80] sm:$0xff]
        %v997 = vld [vmem:[%s831 + $0x88] sm:$0xff]
        %v998 = vld [vmem:[%s831 + $0x90] sm:$0xff]
        %v999 = vld [vmem:[%s831 + $0x98] sm:$0xff]
        %v1000 = vld [vmem:[%s831 + $0xa0] sm:$0xff]
        %v1001 = vld [vmem:[%s831 + $0xa8] sm:$0xff]
        %v1002 = vld [vmem:[%s831 + $0xb0] sm:$0xff]
        %v1003 = vld [vmem:[%s831 + $0xb8] sm:$0xff]
        %v1004 = vld [vmem:[%s831 + $0xc0] sm:$0xff]
        %v1005 = vld [vmem:[%s831 + $0xc8] sm:$0xff]
        %v1006 = vld [vmem:[%s831 + $0xd0] sm:$0xff]
        %v1007 = vld [vmem:[%s831 + $0xd8] sm:$0xff]
        %v1008 = vld [vmem:[%s831 + $0xe0] sm:$0xff]
        %v1009 = vld [vmem:[%s831 + $0xe8] sm:$0xff]
        %v1010 = vld [vmem:[%s831 + $0xf0] sm:$0xff]
        %v1011 = vld [vmem:[%s831 + $0xf8] sm:$0xff]
        %v1012 = vpack.c.bf16 %v982, %v980
        %v1013 = vpack.c.bf16 %v983, %v981
        %v1014 = vpack.c.bf16 %v986, %v984
        %v1015 = vpack.c.bf16 %v987, %v985
        %v1016 = vpack.c.bf16 %v990, %v988
        %v1017 = vpack.c.bf16 %v991, %v989
        %v1018 = vpack.c.bf16 %v994, %v992
        %v1019 = vpack.c.bf16 %v995, %v993
        %v1020 = vpack.c.bf16 %v998, %v996
        %v1021 = vpack.c.bf16 %v999, %v997
        %v1022 = vpack.c.bf16 %v1002, %v1000
        %v1023 = vpack.c.bf16 %v1003, %v1001
        %v1024 = vpack.c.bf16 %v1006, %v1004
        %v1025 = vpack.c.bf16 %v1007, %v1005
        %v1026 = vpack.c.bf16 %v1010, %v1008
        %v1027 = vpack.c.bf16 %v1011, %v1009
        %v1028 = vld [vmem:[#allocation10] sm:$0xf]
        %v1029 = vld [vmem:[#allocation10 + $0x4] sm:$0xf]
        %v1030 = vld [vmem:[#allocation10 + $0x8] sm:$0xf]
        %v1031 = vld [vmem:[#allocation10 + $0xc] sm:$0xf]
        %v1032 = vld [vmem:[#allocation10 + $0x10] sm:$0xf]
        %v1033 = vld [vmem:[#allocation10 + $0x14] sm:$0xf]
        %v1034 = vld [vmem:[#allocation10 + $0x18] sm:$0xf]
        %v1035 = vld [vmem:[#allocation10 + $0x1c] sm:$0xf]
        %v1036 = vld [vmem:[#allocation10 + $0x20] sm:$0xf]
        %v1037 = vld [vmem:[#allocation10 + $0x24] sm:$0xf]
        %v1038 = vld [vmem:[#allocation10 + $0x28] sm:$0xf]
        %v1039 = vld [vmem:[#allocation10 + $0x2c] sm:$0xf]
        %v1040 = vld [vmem:[#allocation10 + $0x30] sm:$0xf]
        %v1041 = vld [vmem:[#allocation10 + $0x34] sm:$0xf]
        %v1042 = vld [vmem:[#allocation10 + $0x38] sm:$0xf]
        %v1043 = vld [vmem:[#allocation10 + $0x3c] sm:$0xf]
        %v1044 = vld [vmem:[#allocation10 + $0x40] sm:$0xf]
        %v1045 = vld [vmem:[#allocation10 + $0x44] sm:$0xf]
        %v1046 = vld [vmem:[#allocation10 + $0x48] sm:$0xf]
        %v1047 = vld [vmem:[#allocation10 + $0x4c] sm:$0xf]
        %v1048 = vld [vmem:[#allocation10 + $0x50] sm:$0xf]
        %v1049 = vld [vmem:[#allocation10 + $0x54] sm:$0xf]
        %v1050 = vld [vmem:[#allocation10 + $0x58] sm:$0xf]
        %v1051 = vld [vmem:[#allocation10 + $0x5c] sm:$0xf]
        %v1052 = vld [vmem:[#allocation10 + $0x60] sm:$0xf]
        %v1053 = vld [vmem:[#allocation10 + $0x64] sm:$0xf]
        %v1054 = vld [vmem:[#allocation10 + $0x68] sm:$0xf]
        %v1055 = vld [vmem:[#allocation10 + $0x6c] sm:$0xf]
        %v1056 = vld [vmem:[#allocation10 + $0x70] sm:$0xf]
        %v1057 = vld [vmem:[#allocation10 + $0x74] sm:$0xf]
        %v1058 = vld [vmem:[#allocation10 + $0x78] sm:$0xf]
        %v1059 = vld [vmem:[#allocation10 + $0x7c] sm:$0xf]
        %v1060 = vld [vmem:[%s5] sm:$0x1]
        %v1062 = vperm.slane %v1060, 0
        %v1096 = vunpack.c.l.b16 %v1028
        %v1097 = vunpack.c.l.b16 %v1029
        %v1098 = vunpack.c.l.b16 %v1030
        %v1099 = vunpack.c.l.b16 %v1031
        %v1100 = vunpack.c.l.b16 %v1032
        %v1101 = vunpack.c.l.b16 %v1033
        %v1102 = vunpack.c.l.b16 %v1034
        %v1103 = vunpack.c.l.b16 %v1035
        %v1104 = vunpack.c.l.b16 %v1036
        %v1105 = vunpack.c.l.b16 %v1037
        %v1106 = vunpack.c.l.b16 %v1038
        %v1107 = vunpack.c.l.b16 %v1039
        %v1108 = vunpack.c.l.b16 %v1040
        %v1109 = vunpack.c.l.b16 %v1041
        %v1110 = vunpack.c.l.b16 %v1042
        %v1111 = vunpack.c.l.b16 %v1043
        %v1112 = vunpack.c.l.b16 %v1044
        %v1113 = vunpack.c.l.b16 %v1045
        %v1114 = vunpack.c.l.b16 %v1046
        %v1115 = vunpack.c.l.b16 %v1047
        %v1116 = vunpack.c.l.b16 %v1048
        %v1117 = vunpack.c.l.b16 %v1049
        %v1118 = vunpack.c.l.b16 %v1050
        %v1119 = vunpack.c.l.b16 %v1051
        %v1120 = vunpack.c.l.b16 %v1052
        %v1121 = vunpack.c.l.b16 %v1053
        %v1122 = vunpack.c.l.b16 %v1054
        %v1123 = vunpack.c.l.b16 %v1055
        %v1124 = vunpack.c.l.b16 %v1056
        %v1125 = vunpack.c.l.b16 %v1057
        %v1126 = vunpack.c.l.b16 %v1058
        %v1127 = vunpack.c.l.b16 %v1059
        %v1128 = vpack.c.b16 %v1097, %v1096
        %v1129 = vpack.c.b16 %v1099, %v1098
        %v1130 = vpack.c.b16 %v1101, %v1100
        %v1131 = vpack.c.b16 %v1103, %v1102
        %v1132 = vpack.c.b16 %v1105, %v1104
        %v1133 = vpack.c.b16 %v1107, %v1106
        %v1134 = vpack.c.b16 %v1109, %v1108
        %v1135 = vpack.c.b16 %v1111, %v1110
        %v1136 = vpack.c.b16 %v1113, %v1112
        %v1137 = vpack.c.b16 %v1115, %v1114
        %v1138 = vpack.c.b16 %v1117, %v1116
        %v1139 = vpack.c.b16 %v1119, %v1118
        %v1140 = vpack.c.b16 %v1121, %v1120
        %v1141 = vpack.c.b16 %v1123, %v1122
        %v1142 = vpack.c.b16 %v1125, %v1124
        %v1143 = vpack.c.b16 %v1127, %v1126
        %1160 = vmatpush.bf16.msra.mxu0 %v1135
        %1161 = vmatpush.bf16.msra.mxu0 %v1134
        %1162 = vmatpush.bf16.msra.mxu0 %v1133
        %1163 = vmatpush.bf16.msra.mxu0 %v1132
        %1164 = vmatpush.bf16.msra.mxu0 %v1131
        %1165 = vmatpush.bf16.msra.mxu0 %v1130
        %1166 = vmatpush.bf16.msra.mxu0 %v1129
        %1167 = vmatpush.bf16.msra.mxu0 %v1128
        %1168 = vmatmul.bf16.gmra.mxu0 %v1012
        %v1169 = vpop.f32.mrf.mxu0
        %v1170 = vadd.f32 %v1062, %v1169
        %v1171 = vpop.f32.mrf.mxu0
        %v1172 = vadd.f32 %v1062, %v1171
        %1173 = vmatmul.bf16.gmra.mxu0 %v1014
        %v1174 = vpop.f32.mrf.mxu0
        %v1175 = vadd.f32 %v1062, %v1174
        %v1176 = vpop.f32.mrf.mxu0
        %v1177 = vadd.f32 %v1062, %v1176
        %1178 = vmatmul.bf16.gmra.mxu0 %v1016
        %v1179 = vpop.f32.mrf.mxu0
        %v1180 = vadd.f32 %v1062, %v1179
        %v1181 = vpop.f32.mrf.mxu0
        %v1182 = vadd.f32 %v1062, %v1181
        %1183 = vmatmul.bf16.gmra.mxu0 %v1018
        %v1184 = vpop.f32.mrf.mxu0
        %v1185 = vadd.f32 %v1062, %v1184
        %v1186 = vpop.f32.mrf.mxu0
        %v1187 = vadd.f32 %v1062, %v1186
        %1188 = vmatmul.bf16.gmra.mxu0 %v1020
        %v1189 = vpop.f32.mrf.mxu0
        %v1190 = vadd.f32 %v1062, %v1189
        %v1191 = vpop.f32.mrf.mxu0
        %v1192 = vadd.f32 %v1062, %v1191
        %1193 = vmatmul.bf16.gmra.mxu0 %v1022
        %v1194 = vpop.f32.mrf.mxu0
        %v1195 = vadd.f32 %v1062, %v1194
        %v1196 = vpop.f32.mrf.mxu0
        %v1197 = vadd.f32 %v1062, %v1196
        %1198 = vmatmul.bf16.gmra.mxu0 %v1024
        %v1199 = vpop.f32.mrf.mxu0
        %v1200 = vadd.f32 %v1062, %v1199
        %v1201 = vpop.f32.mrf.mxu0
        %v1202 = vadd.f32 %v1062, %v1201
        %1203 = vmatmul.bf16.gmra.mxu0 %v1026
        %v1204 = vpop.f32.mrf.mxu0
        %v1205 = vadd.f32 %v1062, %v1204
        %v1206 = vpop.f32.mrf.mxu0
        %v1207 = vadd.f32 %v1062, %v1206
        %1208 = vdwg.mxu0
        %1209 = vmatpush.bf16.msra.mxu0 %v1143
        %1210 = vmatpush.bf16.msra.mxu0 %v1142
        %1211 = vmatpush.bf16.msra.mxu0 %v1141
        %1212 = vmatpush.bf16.msra.mxu0 %v1140
        %1213 = vmatpush.bf16.msra.mxu0 %v1139
        %1214 = vmatpush.bf16.msra.mxu0 %v1138
        %1215 = vmatpush.bf16.msra.mxu0 %v1137
        %1216 = vmatpush.bf16.msra.mxu0 %v1136
        %1217 = vmatmul.bf16.gmra.mxu0 %v1013
        %v1218 = vpop.f32.mrf.mxu0
        %v1219 = vadd.f32 %v1170, %v1218
        %v1220 = vpop.f32.mrf.mxu0
        %v1221 = vadd.f32 %v1172, %v1220
        %1222 = vmatmul.bf16.gmra.mxu0 %v1015
        %v1223 = vpop.f32.mrf.mxu0
        %v1224 = vadd.f32 %v1175, %v1223
        %v1225 = vpop.f32.mrf.mxu0
        %v1226 = vadd.f32 %v1177, %v1225
        %1227 = vmatmul.bf16.gmra.mxu0 %v1017
        %v1228 = vpop.f32.mrf.mxu0
        %v1229 = vadd.f32 %v1180, %v1228
        %v1230 = vpop.f32.mrf.mxu0
        %v1231 = vadd.f32 %v1182, %v1230
        %1232 = vmatmul.bf16.gmra.mxu0 %v1019
        %v1233 = vpop.f32.mrf.mxu0
        %v1234 = vadd.f32 %v1185, %v1233
        %v1235 = vpop.f32.mrf.mxu0
        %v1236 = vadd.f32 %v1187, %v1235
        %1237 = vmatmul.bf16.gmra.mxu0 %v1021
        %v1238 = vpop.f32.mrf.mxu0
        %v1239 = vadd.f32 %v1190, %v1238
        %v1240 = vpop.f32.mrf.mxu0
        %v1241 = vadd.f32 %v1192, %v1240
        %1242 = vmatmul.bf16.gmra.mxu0 %v1023
        %v1243 = vpop.f32.mrf.mxu0
        %v1244 = vadd.f32 %v1195, %v1243
        %v1245 = vpop.f32.mrf.mxu0
        %v1246 = vadd.f32 %v1197, %v1245
        %1247 = vmatmul.bf16.gmra.mxu0 %v1025
        %v1248 = vpop.f32.mrf.mxu0
        %v1249 = vadd.f32 %v1200, %v1248
        %v1250 = vpop.f32.mrf.mxu0
        %v1251 = vadd.f32 %v1202, %v1250
        %1252 = vmatmul.bf16.gmra.mxu0 %v1027
        %v1253 = vpop.f32.mrf.mxu0
        %v1254 = vadd.f32 %v1205, %v1253
        %v1255 = vpop.f32.mrf.mxu0
        %v1256 = vadd.f32 %v1207, %v1255
        %1257 = vdwg.mxu0
        %vm1258 = vcmp.gt.f32.partialorder %v1219, 0.0
        %vm1259 = vcmp.gt.f32.partialorder %v1221, 0.0
        %vm1260 = vcmp.gt.f32.partialorder %v1224, 0.0
        %vm1261 = vcmp.gt.f32.partialorder %v1226, 0.0
        %vm1262 = vcmp.gt.f32.partialorder %v1229, 0.0
        %vm1263 = vcmp.gt.f32.partialorder %v1231, 0.0
        %vm1264 = vcmp.gt.f32.partialorder %v1234, 0.0
        %vm1265 = vcmp.gt.f32.partialorder %v1236, 0.0
        %vm1266 = vcmp.gt.f32.partialorder %v1239, 0.0
        %vm1267 = vcmp.gt.f32.partialorder %v1241, 0.0
        %vm1268 = vcmp.gt.f32.partialorder %v1244, 0.0
        %vm1269 = vcmp.gt.f32.partialorder %v1246, 0.0
        %vm1270 = vcmp.gt.f32.partialorder %v1249, 0.0
        %vm1271 = vcmp.gt.f32.partialorder %v1251, 0.0
        %vm1272 = vcmp.gt.f32.partialorder %v1254, 0.0
        %vm1273 = vcmp.gt.f32.partialorder %v1256, 0.0
        %v1274 = vmul.f32 %v1219, 0.01
        %v1275 = vmul.f32 %v1221, 0.01
        %v1276 = vmul.f32 %v1224, 0.01
        %v1277 = vmul.f32 %v1226, 0.01
        %v1278 = vmul.f32 %v1229, 0.01
        %v1279 = vmul.f32 %v1231, 0.01
        %v1280 = vmul.f32 %v1234, 0.01
        %v1281 = vmul.f32 %v1236, 0.01
        %v1282 = vmul.f32 %v1239, 0.01
        %v1283 = vmul.f32 %v1241, 0.01
        %v1284 = vmul.f32 %v1244, 0.01
        %v1285 = vmul.f32 %v1246, 0.01
        %v1286 = vmul.f32 %v1249, 0.01
        %v1287 = vmul.f32 %v1251, 0.01
        %v1288 = vmul.f32 %v1254, 0.01
        %v1289 = vmul.f32 %v1256, 0.01
        %v1290 = vsel %vm1258, %v1219, %v1274
        %v1291 = vsel %vm1259, %v1221, %v1275
        %v1292 = vsel %vm1260, %v1224, %v1276
        %v1293 = vsel %vm1261, %v1226, %v1277
        %v1294 = vsel %vm1262, %v1229, %v1278
        %v1295 = vsel %vm1263, %v1231, %v1279
        %v1296 = vsel %vm1264, %v1234, %v1280
        %v1297 = vsel %vm1265, %v1236, %v1281
        %v1298 = vsel %vm1266, %v1239, %v1282
        %v1299 = vsel %vm1267, %v1241, %v1283
        %v1300 = vsel %vm1268, %v1244, %v1284
        %v1301 = vsel %vm1269, %v1246, %v1285
        %v1302 = vsel %vm1270, %v1249, %v1286
        %v1303 = vsel %vm1271, %v1251, %v1287
        %v1304 = vsel %vm1272, %v1254, %v1288
        %v1305 = vsel %vm1273, %v1256, %v1289
        %v1306 = vpack.c.bf16 %v1290, %v1290
        %v1307 = vpack.c.bf16 %v1291, %v1291
        %v1308 = vpack.c.bf16 %v1292, %v1292
        %v1309 = vpack.c.bf16 %v1293, %v1293
        %v1310 = vpack.c.bf16 %v1294, %v1294
        %v1311 = vpack.c.bf16 %v1295, %v1295
        %v1312 = vpack.c.bf16 %v1296, %v1296
        %v1313 = vpack.c.bf16 %v1297, %v1297
        %v1314 = vpack.c.bf16 %v1298, %v1298
        %v1315 = vpack.c.bf16 %v1299, %v1299
        %v1316 = vpack.c.bf16 %v1300, %v1300
        %v1317 = vpack.c.bf16 %v1301, %v1301
        %v1318 = vpack.c.bf16 %v1302, %v1302
        %v1319 = vpack.c.bf16 %v1303, %v1303
        %v1320 = vpack.c.bf16 %v1304, %v1304
        %v1321 = vpack.c.bf16 %v1305, %v1305
        %v1322 = vpack.c.bf16 %v964, %v964
        %v1323 = vpack.c.bf16 %v965, %v965
        %v1324 = vpack.c.bf16 %v966, %v966
        %v1325 = vpack.c.bf16 %v967, %v967
        %v1326 = vpack.c.bf16 %v968, %v968
        %v1327 = vpack.c.bf16 %v969, %v969
        %v1328 = vpack.c.bf16 %v970, %v970
        %v1329 = vpack.c.bf16 %v971, %v971
        %v1330 = vpack.c.bf16 %v972, %v972
        %v1331 = vpack.c.bf16 %v973, %v973
        %v1332 = vpack.c.bf16 %v974, %v974
        %v1333 = vpack.c.bf16 %v975, %v975
        %v1334 = vpack.c.bf16 %v976, %v976
        %v1335 = vpack.c.bf16 %v977, %v977
        %v1336 = vpack.c.bf16 %v978, %v978
        %v1337 = vpack.c.bf16 %v979, %v979
        %v1354 = vunpack.c.l.b16 %v1306
        %v1355 = vunpack.c.l.b16 %v1307
        %v1356 = vunpack.c.l.b16 %v1308
        %v1357 = vunpack.c.l.b16 %v1309
        %v1358 = vunpack.c.l.b16 %v1310
        %v1359 = vunpack.c.l.b16 %v1311
        %v1360 = vunpack.c.l.b16 %v1312
        %v1361 = vunpack.c.l.b16 %v1313
        %v1362 = vunpack.c.l.b16 %v1314
        %v1363 = vunpack.c.l.b16 %v1315
        %v1364 = vunpack.c.l.b16 %v1316
        %v1365 = vunpack.c.l.b16 %v1317
        %v1366 = vunpack.c.l.b16 %v1318
        %v1367 = vunpack.c.l.b16 %v1319
        %v1368 = vunpack.c.l.b16 %v1320
        %v1369 = vunpack.c.l.b16 %v1321
        %v1370 = vpack.c.b16 %v1355, %v1354
        %v1371 = vpack.c.b16 %v1357, %v1356
        %v1372 = vpack.c.b16 %v1359, %v1358
        %v1373 = vpack.c.b16 %v1361, %v1360
        %v1374 = vpack.c.b16 %v1363, %v1362
        %v1375 = vpack.c.b16 %v1365, %v1364
        %v1376 = vpack.c.b16 %v1367, %v1366
        %v1377 = vpack.c.b16 %v1369, %v1368
        %v1402 = vunpack.c.l.b16 %v1322
        %v1403 = vunpack.c.l.b16 %v1323
        %v1404 = vunpack.c.l.b16 %v1324
        %v1405 = vunpack.c.l.b16 %v1325
        %v1406 = vunpack.c.l.b16 %v1326
        %v1407 = vunpack.c.l.b16 %v1327
        %v1408 = vunpack.c.l.b16 %v1328
        %v1409 = vunpack.c.l.b16 %v1329
        %v1410 = vunpack.c.l.b16 %v1330
        %v1411 = vunpack.c.l.b16 %v1331
        %v1412 = vunpack.c.l.b16 %v1332
        %v1413 = vunpack.c.l.b16 %v1333
        %v1414 = vunpack.c.l.b16 %v1334
        %v1415 = vunpack.c.l.b16 %v1335
        %v1416 = vunpack.c.l.b16 %v1336
        %v1417 = vunpack.c.l.b16 %v1337
        %v1418 = vpack.c.b16 %v1403, %v1402
        %v1419 = vpack.c.b16 %v1405, %v1404
        %v1420 = vpack.c.b16 %v1407, %v1406
        %v1421 = vpack.c.b16 %v1409, %v1408
        %v1422 = vpack.c.b16 %v1411, %v1410
        %v1423 = vpack.c.b16 %v1413, %v1412
        %v1424 = vpack.c.b16 %v1415, %v1414
        %v1425 = vpack.c.b16 %v1417, %v1416
        %v1434 = vld [vmem:[#allocation11] sm:$0xf]
        %v1435 = vld [vmem:[#allocation11 + $0x4] sm:$0xf]
        %v1436 = vld [vmem:[#allocation11 + $0x8] sm:$0xf]
        %v1437 = vld [vmem:[#allocation11 + $0xc] sm:$0xf]
        %v1438 = vld [vmem:[#allocation11 + $0x10] sm:$0xf]
        %v1439 = vld [vmem:[#allocation11 + $0x14] sm:$0xf]
        %v1440 = vld [vmem:[#allocation11 + $0x18] sm:$0xf]
        %v1441 = vld [vmem:[#allocation11 + $0x1c] sm:$0xf]
        %v1442 = vld [vmem:[#allocation11 + $0x20] sm:$0xf]
        %v1443 = vld [vmem:[#allocation11 + $0x24] sm:$0xf]
        %v1444 = vld [vmem:[#allocation11 + $0x28] sm:$0xf]
        %v1445 = vld [vmem:[#allocation11 + $0x2c] sm:$0xf]
        %v1446 = vld [vmem:[#allocation11 + $0x30] sm:$0xf]
        %v1447 = vld [vmem:[#allocation11 + $0x34] sm:$0xf]
        %v1448 = vld [vmem:[#allocation11 + $0x38] sm:$0xf]
        %v1449 = vld [vmem:[#allocation11 + $0x3c] sm:$0xf]
        %v1450 = vld [vmem:[#allocation11 + $0x40] sm:$0xf]
        %v1451 = vld [vmem:[#allocation11 + $0x44] sm:$0xf]
        %v1452 = vld [vmem:[#allocation11 + $0x48] sm:$0xf]
        %v1453 = vld [vmem:[#allocation11 + $0x4c] sm:$0xf]
        %v1454 = vld [vmem:[#allocation11 + $0x50] sm:$0xf]
        %v1455 = vld [vmem:[#allocation11 + $0x54] sm:$0xf]
        %v1456 = vld [vmem:[#allocation11 + $0x58] sm:$0xf]
        %v1457 = vld [vmem:[#allocation11 + $0x5c] sm:$0xf]
        %v1458 = vld [vmem:[#allocation11 + $0x60] sm:$0xf]
        %v1459 = vld [vmem:[#allocation11 + $0x64] sm:$0xf]
        %v1460 = vld [vmem:[#allocation11 + $0x68] sm:$0xf]
        %v1461 = vld [vmem:[#allocation11 + $0x6c] sm:$0xf]
        %v1462 = vld [vmem:[#allocation11 + $0x70] sm:$0xf]
        %v1463 = vld [vmem:[#allocation11 + $0x74] sm:$0xf]
        %v1464 = vld [vmem:[#allocation11 + $0x78] sm:$0xf]
        %v1465 = vld [vmem:[#allocation11 + $0x7c] sm:$0xf]
        %v1466 = vld [vmem:[%s7] sm:$0x1]
        %v1468 = vperm.slane %v1466, 0
        %v1502 = vunpack.c.l.b16 %v1434
        %v1503 = vunpack.c.l.b16 %v1435
        %v1504 = vunpack.c.l.b16 %v1436
        %v1505 = vunpack.c.l.b16 %v1437
        %v1506 = vunpack.c.l.b16 %v1438
        %v1507 = vunpack.c.l.b16 %v1439
        %v1508 = vunpack.c.l.b16 %v1440
        %v1509 = vunpack.c.l.b16 %v1441
        %v1510 = vunpack.c.l.b16 %v1442
        %v1511 = vunpack.c.l.b16 %v1443
        %v1512 = vunpack.c.l.b16 %v1444
        %v1513 = vunpack.c.l.b16 %v1445
        %v1514 = vunpack.c.l.b16 %v1446
        %v1515 = vunpack.c.l.b16 %v1447
        %v1516 = vunpack.c.l.b16 %v1448
        %v1517 = vunpack.c.l.b16 %v1449
        %v1518 = vunpack.c.l.b16 %v1450
        %v1519 = vunpack.c.l.b16 %v1451
        %v1520 = vunpack.c.l.b16 %v1452
        %v1521 = vunpack.c.l.b16 %v1453
        %v1522 = vunpack.c.l.b16 %v1454
        %v1523 = vunpack.c.l.b16 %v1455
        %v1524 = vunpack.c.l.b16 %v1456
        %v1525 = vunpack.c.l.b16 %v1457
        %v1526 = vunpack.c.l.b16 %v1458
        %v1527 = vunpack.c.l.b16 %v1459
        %v1528 = vunpack.c.l.b16 %v1460
        %v1529 = vunpack.c.l.b16 %v1461
        %v1530 = vunpack.c.l.b16 %v1462
        %v1531 = vunpack.c.l.b16 %v1463
        %v1532 = vunpack.c.l.b16 %v1464
        %v1533 = vunpack.c.l.b16 %v1465
        %v1534 = vpack.c.b16 %v1503, %v1502
        %v1535 = vpack.c.b16 %v1505, %v1504
        %v1536 = vpack.c.b16 %v1507, %v1506
        %v1537 = vpack.c.b16 %v1509, %v1508
        %v1538 = vpack.c.b16 %v1511, %v1510
        %v1539 = vpack.c.b16 %v1513, %v1512
        %v1540 = vpack.c.b16 %v1515, %v1514
        %v1541 = vpack.c.b16 %v1517, %v1516
        %v1542 = vpack.c.b16 %v1519, %v1518
        %v1543 = vpack.c.b16 %v1521, %v1520
        %v1544 = vpack.c.b16 %v1523, %v1522
        %v1545 = vpack.c.b16 %v1525, %v1524
        %v1546 = vpack.c.b16 %v1527, %v1526
        %v1547 = vpack.c.b16 %v1529, %v1528
        %v1548 = vpack.c.b16 %v1531, %v1530
        %v1549 = vpack.c.b16 %v1533, %v1532
        %1566 = vmatpush.bf16.msra.mxu0 %v1541
        %1567 = vmatpush.bf16.msra.mxu0 %v1540
        %1568 = vmatpush.bf16.msra.mxu0 %v1539
        %1569 = vmatpush.bf16.msra.mxu0 %v1538
        %1570 = vmatpush.bf16.msra.mxu0 %v1537
        %1571 = vmatpush.bf16.msra.mxu0 %v1536
        %1572 = vmatpush.bf16.msra.mxu0 %v1535
        %1573 = vmatpush.bf16.msra.mxu0 %v1534
        %1574 = vmatmul.bf16.gmra.mxu0 %v1370
        %v1575 = vpop.f32.mrf.mxu0
        %v1576 = vadd.f32 %v1468, %v1575
        %v1577 = vpop.f32.mrf.mxu0
        %v1578 = vadd.f32 %v1468, %v1577
        %1579 = vmatmul.bf16.gmra.mxu0 %v1371
        %v1580 = vpop.f32.mrf.mxu0
        %v1581 = vadd.f32 %v1468, %v1580
        %v1582 = vpop.f32.mrf.mxu0
        %v1583 = vadd.f32 %v1468, %v1582
        %1584 = vmatmul.bf16.gmra.mxu0 %v1372
        %v1585 = vpop.f32.mrf.mxu0
        %v1586 = vadd.f32 %v1468, %v1585
        %v1587 = vpop.f32.mrf.mxu0
        %v1588 = vadd.f32 %v1468, %v1587
        %1589 = vmatmul.bf16.gmra.mxu0 %v1373
        %v1590 = vpop.f32.mrf.mxu0
        %v1591 = vadd.f32 %v1468, %v1590
        %v1592 = vpop.f32.mrf.mxu0
        %v1593 = vadd.f32 %v1468, %v1592
        %1594 = vmatmul.bf16.gmra.mxu0 %v1374
        %v1595 = vpop.f32.mrf.mxu0
        %v1596 = vadd.f32 %v1468, %v1595
        %v1597 = vpop.f32.mrf.mxu0
        %v1598 = vadd.f32 %v1468, %v1597
        %1599 = vmatmul.bf16.gmra.mxu0 %v1375
        %v1600 = vpop.f32.mrf.mxu0
        %v1601 = vadd.f32 %v1468, %v1600
        %v1602 = vpop.f32.mrf.mxu0
        %v1603 = vadd.f32 %v1468, %v1602
        %1604 = vmatmul.bf16.gmra.mxu0 %v1376
        %v1605 = vpop.f32.mrf.mxu0
        %v1606 = vadd.f32 %v1468, %v1605
        %v1607 = vpop.f32.mrf.mxu0
        %v1608 = vadd.f32 %v1468, %v1607
        %1609 = vmatmul.bf16.gmra.mxu0 %v1377
        %v1610 = vpop.f32.mrf.mxu0
        %v1611 = vadd.f32 %v1468, %v1610
        %v1612 = vpop.f32.mrf.mxu0
        %v1613 = vadd.f32 %v1468, %v1612
        %1614 = vdwg.mxu0
        %1615 = vmatpush.bf16.msra.mxu0 %v1549
        %1616 = vmatpush.bf16.msra.mxu0 %v1548
        %1617 = vmatpush.bf16.msra.mxu0 %v1547
        %1618 = vmatpush.bf16.msra.mxu0 %v1546
        %1619 = vmatpush.bf16.msra.mxu0 %v1545
        %1620 = vmatpush.bf16.msra.mxu0 %v1544
        %1621 = vmatpush.bf16.msra.mxu0 %v1543
        %1622 = vmatpush.bf16.msra.mxu0 %v1542
        %1623 = vmatmul.bf16.gmra.mxu0 %v1418
        %v1624 = vpop.f32.mrf.mxu0
        %v1625 = vadd.f32 %v1576, %v1624
        %v1626 = vpop.f32.mrf.mxu0
        %v1627 = vadd.f32 %v1578, %v1626
        %1628 = vmatmul.bf16.gmra.mxu0 %v1419
        %v1629 = vpop.f32.mrf.mxu0
        %v1630 = vadd.f32 %v1581, %v1629
        %v1631 = vpop.f32.mrf.mxu0
        %v1632 = vadd.f32 %v1583, %v1631
        %1633 = vmatmul.bf16.gmra.mxu0 %v1420
        %v1634 = vpop.f32.mrf.mxu0
        %v1635 = vadd.f32 %v1586, %v1634
        %v1636 = vpop.f32.mrf.mxu0
        %v1637 = vadd.f32 %v1588, %v1636
        %1638 = vmatmul.bf16.gmra.mxu0 %v1421
        %v1639 = vpop.f32.mrf.mxu0
        %v1640 = vadd.f32 %v1591, %v1639
        %v1641 = vpop.f32.mrf.mxu0
        %v1642 = vadd.f32 %v1593, %v1641
        %1643 = vmatmul.bf16.gmra.mxu0 %v1422
        %v1644 = vpop.f32.mrf.mxu0
        %v1645 = vadd.f32 %v1596, %v1644
        %v1646 = vpop.f32.mrf.mxu0
        %v1647 = vadd.f32 %v1598, %v1646
        %1648 = vmatmul.bf16.gmra.mxu0 %v1423
        %v1649 = vpop.f32.mrf.mxu0
        %v1650 = vadd.f32 %v1601, %v1649
        %v1651 = vpop.f32.mrf.mxu0
        %v1652 = vadd.f32 %v1603, %v1651
        %1653 = vmatmul.bf16.gmra.mxu0 %v1424
        %v1654 = vpop.f32.mrf.mxu0
        %v1655 = vadd.f32 %v1606, %v1654
        %v1656 = vpop.f32.mrf.mxu0
        %v1657 = vadd.f32 %v1608, %v1656
        %1658 = vmatmul.bf16.gmra.mxu0 %v1425
        %v1659 = vpop.f32.mrf.mxu0
        %v1660 = vadd.f32 %v1611, %v1659
        %v1661 = vpop.f32.mrf.mxu0
        %v1662 = vadd.f32 %v1613, %v1661
        %1663 = vdwg.mxu0
        %vm1664 = vcmp.gt.f32.partialorder %v1625, 0.0
        %vm1665 = vcmp.gt.f32.partialorder %v1627, 0.0
        %vm1666 = vcmp.gt.f32.partialorder %v1630, 0.0
        %vm1667 = vcmp.gt.f32.partialorder %v1632, 0.0
        %vm1668 = vcmp.gt.f32.partialorder %v1635, 0.0
        %vm1669 = vcmp.gt.f32.partialorder %v1637, 0.0
        %vm1670 = vcmp.gt.f32.partialorder %v1640, 0.0
        %vm1671 = vcmp.gt.f32.partialorder %v1642, 0.0
        %vm1672 = vcmp.gt.f32.partialorder %v1645, 0.0
        %vm1673 = vcmp.gt.f32.partialorder %v1647, 0.0
        %vm1674 = vcmp.gt.f32.partialorder %v1650, 0.0
        %vm1675 = vcmp.gt.f32.partialorder %v1652, 0.0
        %vm1676 = vcmp.gt.f32.partialorder %v1655, 0.0
        %vm1677 = vcmp.gt.f32.partialorder %v1657, 0.0
        %vm1678 = vcmp.gt.f32.partialorder %v1660, 0.0
        %vm1679 = vcmp.gt.f32.partialorder %v1662, 0.0
        %v1680 = vmul.f32 %v1625, 0.01
        %v1681 = vmul.f32 %v1627, 0.01
        %v1682 = vmul.f32 %v1630, 0.01
        %v1683 = vmul.f32 %v1632, 0.01
        %v1684 = vmul.f32 %v1635, 0.01
        %v1685 = vmul.f32 %v1637, 0.01
        %v1686 = vmul.f32 %v1640, 0.01
        %v1687 = vmul.f32 %v1642, 0.01
        %v1688 = vmul.f32 %v1645, 0.01
        %v1689 = vmul.f32 %v1647, 0.01
        %v1690 = vmul.f32 %v1650, 0.01
        %v1691 = vmul.f32 %v1652, 0.01
        %v1692 = vmul.f32 %v1655, 0.01
        %v1693 = vmul.f32 %v1657, 0.01
        %v1694 = vmul.f32 %v1660, 0.01
        %v1695 = vmul.f32 %v1662, 0.01
        %v1696 = vsel %vm1664, %v1625, %v1680
        %v1697 = vsel %vm1665, %v1627, %v1681
        %v1698 = vsel %vm1666, %v1630, %v1682
        %v1699 = vsel %vm1667, %v1632, %v1683
        %v1700 = vsel %vm1668, %v1635, %v1684
        %v1701 = vsel %vm1669, %v1637, %v1685
        %v1702 = vsel %vm1670, %v1640, %v1686
        %v1703 = vsel %vm1671, %v1642, %v1687
        %v1704 = vsel %vm1672, %v1645, %v1688
        %v1705 = vsel %vm1673, %v1647, %v1689
        %v1706 = vsel %vm1674, %v1650, %v1690
        %v1707 = vsel %vm1675, %v1652, %v1691
        %v1708 = vsel %vm1676, %v1655, %v1692
        %v1709 = vsel %vm1677, %v1657, %v1693
        %v1710 = vsel %vm1678, %v1660, %v1694
        %v1711 = vsel %vm1679, %v1662, %v1695
        %v1712 = vpack.c.bf16 %v1696, %v1696
        %v1713 = vpack.c.bf16 %v1697, %v1697
        %v1714 = vpack.c.bf16 %v1698, %v1698
        %v1715 = vpack.c.bf16 %v1699, %v1699
        %v1716 = vpack.c.bf16 %v1700, %v1700
        %v1717 = vpack.c.bf16 %v1701, %v1701
        %v1718 = vpack.c.bf16 %v1702, %v1702
        %v1719 = vpack.c.bf16 %v1703, %v1703
        %v1720 = vpack.c.bf16 %v1704, %v1704
        %v1721 = vpack.c.bf16 %v1705, %v1705
        %v1722 = vpack.c.bf16 %v1706, %v1706
        %v1723 = vpack.c.bf16 %v1707, %v1707
        %v1724 = vpack.c.bf16 %v1708, %v1708
        %v1725 = vpack.c.bf16 %v1709, %v1709
        %v1726 = vpack.c.bf16 %v1710, %v1710
        %v1727 = vpack.c.bf16 %v1711, %v1711
        %v1728 = vpack.c.bf16 %v948, %v948
        %v1729 = vpack.c.bf16 %v949, %v949
        %v1730 = vpack.c.bf16 %v950, %v950
        %v1731 = vpack.c.bf16 %v951, %v951
        %v1732 = vpack.c.bf16 %v952, %v952
        %v1733 = vpack.c.bf16 %v953, %v953
        %v1734 = vpack.c.bf16 %v954, %v954
        %v1735 = vpack.c.bf16 %v955, %v955
        %v1736 = vpack.c.bf16 %v956, %v956
        %v1737 = vpack.c.bf16 %v957, %v957
        %v1738 = vpack.c.bf16 %v958, %v958
        %v1739 = vpack.c.bf16 %v959, %v959
        %v1740 = vpack.c.bf16 %v960, %v960
        %v1741 = vpack.c.bf16 %v961, %v961
        %v1742 = vpack.c.bf16 %v962, %v962
        %v1743 = vpack.c.bf16 %v963, %v963
        %v1760 = vunpack.c.l.b16 %v1712
        %v1761 = vunpack.c.l.b16 %v1713
        %v1762 = vunpack.c.l.b16 %v1714
        %v1763 = vunpack.c.l.b16 %v1715
        %v1764 = vunpack.c.l.b16 %v1716
        %v1765 = vunpack.c.l.b16 %v1717
        %v1766 = vunpack.c.l.b16 %v1718
        %v1767 = vunpack.c.l.b16 %v1719
        %v1768 = vunpack.c.l.b16 %v1720
        %v1769 = vunpack.c.l.b16 %v1721
        %v1770 = vunpack.c.l.b16 %v1722
        %v1771 = vunpack.c.l.b16 %v1723
        %v1772 = vunpack.c.l.b16 %v1724
        %v1773 = vunpack.c.l.b16 %v1725
        %v1774 = vunpack.c.l.b16 %v1726
        %v1775 = vunpack.c.l.b16 %v1727
        %v1776 = vpack.c.b16 %v1761, %v1760
        %v1777 = vpack.c.b16 %v1763, %v1762
        %v1778 = vpack.c.b16 %v1765, %v1764
        %v1779 = vpack.c.b16 %v1767, %v1766
        %v1780 = vpack.c.b16 %v1769, %v1768
        %v1781 = vpack.c.b16 %v1771, %v1770
        %v1782 = vpack.c.b16 %v1773, %v1772
        %v1783 = vpack.c.b16 %v1775, %v1774
        %v1808 = vunpack.c.l.b16 %v1728
        %v1809 = vunpack.c.l.b16 %v1729
        %v1810 = vunpack.c.l.b16 %v1730
        %v1811 = vunpack.c.l.b16 %v1731
        %v1812 = vunpack.c.l.b16 %v1732
        %v1813 = vunpack.c.l.b16 %v1733
        %v1814 = vunpack.c.l.b16 %v1734
        %v1815 = vunpack.c.l.b16 %v1735
        %v1816 = vunpack.c.l.b16 %v1736
        %v1817 = vunpack.c.l.b16 %v1737
        %v1818 = vunpack.c.l.b16 %v1738
        %v1819 = vunpack.c.l.b16 %v1739
        %v1820 = vunpack.c.l.b16 %v1740
        %v1821 = vunpack.c.l.b16 %v1741
        %v1822 = vunpack.c.l.b16 %v1742
        %v1823 = vunpack.c.l.b16 %v1743
        %v1824 = vpack.c.b16 %v1809, %v1808
        %v1825 = vpack.c.b16 %v1811, %v1810
        %v1826 = vpack.c.b16 %v1813, %v1812
        %v1827 = vpack.c.b16 %v1815, %v1814
        %v1828 = vpack.c.b16 %v1817, %v1816
        %v1829 = vpack.c.b16 %v1819, %v1818
        %v1830 = vpack.c.b16 %v1821, %v1820
        %v1831 = vpack.c.b16 %v1823, %v1822
        %v1840 = vld [vmem:[#allocation13] sm:$0xf]
        %v1841 = vld [vmem:[#allocation13 + $0x4] sm:$0xf]
        %v1842 = vld [vmem:[#allocation13 + $0x8] sm:$0xf]
        %v1843 = vld [vmem:[#allocation13 + $0xc] sm:$0xf]
        %v1844 = vld [vmem:[#allocation13 + $0x10] sm:$0xf]
        %v1845 = vld [vmem:[#allocation13 + $0x14] sm:$0xf]
        %v1846 = vld [vmem:[#allocation13 + $0x18] sm:$0xf]
        %v1847 = vld [vmem:[#allocation13 + $0x1c] sm:$0xf]
        %v1848 = vld [vmem:[#allocation13 + $0x20] sm:$0xf]
        %v1849 = vld [vmem:[#allocation13 + $0x24] sm:$0xf]
        %v1850 = vld [vmem:[#allocation13 + $0x28] sm:$0xf]
        %v1851 = vld [vmem:[#allocation13 + $0x2c] sm:$0xf]
        %v1852 = vld [vmem:[#allocation13 + $0x30] sm:$0xf]
        %v1853 = vld [vmem:[#allocation13 + $0x34] sm:$0xf]
        %v1854 = vld [vmem:[#allocation13 + $0x38] sm:$0xf]
        %v1855 = vld [vmem:[#allocation13 + $0x3c] sm:$0xf]
        %v1856 = vld [vmem:[#allocation13 + $0x40] sm:$0xf]
        %v1857 = vld [vmem:[#allocation13 + $0x44] sm:$0xf]
        %v1858 = vld [vmem:[#allocation13 + $0x48] sm:$0xf]
        %v1859 = vld [vmem:[#allocation13 + $0x4c] sm:$0xf]
        %v1860 = vld [vmem:[#allocation13 + $0x50] sm:$0xf]
        %v1861 = vld [vmem:[#allocation13 + $0x54] sm:$0xf]
        %v1862 = vld [vmem:[#allocation13 + $0x58] sm:$0xf]
        %v1863 = vld [vmem:[#allocation13 + $0x5c] sm:$0xf]
        %v1864 = vld [vmem:[#allocation13 + $0x60] sm:$0xf]
        %v1865 = vld [vmem:[#allocation13 + $0x64] sm:$0xf]
        %v1866 = vld [vmem:[#allocation13 + $0x68] sm:$0xf]
        %v1867 = vld [vmem:[#allocation13 + $0x6c] sm:$0xf]
        %v1868 = vld [vmem:[#allocation13 + $0x70] sm:$0xf]
        %v1869 = vld [vmem:[#allocation13 + $0x74] sm:$0xf]
        %v1870 = vld [vmem:[#allocation13 + $0x78] sm:$0xf]
        %v1871 = vld [vmem:[#allocation13 + $0x7c] sm:$0xf]
        %v1872 = vld [vmem:[%s9] sm:$0x1]
        %v1874 = vperm.slane %v1872, 0
        %v1908 = vunpack.c.l.b16 %v1840
        %v1909 = vunpack.c.l.b16 %v1841
        %v1910 = vunpack.c.l.b16 %v1842
        %v1911 = vunpack.c.l.b16 %v1843
        %v1912 = vunpack.c.l.b16 %v1844
        %v1913 = vunpack.c.l.b16 %v1845
        %v1914 = vunpack.c.l.b16 %v1846
        %v1915 = vunpack.c.l.b16 %v1847
        %v1916 = vunpack.c.l.b16 %v1848
        %v1917 = vunpack.c.l.b16 %v1849
        %v1918 = vunpack.c.l.b16 %v1850
        %v1919 = vunpack.c.l.b16 %v1851
        %v1920 = vunpack.c.l.b16 %v1852
        %v1921 = vunpack.c.l.b16 %v1853
        %v1922 = vunpack.c.l.b16 %v1854
        %v1923 = vunpack.c.l.b16 %v1855
        %v1924 = vunpack.c.l.b16 %v1856
        %v1925 = vunpack.c.l.b16 %v1857
        %v1926 = vunpack.c.l.b16 %v1858
        %v1927 = vunpack.c.l.b16 %v1859
        %v1928 = vunpack.c.l.b16 %v1860
        %v1929 = vunpack.c.l.b16 %v1861
        %v1930 = vunpack.c.l.b16 %v1862
        %v1931 = vunpack.c.l.b16 %v1863
        %v1932 = vunpack.c.l.b16 %v1864
        %v1933 = vunpack.c.l.b16 %v1865
        %v1934 = vunpack.c.l.b16 %v1866
        %v1935 = vunpack.c.l.b16 %v1867
        %v1936 = vunpack.c.l.b16 %v1868
        %v1937 = vunpack.c.l.b16 %v1869
        %v1938 = vunpack.c.l.b16 %v1870
        %v1939 = vunpack.c.l.b16 %v1871
        %v1940 = vpack.c.b16 %v1909, %v1908
        %v1941 = vpack.c.b16 %v1911, %v1910
        %v1942 = vpack.c.b16 %v1913, %v1912
        %v1943 = vpack.c.b16 %v1915, %v1914
        %v1944 = vpack.c.b16 %v1917, %v1916
        %v1945 = vpack.c.b16 %v1919, %v1918
        %v1946 = vpack.c.b16 %v1921, %v1920
        %v1947 = vpack.c.b16 %v1923, %v1922
        %v1948 = vpack.c.b16 %v1925, %v1924
        %v1949 = vpack.c.b16 %v1927, %v1926
        %v1950 = vpack.c.b16 %v1929, %v1928
        %v1951 = vpack.c.b16 %v1931, %v1930
        %v1952 = vpack.c.b16 %v1933, %v1932
        %v1953 = vpack.c.b16 %v1935, %v1934
        %v1954 = vpack.c.b16 %v1937, %v1936
        %v1955 = vpack.c.b16 %v1939, %v1938
        %1972 = vmatpush.bf16.msra.mxu0 %v1947
        %1973 = vmatpush.bf16.msra.mxu0 %v1946
        %1974 = vmatpush.bf16.msra.mxu0 %v1945
        %1975 = vmatpush.bf16.msra.mxu0 %v1944
        %1976 = vmatpush.bf16.msra.mxu0 %v1943
        %1977 = vmatpush.bf16.msra.mxu0 %v1942
        %1978 = vmatpush.bf16.msra.mxu0 %v1941
        %1979 = vmatpush.bf16.msra.mxu0 %v1940
        %1980 = vmatmul.bf16.gmra.mxu0 %v1776
        %v1981 = vpop.f32.mrf.mxu0
        %v1982 = vadd.f32 %v1874, %v1981
        %v1983 = vpop.f32.mrf.mxu0
        %v1984 = vadd.f32 %v1874, %v1983
        %1985 = vmatmul.bf16.gmra.mxu0 %v1777
        %v1986 = vpop.f32.mrf.mxu0
        %v1987 = vadd.f32 %v1874, %v1986
        %v1988 = vpop.f32.mrf.mxu0
        %v1989 = vadd.f32 %v1874, %v1988
        %1990 = vmatmul.bf16.gmra.mxu0 %v1778
        %v1991 = vpop.f32.mrf.mxu0
        %v1992 = vadd.f32 %v1874, %v1991
        %v1993 = vpop.f32.mrf.mxu0
        %v1994 = vadd.f32 %v1874, %v1993
        %1995 = vmatmul.bf16.gmra.mxu0 %v1779
        %v1996 = vpop.f32.mrf.mxu0
        %v1997 = vadd.f32 %v1874, %v1996
        %v1998 = vpop.f32.mrf.mxu0
        %v1999 = vadd.f32 %v1874, %v1998
        %2000 = vmatmul.bf16.gmra.mxu0 %v1780
        %v2001 = vpop.f32.mrf.mxu0
        %v2002 = vadd.f32 %v1874, %v2001
        %v2003 = vpop.f32.mrf.mxu0
        %v2004 = vadd.f32 %v1874, %v2003
        %2005 = vmatmul.bf16.gmra.mxu0 %v1781
        %v2006 = vpop.f32.mrf.mxu0
        %v2007 = vadd.f32 %v1874, %v2006
        %v2008 = vpop.f32.mrf.mxu0
        %v2009 = vadd.f32 %v1874, %v2008
        %2010 = vmatmul.bf16.gmra.mxu0 %v1782
        %v2011 = vpop.f32.mrf.mxu0
        %v2012 = vadd.f32 %v1874, %v2011
        %v2013 = vpop.f32.mrf.mxu0
        %v2014 = vadd.f32 %v1874, %v2013
        %2015 = vmatmul.bf16.gmra.mxu0 %v1783
        %v2016 = vpop.f32.mrf.mxu0
        %v2017 = vadd.f32 %v1874, %v2016
        %v2018 = vpop.f32.mrf.mxu0
        %v2019 = vadd.f32 %v1874, %v2018
        %2020 = vdwg.mxu0
        %2021 = vmatpush.bf16.msra.mxu0 %v1955
        %2022 = vmatpush.bf16.msra.mxu0 %v1954
        %2023 = vmatpush.bf16.msra.mxu0 %v1953
        %2024 = vmatpush.bf16.msra.mxu0 %v1952
        %2025 = vmatpush.bf16.msra.mxu0 %v1951
        %2026 = vmatpush.bf16.msra.mxu0 %v1950
        %2027 = vmatpush.bf16.msra.mxu0 %v1949
        %2028 = vmatpush.bf16.msra.mxu0 %v1948
        %2029 = vmatmul.bf16.gmra.mxu0 %v1824
        %v2030 = vpop.f32.mrf.mxu0
        %v2031 = vadd.f32 %v1982, %v2030
        %v2032 = vpop.f32.mrf.mxu0
        %v2033 = vadd.f32 %v1984, %v2032
        %2034 = vmatmul.bf16.gmra.mxu0 %v1825
        %v2035 = vpop.f32.mrf.mxu0
        %v2036 = vadd.f32 %v1987, %v2035
        %v2037 = vpop.f32.mrf.mxu0
        %v2038 = vadd.f32 %v1989, %v2037
        %2039 = vmatmul.bf16.gmra.mxu0 %v1826
        %v2040 = vpop.f32.mrf.mxu0
        %v2041 = vadd.f32 %v1992, %v2040
        %v2042 = vpop.f32.mrf.mxu0
        %v2043 = vadd.f32 %v1994, %v2042
        %2044 = vmatmul.bf16.gmra.mxu0 %v1827
        %v2045 = vpop.f32.mrf.mxu0
        %v2046 = vadd.f32 %v1997, %v2045
        %v2047 = vpop.f32.mrf.mxu0
        %v2048 = vadd.f32 %v1999, %v2047
        %2049 = vmatmul.bf16.gmra.mxu0 %v1828
        %v2050 = vpop.f32.mrf.mxu0
        %v2051 = vadd.f32 %v2002, %v2050
        %v2052 = vpop.f32.mrf.mxu0
        %v2053 = vadd.f32 %v2004, %v2052
        %2054 = vmatmul.bf16.gmra.mxu0 %v1829
        %v2055 = vpop.f32.mrf.mxu0
        %v2056 = vadd.f32 %v2007, %v2055
        %v2057 = vpop.f32.mrf.mxu0
        %v2058 = vadd.f32 %v2009, %v2057
        %2059 = vmatmul.bf16.gmra.mxu0 %v1830
        %v2060 = vpop.f32.mrf.mxu0
        %v2061 = vadd.f32 %v2012, %v2060
        %v2062 = vpop.f32.mrf.mxu0
        %v2063 = vadd.f32 %v2014, %v2062
        %2064 = vmatmul.bf16.gmra.mxu0 %v1831
        %v2065 = vpop.f32.mrf.mxu0
        %v2066 = vadd.f32 %v2017, %v2065
        %v2067 = vpop.f32.mrf.mxu0
        %v2068 = vadd.f32 %v2019, %v2067
        %2069 = vdwg.mxu0
        %vm2070 = vcmp.gt.f32.partialorder %v2031, 0.0
        %vm2071 = vcmp.gt.f32.partialorder %v2033, 0.0
        %vm2072 = vcmp.gt.f32.partialorder %v2036, 0.0
        %vm2073 = vcmp.gt.f32.partialorder %v2038, 0.0
        %vm2074 = vcmp.gt.f32.partialorder %v2041, 0.0
        %vm2075 = vcmp.gt.f32.partialorder %v2043, 0.0
        %vm2076 = vcmp.gt.f32.partialorder %v2046, 0.0
        %vm2077 = vcmp.gt.f32.partialorder %v2048, 0.0
        %vm2078 = vcmp.gt.f32.partialorder %v2051, 0.0
        %vm2079 = vcmp.gt.f32.partialorder %v2053, 0.0
        %vm2080 = vcmp.gt.f32.partialorder %v2056, 0.0
        %vm2081 = vcmp.gt.f32.partialorder %v2058, 0.0
        %vm2082 = vcmp.gt.f32.partialorder %v2061, 0.0
        %vm2083 = vcmp.gt.f32.partialorder %v2063, 0.0
        %vm2084 = vcmp.gt.f32.partialorder %v2066, 0.0
        %vm2085 = vcmp.gt.f32.partialorder %v2068, 0.0
        %v2086 = vmul.f32 %v2031, 0.01
        %v2087 = vmul.f32 %v2033, 0.01
        %v2088 = vmul.f32 %v2036, 0.01
        %v2089 = vmul.f32 %v2038, 0.01
        %v2090 = vmul.f32 %v2041, 0.01
        %v2091 = vmul.f32 %v2043, 0.01
        %v2092 = vmul.f32 %v2046, 0.01
        %v2093 = vmul.f32 %v2048, 0.01
        %v2094 = vmul.f32 %v2051, 0.01
        %v2095 = vmul.f32 %v2053, 0.01
        %v2096 = vmul.f32 %v2056, 0.01
        %v2097 = vmul.f32 %v2058, 0.01
        %v2098 = vmul.f32 %v2061, 0.01
        %v2099 = vmul.f32 %v2063, 0.01
        %v2100 = vmul.f32 %v2066, 0.01
        %v2101 = vmul.f32 %v2068, 0.01
        %v2102 = vsel %vm2070, %v2031, %v2086
        %v2103 = vsel %vm2071, %v2033, %v2087
        %v2104 = vsel %vm2072, %v2036, %v2088
        %v2105 = vsel %vm2073, %v2038, %v2089
        %v2106 = vsel %vm2074, %v2041, %v2090
        %v2107 = vsel %vm2075, %v2043, %v2091
        %v2108 = vsel %vm2076, %v2046, %v2092
        %v2109 = vsel %vm2077, %v2048, %v2093
        %v2110 = vsel %vm2078, %v2051, %v2094
        %v2111 = vsel %vm2079, %v2053, %v2095
        %v2112 = vsel %vm2080, %v2056, %v2096
        %v2113 = vsel %vm2081, %v2058, %v2097
        %v2114 = vsel %vm2082, %v2061, %v2098
        %v2115 = vsel %vm2083, %v2063, %v2099
        %v2116 = vsel %vm2084, %v2066, %v2100
        %v2117 = vsel %vm2085, %v2068, %v2101
        %v2118 = vpack.c.bf16 %v2103, %v2102
        %v2119 = vpack.c.bf16 %v2105, %v2104
        %v2120 = vpack.c.bf16 %v2107, %v2106
        %v2121 = vpack.c.bf16 %v2109, %v2108
        %v2122 = vpack.c.bf16 %v2111, %v2110
        %v2123 = vpack.c.bf16 %v2113, %v2112
        %v2124 = vpack.c.bf16 %v2115, %v2114
        %v2125 = vpack.c.bf16 %v2117, %v2116
        %v2126 = vld [vmem:[#allocation14] sm:$0xf]
        %v2127 = vld [vmem:[#allocation14 + $0x4] sm:$0xf]
        %v2128 = vld [vmem:[#allocation14 + $0x8] sm:$0xf]
        %v2129 = vld [vmem:[#allocation14 + $0xc] sm:$0xf]
        %v2130 = vld [vmem:[#allocation14 + $0x10] sm:$0xf]
        %v2131 = vld [vmem:[#allocation14 + $0x14] sm:$0xf]
        %v2132 = vld [vmem:[#allocation14 + $0x18] sm:$0xf]
        %v2133 = vld [vmem:[#allocation14 + $0x1c] sm:$0xf]
        %v2134 = vld [vmem:[#allocation14 + $0x20] sm:$0xf]
        %v2135 = vld [vmem:[#allocation14 + $0x24] sm:$0xf]
        %v2136 = vld [vmem:[#allocation14 + $0x28] sm:$0xf]
        %v2137 = vld [vmem:[#allocation14 + $0x2c] sm:$0xf]
        %v2138 = vld [vmem:[#allocation14 + $0x30] sm:$0xf]
        %v2139 = vld [vmem:[#allocation14 + $0x34] sm:$0xf]
        %v2140 = vld [vmem:[#allocation14 + $0x38] sm:$0xf]
        %v2141 = vld [vmem:[#allocation14 + $0x3c] sm:$0xf]
        %v2142 = vld [vmem:[%s11] sm:$0x1]
        %v2144 = vperm.slane %v2142, 0
        %v2162 = vunpack.c.l.b16 %v2126
        %v2163 = vunpack.c.l.b16 %v2127
        %v2164 = vunpack.c.l.b16 %v2128
        %v2165 = vunpack.c.l.b16 %v2129
        %v2166 = vunpack.c.l.b16 %v2130
        %v2167 = vunpack.c.l.b16 %v2131
        %v2168 = vunpack.c.l.b16 %v2132
        %v2169 = vunpack.c.l.b16 %v2133
        %v2170 = vunpack.c.l.b16 %v2134
        %v2171 = vunpack.c.l.b16 %v2135
        %v2172 = vunpack.c.l.b16 %v2136
        %v2173 = vunpack.c.l.b16 %v2137
        %v2174 = vunpack.c.l.b16 %v2138
        %v2175 = vunpack.c.l.b16 %v2139
        %v2176 = vunpack.c.l.b16 %v2140
        %v2177 = vunpack.c.l.b16 %v2141
        %v2178 = vpack.c.b16 %v2163, %v2162
        %v2179 = vpack.c.b16 %v2165, %v2164
        %v2180 = vpack.c.b16 %v2167, %v2166
        %v2181 = vpack.c.b16 %v2169, %v2168
        %v2182 = vpack.c.b16 %v2171, %v2170
        %v2183 = vpack.c.b16 %v2173, %v2172
        %v2184 = vpack.c.b16 %v2175, %v2174
        %v2185 = vpack.c.b16 %v2177, %v2176
        %2194 = vmatpush.bf16.msra.mxu0 %v2185
        %2195 = vmatpush.bf16.msra.mxu0 %v2184
        %2196 = vmatpush.bf16.msra.mxu0 %v2183
        %2197 = vmatpush.bf16.msra.mxu0 %v2182
        %2198 = vmatpush.bf16.msra.mxu0 %v2181
        %2199 = vmatpush.bf16.msra.mxu0 %v2180
        %2200 = vmatpush.bf16.msra.mxu0 %v2179
        %2201 = vmatpush.bf16.msra.mxu0 %v2178
        %2202 = vmatmul.bf16.gmra.mxu0 %v2118
        %v2203 = vpop.f32.mrf.mxu0
        %v2204 = vadd.f32 %v2144, %v2203
        %v2205 = vpop.f32.mrf.mxu0
        %v2206 = vadd.f32 %v2144, %v2205
        %2207 = vmatmul.bf16.gmra.mxu0 %v2119
        %v2208 = vpop.f32.mrf.mxu0
        %v2209 = vadd.f32 %v2144, %v2208
        %v2210 = vpop.f32.mrf.mxu0
        %v2211 = vadd.f32 %v2144, %v2210
        %2212 = vmatmul.bf16.gmra.mxu0 %v2120
        %v2213 = vpop.f32.mrf.mxu0
        %v2214 = vadd.f32 %v2144, %v2213
        %v2215 = vpop.f32.mrf.mxu0
        %v2216 = vadd.f32 %v2144, %v2215
        %2217 = vmatmul.bf16.gmra.mxu0 %v2121
        %v2218 = vpop.f32.mrf.mxu0
        %v2219 = vadd.f32 %v2144, %v2218
        %v2220 = vpop.f32.mrf.mxu0
        %v2221 = vadd.f32 %v2144, %v2220
        %2222 = vmatmul.bf16.gmra.mxu0 %v2122
        %v2223 = vpop.f32.mrf.mxu0
        %v2224 = vadd.f32 %v2144, %v2223
        %v2225 = vpop.f32.mrf.mxu0
        %v2226 = vadd.f32 %v2144, %v2225
        %2227 = vmatmul.bf16.gmra.mxu0 %v2123
        %v2228 = vpop.f32.mrf.mxu0
        %v2229 = vadd.f32 %v2144, %v2228
        %v2230 = vpop.f32.mrf.mxu0
        %v2231 = vadd.f32 %v2144, %v2230
        %2232 = vmatmul.bf16.gmra.mxu0 %v2124
        %v2233 = vpop.f32.mrf.mxu0
        %v2234 = vadd.f32 %v2144, %v2233
        %v2235 = vpop.f32.mrf.mxu0
        %v2236 = vadd.f32 %v2144, %v2235
        %2237 = vmatmul.bf16.gmra.mxu0 %v2125
        %v2238 = vpop.f32.mrf.mxu0
        %v2239 = vadd.f32 %v2144, %v2238
        %v2240 = vpop.f32.mrf.mxu0
        %v2241 = vadd.f32 %v2144, %v2240
        %2242 = vdwg.mxu0
        %v2243 = vld [vmem:[%s801] sm:$0xff]
        %v2244 = vld [vmem:[%s801 + $0x8] sm:$0xff]
        %v2245 = vld [vmem:[%s801 + $0x10] sm:$0xff]
        %v2246 = vld [vmem:[%s801 + $0x18] sm:$0xff]
        %v2247 = vld [vmem:[%s801 + $0x20] sm:$0xff]
        %v2248 = vld [vmem:[%s801 + $0x28] sm:$0xff]
        %v2249 = vld [vmem:[%s801 + $0x30] sm:$0xff]
        %v2250 = vld [vmem:[%s801 + $0x38] sm:$0xff]
        %v2251 = vld [vmem:[%s801 + $0x40] sm:$0xff]
        %v2252 = vld [vmem:[%s801 + $0x48] sm:$0xff]
        %v2253 = vld [vmem:[%s801 + $0x50] sm:$0xff]
        %v2254 = vld [vmem:[%s801 + $0x58] sm:$0xff]
        %v2255 = vld [vmem:[%s801 + $0x60] sm:$0xff]
        %v2256 = vld [vmem:[%s801 + $0x68] sm:$0xff]
        %v2257 = vld [vmem:[%s801 + $0x70] sm:$0xff]
        %v2258 = vld [vmem:[%s801 + $0x78] sm:$0xff]
        %v2259 = vadd.f32 %v2243, %v2204
        %v2260 = vadd.f32 %v2244, %v2206
        %v2261 = vadd.f32 %v2245, %v2209
        %v2262 = vadd.f32 %v2246, %v2211
        %v2263 = vadd.f32 %v2247, %v2214
        %v2264 = vadd.f32 %v2248, %v2216
        %v2265 = vadd.f32 %v2249, %v2219
        %v2266 = vadd.f32 %v2250, %v2221
        %v2267 = vadd.f32 %v2251, %v2224
        %v2268 = vadd.f32 %v2252, %v2226
        %v2269 = vadd.f32 %v2253, %v2229
        %v2270 = vadd.f32 %v2254, %v2231
        %v2271 = vadd.f32 %v2255, %v2234
        %v2272 = vadd.f32 %v2256, %v2236
        %v2273 = vadd.f32 %v2257, %v2239
        %v2274 = vadd.f32 %v2258, %v2241
        %v2275 = vld [vmem:[%s18] sm:$0x1]
        %v2276 = vld [vmem:[%s19] sm:$0x1]
        %2277 = vadd.xlane.f32.xlu0 %v2259
        %v2278 = vpop.xlane.xlu0 %2277
        %2279 = vadd.xlane.f32.xlu0 %v2260
        %v2280 = vpop.xlane.xlu0 %2279
        %2281 = vadd.xlane.f32.xlu0 %v2261
        %v2282 = vpop.xlane.xlu0 %2281
        %2283 = vadd.xlane.f32.xlu0 %v2262
        %v2284 = vpop.xlane.xlu0 %2283
        %2285 = vadd.xlane.f32.xlu0 %v2263
        %v2286 = vpop.xlane.xlu0 %2285
        %2287 = vadd.xlane.f32.xlu0 %v2264
        %v2288 = vpop.xlane.xlu0 %2287
        %2289 = vadd.xlane.f32.xlu0 %v2265
        %v2290 = vpop.xlane.xlu0 %2289
        %2291 = vadd.xlane.f32.xlu0 %v2266
        %v2292 = vpop.xlane.xlu0 %2291
        %2293 = vadd.xlane.f32.xlu0 %v2267
        %v2294 = vpop.xlane.xlu0 %2293
        %2295 = vadd.xlane.f32.xlu0 %v2268
        %v2296 = vpop.xlane.xlu0 %2295
        %2297 = vadd.xlane.f32.xlu0 %v2269
        %v2298 = vpop.xlane.xlu0 %2297
        %2299 = vadd.xlane.f32.xlu0 %v2270
        %v2300 = vpop.xlane.xlu0 %2299
        %2301 = vadd.xlane.f32.xlu0 %v2271
        %v2302 = vpop.xlane.xlu0 %2301
        %2303 = vadd.xlane.f32.xlu0 %v2272
        %v2304 = vpop.xlane.xlu0 %2303
        %2305 = vadd.xlane.f32.xlu0 %v2273
        %v2306 = vpop.xlane.xlu0 %2305
        %2307 = vadd.xlane.f32.xlu0 %v2274
        %v2308 = vpop.xlane.xlu0 %2307
        %v2309 = vrcp.pop 128.0
        %v2310 = vmul.f32 128.0, %v2309
        %v2311 = vsub.f32 1.0, %v2310
        %v2312 = vmul.f32 %v2309, %v2311
        %v2313 = vadd.f32 %v2309, %v2312
        %vm2314 = vweird.f32 %v2309
        %v2315 = vsel %vm2314, %v2309, %v2313
        %v2316 = vmul.f32 %v2278, %v2315
        %v2317 = vmul.f32 %v2280, %v2315
        %v2318 = vmul.f32 %v2282, %v2315
        %v2319 = vmul.f32 %v2284, %v2315
        %v2320 = vmul.f32 %v2286, %v2315
        %v2321 = vmul.f32 %v2288, %v2315
        %v2322 = vmul.f32 %v2290, %v2315
        %v2323 = vmul.f32 %v2292, %v2315
        %v2324 = vmul.f32 %v2294, %v2315
        %v2325 = vmul.f32 %v2296, %v2315
        %v2326 = vmul.f32 %v2298, %v2315
        %v2327 = vmul.f32 %v2300, %v2315
        %v2328 = vmul.f32 %v2302, %v2315
        %v2329 = vmul.f32 %v2304, %v2315
        %v2330 = vmul.f32 %v2306, %v2315
        %v2331 = vmul.f32 %v2308, %v2315
        %v2332 = vsub.f32 %v2259, %v2316
        %v2333 = vsub.f32 %v2260, %v2317
        %v2334 = vsub.f32 %v2261, %v2318
        %v2335 = vsub.f32 %v2262, %v2319
        %v2336 = vsub.f32 %v2263, %v2320
        %v2337 = vsub.f32 %v2264, %v2321
        %v2338 = vsub.f32 %v2265, %v2322
        %v2339 = vsub.f32 %v2266, %v2323
        %v2340 = vsub.f32 %v2267, %v2324
        %v2341 = vsub.f32 %v2268, %v2325
        %v2342 = vsub.f32 %v2269, %v2326
        %v2343 = vsub.f32 %v2270, %v2327
        %v2344 = vsub.f32 %v2271, %v2328
        %v2345 = vsub.f32 %v2272, %v2329
        %v2346 = vsub.f32 %v2273, %v2330
        %v2347 = vsub.f32 %v2274, %v2331
        %v2348 = vmul.f32 %v2332, %v2332
        %v2349 = vmul.f32 %v2333, %v2333
        %v2350 = vmul.f32 %v2334, %v2334
        %v2351 = vmul.f32 %v2335, %v2335
        %v2352 = vmul.f32 %v2336, %v2336
        %v2353 = vmul.f32 %v2337, %v2337
        %v2354 = vmul.f32 %v2338, %v2338
        %v2355 = vmul.f32 %v2339, %v2339
        %v2356 = vmul.f32 %v2340, %v2340
        %v2357 = vmul.f32 %v2341, %v2341
        %v2358 = vmul.f32 %v2342, %v2342
        %v2359 = vmul.f32 %v2343, %v2343
        %v2360 = vmul.f32 %v2344, %v2344
        %v2361 = vmul.f32 %v2345, %v2345
        %v2362 = vmul.f32 %v2346, %v2346
        %v2363 = vmul.f32 %v2347, %v2347
        %2364 = vadd.xlane.f32.xlu0 %v2348
        %v2365 = vpop.xlane.xlu0 %2364
        %2366 = vadd.xlane.f32.xlu0 %v2349
        %v2367 = vpop.xlane.xlu0 %2366
        %2368 = vadd.xlane.f32.xlu0 %v2350
        %v2369 = vpop.xlane.xlu0 %2368
        %2370 = vadd.xlane.f32.xlu0 %v2351
        %v2371 = vpop.xlane.xlu0 %2370
        %2372 = vadd.xlane.f32.xlu0 %v2352
        %v2373 = vpop.xlane.xlu0 %2372
        %2374 = vadd.xlane.f32.xlu0 %v2353
        %v2375 = vpop.xlane.xlu0 %2374
        %2376 = vadd.xlane.f32.xlu0 %v2354
        %v2377 = vpop.xlane.xlu0 %2376
        %2378 = vadd.xlane.f32.xlu0 %v2355
        %v2379 = vpop.xlane.xlu0 %2378
        %2380 = vadd.xlane.f32.xlu0 %v2356
        %v2381 = vpop.xlane.xlu0 %2380
        %2382 = vadd.xlane.f32.xlu0 %v2357
        %v2383 = vpop.xlane.xlu0 %2382
        %2384 = vadd.xlane.f32.xlu0 %v2358
        %v2385 = vpop.xlane.xlu0 %2384
        %2386 = vadd.xlane.f32.xlu0 %v2359
        %v2387 = vpop.xlane.xlu0 %2386
        %2388 = vadd.xlane.f32.xlu0 %v2360
        %v2389 = vpop.xlane.xlu0 %2388
        %2390 = vadd.xlane.f32.xlu0 %v2361
        %v2391 = vpop.xlane.xlu0 %2390
        %2392 = vadd.xlane.f32.xlu0 %v2362
        %v2393 = vpop.xlane.xlu0 %2392
        %2394 = vadd.xlane.f32.xlu0 %v2363
        %v2395 = vpop.xlane.xlu0 %2394
        %v2396 = vmul.f32 %v2365, %v2315
        %v2397 = vmul.f32 %v2367, %v2315
        %v2398 = vmul.f32 %v2369, %v2315
        %v2399 = vmul.f32 %v2371, %v2315
        %v2400 = vmul.f32 %v2373, %v2315
        %v2401 = vmul.f32 %v2375, %v2315
        %v2402 = vmul.f32 %v2377, %v2315
        %v2403 = vmul.f32 %v2379, %v2315
        %v2404 = vmul.f32 %v2381, %v2315
        %v2405 = vmul.f32 %v2383, %v2315
        %v2406 = vmul.f32 %v2385, %v2315
        %v2407 = vmul.f32 %v2387, %v2315
        %v2408 = vmul.f32 %v2389, %v2315
        %v2409 = vmul.f32 %v2391, %v2315
        %v2410 = vmul.f32 %v2393, %v2315
        %v2411 = vmul.f32 %v2395, %v2315
        %v2412 = vadd.f32 %v2396, 1e-05
        %v2413 = vadd.f32 %v2397, 1e-05
        %v2414 = vadd.f32 %v2398, 1e-05
        %v2415 = vadd.f32 %v2399, 1e-05
        %v2416 = vadd.f32 %v2400, 1e-05
        %v2417 = vadd.f32 %v2401, 1e-05
        %v2418 = vadd.f32 %v2402, 1e-05
        %v2419 = vadd.f32 %v2403, 1e-05
        %v2420 = vadd.f32 %v2404, 1e-05
        %v2421 = vadd.f32 %v2405, 1e-05
        %v2422 = vadd.f32 %v2406, 1e-05
        %v2423 = vadd.f32 %v2407, 1e-05
        %v2424 = vadd.f32 %v2408, 1e-05
        %v2425 = vadd.f32 %v2409, 1e-05
        %v2426 = vadd.f32 %v2410, 1e-05
        %v2427 = vadd.f32 %v2411, 1e-05
        %v2428 = vrsqrt.pop %v2412
        %v2429 = vmul.f32 %v2428, %v2412
        %v2430 = vmul.f32 %v2429, %v2428
        %v2431 = vmul.f32 0.5, %v2430
        %v2432 = vsub.f32 1.5, %v2431
        %v2433 = vmul.f32 %v2428, %v2432
        %vm2434 = vweird.f32 %v2412
        %vm2435 = vweird.f32 %v2428
        %vm2436 = vmor %vm2434, %vm2435
        %v2437 = vsel %vm2436, %v2428, %v2433
        %v2438 = vrsqrt.pop %v2413
        %v2439 = vmul.f32 %v2438, %v2413
        %v2440 = vmul.f32 %v2439, %v2438
        %v2441 = vmul.f32 0.5, %v2440
        %v2442 = vsub.f32 1.5, %v2441
        %v2443 = vmul.f32 %v2438, %v2442
        %vm2444 = vweird.f32 %v2413
        %vm2445 = vweird.f32 %v2438
        %vm2446 = vmor %vm2444, %vm2445
        %v2447 = vsel %vm2446, %v2438, %v2443
        %v2448 = vrsqrt.pop %v2414
        %v2449 = vmul.f32 %v2448, %v2414
        %v2450 = vmul.f32 %v2449, %v2448
        %v2451 = vmul.f32 0.5, %v2450
        %v2452 = vsub.f32 1.5, %v2451
        %v2453 = vmul.f32 %v2448, %v2452
        %vm2454 = vweird.f32 %v2414
        %vm2455 = vweird.f32 %v2448
        %vm2456 = vmor %vm2454, %vm2455
        %v2457 = vsel %vm2456, %v2448, %v2453
        %v2458 = vrsqrt.pop %v2415
        %v2459 = vmul.f32 %v2458, %v2415
        %v2460 = vmul.f32 %v2459, %v2458
        %v2461 = vmul.f32 0.5, %v2460
        %v2462 = vsub.f32 1.5, %v2461
        %v2463 = vmul.f32 %v2458, %v2462
        %vm2464 = vweird.f32 %v2415
        %vm2465 = vweird.f32 %v2458
        %vm2466 = vmor %vm2464, %vm2465
        %v2467 = vsel %vm2466, %v2458, %v2463
        %v2468 = vrsqrt.pop %v2416
        %v2469 = vmul.f32 %v2468, %v2416
        %v2470 = vmul.f32 %v2469, %v2468
        %v2471 = vmul.f32 0.5, %v2470
        %v2472 = vsub.f32 1.5, %v2471
        %v2473 = vmul.f32 %v2468, %v2472
        %vm2474 = vweird.f32 %v2416
        %vm2475 = vweird.f32 %v2468
        %vm2476 = vmor %vm2474, %vm2475
        %v2477 = vsel %vm2476, %v2468, %v2473
        %v2478 = vrsqrt.pop %v2417
        %v2479 = vmul.f32 %v2478, %v2417
        %v2480 = vmul.f32 %v2479, %v2478
        %v2481 = vmul.f32 0.5, %v2480
        %v2482 = vsub.f32 1.5, %v2481
        %v2483 = vmul.f32 %v2478, %v2482
        %vm2484 = vweird.f32 %v2417
        %vm2485 = vweird.f32 %v2478
        %vm2486 = vmor %vm2484, %vm2485
        %v2487 = vsel %vm2486, %v2478, %v2483
        %v2488 = vrsqrt.pop %v2418
        %v2489 = vmul.f32 %v2488, %v2418
        %v2490 = vmul.f32 %v2489, %v2488
        %v2491 = vmul.f32 0.5, %v2490
        %v2492 = vsub.f32 1.5, %v2491
        %v2493 = vmul.f32 %v2488, %v2492
        %vm2494 = vweird.f32 %v2418
        %vm2495 = vweird.f32 %v2488
        %vm2496 = vmor %vm2494, %vm2495
        %v2497 = vsel %vm2496, %v2488, %v2493
        %v2498 = vrsqrt.pop %v2419
        %v2499 = vmul.f32 %v2498, %v2419
        %v2500 = vmul.f32 %v2499, %v2498
        %v2501 = vmul.f32 0.5, %v2500
        %v2502 = vsub.f32 1.5, %v2501
        %v2503 = vmul.f32 %v2498, %v2502
        %vm2504 = vweird.f32 %v2419
        %vm2505 = vweird.f32 %v2498
        %vm2506 = vmor %vm2504, %vm2505
        %v2507 = vsel %vm2506, %v2498, %v2503
        %v2508 = vrsqrt.pop %v2420
        %v2509 = vmul.f32 %v2508, %v2420
        %v2510 = vmul.f32 %v2509, %v2508
        %v2511 = vmul.f32 0.5, %v2510
        %v2512 = vsub.f32 1.5, %v2511
        %v2513 = vmul.f32 %v2508, %v2512
        %vm2514 = vweird.f32 %v2420
        %vm2515 = vweird.f32 %v2508
        %vm2516 = vmor %vm2514, %vm2515
        %v2517 = vsel %vm2516, %v2508, %v2513
        %v2518 = vrsqrt.pop %v2421
        %v2519 = vmul.f32 %v2518, %v2421
        %v2520 = vmul.f32 %v2519, %v2518
        %v2521 = vmul.f32 0.5, %v2520
        %v2522 = vsub.f32 1.5, %v2521
        %v2523 = vmul.f32 %v2518, %v2522
        %vm2524 = vweird.f32 %v2421
        %vm2525 = vweird.f32 %v2518
        %vm2526 = vmor %vm2524, %vm2525
        %v2527 = vsel %vm2526, %v2518, %v2523
        %v2528 = vrsqrt.pop %v2422
        %v2529 = vmul.f32 %v2528, %v2422
        %v2530 = vmul.f32 %v2529, %v2528
        %v2531 = vmul.f32 0.5, %v2530
        %v2532 = vsub.f32 1.5, %v2531
        %v2533 = vmul.f32 %v2528, %v2532
        %vm2534 = vweird.f32 %v2422
        %vm2535 = vweird.f32 %v2528
        %vm2536 = vmor %vm2534, %vm2535
        %v2537 = vsel %vm2536, %v2528, %v2533
        %v2538 = vrsqrt.pop %v2423
        %v2539 = vmul.f32 %v2538, %v2423
        %v2540 = vmul.f32 %v2539, %v2538
        %v2541 = vmul.f32 0.5, %v2540
        %v2542 = vsub.f32 1.5, %v2541
        %v2543 = vmul.f32 %v2538, %v2542
        %vm2544 = vweird.f32 %v2423
        %vm2545 = vweird.f32 %v2538
        %vm2546 = vmor %vm2544, %vm2545
        %v2547 = vsel %vm2546, %v2538, %v2543
        %v2548 = vrsqrt.pop %v2424
        %v2549 = vmul.f32 %v2548, %v2424
        %v2550 = vmul.f32 %v2549, %v2548
        %v2551 = vmul.f32 0.5, %v2550
        %v2552 = vsub.f32 1.5, %v2551
        %v2553 = vmul.f32 %v2548, %v2552
        %vm2554 = vweird.f32 %v2424
        %vm2555 = vweird.f32 %v2548
        %vm2556 = vmor %vm2554, %vm2555
        %v2557 = vsel %vm2556, %v2548, %v2553
        %v2558 = vrsqrt.pop %v2425
        %v2559 = vmul.f32 %v2558, %v2425
        %v2560 = vmul.f32 %v2559, %v2558
        %v2561 = vmul.f32 0.5, %v2560
        %v2562 = vsub.f32 1.5, %v2561
        %v2563 = vmul.f32 %v2558, %v2562
        %vm2564 = vweird.f32 %v2425
        %vm2565 = vweird.f32 %v2558
        %vm2566 = vmor %vm2564, %vm2565
        %v2567 = vsel %vm2566, %v2558, %v2563
        %v2568 = vrsqrt.pop %v2426
        %v2569 = vmul.f32 %v2568, %v2426
        %v2570 = vmul.f32 %v2569, %v2568
        %v2571 = vmul.f32 0.5, %v2570
        %v2572 = vsub.f32 1.5, %v2571
        %v2573 = vmul.f32 %v2568, %v2572
        %vm2574 = vweird.f32 %v2426
        %vm2575 = vweird.f32 %v2568
        %vm2576 = vmor %vm2574, %vm2575
        %v2577 = vsel %vm2576, %v2568, %v2573
        %v2578 = vrsqrt.pop %v2427
        %v2579 = vmul.f32 %v2578, %v2427
        %v2580 = vmul.f32 %v2579, %v2578
        %v2581 = vmul.f32 0.5, %v2580
        %v2582 = vsub.f32 1.5, %v2581
        %v2583 = vmul.f32 %v2578, %v2582
        %vm2584 = vweird.f32 %v2427
        %vm2585 = vweird.f32 %v2578
        %vm2586 = vmor %vm2584, %vm2585
        %v2587 = vsel %vm2586, %v2578, %v2583
        %v2588 = vmul.f32 %v2332, %v2437
        %v2589 = vmul.f32 %v2333, %v2447
        %v2590 = vmul.f32 %v2334, %v2457
        %v2591 = vmul.f32 %v2335, %v2467
        %v2592 = vmul.f32 %v2336, %v2477
        %v2593 = vmul.f32 %v2337, %v2487
        %v2594 = vmul.f32 %v2338, %v2497
        %v2595 = vmul.f32 %v2339, %v2507
        %v2596 = vmul.f32 %v2340, %v2517
        %v2597 = vmul.f32 %v2341, %v2527
        %v2598 = vmul.f32 %v2342, %v2537
        %v2599 = vmul.f32 %v2343, %v2547
        %v2600 = vmul.f32 %v2344, %v2557
        %v2601 = vmul.f32 %v2345, %v2567
        %v2602 = vmul.f32 %v2346, %v2577
        %v2603 = vmul.f32 %v2347, %v2587
        %v2605 = vperm.slane %v2275, 0
        %v2607 = vmul.f32 %v2588, %v2605
        %v2608 = vmul.f32 %v2589, %v2605
        %v2609 = vmul.f32 %v2590, %v2605
        %v2610 = vmul.f32 %v2591, %v2605
        %v2611 = vmul.f32 %v2592, %v2605
        %v2612 = vmul.f32 %v2593, %v2605
        %v2613 = vmul.f32 %v2594, %v2605
        %v2614 = vmul.f32 %v2595, %v2605
        %v2615 = vmul.f32 %v2596, %v2605
        %v2616 = vmul.f32 %v2597, %v2605
        %v2617 = vmul.f32 %v2598, %v2605
        %v2618 = vmul.f32 %v2599, %v2605
        %v2619 = vmul.f32 %v2600, %v2605
        %v2620 = vmul.f32 %v2601, %v2605
        %v2621 = vmul.f32 %v2602, %v2605
        %v2622 = vmul.f32 %v2603, %v2605
        %v2624 = vperm.slane %v2276, 0
        %v2626 = vadd.f32 %v2607, %v2624
        %v2627 = vadd.f32 %v2608, %v2624
        %v2628 = vadd.f32 %v2609, %v2624
        %v2629 = vadd.f32 %v2610, %v2624
        %v2630 = vadd.f32 %v2611, %v2624
        %v2631 = vadd.f32 %v2612, %v2624
        %v2632 = vadd.f32 %v2613, %v2624
        %v2633 = vadd.f32 %v2614, %v2624
        %v2634 = vadd.f32 %v2615, %v2624
        %v2635 = vadd.f32 %v2616, %v2624
        %v2636 = vadd.f32 %v2617, %v2624
        %v2637 = vadd.f32 %v2618, %v2624
        %v2638 = vadd.f32 %v2619, %v2624
        %v2639 = vadd.f32 %v2620, %v2624
        %v2640 = vadd.f32 %v2621, %v2624
        %v2641 = vadd.f32 %v2622, %v2624
        %v2642 = vpack.c.bf16 %v2627, %v2626
        %v2643 = vpack.c.bf16 %v2629, %v2628
        %v2644 = vpack.c.bf16 %v2631, %v2630
        %v2645 = vpack.c.bf16 %v2633, %v2632
        %v2646 = vpack.c.bf16 %v2635, %v2634
        %v2647 = vpack.c.bf16 %v2637, %v2636
        %v2648 = vpack.c.bf16 %v2639, %v2638
        %v2649 = vpack.c.bf16 %v2641, %v2640
        %v2650 = vld [vmem:[#allocation16] sm:$0xf]
        %v2651 = vld [vmem:[#allocation16 + $0x4] sm:$0xf]
        %v2652 = vld [vmem:[#allocation16 + $0x8] sm:$0xf]
        %v2653 = vld [vmem:[#allocation16 + $0xc] sm:$0xf]
        %v2654 = vld [vmem:[#allocation16 + $0x10] sm:$0xf]
        %v2655 = vld [vmem:[#allocation16 + $0x14] sm:$0xf]
        %v2656 = vld [vmem:[#allocation16 + $0x18] sm:$0xf]
        %v2657 = vld [vmem:[#allocation16 + $0x1c] sm:$0xf]
        %v2658 = vld [vmem:[#allocation16 + $0x20] sm:$0xf]
        %v2659 = vld [vmem:[#allocation16 + $0x24] sm:$0xf]
        %v2660 = vld [vmem:[#allocation16 + $0x28] sm:$0xf]
        %v2661 = vld [vmem:[#allocation16 + $0x2c] sm:$0xf]
        %v2662 = vld [vmem:[#allocation16 + $0x30] sm:$0xf]
        %v2663 = vld [vmem:[#allocation16 + $0x34] sm:$0xf]
        %v2664 = vld [vmem:[#allocation16 + $0x38] sm:$0xf]
        %v2665 = vld [vmem:[#allocation16 + $0x3c] sm:$0xf]
        %v2666 = vld [vmem:[%s13] sm:$0x1]
        %v2668 = vperm.slane %v2666, 0
        %v2686 = vunpack.c.l.b16 %v2650
        %v2687 = vunpack.c.l.b16 %v2651
        %v2688 = vunpack.c.l.b16 %v2652
        %v2689 = vunpack.c.l.b16 %v2653
        %v2690 = vunpack.c.l.b16 %v2654
        %v2691 = vunpack.c.l.b16 %v2655
        %v2692 = vunpack.c.l.b16 %v2656
        %v2693 = vunpack.c.l.b16 %v2657
        %v2694 = vunpack.c.l.b16 %v2658
        %v2695 = vunpack.c.l.b16 %v2659
        %v2696 = vunpack.c.l.b16 %v2660
        %v2697 = vunpack.c.l.b16 %v2661
        %v2698 = vunpack.c.l.b16 %v2662
        %v2699 = vunpack.c.l.b16 %v2663
        %v2700 = vunpack.c.l.b16 %v2664
        %v2701 = vunpack.c.l.b16 %v2665
        %v2702 = vpack.c.b16 %v2687, %v2686
        %v2703 = vpack.c.b16 %v2689, %v2688
        %v2704 = vpack.c.b16 %v2691, %v2690
        %v2705 = vpack.c.b16 %v2693, %v2692
        %v2706 = vpack.c.b16 %v2695, %v2694
        %v2707 = vpack.c.b16 %v2697, %v2696
        %v2708 = vpack.c.b16 %v2699, %v2698
        %v2709 = vpack.c.b16 %v2701, %v2700
        %2718 = vmatpush.bf16.msra.mxu0 %v2709
        %2719 = vmatpush.bf16.msra.mxu0 %v2708
        %2720 = vmatpush.bf16.msra.mxu0 %v2707
        %2721 = vmatpush.bf16.msra.mxu0 %v2706
        %2722 = vmatpush.bf16.msra.mxu0 %v2705
        %2723 = vmatpush.bf16.msra.mxu0 %v2704
        %2724 = vmatpush.bf16.msra.mxu0 %v2703
        %2725 = vmatpush.bf16.msra.mxu0 %v2702
        %2726 = vmatmul.bf16.gmra.mxu0 %v2642
        %v2727 = vpop.f32.mrf.mxu0
        %v2728 = vadd.f32 %v2668, %v2727
        %v2729 = vpop.f32.mrf.mxu0
        %v2730 = vadd.f32 %v2668, %v2729
        %2731 = vmatmul.bf16.gmra.mxu0 %v2643
        %v2732 = vpop.f32.mrf.mxu0
        %v2733 = vadd.f32 %v2668, %v2732
        %v2734 = vpop.f32.mrf.mxu0
        %v2735 = vadd.f32 %v2668, %v2734
        %2736 = vmatmul.bf16.gmra.mxu0 %v2644
        %v2737 = vpop.f32.mrf.mxu0
        %v2738 = vadd.f32 %v2668, %v2737
        %v2739 = vpop.f32.mrf.mxu0
        %v2740 = vadd.f32 %v2668, %v2739
        %2741 = vmatmul.bf16.gmra.mxu0 %v2645
        %v2742 = vpop.f32.mrf.mxu0
        %v2743 = vadd.f32 %v2668, %v2742
        %v2744 = vpop.f32.mrf.mxu0
        %v2745 = vadd.f32 %v2668, %v2744
        %2746 = vmatmul.bf16.gmra.mxu0 %v2646
        %v2747 = vpop.f32.mrf.mxu0
        %v2748 = vadd.f32 %v2668, %v2747
        %v2749 = vpop.f32.mrf.mxu0
        %v2750 = vadd.f32 %v2668, %v2749
        %2751 = vmatmul.bf16.gmra.mxu0 %v2647
        %v2752 = vpop.f32.mrf.mxu0
        %v2753 = vadd.f32 %v2668, %v2752
        %v2754 = vpop.f32.mrf.mxu0
        %v2755 = vadd.f32 %v2668, %v2754
        %2756 = vmatmul.bf16.gmra.mxu0 %v2648
        %v2757 = vpop.f32.mrf.mxu0
        %v2758 = vadd.f32 %v2668, %v2757
        %v2759 = vpop.f32.mrf.mxu0
        %v2760 = vadd.f32 %v2668, %v2759
        %2761 = vmatmul.bf16.gmra.mxu0 %v2649
        %v2762 = vpop.f32.mrf.mxu0
        %v2763 = vadd.f32 %v2668, %v2762
        %v2764 = vpop.f32.mrf.mxu0
        %v2765 = vadd.f32 %v2668, %v2764
        %2766 = vdwg.mxu0
        %vm2767 = vcmp.gt.f32.partialorder %v2728, 0.0
        %vm2768 = vcmp.gt.f32.partialorder %v2730, 0.0
        %vm2769 = vcmp.gt.f32.partialorder %v2733, 0.0
        %vm2770 = vcmp.gt.f32.partialorder %v2735, 0.0
        %vm2771 = vcmp.gt.f32.partialorder %v2738, 0.0
        %vm2772 = vcmp.gt.f32.partialorder %v2740, 0.0
        %vm2773 = vcmp.gt.f32.partialorder %v2743, 0.0
        %vm2774 = vcmp.gt.f32.partialorder %v2745, 0.0
        %vm2775 = vcmp.gt.f32.partialorder %v2748, 0.0
        %vm2776 = vcmp.gt.f32.partialorder %v2750, 0.0
        %vm2777 = vcmp.gt.f32.partialorder %v2753, 0.0
        %vm2778 = vcmp.gt.f32.partialorder %v2755, 0.0
        %vm2779 = vcmp.gt.f32.partialorder %v2758, 0.0
        %vm2780 = vcmp.gt.f32.partialorder %v2760, 0.0
        %vm2781 = vcmp.gt.f32.partialorder %v2763, 0.0
        %vm2782 = vcmp.gt.f32.partialorder %v2765, 0.0
        %v2783 = vmul.f32 %v2728, 0.01
        %v2784 = vmul.f32 %v2730, 0.01
        %v2785 = vmul.f32 %v2733, 0.01
        %v2786 = vmul.f32 %v2735, 0.01
        %v2787 = vmul.f32 %v2738, 0.01
        %v2788 = vmul.f32 %v2740, 0.01
        %v2789 = vmul.f32 %v2743, 0.01
        %v2790 = vmul.f32 %v2745, 0.01
        %v2791 = vmul.f32 %v2748, 0.01
        %v2792 = vmul.f32 %v2750, 0.01
        %v2793 = vmul.f32 %v2753, 0.01
        %v2794 = vmul.f32 %v2755, 0.01
        %v2795 = vmul.f32 %v2758, 0.01
        %v2796 = vmul.f32 %v2760, 0.01
        %v2797 = vmul.f32 %v2763, 0.01
        %v2798 = vmul.f32 %v2765, 0.01
        %v2799 = vsel %vm2767, %v2728, %v2783
        %v2800 = vsel %vm2768, %v2730, %v2784
        %v2801 = vsel %vm2769, %v2733, %v2785
        %v2802 = vsel %vm2770, %v2735, %v2786
        %v2803 = vsel %vm2771, %v2738, %v2787
        %v2804 = vsel %vm2772, %v2740, %v2788
        %v2805 = vsel %vm2773, %v2743, %v2789
        %v2806 = vsel %vm2774, %v2745, %v2790
        %v2807 = vsel %vm2775, %v2748, %v2791
        %v2808 = vsel %vm2776, %v2750, %v2792
        %v2809 = vsel %vm2777, %v2753, %v2793
        %v2810 = vsel %vm2778, %v2755, %v2794
        %v2811 = vsel %vm2779, %v2758, %v2795
        %v2812 = vsel %vm2780, %v2760, %v2796
        %v2813 = vsel %vm2781, %v2763, %v2797
        %v2814 = vsel %vm2782, %v2765, %v2798
        %v2815 = vpack.c.bf16 %v2800, %v2799
        %v2816 = vpack.c.bf16 %v2802, %v2801
        %v2817 = vpack.c.bf16 %v2804, %v2803
        %v2818 = vpack.c.bf16 %v2806, %v2805
        %v2819 = vpack.c.bf16 %v2808, %v2807
        %v2820 = vpack.c.bf16 %v2810, %v2809
        %v2821 = vpack.c.bf16 %v2812, %v2811
        %v2822 = vpack.c.bf16 %v2814, %v2813
        %v2823 = vld [vmem:[#allocation17] sm:$0xf]
        %v2824 = vld [vmem:[#allocation17 + $0x4] sm:$0xf]
        %v2825 = vld [vmem:[#allocation17 + $0x8] sm:$0xf]
        %v2826 = vld [vmem:[#allocation17 + $0xc] sm:$0xf]
        %v2827 = vld [vmem:[#allocation17 + $0x10] sm:$0xf]
        %v2828 = vld [vmem:[#allocation17 + $0x14] sm:$0xf]
        %v2829 = vld [vmem:[#allocation17 + $0x18] sm:$0xf]
        %v2830 = vld [vmem:[#allocation17 + $0x1c] sm:$0xf]
        %v2831 = vld [vmem:[#allocation17 + $0x20] sm:$0xf]
        %v2832 = vld [vmem:[#allocation17 + $0x24] sm:$0xf]
        %v2833 = vld [vmem:[#allocation17 + $0x28] sm:$0xf]
        %v2834 = vld [vmem:[#allocation17 + $0x2c] sm:$0xf]
        %v2835 = vld [vmem:[#allocation17 + $0x30] sm:$0xf]
        %v2836 = vld [vmem:[#allocation17 + $0x34] sm:$0xf]
        %v2837 = vld [vmem:[#allocation17 + $0x38] sm:$0xf]
        %v2838 = vld [vmem:[#allocation17 + $0x3c] sm:$0xf]
        %v2839 = vld [vmem:[%s15] sm:$0x1]
        %v2841 = vperm.slane %v2839, 0
        %v2859 = vunpack.c.l.b16 %v2823
        %v2860 = vunpack.c.l.b16 %v2824
        %v2861 = vunpack.c.l.b16 %v2825
        %v2862 = vunpack.c.l.b16 %v2826
        %v2863 = vunpack.c.l.b16 %v2827
        %v2864 = vunpack.c.l.b16 %v2828
        %v2865 = vunpack.c.l.b16 %v2829
        %v2866 = vunpack.c.l.b16 %v2830
        %v2867 = vunpack.c.l.b16 %v2831
        %v2868 = vunpack.c.l.b16 %v2832
        %v2869 = vunpack.c.l.b16 %v2833
        %v2870 = vunpack.c.l.b16 %v2834
        %v2871 = vunpack.c.l.b16 %v2835
        %v2872 = vunpack.c.l.b16 %v2836
        %v2873 = vunpack.c.l.b16 %v2837
        %v2874 = vunpack.c.l.b16 %v2838
        %v2875 = vpack.c.b16 %v2860, %v2859
        %v2876 = vpack.c.b16 %v2862, %v2861
        %v2877 = vpack.c.b16 %v2864, %v2863
        %v2878 = vpack.c.b16 %v2866, %v2865
        %v2879 = vpack.c.b16 %v2868, %v2867
        %v2880 = vpack.c.b16 %v2870, %v2869
        %v2881 = vpack.c.b16 %v2872, %v2871
        %v2882 = vpack.c.b16 %v2874, %v2873
        %2891 = vmatpush.bf16.msra.mxu0 %v2882
        %2892 = vmatpush.bf16.msra.mxu0 %v2881
        %2893 = vmatpush.bf16.msra.mxu0 %v2880
        %2894 = vmatpush.bf16.msra.mxu0 %v2879
        %2895 = vmatpush.bf16.msra.mxu0 %v2878
        %2896 = vmatpush.bf16.msra.mxu0 %v2877
        %2897 = vmatpush.bf16.msra.mxu0 %v2876
        %2898 = vmatpush.bf16.msra.mxu0 %v2875
        %2899 = vmatmul.bf16.gmra.mxu0 %v2815
        %v2900 = vpop.f32.mrf.mxu0
        %v2901 = vadd.f32 %v2841, %v2900
        %v2902 = vpop.f32.mrf.mxu0
        %v2903 = vadd.f32 %v2841, %v2902
        %2904 = vmatmul.bf16.gmra.mxu0 %v2816
        %v2905 = vpop.f32.mrf.mxu0
        %v2906 = vadd.f32 %v2841, %v2905
        %v2907 = vpop.f32.mrf.mxu0
        %v2908 = vadd.f32 %v2841, %v2907
        %2909 = vmatmul.bf16.gmra.mxu0 %v2817
        %v2910 = vpop.f32.mrf.mxu0
        %v2911 = vadd.f32 %v2841, %v2910
        %v2912 = vpop.f32.mrf.mxu0
        %v2913 = vadd.f32 %v2841, %v2912
        %2914 = vmatmul.bf16.gmra.mxu0 %v2818
        %v2915 = vpop.f32.mrf.mxu0
        %v2916 = vadd.f32 %v2841, %v2915
        %v2917 = vpop.f32.mrf.mxu0
        %v2918 = vadd.f32 %v2841, %v2917
        %2919 = vmatmul.bf16.gmra.mxu0 %v2819
        %v2920 = vpop.f32.mrf.mxu0
        %v2921 = vadd.f32 %v2841, %v2920
        %v2922 = vpop.f32.mrf.mxu0
        %v2923 = vadd.f32 %v2841, %v2922
        %2924 = vmatmul.bf16.gmra.mxu0 %v2820
        %v2925 = vpop.f32.mrf.mxu0
        %v2926 = vadd.f32 %v2841, %v2925
        %v2927 = vpop.f32.mrf.mxu0
        %v2928 = vadd.f32 %v2841, %v2927
        %2929 = vmatmul.bf16.gmra.mxu0 %v2821
        %v2930 = vpop.f32.mrf.mxu0
        %v2931 = vadd.f32 %v2841, %v2930
        %v2932 = vpop.f32.mrf.mxu0
        %v2933 = vadd.f32 %v2841, %v2932
        %2934 = vmatmul.bf16.gmra.mxu0 %v2822
        %v2935 = vpop.f32.mrf.mxu0
        %v2936 = vadd.f32 %v2841, %v2935
        %v2937 = vpop.f32.mrf.mxu0
        %v2938 = vadd.f32 %v2841, %v2937
        %2939 = vdwg.mxu0
        %vm2940 = vcmp.gt.f32.partialorder %v2901, 0.0
        %vm2941 = vcmp.gt.f32.partialorder %v2903, 0.0
        %vm2942 = vcmp.gt.f32.partialorder %v2906, 0.0
        %vm2943 = vcmp.gt.f32.partialorder %v2908, 0.0
        %vm2944 = vcmp.gt.f32.partialorder %v2911, 0.0
        %vm2945 = vcmp.gt.f32.partialorder %v2913, 0.0
        %vm2946 = vcmp.gt.f32.partialorder %v2916, 0.0
        %vm2947 = vcmp.gt.f32.partialorder %v2918, 0.0
        %vm2948 = vcmp.gt.f32.partialorder %v2921, 0.0
        %vm2949 = vcmp.gt.f32.partialorder %v2923, 0.0
        %vm2950 = vcmp.gt.f32.partialorder %v2926, 0.0
        %vm2951 = vcmp.gt.f32.partialorder %v2928, 0.0
        %vm2952 = vcmp.gt.f32.partialorder %v2931, 0.0
        %vm2953 = vcmp.gt.f32.partialorder %v2933, 0.0
        %vm2954 = vcmp.gt.f32.partialorder %v2936, 0.0
        %vm2955 = vcmp.gt.f32.partialorder %v2938, 0.0
        %v2956 = vmul.f32 %v2901, 0.01
        %v2957 = vmul.f32 %v2903, 0.01
        %v2958 = vmul.f32 %v2906, 0.01
        %v2959 = vmul.f32 %v2908, 0.01
        %v2960 = vmul.f32 %v2911, 0.01
        %v2961 = vmul.f32 %v2913, 0.01
        %v2962 = vmul.f32 %v2916, 0.01
        %v2963 = vmul.f32 %v2918, 0.01
        %v2964 = vmul.f32 %v2921, 0.01
        %v2965 = vmul.f32 %v2923, 0.01
        %v2966 = vmul.f32 %v2926, 0.01
        %v2967 = vmul.f32 %v2928, 0.01
        %v2968 = vmul.f32 %v2931, 0.01
        %v2969 = vmul.f32 %v2933, 0.01
        %v2970 = vmul.f32 %v2936, 0.01
        %v2971 = vmul.f32 %v2938, 0.01
        %v2972 = vsel %vm2940, %v2901, %v2956
        %v2973 = vsel %vm2941, %v2903, %v2957
        %v2974 = vsel %vm2942, %v2906, %v2958
        %v2975 = vsel %vm2943, %v2908, %v2959
        %v2976 = vsel %vm2944, %v2911, %v2960
        %v2977 = vsel %vm2945, %v2913, %v2961
        %v2978 = vsel %vm2946, %v2916, %v2962
        %v2979 = vsel %vm2947, %v2918, %v2963
        %v2980 = vsel %vm2948, %v2921, %v2964
        %v2981 = vsel %vm2949, %v2923, %v2965
        %v2982 = vsel %vm2950, %v2926, %v2966
        %v2983 = vsel %vm2951, %v2928, %v2967
        %v2984 = vsel %vm2952, %v2931, %v2968
        %v2985 = vsel %vm2953, %v2933, %v2969
        %v2986 = vsel %vm2954, %v2936, %v2970
        %v2987 = vsel %vm2955, %v2938, %v2971
        %v2988 = vpack.c.bf16 %v2973, %v2972
        %v2989 = vpack.c.bf16 %v2975, %v2974
        %v2990 = vpack.c.bf16 %v2977, %v2976
        %v2991 = vpack.c.bf16 %v2979, %v2978
        %v2992 = vpack.c.bf16 %v2981, %v2980
        %v2993 = vpack.c.bf16 %v2983, %v2982
        %v2994 = vpack.c.bf16 %v2985, %v2984
        %v2995 = vpack.c.bf16 %v2987, %v2986
        %v2996 = vld [vmem:[#allocation19] sm:$0xf]
        %v2997 = vld [vmem:[#allocation19 + $0x4] sm:$0xf]
        %v2998 = vld [vmem:[#allocation19 + $0x8] sm:$0xf]
        %v2999 = vld [vmem:[#allocation19 + $0xc] sm:$0xf]
        %v3000 = vld [vmem:[#allocation19 + $0x10] sm:$0xf]
        %v3001 = vld [vmem:[#allocation19 + $0x14] sm:$0xf]
        %v3002 = vld [vmem:[#allocation19 + $0x18] sm:$0xf]
        %v3003 = vld [vmem:[#allocation19 + $0x1c] sm:$0xf]
        %v3004 = vld [vmem:[#allocation19 + $0x20] sm:$0xf]
        %v3005 = vld [vmem:[#allocation19 + $0x24] sm:$0xf]
        %v3006 = vld [vmem:[#allocation19 + $0x28] sm:$0xf]
        %v3007 = vld [vmem:[#allocation19 + $0x2c] sm:$0xf]
        %v3008 = vld [vmem:[#allocation19 + $0x30] sm:$0xf]
        %v3009 = vld [vmem:[#allocation19 + $0x34] sm:$0xf]
        %v3010 = vld [vmem:[#allocation19 + $0x38] sm:$0xf]
        %v3011 = vld [vmem:[#allocation19 + $0x3c] sm:$0xf]
        %v3012 = vld [vmem:[%s17] sm:$0x1]
        %v3014 = vperm.slane %v3012, 0
        %v3032 = vunpack.c.l.b16 %v2996
        %v3033 = vunpack.c.l.b16 %v2997
        %v3034 = vunpack.c.l.b16 %v2998
        %v3035 = vunpack.c.l.b16 %v2999
        %v3036 = vunpack.c.l.b16 %v3000
        %v3037 = vunpack.c.l.b16 %v3001
        %v3038 = vunpack.c.l.b16 %v3002
        %v3039 = vunpack.c.l.b16 %v3003
        %v3040 = vunpack.c.l.b16 %v3004
        %v3041 = vunpack.c.l.b16 %v3005
        %v3042 = vunpack.c.l.b16 %v3006
        %v3043 = vunpack.c.l.b16 %v3007
        %v3044 = vunpack.c.l.b16 %v3008
        %v3045 = vunpack.c.l.b16 %v3009
        %v3046 = vunpack.c.l.b16 %v3010
        %v3047 = vunpack.c.l.b16 %v3011
        %v3048 = vpack.c.b16 %v3033, %v3032
        %v3049 = vpack.c.b16 %v3035, %v3034
        %v3050 = vpack.c.b16 %v3037, %v3036
        %v3051 = vpack.c.b16 %v3039, %v3038
        %v3052 = vpack.c.b16 %v3041, %v3040
        %v3053 = vpack.c.b16 %v3043, %v3042
        %v3054 = vpack.c.b16 %v3045, %v3044
        %v3055 = vpack.c.b16 %v3047, %v3046
        %3064 = vmatpush.bf16.msra.mxu0 %v3055
        %3065 = vmatpush.bf16.msra.mxu0 %v3054
        %3066 = vmatpush.bf16.msra.mxu0 %v3053
        %3067 = vmatpush.bf16.msra.mxu0 %v3052
        %3068 = vmatpush.bf16.msra.mxu0 %v3051
        %3069 = vmatpush.bf16.msra.mxu0 %v3050
        %3070 = vmatpush.bf16.msra.mxu0 %v3049
        %3071 = vmatpush.bf16.msra.mxu0 %v3048
        %3072 = vmatmul.bf16.gmra.mxu0 %v2988
        %v3073 = vpop.f32.mrf.mxu0
        %v3074 = vadd.f32 %v3014, %v3073
        %v3075 = vpop.f32.mrf.mxu0
        %v3076 = vadd.f32 %v3014, %v3075
        %3077 = vmatmul.bf16.gmra.mxu0 %v2989
        %v3078 = vpop.f32.mrf.mxu0
        %v3079 = vadd.f32 %v3014, %v3078
        %v3080 = vpop.f32.mrf.mxu0
        %v3081 = vadd.f32 %v3014, %v3080
        %3082 = vmatmul.bf16.gmra.mxu0 %v2990
        %v3083 = vpop.f32.mrf.mxu0
        %v3084 = vadd.f32 %v3014, %v3083
        %v3085 = vpop.f32.mrf.mxu0
        %v3086 = vadd.f32 %v3014, %v3085
        %3087 = vmatmul.bf16.gmra.mxu0 %v2991
        %v3088 = vpop.f32.mrf.mxu0
        %v3089 = vadd.f32 %v3014, %v3088
        %v3090 = vpop.f32.mrf.mxu0
        %v3091 = vadd.f32 %v3014, %v3090
        %3092 = vmatmul.bf16.gmra.mxu0 %v2992
        %v3093 = vpop.f32.mrf.mxu0
        %v3094 = vadd.f32 %v3014, %v3093
        %v3095 = vpop.f32.mrf.mxu0
        %v3096 = vadd.f32 %v3014, %v3095
        %3097 = vmatmul.bf16.gmra.mxu0 %v2993
        %v3098 = vpop.f32.mrf.mxu0
        %v3099 = vadd.f32 %v3014, %v3098
        %v3100 = vpop.f32.mrf.mxu0
        %v3101 = vadd.f32 %v3014, %v3100
        %3102 = vmatmul.bf16.gmra.mxu0 %v2994
        %v3103 = vpop.f32.mrf.mxu0
        %v3104 = vadd.f32 %v3014, %v3103
        %v3105 = vpop.f32.mrf.mxu0
        %v3106 = vadd.f32 %v3014, %v3105
        %3107 = vmatmul.bf16.gmra.mxu0 %v2995
        %v3108 = vpop.f32.mrf.mxu0
        %v3109 = vadd.f32 %v3014, %v3108
        %v3110 = vpop.f32.mrf.mxu0
        %v3111 = vadd.f32 %v3014, %v3110
        %3112 = vdwg.mxu0
        %v3113 = vadd.f32 %v2626, %v3074
        %v3114 = vadd.f32 %v2627, %v3076
        %v3115 = vadd.f32 %v2628, %v3079
        %v3116 = vadd.f32 %v2629, %v3081
        %v3117 = vadd.f32 %v2630, %v3084
        %v3118 = vadd.f32 %v2631, %v3086
        %v3119 = vadd.f32 %v2632, %v3089
        %v3120 = vadd.f32 %v2633, %v3091
        %v3121 = vadd.f32 %v2634, %v3094
        %v3122 = vadd.f32 %v2635, %v3096
        %v3123 = vadd.f32 %v2636, %v3099
        %v3124 = vadd.f32 %v2637, %v3101
        %v3125 = vadd.f32 %v2638, %v3104
        %v3126 = vadd.f32 %v2639, %v3106
        %v3127 = vadd.f32 %v2640, %v3109
        %v3128 = vadd.f32 %v2641, %v3111
        %v3129 = vld [vmem:[%s20] sm:$0x1]
        %v3130 = vld [vmem:[%s21] sm:$0x1]
        %3131 = vadd.xlane.f32.xlu0 %v3113
        %v3132 = vpop.xlane.xlu0 %3131
        %3133 = vadd.xlane.f32.xlu0 %v3114
        %v3134 = vpop.xlane.xlu0 %3133
        %3135 = vadd.xlane.f32.xlu0 %v3115
        %v3136 = vpop.xlane.xlu0 %3135
        %3137 = vadd.xlane.f32.xlu0 %v3116
        %v3138 = vpop.xlane.xlu0 %3137
        %3139 = vadd.xlane.f32.xlu0 %v3117
        %v3140 = vpop.xlane.xlu0 %3139
        %3141 = vadd.xlane.f32.xlu0 %v3118
        %v3142 = vpop.xlane.xlu0 %3141
        %3143 = vadd.xlane.f32.xlu0 %v3119
        %v3144 = vpop.xlane.xlu0 %3143
        %3145 = vadd.xlane.f32.xlu0 %v3120
        %v3146 = vpop.xlane.xlu0 %3145
        %3147 = vadd.xlane.f32.xlu0 %v3121
        %v3148 = vpop.xlane.xlu0 %3147
        %3149 = vadd.xlane.f32.xlu0 %v3122
        %v3150 = vpop.xlane.xlu0 %3149
        %3151 = vadd.xlane.f32.xlu0 %v3123
        %v3152 = vpop.xlane.xlu0 %3151
        %3153 = vadd.xlane.f32.xlu0 %v3124
        %v3154 = vpop.xlane.xlu0 %3153
        %3155 = vadd.xlane.f32.xlu0 %v3125
        %v3156 = vpop.xlane.xlu0 %3155
        %3157 = vadd.xlane.f32.xlu0 %v3126
        %v3158 = vpop.xlane.xlu0 %3157
        %3159 = vadd.xlane.f32.xlu0 %v3127
        %v3160 = vpop.xlane.xlu0 %3159
        %3161 = vadd.xlane.f32.xlu0 %v3128
        %v3162 = vpop.xlane.xlu0 %3161
        %v3163 = vmul.f32 %v3132, %v2315
        %v3164 = vmul.f32 %v3134, %v2315
        %v3165 = vmul.f32 %v3136, %v2315
        %v3166 = vmul.f32 %v3138, %v2315
        %v3167 = vmul.f32 %v3140, %v2315
        %v3168 = vmul.f32 %v3142, %v2315
        %v3169 = vmul.f32 %v3144, %v2315
        %v3170 = vmul.f32 %v3146, %v2315
        %v3171 = vmul.f32 %v3148, %v2315
        %v3172 = vmul.f32 %v3150, %v2315
        %v3173 = vmul.f32 %v3152, %v2315
        %v3174 = vmul.f32 %v3154, %v2315
        %v3175 = vmul.f32 %v3156, %v2315
        %v3176 = vmul.f32 %v3158, %v2315
        %v3177 = vmul.f32 %v3160, %v2315
        %v3178 = vmul.f32 %v3162, %v2315
        %v3179 = vsub.f32 %v3113, %v3163
        %v3180 = vsub.f32 %v3114, %v3164
        %v3181 = vsub.f32 %v3115, %v3165
        %v3182 = vsub.f32 %v3116, %v3166
        %v3183 = vsub.f32 %v3117, %v3167
        %v3184 = vsub.f32 %v3118, %v3168
        %v3185 = vsub.f32 %v3119, %v3169
        %v3186 = vsub.f32 %v3120, %v3170
        %v3187 = vsub.f32 %v3121, %v3171
        %v3188 = vsub.f32 %v3122, %v3172
        %v3189 = vsub.f32 %v3123, %v3173
        %v3190 = vsub.f32 %v3124, %v3174
        %v3191 = vsub.f32 %v3125, %v3175
        %v3192 = vsub.f32 %v3126, %v3176
        %v3193 = vsub.f32 %v3127, %v3177
        %v3194 = vsub.f32 %v3128, %v3178
        %v3195 = vmul.f32 %v3179, %v3179
        %v3196 = vmul.f32 %v3180, %v3180
        %v3197 = vmul.f32 %v3181, %v3181
        %v3198 = vmul.f32 %v3182, %v3182
        %v3199 = vmul.f32 %v3183, %v3183
        %v3200 = vmul.f32 %v3184, %v3184
        %v3201 = vmul.f32 %v3185, %v3185
        %v3202 = vmul.f32 %v3186, %v3186
        %v3203 = vmul.f32 %v3187, %v3187
        %v3204 = vmul.f32 %v3188, %v3188
        %v3205 = vmul.f32 %v3189, %v3189
        %v3206 = vmul.f32 %v3190, %v3190
        %v3207 = vmul.f32 %v3191, %v3191
        %v3208 = vmul.f32 %v3192, %v3192
        %v3209 = vmul.f32 %v3193, %v3193
        %v3210 = vmul.f32 %v3194, %v3194
        %3211 = vadd.xlane.f32.xlu0 %v3195
        %v3212 = vpop.xlane.xlu0 %3211
        %3213 = vadd.xlane.f32.xlu0 %v3196
        %v3214 = vpop.xlane.xlu0 %3213
        %3215 = vadd.xlane.f32.xlu0 %v3197
        %v3216 = vpop.xlane.xlu0 %3215
        %3217 = vadd.xlane.f32.xlu0 %v3198
        %v3218 = vpop.xlane.xlu0 %3217
        %3219 = vadd.xlane.f32.xlu0 %v3199
        %v3220 = vpop.xlane.xlu0 %3219
        %3221 = vadd.xlane.f32.xlu0 %v3200
        %v3222 = vpop.xlane.xlu0 %3221
        %3223 = vadd.xlane.f32.xlu0 %v3201
        %v3224 = vpop.xlane.xlu0 %3223
        %3225 = vadd.xlane.f32.xlu0 %v3202
        %v3226 = vpop.xlane.xlu0 %3225
        %3227 = vadd.xlane.f32.xlu0 %v3203
        %v3228 = vpop.xlane.xlu0 %3227
        %3229 = vadd.xlane.f32.xlu0 %v3204
        %v3230 = vpop.xlane.xlu0 %3229
        %3231 = vadd.xlane.f32.xlu0 %v3205
        %v3232 = vpop.xlane.xlu0 %3231
        %3233 = vadd.xlane.f32.xlu0 %v3206
        %v3234 = vpop.xlane.xlu0 %3233
        %3235 = vadd.xlane.f32.xlu0 %v3207
        %v3236 = vpop.xlane.xlu0 %3235
        %3237 = vadd.xlane.f32.xlu0 %v3208
        %v3238 = vpop.xlane.xlu0 %3237
        %3239 = vadd.xlane.f32.xlu0 %v3209
        %v3240 = vpop.xlane.xlu0 %3239
        %3241 = vadd.xlane.f32.xlu0 %v3210
        %v3242 = vpop.xlane.xlu0 %3241
        %v3243 = vmul.f32 %v3212, %v2315
        %v3244 = vmul.f32 %v3214, %v2315
        %v3245 = vmul.f32 %v3216, %v2315
        %v3246 = vmul.f32 %v3218, %v2315
        %v3247 = vmul.f32 %v3220, %v2315
        %v3248 = vmul.f32 %v3222, %v2315
        %v3249 = vmul.f32 %v3224, %v2315
        %v3250 = vmul.f32 %v3226, %v2315
        %v3251 = vmul.f32 %v3228, %v2315
        %v3252 = vmul.f32 %v3230, %v2315
        %v3253 = vmul.f32 %v3232, %v2315
        %v3254 = vmul.f32 %v3234, %v2315
        %v3255 = vmul.f32 %v3236, %v2315
        %v3256 = vmul.f32 %v3238, %v2315
        %v3257 = vmul.f32 %v3240, %v2315
        %v3258 = vmul.f32 %v3242, %v2315
        %v3259 = vadd.f32 %v3243, 1e-05
        %v3260 = vadd.f32 %v3244, 1e-05
        %v3261 = vadd.f32 %v3245, 1e-05
        %v3262 = vadd.f32 %v3246, 1e-05
        %v3263 = vadd.f32 %v3247, 1e-05
        %v3264 = vadd.f32 %v3248, 1e-05
        %v3265 = vadd.f32 %v3249, 1e-05
        %v3266 = vadd.f32 %v3250, 1e-05
        %v3267 = vadd.f32 %v3251, 1e-05
        %v3268 = vadd.f32 %v3252, 1e-05
        %v3269 = vadd.f32 %v3253, 1e-05
        %v3270 = vadd.f32 %v3254, 1e-05
        %v3271 = vadd.f32 %v3255, 1e-05
        %v3272 = vadd.f32 %v3256, 1e-05
        %v3273 = vadd.f32 %v3257, 1e-05
        %v3274 = vadd.f32 %v3258, 1e-05
        %v3275 = vrsqrt.pop %v3259
        %v3276 = vmul.f32 %v3275, %v3259
        %v3277 = vmul.f32 %v3276, %v3275
        %v3278 = vmul.f32 0.5, %v3277
        %v3279 = vsub.f32 1.5, %v3278
        %v3280 = vmul.f32 %v3275, %v3279
        %vm3281 = vweird.f32 %v3259
        %vm3282 = vweird.f32 %v3275
        %vm3283 = vmor %vm3281, %vm3282
        %v3284 = vsel %vm3283, %v3275, %v3280
        %v3285 = vrsqrt.pop %v3260
        %v3286 = vmul.f32 %v3285, %v3260
        %v3287 = vmul.f32 %v3286, %v3285
        %v3288 = vmul.f32 0.5, %v3287
        %v3289 = vsub.f32 1.5, %v3288
        %v3290 = vmul.f32 %v3285, %v3289
        %vm3291 = vweird.f32 %v3260
        %vm3292 = vweird.f32 %v3285
        %vm3293 = vmor %vm3291, %vm3292
        %v3294 = vsel %vm3293, %v3285, %v3290
        %v3295 = vrsqrt.pop %v3261
        %v3296 = vmul.f32 %v3295, %v3261
        %v3297 = vmul.f32 %v3296, %v3295
        %v3298 = vmul.f32 0.5, %v3297
        %v3299 = vsub.f32 1.5, %v3298
        %v3300 = vmul.f32 %v3295, %v3299
        %vm3301 = vweird.f32 %v3261
        %vm3302 = vweird.f32 %v3295
        %vm3303 = vmor %vm3301, %vm3302
        %v3304 = vsel %vm3303, %v3295, %v3300
        %v3305 = vrsqrt.pop %v3262
        %v3306 = vmul.f32 %v3305, %v3262
        %v3307 = vmul.f32 %v3306, %v3305
        %v3308 = vmul.f32 0.5, %v3307
        %v3309 = vsub.f32 1.5, %v3308
        %v3310 = vmul.f32 %v3305, %v3309
        %vm3311 = vweird.f32 %v3262
        %vm3312 = vweird.f32 %v3305
        %vm3313 = vmor %vm3311, %vm3312
        %v3314 = vsel %vm3313, %v3305, %v3310
        %v3315 = vrsqrt.pop %v3263
        %v3316 = vmul.f32 %v3315, %v3263
        %v3317 = vmul.f32 %v3316, %v3315
        %v3318 = vmul.f32 0.5, %v3317
        %v3319 = vsub.f32 1.5, %v3318
        %v3320 = vmul.f32 %v3315, %v3319
        %vm3321 = vweird.f32 %v3263
        %vm3322 = vweird.f32 %v3315
        %vm3323 = vmor %vm3321, %vm3322
        %v3324 = vsel %vm3323, %v3315, %v3320
        %v3325 = vrsqrt.pop %v3264
        %v3326 = vmul.f32 %v3325, %v3264
        %v3327 = vmul.f32 %v3326, %v3325
        %v3328 = vmul.f32 0.5, %v3327
        %v3329 = vsub.f32 1.5, %v3328
        %v3330 = vmul.f32 %v3325, %v3329
        %vm3331 = vweird.f32 %v3264
        %vm3332 = vweird.f32 %v3325
        %vm3333 = vmor %vm3331, %vm3332
        %v3334 = vsel %vm3333, %v3325, %v3330
        %v3335 = vrsqrt.pop %v3265
        %v3336 = vmul.f32 %v3335, %v3265
        %v3337 = vmul.f32 %v3336, %v3335
        %v3338 = vmul.f32 0.5, %v3337
        %v3339 = vsub.f32 1.5, %v3338
        %v3340 = vmul.f32 %v3335, %v3339
        %vm3341 = vweird.f32 %v3265
        %vm3342 = vweird.f32 %v3335
        %vm3343 = vmor %vm3341, %vm3342
        %v3344 = vsel %vm3343, %v3335, %v3340
        %v3345 = vrsqrt.pop %v3266
        %v3346 = vmul.f32 %v3345, %v3266
        %v3347 = vmul.f32 %v3346, %v3345
        %v3348 = vmul.f32 0.5, %v3347
        %v3349 = vsub.f32 1.5, %v3348
        %v3350 = vmul.f32 %v3345, %v3349
        %vm3351 = vweird.f32 %v3266
        %vm3352 = vweird.f32 %v3345
        %vm3353 = vmor %vm3351, %vm3352
        %v3354 = vsel %vm3353, %v3345, %v3350
        %v3355 = vrsqrt.pop %v3267
        %v3356 = vmul.f32 %v3355, %v3267
        %v3357 = vmul.f32 %v3356, %v3355
        %v3358 = vmul.f32 0.5, %v3357
        %v3359 = vsub.f32 1.5, %v3358
        %v3360 = vmul.f32 %v3355, %v3359
        %vm3361 = vweird.f32 %v3267
        %vm3362 = vweird.f32 %v3355
        %vm3363 = vmor %vm3361, %vm3362
        %v3364 = vsel %vm3363, %v3355, %v3360
        %v3365 = vrsqrt.pop %v3268
        %v3366 = vmul.f32 %v3365, %v3268
        %v3367 = vmul.f32 %v3366, %v3365
        %v3368 = vmul.f32 0.5, %v3367
        %v3369 = vsub.f32 1.5, %v3368
        %v3370 = vmul.f32 %v3365, %v3369
        %vm3371 = vweird.f32 %v3268
        %vm3372 = vweird.f32 %v3365
        %vm3373 = vmor %vm3371, %vm3372
        %v3374 = vsel %vm3373, %v3365, %v3370
        %v3375 = vrsqrt.pop %v3269
        %v3376 = vmul.f32 %v3375, %v3269
        %v3377 = vmul.f32 %v3376, %v3375
        %v3378 = vmul.f32 0.5, %v3377
        %v3379 = vsub.f32 1.5, %v3378
        %v3380 = vmul.f32 %v3375, %v3379
        %vm3381 = vweird.f32 %v3269
        %vm3382 = vweird.f32 %v3375
        %vm3383 = vmor %vm3381, %vm3382
        %v3384 = vsel %vm3383, %v3375, %v3380
        %v3385 = vrsqrt.pop %v3270
        %v3386 = vmul.f32 %v3385, %v3270
        %v3387 = vmul.f32 %v3386, %v3385
        %v3388 = vmul.f32 0.5, %v3387
        %v3389 = vsub.f32 1.5, %v3388
        %v3390 = vmul.f32 %v3385, %v3389
        %vm3391 = vweird.f32 %v3270
        %vm3392 = vweird.f32 %v3385
        %vm3393 = vmor %vm3391, %vm3392
        %v3394 = vsel %vm3393, %v3385, %v3390
        %v3395 = vrsqrt.pop %v3271
        %v3396 = vmul.f32 %v3395, %v3271
        %v3397 = vmul.f32 %v3396, %v3395
        %v3398 = vmul.f32 0.5, %v3397
        %v3399 = vsub.f32 1.5, %v3398
        %v3400 = vmul.f32 %v3395, %v3399
        %vm3401 = vweird.f32 %v3271
        %vm3402 = vweird.f32 %v3395
        %vm3403 = vmor %vm3401, %vm3402
        %v3404 = vsel %vm3403, %v3395, %v3400
        %v3405 = vrsqrt.pop %v3272
        %v3406 = vmul.f32 %v3405, %v3272
        %v3407 = vmul.f32 %v3406, %v3405
        %v3408 = vmul.f32 0.5, %v3407
        %v3409 = vsub.f32 1.5, %v3408
        %v3410 = vmul.f32 %v3405, %v3409
        %vm3411 = vweird.f32 %v3272
        %vm3412 = vweird.f32 %v3405
        %vm3413 = vmor %vm3411, %vm3412
        %v3414 = vsel %vm3413, %v3405, %v3410
        %v3415 = vrsqrt.pop %v3273
        %v3416 = vmul.f32 %v3415, %v3273
        %v3417 = vmul.f32 %v3416, %v3415
        %v3418 = vmul.f32 0.5, %v3417
        %v3419 = vsub.f32 1.5, %v3418
        %v3420 = vmul.f32 %v3415, %v3419
        %vm3421 = vweird.f32 %v3273
        %vm3422 = vweird.f32 %v3415
        %vm3423 = vmor %vm3421, %vm3422
        %v3424 = vsel %vm3423, %v3415, %v3420
        %v3425 = vrsqrt.pop %v3274
        %v3426 = vmul.f32 %v3425, %v3274
        %v3427 = vmul.f32 %v3426, %v3425
        %v3428 = vmul.f32 0.5, %v3427
        %v3429 = vsub.f32 1.5, %v3428
        %v3430 = vmul.f32 %v3425, %v3429
        %vm3431 = vweird.f32 %v3274
        %vm3432 = vweird.f32 %v3425
        %vm3433 = vmor %vm3431, %vm3432
        %v3434 = vsel %vm3433, %v3425, %v3430
        %v3435 = vmul.f32 %v3179, %v3284
        %v3436 = vmul.f32 %v3180, %v3294
        %v3437 = vmul.f32 %v3181, %v3304
        %v3438 = vmul.f32 %v3182, %v3314
        %v3439 = vmul.f32 %v3183, %v3324
        %v3440 = vmul.f32 %v3184, %v3334
        %v3441 = vmul.f32 %v3185, %v3344
        %v3442 = vmul.f32 %v3186, %v3354
        %v3443 = vmul.f32 %v3187, %v3364
        %v3444 = vmul.f32 %v3188, %v3374
        %v3445 = vmul.f32 %v3189, %v3384
        %v3446 = vmul.f32 %v3190, %v3394
        %v3447 = vmul.f32 %v3191, %v3404
        %v3448 = vmul.f32 %v3192, %v3414
        %v3449 = vmul.f32 %v3193, %v3424
        %v3450 = vmul.f32 %v3194, %v3434
        %v3452 = vperm.slane %v3129, 0
        %v3454 = vmul.f32 %v3435, %v3452
        %v3455 = vmul.f32 %v3436, %v3452
        %v3456 = vmul.f32 %v3437, %v3452
        %v3457 = vmul.f32 %v3438, %v3452
        %v3458 = vmul.f32 %v3439, %v3452
        %v3459 = vmul.f32 %v3440, %v3452
        %v3460 = vmul.f32 %v3441, %v3452
        %v3461 = vmul.f32 %v3442, %v3452
        %v3462 = vmul.f32 %v3443, %v3452
        %v3463 = vmul.f32 %v3444, %v3452
        %v3464 = vmul.f32 %v3445, %v3452
        %v3465 = vmul.f32 %v3446, %v3452
        %v3466 = vmul.f32 %v3447, %v3452
        %v3467 = vmul.f32 %v3448, %v3452
        %v3468 = vmul.f32 %v3449, %v3452
        %v3469 = vmul.f32 %v3450, %v3452
        %v3471 = vperm.slane %v3130, 0
        %v3473 = vadd.f32 %v3454, %v3471
        %v3474 = vadd.f32 %v3455, %v3471
        %v3475 = vadd.f32 %v3456, %v3471
        %v3476 = vadd.f32 %v3457, %v3471
        %v3477 = vadd.f32 %v3458, %v3471
        %v3478 = vadd.f32 %v3459, %v3471
        %v3479 = vadd.f32 %v3460, %v3471
        %v3480 = vadd.f32 %v3461, %v3471
        %v3481 = vadd.f32 %v3462, %v3471
        %v3482 = vadd.f32 %v3463, %v3471
        %v3483 = vadd.f32 %v3464, %v3471
        %v3484 = vadd.f32 %v3465, %v3471
        %v3485 = vadd.f32 %v3466, %v3471
        %v3486 = vadd.f32 %v3467, %v3471
        %v3487 = vadd.f32 %v3468, %v3471
        %v3488 = vadd.f32 %v3469, %v3471
        %3489 = vst [vmem:[%s942] sm:$0xff] %v3473
        %3490 = vst [vmem:[%s942 + $0x8] sm:$0xff] %v3474
        %3491 = vst [vmem:[%s942 + $0x10] sm:$0xff] %v3475
        %3492 = vst [vmem:[%s942 + $0x18] sm:$0xff] %v3476
        %3493 = vst [vmem:[%s942 + $0x20] sm:$0xff] %v3477
        %3494 = vst [vmem:[%s942 + $0x28] sm:$0xff] %v3478
        %3495 = vst [vmem:[%s942 + $0x30] sm:$0xff] %v3479
        %3496 = vst [vmem:[%s942 + $0x38] sm:$0xff] %v3480
        %3497 = vst [vmem:[%s942 + $0x40] sm:$0xff] %v3481
        %3498 = vst [vmem:[%s942 + $0x48] sm:$0xff] %v3482
        %3499 = vst [vmem:[%s942 + $0x50] sm:$0xff] %v3483
        %3500 = vst [vmem:[%s942 + $0x58] sm:$0xff] %v3484
        %3501 = vst [vmem:[%s942 + $0x60] sm:$0xff] %v3485
        %3502 = vst [vmem:[%s942 + $0x68] sm:$0xff] %v3486
        %3503 = vst [vmem:[%s942 + $0x70] sm:$0xff] %v3487
        %3504 = vst [vmem:[%s942 + $0x78] sm:$0xff] %v3488
        %s3505 = sand.u32 %s538, 1
        %s3506 = scalar_lea.sflag [#allocation4], %s3505
        %s3507 = sand.u32 %s538, 1
        %s3508 = smul.addr %s3507, 128
        %s3509 = scalar_lea.vmem [#allocation20], %s3508
        // Predicated region
        $region153: #{tpu_custom_call.1} parent=107 // pred_check
          %p3510 = pneg %p548
        $region154: #{tpu_custom_call.1} parent=107 // pred_check_branch
          %3512 = sbr.rel (%p3510) target = $region156
        $region155: #{tpu_custom_call.1} parent=107 // pred_region
          %s3513 = smul.u32 16, %s48
          %3515 = vsyncadd %s3506, 0
          %s3516 = smul.addr %s3513, 8
          %s3517 = scalar_lea.hbm %s22, %s3516
          %s3518 = sshll.u32 %s3509, 4
          %s3519 = int_to_ptr.vmem [resolvable:$true] %s3518
          %s3520 = sshll.u32 %s3517, 4
          %s3521 = int_to_ptr.hbm [resolvable:$true] %s3520
          %3526 = dma.vmem_to_hbm [thread:$0]  %s3519, 2048, %s3521, %s3506, 128, 128, 8
        $region156: #{tpu_custom_call.1} parent=107 // pred_fallthru
          _
      $region108: #{tpu_custom_call.1} parent=5 // pred_fallthru
        _
      %p3527 = scmp.le.s32.totalorder 2, %s43
      // Predicated region
      $region157: #{tpu_custom_call.1} parent=5 // pred_check
        %p3528 = pneg %p3527
      $region158: #{tpu_custom_call.1} parent=5 // pred_check_branch
        %3530 = sbr.rel (%p3528) target = $region160
      $region159: #{tpu_custom_call.1} parent=5 // pred_region
        %s3531 = ssub.s32 %s43, 2
        // Predicated region
        $region161: #{tpu_custom_call.1} parent=159 // pred_check
          %p3532 = pneg %p554
        $region162: #{tpu_custom_call.1} parent=159 // pred_check_branch
          %3534 = sbr.rel (%p3532) target = $region164
        $region163: #{tpu_custom_call.1} parent=159 // pred_region
          %s3535 = sand.u32 %s539, 1
          %s3536 = scalar_lea.sflag [#allocation4], %s3535
          %s3537 = sand.u32 %s539, 1
          %s3538 = smul.addr %s3537, 128
          %s3539 = scalar_lea.vmem [#allocation20], %s3538
          %3541 = dma.done %s3536, 2048
        $region164: #{tpu_custom_call.1} parent=159 // pred_fallthru
          _
      $region160: #{tpu_custom_call.1} parent=5 // pred_fallthru
        _
    $region6: #{tpu_custom_call.1} parent=1 // loop_footer
      %s47 = sadd.s32 1, %s43
    $region7: #{tpu_custom_call.1} parent=1 // loop_footer_branch
      %42 = sbr.rel target = $region3
    $region8: #{tpu_custom_call.1} parent=1 // loop_exit
      _
    %3542 = vsyncpa [#allocation3], 1
    %s3543 = scalar_lea.sflag [#allocation3], 1
    %3544 = vsyncpa %s3543, 1
    %3545 = vsyncpa [#allocation6], 1
    %s3546 = scalar_lea.sflag [#allocation6], 1
    %3547 = vsyncpa %s3546, 1
    %3548 = vsyncpa [#allocation9], 1
    %s3549 = scalar_lea.sflag [#allocation9], 1
    %3550 = vsyncpa %s3549, 1
    %3551 = vsyncpa [#allocation12], 1
    %3552 = vsyncpa [#allocation15], 1
    %3553 = vsyncpa [#allocation18], 1
    %3554 = vsyncpa [#allocation4], 1
    %s3555 = scalar_lea.sflag [#allocation4], 1
    %3556 = vsyncpa %s3555, 1

// kernel: tpu_custom_call.1
$region0: #{tpu_custom_call.1}
  #allocation0 [shape = 'u32[]', space=smem, size = 0x4, offset = 0x4, fixed_abs, tag = 'smem constant byte address 0x4 - core index']
  #allocation1 [shape = 'u32[72,128]{1,0:T(1,128)}', space=vmem, size = 0x9000, scoped, tag = 'internal scratch']
  %s0 = inlined_call_operand.hbm [shape: f32[256,128], index: 0, kind: input, shape index: {}]
  %s1 = inlined_call_operand.hbm [shape: f32[256,128], index: 1, kind: input, shape index: {}]
  %s2 = inlined_call_operand.hbm [shape: f32[256,128], index: 2, kind: input, shape index: {}]
  %s3 = inlined_call_operand.hbm [shape: f32[256,256], index: 3, kind: input, shape index: {}]
  %s4 = inlined_call_operand.hbm [shape: bf16[256,128], index: 4, kind: input, shape index: {}]
  %s5 = inlined_call_operand.vmem [shape: f32[1,128], index: 5, kind: input, shape index: {}]
  %s6 = inlined_call_operand.hbm [shape: bf16[256,128], index: 6, kind: input, shape index: {}]
  %s7 = inlined_call_operand.vmem [shape: f32[1,128], index: 7, kind: input, shape index: {}]
  %s8 = inlined_call_operand.hbm [shape: bf16[256,128], index: 8, kind: input, shape index: {}]
  %s9 = inlined_call_operand.vmem [shape: f32[1,128], index: 9, kind: input, shape index: {}]
  %s10 = inlined_call_operand.hbm [shape: bf16[128,128], index: 10, kind: input, shape index: {}]
  %s11 = inlined_call_operand.vmem [shape: f32[1,128], index: 11, kind: input, shape index: {}]
  %s12 = inlined_call_operand.hbm [shape: bf16[128,128], index: 12, kind: input, shape index: {}]
  %s13 = inlined_call_operand.vmem [shape: f32[1,128], index: 13, kind: input, shape index: {}]
  %s14 = inlined_call_operand.hbm [shape: bf16[128,128], index: 14, kind: input, shape index: {}]
  %s15 = inlined_call_operand.vmem [shape: f32[1,128], index: 15, kind: input, shape index: {}]
  %s16 = inlined_call_operand.hbm [shape: bf16[128,128], index: 16, kind: input, shape index: {}]
  %s17 = inlined_call_operand.vmem [shape: f32[1,128], index: 17, kind: input, shape index: {}]
  %s18 = inlined_call_operand.vmem [shape: f32[1,128], index: 18, kind: input, shape index: {}]
  %s19 = inlined_call_operand.vmem [shape: f32[1,128], index: 19, kind: input, shape index: {}]
  %s20 = inlined_call_operand.vmem [shape: f32[1,128], index: 20, kind: input, shape index: {}]
  %s21 = inlined_call_operand.vmem [shape: f32[1,128], index: 21, kind: input, shape index: {}]
  %s22 = inlined_call_operand.hbm [shape: f32[256,128], index: 22, kind: output, shape index: {}]
  %s23 = sld [smem:[#allocation0]]
  $region165: #{tpu_custom_call.1} parent=0
    _
  %s25 = ssub.s32 1, %s23
  %s26 = scalar_select 0, %s25, %s23
  $region1: #{tpu_custom_call.1} parent=0
    #allocation2 [shape = 'u8[131072]{0}', space=vmem, size = 0x20000, scoped, tag = 'input window, operand 0']
    #allocation3 [shape = 's32[2]{0}', space=sflag, size = 0x8, scoped, tag = 'scoped memory for tpu_custom_call.1']
    #allocation4 [shape = 's32[2]{0}', space=sflag, size = 0x8, scoped, tag = 'scoped memory for tpu_custom_call.1']
    #allocation5 [shape = 'u8[131072]{0}', space=vmem, size = 0x20000, scoped, tag = 'input window, operand 1']
    #allocation6 [shape = 's32[2]{0}', space=sflag, size = 0x8, scoped, tag = 'scoped memory for tpu_custom_call.1']
    #allocation7 [shape = 'u8[131072]{0}', space=vmem, size = 0x20000, scoped, tag = 'input window, operand 2']
    #allocation8 [shape = 'u8[262144]{0}', space=vmem, size = 0x40000, scoped, tag = 'input window, operand 3']
    #allocation9 [shape = 's32[2]{0}', space=sflag, size = 0x8, scoped, tag = 'scoped memory for tpu_custom_call.1']
    #allocation10 [shape = 'u8[65536]{0}', space=vmem, size = 0x10000, scoped, tag = 'input window, operand 4, single buffered']
    #allocation11 [shape = 'u8[65536]{0}', space=vmem, size = 0x10000, scoped, tag = 'input window, operand 6, single buffered']
    #allocation12 [shape = 's32[1]{0}', space=sflag, size = 0x4, scoped, tag = 'scoped memory for tpu_custom_call.1']
    #allocation13 [shape = 'u8[65536]{0}', space=vmem, size = 0x10000, scoped, tag = 'input window, operand 8, single buffered']
    #allocation14 [shape = 'u8[32768]{0}', space=vmem, size = 0x8000, scoped, tag = 'input window, operand 10, single buffered']
    #allocation15 [shape = 's32[1]{0}', space=sflag, size = 0x4, scoped, tag = 'scoped memory for tpu_custom_call.1']
    #allocation16 [shape = 'u8[32768]{0}', space=vmem, size = 0x8000, scoped, tag = 'input window, operand 12, single buffered']
    #allocation17 [shape = 'u8[32768]{0}', space=vmem, size = 0x8000, scoped, tag = 'input window, operand 14, single buffered']
    #allocation18 [shape = 's32[1]{0}', space=sflag, size = 0x4, scoped, tag = 'scoped memory for tpu_custom_call.1']
    #allocation19 [shape = 'u8[32768]{0}', space=vmem, size = 0x8000, scoped, tag = 'input window, operand 16, single buffered']
    #allocation20 [shape = 'u8[131072]{0}', space=vmem, size = 0x20000, scoped, tag = 'output window, operand 0']
    %27 = vsyncpa [#allocation3], 0
    %s28 = scalar_lea.sflag [#allocation3], 1
    %29 = vsyncpa %s28, 0
    %30 = vsyncpa [#allocation6], 0
    %s31 = scalar_lea.sflag [#allocation6], 1
    %32 = vsyncpa %s31, 0
    %33 = vsyncpa [#allocation9], 0
    %s34 = scalar_lea.sflag [#allocation9], 1
    %35 = vsyncpa %s34, 0
    %36 = vsyncpa [#allocation12], 0
    %37 = vsyncpa [#allocation15], 0
    %38 = vsyncpa [#allocation18], 0
    %39 = vsyncpa [#allocation4], 0
    %s40 = scalar_lea.sflag [#allocation4], 1
    %41 = vsyncpa %s40, 0
    loop: start=0, step=1, limit=4
    $region2: #{tpu_custom_call.1} parent=1 // loop_pre_header
      _
    $region3: #{tpu_custom_call.1} parent=1 // loop_header
      %s43 = sphi 0, %s47
      %p44 = scmp.ge.s32.totalorder %s43, 4
      %s53 = sphi 0, %s55
      %s56 = sphi 0, %s53
      %s57 = sphi 0, %s56
      %s73 = sphi 0, %s57
      %s79 = sphi 0, %s81
      %s82 = sphi 0, %s79
      %s83 = sphi 0, %s82
      %s99 = sphi 0, %s83
      %s105 = sphi 0, %s107
      %s108 = sphi 0, %s105
      %s109 = sphi 0, %s108
      %s125 = sphi 0, %s109
      %s131 = sphi 0, %s133
      %s134 = sphi 0, %s131
      %s135 = sphi 0, %s134
      %s151 = sphi 0, %s135
      %s155 = sphi 0, %s155
      %s157 = sphi 0, %s155
      %s158 = sphi 0, %s157
      %s172 = sphi 0, %s158
      %s176 = sphi 0, %s176
      %s178 = sphi 0, %s176
      %s179 = sphi 0, %s178
      %s193 = sphi 0, %s179
      %s197 = sphi 0, %s197
      %s199 = sphi 0, %s197
      %s200 = sphi 0, %s199
      %s214 = sphi 0, %s200
      %s218 = sphi 0, %s218
      %s220 = sphi 0, %s218
      %s221 = sphi 0, %s220
      %s235 = sphi 0, %s221
      %s239 = sphi 0, %s239
      %s241 = sphi 0, %s239
      %s242 = sphi 0, %s241
      %s256 = sphi 0, %s242
      %s260 = sphi 0, %s260
      %s262 = sphi 0, %s260
      %s263 = sphi 0, %s262
      %s277 = sphi 0, %s263
      %s281 = sphi 0, %s281
      %s283 = sphi 0, %s281
      %s284 = sphi 0, %s283
      %s298 = sphi 0, %s284
      %s302 = sphi 0, %s302
      %s304 = sphi 0, %s302
      %s305 = sphi 0, %s304
      %s319 = sphi 0, %s305
      %s323 = sphi 0, %s323
      %s325 = sphi 0, %s323
      %s326 = sphi 0, %s325
      %s340 = sphi 0, %s326
      %s344 = sphi 0, %s344
      %s346 = sphi 0, %s344
      %s347 = sphi 0, %s346
      %s361 = sphi 0, %s347
      %s365 = sphi 0, %s365
      %s367 = sphi 0, %s365
      %s368 = sphi 0, %s367
      %s382 = sphi 0, %s368
      %s386 = sphi 0, %s386
      %s388 = sphi 0, %s386
      %s389 = sphi 0, %s388
      %s403 = sphi 0, %s389
      %s407 = sphi 0, %s407
      %s409 = sphi 0, %s407
      %s410 = sphi 0, %s409
      %s424 = sphi 0, %s410
      %s428 = sphi 0, %s428
      %s430 = sphi 0, %s428
      %s431 = sphi 0, %s430
      %s445 = sphi 0, %s431
      %s449 = sphi 0, %s449
      %s451 = sphi 0, %s449
      %s452 = sphi 0, %s451
      %s466 = sphi 0, %s452
      %s470 = sphi 0, %s470
      %s472 = sphi 0, %s470
      %s473 = sphi 0, %s472
      %s487 = sphi 0, %s473
      %s491 = sphi 0, %s491
      %s493 = sphi 0, %s491
      %s494 = sphi 0, %s493
      %s508 = sphi 0, %s494
      %s512 = sphi 0, %s512
      %s514 = sphi 0, %s512
      %s515 = sphi 0, %s514
      %s529 = sphi 0, %s515
      %s535 = sphi 0, %s537
      %s538 = sphi 0, %s535
      %s539 = sphi 0, %s538
      %s555 = sphi 0, %s539
    $region4: #{tpu_custom_call.1} parent=1 // loop_header_branch
      %46 = sbr.rel (%p44) target = $region8
    $region5: #{tpu_custom_call.1} parent=1 // loop_body
      %s48 = ssub.s32 %s43, 1
      %s49 = ssub.s32 %s43, 2
      %s50 = sadd.s32 %s43, 1
      %s51 = ssub.s32 %s43, %s50
      %p52 = scmp.eq.s32.totalorder %s51, 0
      %s54 = sadd.s32 %s53, 1
      %s55 = scalar_select %p52, %s53, %s54
      %p58 = pneg %p52
      %p59 = scmp.eq.s32.totalorder %s43, 1
      %p60 = por %p58, %p59
      %p61 = scmp.ne.s32.totalorder %s53, %s56
      %p62 = scmp.eq.s32.totalorder %s43, 0
      %p63 = por %p61, %p62
      %p64 = scmp.ne.s32.totalorder %s53, %s56
      %p65 = scmp.eq.s32.totalorder %s48, 1
      %p66 = por %p64, %p65
      %p67 = scmp.ne.s32.totalorder %s56, %s57
      %p68 = scmp.eq.s32.totalorder %s48, 0
      %p69 = por %p67, %p68
      %p70 = scmp.ne.s32.totalorder %s56, %s57
      %p71 = scmp.eq.s32.totalorder %s49, 1
      %p72 = por %p70, %p71
      %p74 = scmp.ne.s32.totalorder %s57, %s73
      %p75 = scmp.eq.s32.totalorder %s49, 0
      %p76 = por %p74, %p75
      %s77 = ssub.s32 %s43, %s50
      %p78 = scmp.eq.s32.totalorder %s77, 0
      %s80 = sadd.s32 %s79, 1
      %s81 = scalar_select %p78, %s79, %s80
      %p84 = pneg %p78
      %p85 = scmp.eq.s32.totalorder %s43, 1
      %p86 = por %p84, %p85
      %p87 = scmp.ne.s32.totalorder %s79, %s82
      %p88 = scmp.eq.s32.totalorder %s43, 0
      %p89 = por %p87, %p88
      %p90 = scmp.ne.s32.totalorder %s79, %s82
      %p91 = scmp.eq.s32.totalorder %s48, 1
      %p92 = por %p90, %p91
      %p93 = scmp.ne.s32.totalorder %s82, %s83
      %p94 = scmp.eq.s32.totalorder %s48, 0
      %p95 = por %p93, %p94
      %p96 = scmp.ne.s32.totalorder %s82, %s83
      %p97 = scmp.eq.s32.totalorder %s49, 1
      %p98 = por %p96, %p97
      %p100 = scmp.ne.s32.totalorder %s83, %s99
      %p101 = scmp.eq.s32.totalorder %s49, 0
      %p102 = por %p100, %p101
      %s103 = ssub.s32 %s43, %s50
      %p104 = scmp.eq.s32.totalorder %s103, 0
      %s106 = sadd.s32 %s105, 1
      %s107 = scalar_select %p104, %s105, %s106
      %p110 = pneg %p104
      %p111 = scmp.eq.s32.totalorder %s43, 1
      %p112 = por %p110, %p111
      %p113 = scmp.ne.s32.totalorder %s105, %s108
      %p114 = scmp.eq.s32.totalorder %s43, 0
      %p115 = por %p113, %p114
      %p116 = scmp.ne.s32.totalorder %s105, %s108
      %p117 = scmp.eq.s32.totalorder %s48, 1
      %p118 = por %p116, %p117
      %p119 = scmp.ne.s32.totalorder %s108, %s109
      %p120 = scmp.eq.s32.totalorder %s48, 0
      %p121 = por %p119, %p120
      %p122 = scmp.ne.s32.totalorder %s108, %s109
      %p123 = scmp.eq.s32.totalorder %s49, 1
      %p124 = por %p122, %p123
      %p126 = scmp.ne.s32.totalorder %s109, %s125
      %p127 = scmp.eq.s32.totalorder %s49, 0
      %p128 = por %p126, %p127
      %s129 = ssub.s32 %s43, %s50
      %p130 = scmp.eq.s32.totalorder %s129, 0
      %s132 = sadd.s32 %s131, 1
      %s133 = scalar_select %p130, %s131, %s132
      %p136 = pneg %p130
      %p137 = scmp.eq.s32.totalorder %s43, 1
      %p138 = por %p136, %p137
      %p139 = scmp.ne.s32.totalorder %s131, %s134
      %p140 = scmp.eq.s32.totalorder %s43, 0
      %p141 = por %p139, %p140
      %p142 = scmp.ne.s32.totalorder %s131, %s134
      %p143 = scmp.eq.s32.totalorder %s48, 1
      %p144 = por %p142, %p143
      %p145 = scmp.ne.s32.totalorder %s134, %s135
      %p146 = scmp.eq.s32.totalorder %s48, 0
      %p147 = por %p145, %p146
      %p148 = scmp.ne.s32.totalorder %s134, %s135
      %p149 = scmp.eq.s32.totalorder %s49, 1
      %p150 = por %p148, %p149
      %p152 = scmp.ne.s32.totalorder %s135, %s151
      %p153 = scmp.eq.s32.totalorder %s49, 0
      %p154 = por %p152, %p153
      %s156 = sadd.s32 %s155, 1
      %p159 = scmp.eq.s32.totalorder %s43, 1
      %p160 = scmp.ne.s32.totalorder %s155, %s157
      %p161 = scmp.eq.s32.totalorder %s43, 0
      %p162 = por %p160, %p161
      %p163 = scmp.ne.s32.totalorder %s155, %s157
      %p164 = scmp.eq.s32.totalorder %s48, 1
      %p165 = por %p163, %p164
      %p166 = scmp.ne.s32.totalorder %s157, %s158
      %p167 = scmp.eq.s32.totalorder %s48, 0
      %p168 = por %p166, %p167
      %p169 = scmp.ne.s32.totalorder %s157, %s158
      %p170 = scmp.eq.s32.totalorder %s49, 1
      %p171 = por %p169, %p170
      %p173 = scmp.ne.s32.totalorder %s158, %s172
      %p174 = scmp.eq.s32.totalorder %s49, 0
      %p175 = por %p173, %p174
      %s177 = sadd.s32 %s176, 1
      %p180 = scmp.eq.s32.totalorder %s43, 1
      %p181 = scmp.ne.s32.totalorder %s176, %s178
      %p182 = scmp.eq.s32.totalorder %s43, 0
      %p183 = por %p181, %p182
      %p184 = scmp.ne.s32.totalorder %s176, %s178
      %p185 = scmp.eq.s32.totalorder %s48, 1
      %p186 = por %p184, %p185
      %p187 = scmp.ne.s32.totalorder %s178, %s179
      %p188 = scmp.eq.s32.totalorder %s48, 0
      %p189 = por %p187, %p188
      %p190 = scmp.ne.s32.totalorder %s178, %s179
      %p191 = scmp.eq.s32.totalorder %s49, 1
      %p192 = por %p190, %p191
      %p194 = scmp.ne.s32.totalorder %s179, %s193
      %p195 = scmp.eq.s32.totalorder %s49, 0
      %p196 = por %p194, %p195
      %s198 = sadd.s32 %s197, 1
      %p201 = scmp.eq.s32.totalorder %s43, 1
      %p202 = scmp.ne.s32.totalorder %s197, %s199
      %p203 = scmp.eq.s32.totalorder %s43, 0
      %p204 = por %p202, %p203
      %p205 = scmp.ne.s32.totalorder %s197, %s199
      %p206 = scmp.eq.s32.totalorder %s48, 1
      %p207 = por %p205, %p206
      %p208 = scmp.ne.s32.totalorder %s199, %s200
      %p209 = scmp.eq.s32.totalorder %s48, 0
      %p210 = por %p208, %p209
      %p211 = scmp.ne.s32.totalorder %s199, %s200
      %p212 = scmp.eq.s32.totalorder %s49, 1
      %p213 = por %p211, %p212
      %p215 = scmp.ne.s32.totalorder %s200, %s214
      %p216 = scmp.eq.s32.totalorder %s49, 0
      %p217 = por %p215, %p216
      %s219 = sadd.s32 %s218, 1
      %p222 = scmp.eq.s32.totalorder %s43, 1
      %p223 = scmp.ne.s32.totalorder %s218, %s220
      %p224 = scmp.eq.s32.totalorder %s43, 0
      %p225 = por %p223, %p224
      %p226 = scmp.ne.s32.totalorder %s218, %s220
      %p227 = scmp.eq.s32.totalorder %s48, 1
      %p228 = por %p226, %p227
      %p229 = scmp.ne.s32.totalorder %s220, %s221
      %p230 = scmp.eq.s32.totalorder %s48, 0
      %p231 = por %p229, %p230
      %p232 = scmp.ne.s32.totalorder %s220, %s221
      %p233 = scmp.eq.s32.totalorder %s49, 1
      %p234 = por %p232, %p233
      %p236 = scmp.ne.s32.totalorder %s221, %s235
      %p237 = scmp.eq.s32.totalorder %s49, 0
      %p238 = por %p236, %p237
      %s240 = sadd.s32 %s239, 1
      %p243 = scmp.eq.s32.totalorder %s43, 1
      %p244 = scmp.ne.s32.totalorder %s239, %s241
      %p245 = scmp.eq.s32.totalorder %s43, 0
      %p246 = por %p244, %p245
      %p247 = scmp.ne.s32.totalorder %s239, %s241
      %p248 = scmp.eq.s32.totalorder %s48, 1
      %p249 = por %p247, %p248
      %p250 = scmp.ne.s32.totalorder %s241, %s242
      %p251 = scmp.eq.s32.totalorder %s48, 0
      %p252 = por %p250, %p251
      %p253 = scmp.ne.s32.totalorder %s241, %s242
      %p254 = scmp.eq.s32.totalorder %s49, 1
      %p255 = por %p253, %p254
      %p257 = scmp.ne.s32.totalorder %s242, %s256
      %p258 = scmp.eq.s32.totalorder %s49, 0
      %p259 = por %p257, %p258
      %s261 = sadd.s32 %s260, 1
      %p264 = scmp.eq.s32.totalorder %s43, 1
      %p265 = scmp.ne.s32.totalorder %s260, %s262
      %p266 = scmp.eq.s32.totalorder %s43, 0
      %p267 = por %p265, %p266
      %p268 = scmp.ne.s32.totalorder %s260, %s262
      %p269 = scmp.eq.s32.totalorder %s48, 1
      %p270 = por %p268, %p269
      %p271 = scmp.ne.s32.totalorder %s262, %s263
      %p272 = scmp.eq.s32.totalorder %s48, 0
      %p273 = por %p271, %p272
      %p274 = scmp.ne.s32.totalorder %s262, %s263
      %p275 = scmp.eq.s32.totalorder %s49, 1
      %p276 = por %p274, %p275
      %p278 = scmp.ne.s32.totalorder %s263, %s277
      %p279 = scmp.eq.s32.totalorder %s49, 0
      %p280 = por %p278, %p279
      %s282 = sadd.s32 %s281, 1
      %p285 = scmp.eq.s32.totalorder %s43, 1
      %p286 = scmp.ne.s32.totalorder %s281, %s283
      %p287 = scmp.eq.s32.totalorder %s43, 0
      %p288 = por %p286, %p287
      %p289 = scmp.ne.s32.totalorder %s281, %s283
      %p290 = scmp.eq.s32.totalorder %s48, 1
      %p291 = por %p289, %p290
      %p292 = scmp.ne.s32.totalorder %s283, %s284
      %p293 = scmp.eq.s32.totalorder %s48, 0
      %p294 = por %p292, %p293
      %p295 = scmp.ne.s32.totalorder %s283, %s284
      %p296 = scmp.eq.s32.totalorder %s49, 1
      %p297 = por %p295, %p296
      %p299 = scmp.ne.s32.totalorder %s284, %s298
      %p300 = scmp.eq.s32.totalorder %s49, 0
      %p301 = por %p299, %p300
      %s303 = sadd.s32 %s302, 1
      %p306 = scmp.eq.s32.totalorder %s43, 1
      %p307 = scmp.ne.s32.totalorder %s302, %s304
      %p308 = scmp.eq.s32.totalorder %s43, 0
      %p309 = por %p307, %p308
      %p310 = scmp.ne.s32.totalorder %s302, %s304
      %p311 = scmp.eq.s32.totalorder %s48, 1
      %p312 = por %p310, %p311
      %p313 = scmp.ne.s32.totalorder %s304, %s305
      %p314 = scmp.eq.s32.totalorder %s48, 0
      %p315 = por %p313, %p314
      %p316 = scmp.ne.s32.totalorder %s304, %s305
      %p317 = scmp.eq.s32.totalorder %s49, 1
      %p318 = por %p316, %p317
      %p320 = scmp.ne.s32.totalorder %s305, %s319
      %p321 = scmp.eq.s32.totalorder %s49, 0
      %p322 = por %p320, %p321
      %s324 = sadd.s32 %s323, 1
      %p327 = scmp.eq.s32.totalorder %s43, 1
      %p328 = scmp.ne.s32.totalorder %s323, %s325
      %p329 = scmp.eq.s32.totalorder %s43, 0
      %p330 = por %p328, %p329
      %p331 = scmp.ne.s32.totalorder %s323, %s325
      %p332 = scmp.eq.s32.totalorder %s48, 1
      %p333 = por %p331, %p332
      %p334 = scmp.ne.s32.totalorder %s325, %s326
      %p335 = scmp.eq.s32.totalorder %s48, 0
      %p336 = por %p334, %p335
      %p337 = scmp.ne.s32.totalorder %s325, %s326
      %p338 = scmp.eq.s32.totalorder %s49, 1
      %p339 = por %p337, %p338
      %p341 = scmp.ne.s32.totalorder %s326, %s340
      %p342 = scmp.eq.s32.totalorder %s49, 0
      %p343 = por %p341, %p342
      %s345 = sadd.s32 %s344, 1
      %p348 = scmp.eq.s32.totalorder %s43, 1
      %p349 = scmp.ne.s32.totalorder %s344, %s346
      %p350 = scmp.eq.s32.totalorder %s43, 0
      %p351 = por %p349, %p350
      %p352 = scmp.ne.s32.totalorder %s344, %s346
      %p353 = scmp.eq.s32.totalorder %s48, 1
      %p354 = por %p352, %p353
      %p355 = scmp.ne.s32.totalorder %s346, %s347
      %p356 = scmp.eq.s32.totalorder %s48, 0
      %p357 = por %p355, %p356
      %p358 = scmp.ne.s32.totalorder %s346, %s347
      %p359 = scmp.eq.s32.totalorder %s49, 1
      %p360 = por %p358, %p359
      %p362 = scmp.ne.s32.totalorder %s347, %s361
      %p363 = scmp.eq.s32.totalorder %s49, 0
      %p364 = por %p362, %p363
      %s366 = sadd.s32 %s365, 1
      %p369 = scmp.eq.s32.totalorder %s43, 1
      %p370 = scmp.ne.s32.totalorder %s365, %s367
      %p371 = scmp.eq.s32.totalorder %s43, 0
      %p372 = por %p370, %p371
      %p373 = scmp.ne.s32.totalorder %s365, %s367
      %p374 = scmp.eq.s32.totalorder %s48, 1
      %p375 = por %p373, %p374
      %p376 = scmp.ne.s32.totalorder %s367, %s368
      %p377 = scmp.eq.s32.totalorder %s48, 0
      %p378 = por %p376, %p377
      %p379 = scmp.ne.s32.totalorder %s367, %s368
      %p380 = scmp.eq.s32.totalorder %s49, 1
      %p381 = por %p379, %p380
      %p383 = scmp.ne.s32.totalorder %s368, %s382
      %p384 = scmp.eq.s32.totalorder %s49, 0
      %p385 = por %p383, %p384
      %s387 = sadd.s32 %s386, 1
      %p390 = scmp.eq.s32.totalorder %s43, 1
      %p391 = scmp.ne.s32.totalorder %s386, %s388
      %p392 = scmp.eq.s32.totalorder %s43, 0
      %p393 = por %p391, %p392
      %p394 = scmp.ne.s32.totalorder %s386, %s388
      %p395 = scmp.eq.s32.totalorder %s48, 1
      %p396 = por %p394, %p395
      %p397 = scmp.ne.s32.totalorder %s388, %s389
      %p398 = scmp.eq.s32.totalorder %s48, 0
      %p399 = por %p397, %p398
      %p400 = scmp.ne.s32.totalorder %s388, %s389
      %p401 = scmp.eq.s32.totalorder %s49, 1
      %p402 = por %p400, %p401
      %p404 = scmp.ne.s32.totalorder %s389, %s403
      %p405 = scmp.eq.s32.totalorder %s49, 0
      %p406 = por %p404, %p405
      %s408 = sadd.s32 %s407, 1
      %p411 = scmp.eq.s32.totalorder %s43, 1
      %p412 = scmp.ne.s32.totalorder %s407, %s409
      %p413 = scmp.eq.s32.totalorder %s43, 0
      %p414 = por %p412, %p413
      %p415 = scmp.ne.s32.totalorder %s407, %s409
      %p416 = scmp.eq.s32.totalorder %s48, 1
      %p417 = por %p415, %p416
      %p418 = scmp.ne.s32.totalorder %s409, %s410
      %p419 = scmp.eq.s32.totalorder %s48, 0
      %p420 = por %p418, %p419
      %p421 = scmp.ne.s32.totalorder %s409, %s410
      %p422 = scmp.eq.s32.totalorder %s49, 1
      %p423 = por %p421, %p422
      %p425 = scmp.ne.s32.totalorder %s410, %s424
      %p426 = scmp.eq.s32.totalorder %s49, 0
      %p427 = por %p425, %p426
      %s429 = sadd.s32 %s428, 1
      %p432 = scmp.eq.s32.totalorder %s43, 1
      %p433 = scmp.ne.s32.totalorder %s428, %s430
      %p434 = scmp.eq.s32.totalorder %s43, 0
      %p435 = por %p433, %p434
      %p436 = scmp.ne.s32.totalorder %s428, %s430
      %p437 = scmp.eq.s32.totalorder %s48, 1
      %p438 = por %p436, %p437
      %p439 = scmp.ne.s32.totalorder %s430, %s431
      %p440 = scmp.eq.s32.totalorder %s48, 0
      %p441 = por %p439, %p440
      %p442 = scmp.ne.s32.totalorder %s430, %s431
      %p443 = scmp.eq.s32.totalorder %s49, 1
      %p444 = por %p442, %p443
      %p446 = scmp.ne.s32.totalorder %s431, %s445
      %p447 = scmp.eq.s32.totalorder %s49, 0
      %p448 = por %p446, %p447
      %s450 = sadd.s32 %s449, 1
      %p453 = scmp.eq.s32.totalorder %s43, 1
      %p454 = scmp.ne.s32.totalorder %s449, %s451
      %p455 = scmp.eq.s32.totalorder %s43, 0
      %p456 = por %p454, %p455
      %p457 = scmp.ne.s32.totalorder %s449, %s451
      %p458 = scmp.eq.s32.totalorder %s48, 1
      %p459 = por %p457, %p458
      %p460 = scmp.ne.s32.totalorder %s451, %s452
      %p461 = scmp.eq.s32.totalorder %s48, 0
      %p462 = por %p460, %p461
      %p463 = scmp.ne.s32.totalorder %s451, %s452
      %p464 = scmp.eq.s32.totalorder %s49, 1
      %p465 = por %p463, %p464
      %p467 = scmp.ne.s32.totalorder %s452, %s466
      %p468 = scmp.eq.s32.totalorder %s49, 0
      %p469 = por %p467, %p468
      %s471 = sadd.s32 %s470, 1
      %p474 = scmp.eq.s32.totalorder %s43, 1
      %p475 = scmp.ne.s32.totalorder %s470, %s472
      %p476 = scmp.eq.s32.totalorder %s43, 0
      %p477 = por %p475, %p476
      %p478 = scmp.ne.s32.totalorder %s470, %s472
      %p479 = scmp.eq.s32.totalorder %s48, 1
      %p480 = por %p478, %p479
      %p481 = scmp.ne.s32.totalorder %s472, %s473
      %p482 = scmp.eq.s32.totalorder %s48, 0
      %p483 = por %p481, %p482
      %p484 = scmp.ne.s32.totalorder %s472, %s473
      %p485 = scmp.eq.s32.totalorder %s49, 1
      %p486 = por %p484, %p485
      %p488 = scmp.ne.s32.totalorder %s473, %s487
      %p489 = scmp.eq.s32.totalorder %s49, 0
      %p490 = por %p488, %p489
      %s492 = sadd.s32 %s491, 1
      %p495 = scmp.eq.s32.totalorder %s43, 1
      %p496 = scmp.ne.s32.totalorder %s491, %s493
      %p497 = scmp.eq.s32.totalorder %s43, 0
      %p498 = por %p496, %p497
      %p499 = scmp.ne.s32.totalorder %s491, %s493
      %p500 = scmp.eq.s32.totalorder %s48, 1
      %p501 = por %p499, %p500
      %p502 = scmp.ne.s32.totalorder %s493, %s494
      %p503 = scmp.eq.s32.totalorder %s48, 0
      %p504 = por %p502, %p503
      %p505 = scmp.ne.s32.totalorder %s493, %s494
      %p506 = scmp.eq.s32.totalorder %s49, 1
      %p507 = por %p505, %p506
      %p509 = scmp.ne.s32.totalorder %s494, %s508
      %p510 = scmp.eq.s32.totalorder %s49, 0
      %p511 = por %p509, %p510
      %s513 = sadd.s32 %s512, 1
      %p516 = scmp.eq.s32.totalorder %s43, 1
      %p517 = scmp.ne.s32.totalorder %s512, %s514
      %p518 = scmp.eq.s32.totalorder %s43, 0
      %p519 = por %p517, %p518
      %p520 = scmp.ne.s32.totalorder %s512, %s514
      %p521 = scmp.eq.s32.totalorder %s48, 1
      %p522 = por %p520, %p521
      %p523 = scmp.ne.s32.totalorder %s514, %s515
      %p524 = scmp.eq.s32.totalorder %s48, 0
      %p525 = por %p523, %p524
      %p526 = scmp.ne.s32.totalorder %s514, %s515
      %p527 = scmp.eq.s32.totalorder %s49, 1
      %p528 = por %p526, %p527
      %p530 = scmp.ne.s32.totalorder %s515, %s529
      %p531 = scmp.eq.s32.totalorder %s49, 0
      %p532 = por %p530, %p531
      %s533 = ssub.s32 %s43, %s50
      %p534 = scmp.eq.s32.totalorder %s533, 0
      %s536 = sadd.s32 %s535, 1
      %s537 = scalar_select %p534, %s535, %s536
      %p540 = pneg %p534
      %p541 = scmp.eq.s32.totalorder %s43, 1
      %p542 = por %p540, %p541
      %p543 = scmp.ne.s32.totalorder %s535, %s538
      %p544 = scmp.eq.s32.totalorder %s43, 0
      %p545 = por %p543, %p544
      %p546 = scmp.ne.s32.totalorder %s535, %s538
      %p547 = scmp.eq.s32.totalorder %s48, 1
      %p548 = por %p546, %p547
      %p549 = scmp.ne.s32.totalorder %s538, %s539
      %p550 = scmp.eq.s32.totalorder %s48, 0
      %p551 = por %p549, %p550
      %p552 = scmp.ne.s32.totalorder %s538, %s539
      %p553 = scmp.eq.s32.totalorder %s49, 1
      %p554 = por %p552, %p553
      %p556 = scmp.ne.s32.totalorder %s539, %s555
      %p557 = scmp.eq.s32.totalorder %s49, 0
      %p558 = por %p556, %p557
      %p559 = scmp.le.s32.totalorder 1, %s43
      %p560 = scmp.lt.s32.totalorder %s43, 3
      %p561 = pnand %p559, %p560
      %p562 = pneg %p561
      // Predicated region
      $region9: #{tpu_custom_call.1} parent=5 // pred_check
        _
      $region10: #{tpu_custom_call.1} parent=5 // pred_check_branch
        %564 = sbr.rel (%p561) target = $region12
      $region11: #{tpu_custom_call.1} parent=5 // pred_region
        %s565 = ssub.s32 %s43, 1
        // Predicated region
        $region13: #{tpu_custom_call.1} parent=11 // pred_check
          %p566 = pneg %p168
        $region14: #{tpu_custom_call.1} parent=11 // pred_check_branch
          %568 = sbr.rel (%p566) target = $region16
        $region15: #{tpu_custom_call.1} parent=11 // pred_region
          %570 = vsyncadd [#allocation9], 0
          %s571 = sshll.u32 %s4, 4
          %s572 = int_to_ptr.hbm [resolvable:$true] %s571
          %s573 = sshll.u32 [#allocation10], 4
          %s574 = int_to_ptr.vmem [resolvable:$true] %s573
          %579 = dma.hbm_to_vmem [thread:$0]  %s572, 2048, %s574, [#allocation9], 64, 64, 4
        $region16: #{tpu_custom_call.1} parent=11 // pred_fallthru
          _
        // Predicated region
        $region17: #{tpu_custom_call.1} parent=11 // pred_check
          %p580 = pneg %p189
        $region18: #{tpu_custom_call.1} parent=11 // pred_check_branch
          %582 = sbr.rel (%p580) target = $region20
        $region19: #{tpu_custom_call.1} parent=11 // pred_region
          _
        $region20: #{tpu_custom_call.1} parent=11 // pred_fallthru
          _
        // Predicated region
        $region21: #{tpu_custom_call.1} parent=11 // pred_check
          %p583 = pneg %p210
        $region22: #{tpu_custom_call.1} parent=11 // pred_check_branch
          %585 = sbr.rel (%p583) target = $region24
        $region23: #{tpu_custom_call.1} parent=11 // pred_region
          %587 = vsyncadd [#allocation12], 0
          %s588 = sshll.u32 %s6, 4
          %s589 = int_to_ptr.hbm [resolvable:$true] %s588
          %s590 = sshll.u32 [#allocation11], 4
          %s591 = int_to_ptr.vmem [resolvable:$true] %s590
          %596 = dma.hbm_to_vmem [thread:$0]  %s589, 2048, %s591, [#allocation12], 64, 64, 4
        $region24: #{tpu_custom_call.1} parent=11 // pred_fallthru
          _
        // Predicated region
        $region25: #{tpu_custom_call.1} parent=11 // pred_check
          %p597 = pneg %p231
        $region26: #{tpu_custom_call.1} parent=11 // pred_check_branch
          %599 = sbr.rel (%p597) target = $region28
        $region27: #{tpu_custom_call.1} parent=11 // pred_region
          _
        $region28: #{tpu_custom_call.1} parent=11 // pred_fallthru
          _
        // Predicated region
        $region29: #{tpu_custom_call.1} parent=11 // pred_check
          %p600 = pneg %p252
        $region30: #{tpu_custom_call.1} parent=11 // pred_check_branch
          %602 = sbr.rel (%p600) target = $region32
        $region31: #{tpu_custom_call.1} parent=11 // pred_region
          %604 = vsyncadd [#allocation12], 0
          %s605 = sshll.u32 %s8, 4
          %s606 = int_to_ptr.hbm [resolvable:$true] %s605
          %s607 = sshll.u32 [#allocation13], 4
          %s608 = int_to_ptr.vmem [resolvable:$true] %s607
          %613 = dma.hbm_to_vmem [thread:$0]  %s606, 2048, %s608, [#allocation12], 64, 64, 4
        $region32: #{tpu_custom_call.1} parent=11 // pred_fallthru
          _
        // Predicated region
        $region33: #{tpu_custom_call.1} parent=11 // pred_check
          %p614 = pneg %p273
        $region34: #{tpu_custom_call.1} parent=11 // pred_check_branch
          %616 = sbr.rel (%p614) target = $region36
        $region35: #{tpu_custom_call.1} parent=11 // pred_region
          _
        $region36: #{tpu_custom_call.1} parent=11 // pred_fallthru
          _
        // Predicated region
        $region37: #{tpu_custom_call.1} parent=11 // pred_check
          %p617 = pneg %p294
        $region38: #{tpu_custom_call.1} parent=11 // pred_check_branch
          %619 = sbr.rel (%p617) target = $region40
        $region39: #{tpu_custom_call.1} parent=11 // pred_region
          %621 = vsyncadd [#allocation15], 0
          %s622 = sshll.u32 %s10, 4
          %s623 = int_to_ptr.hbm [resolvable:$true] %s622
          %s624 = sshll.u32 [#allocation14], 4
          %s625 = int_to_ptr.vmem [resolvable:$true] %s624
          %630 = dma.hbm_to_vmem [thread:$0]  %s623, 1024, %s625, [#allocation15], 64, 64, 4
        $region40: #{tpu_custom_call.1} parent=11 // pred_fallthru
          _
        // Predicated region
        $region41: #{tpu_custom_call.1} parent=11 // pred_check
          %p631 = pneg %p315
        $region42: #{tpu_custom_call.1} parent=11 // pred_check_branch
          %633 = sbr.rel (%p631) target = $region44
        $region43: #{tpu_custom_call.1} parent=11 // pred_region
          _
        $region44: #{tpu_custom_call.1} parent=11 // pred_fallthru
          _
        // Predicated region
        $region45: #{tpu_custom_call.1} parent=11 // pred_check
          %p634 = pneg %p336
        $region46: #{tpu_custom_call.1} parent=11 // pred_check_branch
          %636 = sbr.rel (%p634) target = $region48
        $region47: #{tpu_custom_call.1} parent=11 // pred_region
          %638 = vsyncadd [#allocation15], 0
          %s639 = sshll.u32 %s12, 4
          %s640 = int_to_ptr.hbm [resolvable:$true] %s639
          %s641 = sshll.u32 [#allocation16], 4
          %s642 = int_to_ptr.vmem [resolvable:$true] %s641
          %647 = dma.hbm_to_vmem [thread:$0]  %s640, 1024, %s642, [#allocation15], 64, 64, 4
        $region48: #{tpu_custom_call.1} parent=11 // pred_fallthru
          _
        // Predicated region
        $region49: #{tpu_custom_call.1} parent=11 // pred_check
          %p648 = pneg %p357
        $region50: #{tpu_custom_call.1} parent=11 // pred_check_branch
          %650 = sbr.rel (%p648) target = $region52
        $region51: #{tpu_custom_call.1} parent=11 // pred_region
          _
        $region52: #{tpu_custom_call.1} parent=11 // pred_fallthru
          _
        // Predicated region
        $region53: #{tpu_custom_call.1} parent=11 // pred_check
          %p651 = pneg %p378
        $region54: #{tpu_custom_call.1} parent=11 // pred_check_branch
          %653 = sbr.rel (%p651) target = $region56
        $region55: #{tpu_custom_call.1} parent=11 // pred_region
          %655 = vsyncadd [#allocation18], 0
          %s656 = sshll.u32 %s14, 4
          %s657 = int_to_ptr.hbm [resolvable:$true] %s656
          %s658 = sshll.u32 [#allocation17], 4
          %s659 = int_to_ptr.vmem [resolvable:$true] %s658
          %664 = dma.hbm_to_vmem [thread:$0]  %s657, 1024, %s659, [#allocation18], 64, 64, 4
        $region56: #{tpu_custom_call.1} parent=11 // pred_fallthru
          _
        // Predicated region
        $region57: #{tpu_custom_call.1} parent=11 // pred_check
          %p665 = pneg %p399
        $region58: #{tpu_custom_call.1} parent=11 // pred_check_branch
          %667 = sbr.rel (%p665) target = $region60
        $region59: #{tpu_custom_call.1} parent=11 // pred_region
          _
        $region60: #{tpu_custom_call.1} parent=11 // pred_fallthru
          _
        // Predicated region
        $region61: #{tpu_custom_call.1} parent=11 // pred_check
          %p668 = pneg %p420
        $region62: #{tpu_custom_call.1} parent=11 // pred_check_branch
          %670 = sbr.rel (%p668) target = $region64
        $region63: #{tpu_custom_call.1} parent=11 // pred_region
          %672 = vsyncadd [#allocation18], 0
          %s673 = sshll.u32 %s16, 4
          %s674 = int_to_ptr.hbm [resolvable:$true] %s673
          %s675 = sshll.u32 [#allocation19], 4
          %s676 = int_to_ptr.vmem [resolvable:$true] %s675
          %681 = dma.hbm_to_vmem [thread:$0]  %s674, 1024, %s676, [#allocation18], 64, 64, 4
        $region64: #{tpu_custom_call.1} parent=11 // pred_fallthru
          _
        // Predicated region
        $region65: #{tpu_custom_call.1} parent=11 // pred_check
          %p682 = pneg %p441
        $region66: #{tpu_custom_call.1} parent=11 // pred_check_branch
          %684 = sbr.rel (%p682) target = $region68
        $region67: #{tpu_custom_call.1} parent=11 // pred_region
          _
        $region68: #{tpu_custom_call.1} parent=11 // pred_fallthru
          _
        // Predicated region
        $region69: #{tpu_custom_call.1} parent=11 // pred_check
          %p685 = pneg %p462
        $region70: #{tpu_custom_call.1} parent=11 // pred_check_branch
          %687 = sbr.rel (%p685) target = $region72
        $region71: #{tpu_custom_call.1} parent=11 // pred_region
          _
        $region72: #{tpu_custom_call.1} parent=11 // pred_fallthru
          _
        // Predicated region
        $region73: #{tpu_custom_call.1} parent=11 // pred_check
          %p688 = pneg %p483
        $region74: #{tpu_custom_call.1} parent=11 // pred_check_branch
          %690 = sbr.rel (%p688) target = $region76
        $region75: #{tpu_custom_call.1} parent=11 // pred_region
          _
        $region76: #{tpu_custom_call.1} parent=11 // pred_fallthru
          _
        // Predicated region
        $region77: #{tpu_custom_call.1} parent=11 // pred_check
          %p691 = pneg %p504
        $region78: #{tpu_custom_call.1} parent=11 // pred_check_branch
          %693 = sbr.rel (%p691) target = $region80
        $region79: #{tpu_custom_call.1} parent=11 // pred_region
          _
        $region80: #{tpu_custom_call.1} parent=11 // pred_fallthru
          _
        // Predicated region
        $region81: #{tpu_custom_call.1} parent=11 // pred_check
          %p694 = pneg %p525
        $region82: #{tpu_custom_call.1} parent=11 // pred_check_branch
          %696 = sbr.rel (%p694) target = $region84
        $region83: #{tpu_custom_call.1} parent=11 // pred_region
          _
        $region84: #{tpu_custom_call.1} parent=11 // pred_fallthru
          _
      $region12: #{tpu_custom_call.1} parent=5 // pred_fallthru
        _
      %p697 = scmp.lt.s32.totalorder %s43, 2
      // Predicated region
      $region85: #{tpu_custom_call.1} parent=5 // pred_check
        %p698 = pneg %p697
      $region86: #{tpu_custom_call.1} parent=5 // pred_check_branch
        %700 = sbr.rel (%p698) target = $region88
      $region87: #{tpu_custom_call.1} parent=5 // pred_region
        // Predicated region
        $region89: #{tpu_custom_call.1} parent=87 // pred_check
          %p701 = pneg %p63
        $region90: #{tpu_custom_call.1} parent=87 // pred_check_branch
          %703 = sbr.rel (%p701) target = $region92
        $region91: #{tpu_custom_call.1} parent=87 // pred_region
          %s704 = sand.u32 %s53, 1
          %s705 = scalar_lea.sflag [#allocation3], %s704
          %s706 = sand.u32 %s53, 1
          %s707 = smul.addr %s706, 128
          %s708 = scalar_lea.vmem [#allocation2], %s707
          %s709 = smul.u32 16, %s43
          %711 = vsyncadd %s705, 0
          %s712 = smul.addr %s709, 8
          %s713 = scalar_lea.hbm %s0, %s712
          %s714 = sshll.u32 %s713, 4
          %s715 = int_to_ptr.hbm [resolvable:$true] %s714
          %s716 = sshll.u32 %s708, 4
          %s717 = int_to_ptr.vmem [resolvable:$true] %s716
          %722 = dma.hbm_to_vmem [thread:$0]  %s715, 2048, %s717, %s705, 128, 128, 8
        $region92: #{tpu_custom_call.1} parent=87 // pred_fallthru
          _
        // Predicated region
        $region93: #{tpu_custom_call.1} parent=87 // pred_check
          %p723 = pneg %p89
        $region94: #{tpu_custom_call.1} parent=87 // pred_check_branch
          %725 = sbr.rel (%p723) target = $region96
        $region95: #{tpu_custom_call.1} parent=87 // pred_region
          %s726 = sand.u32 %s43, 1
          %s727 = scalar_lea.sflag [#allocation6], %s726
          %s728 = sand.u32 %s79, 1
          %s729 = smul.addr %s728, 128
          %s730 = scalar_lea.vmem [#allocation5], %s729
          %s731 = smul.u32 16, %s43
          %733 = vsyncadd %s727, 0
          %s734 = smul.addr %s731, 8
          %s735 = scalar_lea.hbm %s1, %s734
          %s736 = sshll.u32 %s735, 4
          %s737 = int_to_ptr.hbm [resolvable:$true] %s736
          %s738 = sshll.u32 %s730, 4
          %s739 = int_to_ptr.vmem [resolvable:$true] %s738
          %744 = dma.hbm_to_vmem [thread:$0]  %s737, 2048, %s739, %s727, 128, 128, 8
        $region96: #{tpu_custom_call.1} parent=87 // pred_fallthru
          _
        // Predicated region
        $region97: #{tpu_custom_call.1} parent=87 // pred_check
          %p745 = pneg %p115
        $region98: #{tpu_custom_call.1} parent=87 // pred_check_branch
          %747 = sbr.rel (%p745) target = $region100
        $region99: #{tpu_custom_call.1} parent=87 // pred_region
          %s748 = sand.u32 %s43, 1
          %s749 = scalar_lea.sflag [#allocation6], %s748
          %s750 = sand.u32 %s105, 1
          %s751 = smul.addr %s750, 128
          %s752 = scalar_lea.vmem [#allocation7], %s751
          %s753 = smul.u32 16, %s43
          %755 = vsyncadd %s749, 0
          %s756 = smul.addr %s753, 8
          %s757 = scalar_lea.hbm %s2, %s756
          %s758 = sshll.u32 %s757, 4
          %s759 = int_to_ptr.hbm [resolvable:$true] %s758
          %s760 = sshll.u32 %s752, 4
          %s761 = int_to_ptr.vmem [resolvable:$true] %s760
          %766 = dma.hbm_to_vmem [thread:$0]  %s759, 2048, %s761, %s749, 128, 128, 8
        $region100: #{tpu_custom_call.1} parent=87 // pred_fallthru
          _
        // Predicated region
        $region101: #{tpu_custom_call.1} parent=87 // pred_check
          %p767 = pneg %p141
        $region102: #{tpu_custom_call.1} parent=87 // pred_check_branch
          %769 = sbr.rel (%p767) target = $region104
        $region103: #{tpu_custom_call.1} parent=87 // pred_region
          %s770 = sand.u32 %s43, 1
          %s771 = scalar_lea.sflag [#allocation9], %s770
          %s772 = sand.u32 %s131, 1
          %s773 = smul.addr %s772, 256
          %s774 = scalar_lea.vmem [#allocation8], %s773
          %s775 = smul.u32 16, %s43
          %777 = vsyncadd %s771, 0
          %s778 = smul.addr %s775, 2
          %s779 = smul.addr %s778, 8
          %s780 = scalar_lea.hbm %s3, %s779
          %s781 = sshll.u32 %s780, 4
          %s782 = int_to_ptr.hbm [resolvable:$true] %s781
          %s783 = sshll.u32 %s774, 4
          %s784 = int_to_ptr.vmem [resolvable:$true] %s783
          %789 = dma.hbm_to_vmem [thread:$0]  %s782, 4096, %s784, %s771, 256, 256, 16
        $region104: #{tpu_custom_call.1} parent=87 // pred_fallthru
          _
      $region88: #{tpu_custom_call.1} parent=5 // pred_fallthru
        _
      %p790 = scmp.le.s32.totalorder 1, %s43
      %p791 = scmp.lt.s32.totalorder %s43, 3
      %p792 = pnand %p790, %p791
      %p793 = pneg %p792
      // Predicated region
      $region105: #{tpu_custom_call.1} parent=5 // pred_check
        _
      $region106: #{tpu_custom_call.1} parent=5 // pred_check_branch
        %795 = sbr.rel (%p792) target = $region108
      $region107: #{tpu_custom_call.1} parent=5 // pred_region
        %s796 = ssub.s32 %s43, 1
        %s797 = sand.u32 %s56, 1
        %s798 = scalar_lea.sflag [#allocation3], %s797
        %s799 = sand.u32 %s56, 1
        %s800 = smul.addr %s799, 128
        %s801 = scalar_lea.vmem [#allocation2], %s800
        // Predicated region
        $region109: #{tpu_custom_call.1} parent=107 // pred_check
          %p802 = pneg %p69
        $region110: #{tpu_custom_call.1} parent=107 // pred_check_branch
          %804 = sbr.rel (%p802) target = $region112
        $region111: #{tpu_custom_call.1} parent=107 // pred_region
          %806 = dma.done %s798, 2048
        $region112: #{tpu_custom_call.1} parent=107 // pred_fallthru
          _
        %s807 = sand.u32 %s48, 1
        %s808 = scalar_lea.sflag [#allocation6], %s807
        %s809 = sand.u32 %s82, 1
        %s810 = smul.addr %s809, 128
        %s811 = scalar_lea.vmem [#allocation5], %s810
        // Predicated region
        $region113: #{tpu_custom_call.1} parent=107 // pred_check
          %p812 = pneg %p95
        $region114: #{tpu_custom_call.1} parent=107 // pred_check_branch
          %814 = sbr.rel (%p812) target = $region116
        $region115: #{tpu_custom_call.1} parent=107 // pred_region
          %816 = dma.done %s808, 2048
        $region116: #{tpu_custom_call.1} parent=107 // pred_fallthru
          _
        %s817 = sand.u32 %s48, 1
        %s818 = scalar_lea.sflag [#allocation6], %s817
        %s819 = sand.u32 %s108, 1
        %s820 = smul.addr %s819, 128
        %s821 = scalar_lea.vmem [#allocation7], %s820
        // Predicated region
        $region117: #{tpu_custom_call.1} parent=107 // pred_check
          %p822 = pneg %p121
        $region118: #{tpu_custom_call.1} parent=107 // pred_check_branch
          %824 = sbr.rel (%p822) target = $region120
        $region119: #{tpu_custom_call.1} parent=107 // pred_region
          %826 = dma.done %s818, 2048
        $region120: #{tpu_custom_call.1} parent=107 // pred_fallthru
          _
        %s827 = sand.u32 %s48, 1
        %s828 = scalar_lea.sflag [#allocation9], %s827
        %s829 = sand.u32 %s134, 1
        %s830 = smul.addr %s829, 256
        %s831 = scalar_lea.vmem [#allocation8], %s830
        // Predicated region
        $region121: #{tpu_custom_call.1} parent=107 // pred_check
          %p832 = pneg %p147
        $region122: #{tpu_custom_call.1} parent=107 // pred_check_branch
          %834 = sbr.rel (%p832) target = $region124
        $region123: #{tpu_custom_call.1} parent=107 // pred_region
          %836 = dma.done %s828, 4096
        $region124: #{tpu_custom_call.1} parent=107 // pred_fallthru
          _
        // Predicated region
        $region125: #{tpu_custom_call.1} parent=107 // pred_check
          %p837 = pneg %p168
        $region126: #{tpu_custom_call.1} parent=107 // pred_check_branch
          %839 = sbr.rel (%p837) target = $region128
        $region127: #{tpu_custom_call.1} parent=107 // pred_region
          %841 = dma.done [#allocation9], 2048
        $region128: #{tpu_custom_call.1} parent=107 // pred_fallthru
          _
        // Predicated region
        $region129: #{tpu_custom_call.1} parent=107 // pred_check
          %p842 = pneg %p210
        $region130: #{tpu_custom_call.1} parent=107 // pred_check_branch
          %844 = sbr.rel (%p842) target = $region132
        $region131: #{tpu_custom_call.1} parent=107 // pred_region
          %846 = dma.done [#allocation12], 2048
        $region132: #{tpu_custom_call.1} parent=107 // pred_fallthru
          _
        // Predicated region
        $region133: #{tpu_custom_call.1} parent=107 // pred_check
          %p847 = pneg %p252
        $region134: #{tpu_custom_call.1} parent=107 // pred_check_branch
          %849 = sbr.rel (%p847) target = $region136
        $region135: #{tpu_custom_call.1} parent=107 // pred_region
          %851 = dma.done [#allocation12], 2048
        $region136: #{tpu_custom_call.1} parent=107 // pred_fallthru
          _
        // Predicated region
        $region137: #{tpu_custom_call.1} parent=107 // pred_check
          %p852 = pneg %p294
        $region138: #{tpu_custom_call.1} parent=107 // pred_check_branch
          %854 = sbr.rel (%p852) target = $region140
        $region139: #{tpu_custom_call.1} parent=107 // pred_region
          %856 = dma.done [#allocation15], 1024
        $region140: #{tpu_custom_call.1} parent=107 // pred_fallthru
          _
        // Predicated region
        $region141: #{tpu_custom_call.1} parent=107 // pred_check
          %p857 = pneg %p336
        $region142: #{tpu_custom_call.1} parent=107 // pred_check_branch
          %859 = sbr.rel (%p857) target = $region144
        $region143: #{tpu_custom_call.1} parent=107 // pred_region
          %861 = dma.done [#allocation15], 1024
        $region144: #{tpu_custom_call.1} parent=107 // pred_fallthru
          _
        // Predicated region
        $region145: #{tpu_custom_call.1} parent=107 // pred_check
          %p862 = pneg %p378
        $region146: #{tpu_custom_call.1} parent=107 // pred_check_branch
          %864 = sbr.rel (%p862) target = $region148
        $region147: #{tpu_custom_call.1} parent=107 // pred_region
          %866 = dma.done [#allocation18], 1024
        $region148: #{tpu_custom_call.1} parent=107 // pred_fallthru
          _
        // Predicated region
        $region149: #{tpu_custom_call.1} parent=107 // pred_check
          %p867 = pneg %p420
        $region150: #{tpu_custom_call.1} parent=107 // pred_check_branch
          %869 = sbr.rel (%p867) target = $region152
        $region151: #{tpu_custom_call.1} parent=107 // pred_region
          %871 = dma.done [#allocation18], 1024
        $region152: #{tpu_custom_call.1} parent=107 // pred_fallthru
          _
        %s872 = sand.u32 %s56, 1
        %s873 = scalar_lea.sflag [#allocation3], %s872
        %s874 = sand.u32 %s56, 1
        %s875 = smul.addr %s874, 128
        %s876 = scalar_lea.vmem [#allocation2], %s875
        %p877 = pneg %p69
        %p878 = pneg %p66
        %s879 = sand.u32 %s48, 1
        %s880 = scalar_lea.sflag [#allocation6], %s879
        %s881 = sand.u32 %s82, 1
        %s882 = smul.addr %s881, 128
        %s883 = scalar_lea.vmem [#allocation5], %s882
        %p884 = pneg %p95
        %p885 = pneg %p92
        %s886 = sand.u32 %s48, 1
        %s887 = scalar_lea.sflag [#allocation6], %s886
        %s888 = sand.u32 %s108, 1
        %s889 = smul.addr %s888, 128
        %s890 = scalar_lea.vmem [#allocation7], %s889
        %p891 = pneg %p121
        %p892 = pneg %p118
        %s893 = sand.u32 %s48, 1
        %s894 = scalar_lea.sflag [#allocation9], %s893
        %s895 = sand.u32 %s134, 1
        %s896 = smul.addr %s895, 256
        %s897 = scalar_lea.vmem [#allocation8], %s896
        %p898 = pneg %p147
        %p899 = pneg %p144
        %p900 = pneg %p168
        %p901 = pneg %p165
        %p902 = pneg %p189
        %p903 = pneg %p186
        %p904 = pneg %p210
        %p905 = pneg %p207
        %p906 = pneg %p231
        %p907 = pneg %p228
        %p908 = pneg %p252
        %p909 = pneg %p249
        %p910 = pneg %p273
        %p911 = pneg %p270
        %p912 = pneg %p294
        %p913 = pneg %p291
        %p914 = pneg %p315
        %p915 = pneg %p312
        %p916 = pneg %p336
        %p917 = pneg %p333
        %p918 = pneg %p357
        %p919 = pneg %p354
        %p920 = pneg %p378
        %p921 = pneg %p375
        %p922 = pneg %p399
        %p923 = pneg %p396
        %p924 = pneg %p420
        %p925 = pneg %p417
        %p926 = pneg %p441
        %p927 = pneg %p438
        %p928 = pneg %p462
        %p929 = pneg %p459
        %p930 = pneg %p483
        %p931 = pneg %p480
        %p932 = pneg %p504
        %p933 = pneg %p501
        %p934 = pneg %p525
        %p935 = pneg %p522
        %p936 = pneg %p551
        %p937 = pneg %p548
        %s938 = sand.u32 %s538, 1
        %s939 = scalar_lea.sflag [#allocation4], %s938
        %s940 = sand.u32 %s538, 1
        %s941 = smul.addr %s940, 128
        %s942 = scalar_lea.vmem [#allocation20], %s941
        %s943 = smul.u32 16, %s48
        %s944 = smul.u32 16, %s48
        %s945 = smul.u32 16, %s48
        %s946 = smul.u32 16, %s48
        %s947 = smul.u32 16, %s48
        %v948 = vld [vmem:[%s811] sm:$0xff]
        %v949 = vld [vmem:[%s811 + $0x8] sm:$0xff]
        %v950 = vld [vmem:[%s811 + $0x10] sm:$0xff]
        %v951 = vld [vmem:[%s811 + $0x18] sm:$0xff]
        %v952 = vld [vmem:[%s811 + $0x20] sm:$0xff]
        %v953 = vld [vmem:[%s811 + $0x28] sm:$0xff]
        %v954 = vld [vmem:[%s811 + $0x30] sm:$0xff]
        %v955 = vld [vmem:[%s811 + $0x38] sm:$0xff]
        %v956 = vld [vmem:[%s811 + $0x40] sm:$0xff]
        %v957 = vld [vmem:[%s811 + $0x48] sm:$0xff]
        %v958 = vld [vmem:[%s811 + $0x50] sm:$0xff]
        %v959 = vld [vmem:[%s811 + $0x58] sm:$0xff]
        %v960 = vld [vmem:[%s811 + $0x60] sm:$0xff]
        %v961 = vld [vmem:[%s811 + $0x68] sm:$0xff]
        %v962 = vld [vmem:[%s811 + $0x70] sm:$0xff]
        %v963 = vld [vmem:[%s811 + $0x78] sm:$0xff]
        %v964 = vld [vmem:[%s821] sm:$0xff]
        %v965 = vld [vmem:[%s821 + $0x8] sm:$0xff]
        %v966 = vld [vmem:[%s821 + $0x10] sm:$0xff]
        %v967 = vld [vmem:[%s821 + $0x18] sm:$0xff]
        %v968 = vld [vmem:[%s821 + $0x20] sm:$0xff]
        %v969 = vld [vmem:[%s821 + $0x28] sm:$0xff]
        %v970 = vld [vmem:[%s821 + $0x30] sm:$0xff]
        %v971 = vld [vmem:[%s821 + $0x38] sm:$0xff]
        %v972 = vld [vmem:[%s821 + $0x40] sm:$0xff]
        %v973 = vld [vmem:[%s821 + $0x48] sm:$0xff]
        %v974 = vld [vmem:[%s821 + $0x50] sm:$0xff]
        %v975 = vld [vmem:[%s821 + $0x58] sm:$0xff]
        %v976 = vld [vmem:[%s821 + $0x60] sm:$0xff]
        %v977 = vld [vmem:[%s821 + $0x68] sm:$0xff]
        %v978 = vld [vmem:[%s821 + $0x70] sm:$0xff]
        %v979 = vld [vmem:[%s821 + $0x78] sm:$0xff]
        %v980 = vld [vmem:[%s831] sm:$0xff]
        %v981 = vld [vmem:[%s831 + $0x8] sm:$0xff]
        %v982 = vld [vmem:[%s831 + $0x10] sm:$0xff]
        %v983 = vld [vmem:[%s831 + $0x18] sm:$0xff]
        %v984 = vld [vmem:[%s831 + $0x20] sm:$0xff]
        %v985 = vld [vmem:[%s831 + $0x28] sm:$0xff]
        %v986 = vld [vmem:[%s831 + $0x30] sm:$0xff]
        %v987 = vld [vmem:[%s831 + $0x38] sm:$0xff]
        %v988 = vld [vmem:[%s831 + $0x40] sm:$0xff]
        %v989 = vld [vmem:[%s831 + $0x48] sm:$0xff]
        %v990 = vld [vmem:[%s831 + $0x50] sm:$0xff]
        %v991 = vld [vmem:[%s831 + $0x58] sm:$0xff]
        %v992 = vld [vmem:[%s831 + $0x60] sm:$0xff]
        %v993 = vld [vmem:[%s831 + $0x68] sm:$0xff]
        %v994 = vld [vmem:[%s831 + $0x70] sm:$0xff]
        %v995 = vld [vmem:[%s831 + $0x78] sm:$0xff]
        %v996 = vld [vmem:[%s831 + $0x80] sm:$0xff]
        %v997 = vld [vmem:[%s831 + $0x88] sm:$0xff]
        %v998 = vld [vmem:[%s831 + $0x90] sm:$0xff]
        %v999 = vld [vmem:[%s831 + $0x98] sm:$0xff]
        %v1000 = vld [vmem:[%s831 + $0xa0] sm:$0xff]
        %v1001 = vld [vmem:[%s831 + $0xa8] sm:$0xff]
        %v1002 = vld [vmem:[%s831 + $0xb0] sm:$0xff]
        %v1003 = vld [vmem:[%s831 + $0xb8] sm:$0xff]
        %v1004 = vld [vmem:[%s831 + $0xc0] sm:$0xff]
        %v1005 = vld [vmem:[%s831 + $0xc8] sm:$0xff]
        %v1006 = vld [vmem:[%s831 + $0xd0] sm:$0xff]
        %v1007 = vld [vmem:[%s831 + $0xd8] sm:$0xff]
        %v1008 = vld [vmem:[%s831 + $0xe0] sm:$0xff]
        %v1009 = vld [vmem:[%s831 + $0xe8] sm:$0xff]
        %v1010 = vld [vmem:[%s831 + $0xf0] sm:$0xff]
        %v1011 = vld [vmem:[%s831 + $0xf8] sm:$0xff]
        %v1012 = vpack.c.bf16 %v982, %v980
        %v1013 = vpack.c.bf16 %v983, %v981
        %v1014 = vpack.c.bf16 %v986, %v984
        %v1015 = vpack.c.bf16 %v987, %v985
        %v1016 = vpack.c.bf16 %v990, %v988
        %v1017 = vpack.c.bf16 %v991, %v989
        %v1018 = vpack.c.bf16 %v994, %v992
        %v1019 = vpack.c.bf16 %v995, %v993
        %v1020 = vpack.c.bf16 %v998, %v996
        %v1021 = vpack.c.bf16 %v999, %v997
        %v1022 = vpack.c.bf16 %v1002, %v1000
        %v1023 = vpack.c.bf16 %v1003, %v1001
        %v1024 = vpack.c.bf16 %v1006, %v1004
        %v1025 = vpack.c.bf16 %v1007, %v1005
        %v1026 = vpack.c.bf16 %v1010, %v1008
        %v1027 = vpack.c.bf16 %v1011, %v1009
        %v1028 = vld [vmem:[#allocation10] sm:$0xf]
        %v1029 = vld [vmem:[#allocation10 + $0x4] sm:$0xf]
        %v1030 = vld [vmem:[#allocation10 + $0x8] sm:$0xf]
        %v1031 = vld [vmem:[#allocation10 + $0xc] sm:$0xf]
        %v1032 = vld [vmem:[#allocation10 + $0x10] sm:$0xf]
        %v1033 = vld [vmem:[#allocation10 + $0x14] sm:$0xf]
        %v1034 = vld [vmem:[#allocation10 + $0x18] sm:$0xf]
        %v1035 = vld [vmem:[#allocation10 + $0x1c] sm:$0xf]
        %v1036 = vld [vmem:[#allocation10 + $0x20] sm:$0xf]
        %v1037 = vld [vmem:[#allocation10 + $0x24] sm:$0xf]
        %v1038 = vld [vmem:[#allocation10 + $0x28] sm:$0xf]
        %v1039 = vld [vmem:[#allocation10 + $0x2c] sm:$0xf]
        %v1040 = vld [vmem:[#allocation10 + $0x30] sm:$0xf]
        %v1041 = vld [vmem:[#allocation10 + $0x34] sm:$0xf]
        %v1042 = vld [vmem:[#allocation10 + $0x38] sm:$0xf]
        %v1043 = vld [vmem:[#allocation10 + $0x3c] sm:$0xf]
        %v1044 = vld [vmem:[#allocation10 + $0x40] sm:$0xf]
        %v1045 = vld [vmem:[#allocation10 + $0x44] sm:$0xf]
        %v1046 = vld [vmem:[#allocation10 + $0x48] sm:$0xf]
        %v1047 = vld [vmem:[#allocation10 + $0x4c] sm:$0xf]
        %v1048 = vld [vmem:[#allocation10 + $0x50] sm:$0xf]
        %v1049 = vld [vmem:[#allocation10 + $0x54] sm:$0xf]
        %v1050 = vld [vmem:[#allocation10 + $0x58] sm:$0xf]
        %v1051 = vld [vmem:[#allocation10 + $0x5c] sm:$0xf]
        %v1052 = vld [vmem:[#allocation10 + $0x60] sm:$0xf]
        %v1053 = vld [vmem:[#allocation10 + $0x64] sm:$0xf]
        %v1054 = vld [vmem:[#allocation10 + $0x68] sm:$0xf]
        %v1055 = vld [vmem:[#allocation10 + $0x6c] sm:$0xf]
        %v1056 = vld [vmem:[#allocation10 + $0x70] sm:$0xf]
        %v1057 = vld [vmem:[#allocation10 + $0x74] sm:$0xf]
        %v1058 = vld [vmem:[#allocation10 + $0x78] sm:$0xf]
        %v1059 = vld [vmem:[#allocation10 + $0x7c] sm:$0xf]
        %v1060 = vld [vmem:[%s5] sm:$0x1]
        %v1062 = vperm.slane %v1060, 0
        %v1096 = vunpack.c.l.b16 %v1028
        %v1097 = vunpack.c.l.b16 %v1029
        %v1098 = vunpack.c.l.b16 %v1030
        %v1099 = vunpack.c.l.b16 %v1031
        %v1100 = vunpack.c.l.b16 %v1032
        %v1101 = vunpack.c.l.b16 %v1033
        %v1102 = vunpack.c.l.b16 %v1034
        %v1103 = vunpack.c.l.b16 %v1035
        %v1104 = vunpack.c.l.b16 %v1036
        %v1105 = vunpack.c.l.b16 %v1037
        %v1106 = vunpack.c.l.b16 %v1038
        %v1107 = vunpack.c.l.b16 %v1039
        %v1108 = vunpack.c.l.b16 %v1040
        %v1109 = vunpack.c.l.b16 %v1041
        %v1110 = vunpack.c.l.b16 %v1042
        %v1111 = vunpack.c.l.b16 %v1043
        %v1112 = vunpack.c.l.b16 %v1044
        %v1113 = vunpack.c.l.b16 %v1045
        %v1114 = vunpack.c.l.b16 %v1046
        %v1115 = vunpack.c.l.b16 %v1047
        %v1116 = vunpack.c.l.b16 %v1048
        %v1117 = vunpack.c.l.b16 %v1049
        %v1118 = vunpack.c.l.b16 %v1050
        %v1119 = vunpack.c.l.b16 %v1051
        %v1120 = vunpack.c.l.b16 %v1052
        %v1121 = vunpack.c.l.b16 %v1053
        %v1122 = vunpack.c.l.b16 %v1054
        %v1123 = vunpack.c.l.b16 %v1055
        %v1124 = vunpack.c.l.b16 %v1056
        %v1125 = vunpack.c.l.b16 %v1057
        %v1126 = vunpack.c.l.b16 %v1058
        %v1127 = vunpack.c.l.b16 %v1059
        %v1128 = vpack.c.b16 %v1097, %v1096
        %v1129 = vpack.c.b16 %v1099, %v1098
        %v1130 = vpack.c.b16 %v1101, %v1100
        %v1131 = vpack.c.b16 %v1103, %v1102
        %v1132 = vpack.c.b16 %v1105, %v1104
        %v1133 = vpack.c.b16 %v1107, %v1106
        %v1134 = vpack.c.b16 %v1109, %v1108
        %v1135 = vpack.c.b16 %v1111, %v1110
        %v1136 = vpack.c.b16 %v1113, %v1112
        %v1137 = vpack.c.b16 %v1115, %v1114
        %v1138 = vpack.c.b16 %v1117, %v1116
        %v1139 = vpack.c.b16 %v1119, %v1118
        %v1140 = vpack.c.b16 %v1121, %v1120
        %v1141 = vpack.c.b16 %v1123, %v1122
        %v1142 = vpack.c.b16 %v1125, %v1124
        %v1143 = vpack.c.b16 %v1127, %v1126
        %1160 = vmatpush.bf16.msra.mxu0 %v1135
        %1161 = vmatpush.bf16.msra.mxu0 %v1134
        %1162 = vmatpush.bf16.msra.mxu0 %v1133
        %1163 = vmatpush.bf16.msra.mxu0 %v1132
        %1164 = vmatpush.bf16.msra.mxu0 %v1131
        %1165 = vmatpush.bf16.msra.mxu0 %v1130
        %1166 = vmatpush.bf16.msra.mxu0 %v1129
        %1167 = vmatpush.bf16.msra.mxu0 %v1128
        %1168 = vmatmul.bf16.gmra.mxu0 %v1012
        %v1169 = vpop.f32.mrf.mxu0
        %v1170 = vadd.f32 %v1062, %v1169
        %v1171 = vpop.f32.mrf.mxu0
        %v1172 = vadd.f32 %v1062, %v1171
        %1173 = vmatmul.bf16.gmra.mxu0 %v1014
        %v1174 = vpop.f32.mrf.mxu0
        %v1175 = vadd.f32 %v1062, %v1174
        %v1176 = vpop.f32.mrf.mxu0
        %v1177 = vadd.f32 %v1062, %v1176
        %1178 = vmatmul.bf16.gmra.mxu0 %v1016
        %v1179 = vpop.f32.mrf.mxu0
        %v1180 = vadd.f32 %v1062, %v1179
        %v1181 = vpop.f32.mrf.mxu0
        %v1182 = vadd.f32 %v1062, %v1181
        %1183 = vmatmul.bf16.gmra.mxu0 %v1018
        %v1184 = vpop.f32.mrf.mxu0
        %v1185 = vadd.f32 %v1062, %v1184
        %v1186 = vpop.f32.mrf.mxu0
        %v1187 = vadd.f32 %v1062, %v1186
        %1188 = vmatmul.bf16.gmra.mxu0 %v1020
        %v1189 = vpop.f32.mrf.mxu0
        %v1190 = vadd.f32 %v1062, %v1189
        %v1191 = vpop.f32.mrf.mxu0
        %v1192 = vadd.f32 %v1062, %v1191
        %1193 = vmatmul.bf16.gmra.mxu0 %v1022
        %v1194 = vpop.f32.mrf.mxu0
        %v1195 = vadd.f32 %v1062, %v1194
        %v1196 = vpop.f32.mrf.mxu0
        %v1197 = vadd.f32 %v1062, %v1196
        %1198 = vmatmul.bf16.gmra.mxu0 %v1024
        %v1199 = vpop.f32.mrf.mxu0
        %v1200 = vadd.f32 %v1062, %v1199
        %v1201 = vpop.f32.mrf.mxu0
        %v1202 = vadd.f32 %v1062, %v1201
        %1203 = vmatmul.bf16.gmra.mxu0 %v1026
        %v1204 = vpop.f32.mrf.mxu0
        %v1205 = vadd.f32 %v1062, %v1204
        %v1206 = vpop.f32.mrf.mxu0
        %v1207 = vadd.f32 %v1062, %v1206
        %1208 = vdwg.mxu0
        %1209 = vmatpush.bf16.msra.mxu0 %v1143
        %1210 = vmatpush.bf16.msra.mxu0 %v1142
        %1211 = vmatpush.bf16.msra.mxu0 %v1141
        %1212 = vmatpush.bf16.msra.mxu0 %v1140
        %1213 = vmatpush.bf16.msra.mxu0 %v1139
        %1214 = vmatpush.bf16.msra.mxu0 %v1138
        %1215 = vmatpush.bf16.msra.mxu0 %v1137
        %1216 = vmatpush.bf16.msra.mxu0 %v1136
        %1217 = vmatmul.bf16.gmra.mxu0 %v1013
        %v1218 = vpop.f32.mrf.mxu0
        %v1219 = vadd.f32 %v1170, %v1218
        %v1220 = vpop.f32.mrf.mxu0
        %v1221 = vadd.f32 %v1172, %v1220
        %1222 = vmatmul.bf16.gmra.mxu0 %v1015
        %v1223 = vpop.f32.mrf.mxu0
        %v1224 = vadd.f32 %v1175, %v1223
        %v1225 = vpop.f32.mrf.mxu0
        %v1226 = vadd.f32 %v1177, %v1225
        %1227 = vmatmul.bf16.gmra.mxu0 %v1017
        %v1228 = vpop.f32.mrf.mxu0
        %v1229 = vadd.f32 %v1180, %v1228
        %v1230 = vpop.f32.mrf.mxu0
        %v1231 = vadd.f32 %v1182, %v1230
        %1232 = vmatmul.bf16.gmra.mxu0 %v1019
        %v1233 = vpop.f32.mrf.mxu0
        %v1234 = vadd.f32 %v1185, %v1233
        %v1235 = vpop.f32.mrf.mxu0
        %v1236 = vadd.f32 %v1187, %v1235
        %1237 = vmatmul.bf16.gmra.mxu0 %v1021
        %v1238 = vpop.f32.mrf.mxu0
        %v1239 = vadd.f32 %v1190, %v1238
        %v1240 = vpop.f32.mrf.mxu0
        %v1241 = vadd.f32 %v1192, %v1240
        %1242 = vmatmul.bf16.gmra.mxu0 %v1023
        %v1243 = vpop.f32.mrf.mxu0
        %v1244 = vadd.f32 %v1195, %v1243
        %v1245 = vpop.f32.mrf.mxu0
        %v1246 = vadd.f32 %v1197, %v1245
        %1247 = vmatmul.bf16.gmra.mxu0 %v1025
        %v1248 = vpop.f32.mrf.mxu0
        %v1249 = vadd.f32 %v1200, %v1248
        %v1250 = vpop.f32.mrf.mxu0
        %v1251 = vadd.f32 %v1202, %v1250
        %1252 = vmatmul.bf16.gmra.mxu0 %v1027
        %v1253 = vpop.f32.mrf.mxu0
        %v1254 = vadd.f32 %v1205, %v1253
        %v1255 = vpop.f32.mrf.mxu0
        %v1256 = vadd.f32 %v1207, %v1255
        %1257 = vdwg.mxu0
        %vm1258 = vcmp.gt.f32.partialorder %v1219, 0.0
        %vm1259 = vcmp.gt.f32.partialorder %v1221, 0.0
        %vm1260 = vcmp.gt.f32.partialorder %v1224, 0.0
        %vm1261 = vcmp.gt.f32.partialorder %v1226, 0.0
        %vm1262 = vcmp.gt.f32.partialorder %v1229, 0.0
        %vm1263 = vcmp.gt.f32.partialorder %v1231, 0.0
        %vm1264 = vcmp.gt.f32.partialorder %v1234, 0.0
        %vm1265 = vcmp.gt.f32.partialorder %v1236, 0.0
        %vm1266 = vcmp.gt.f32.partialorder %v1239, 0.0
        %vm1267 = vcmp.gt.f32.partialorder %v1241, 0.0
        %vm1268 = vcmp.gt.f32.partialorder %v1244, 0.0
        %vm1269 = vcmp.gt.f32.partialorder %v1246, 0.0
        %vm1270 = vcmp.gt.f32.partialorder %v1249, 0.0
        %vm1271 = vcmp.gt.f32.partialorder %v1251, 0.0
        %vm1272 = vcmp.gt.f32.partialorder %v1254, 0.0
        %vm1273 = vcmp.gt.f32.partialorder %v1256, 0.0
        %v1274 = vmul.f32 %v1219, 0.01
        %v1275 = vmul.f32 %v1221, 0.01
        %v1276 = vmul.f32 %v1224, 0.01
        %v1277 = vmul.f32 %v1226, 0.01
        %v1278 = vmul.f32 %v1229, 0.01
        %v1279 = vmul.f32 %v1231, 0.01
        %v1280 = vmul.f32 %v1234, 0.01
        %v1281 = vmul.f32 %v1236, 0.01
        %v1282 = vmul.f32 %v1239, 0.01
        %v1283 = vmul.f32 %v1241, 0.01
        %v1284 = vmul.f32 %v1244, 0.01
        %v1285 = vmul.f32 %v1246, 0.01
        %v1286 = vmul.f32 %v1249, 0.01
        %v1287 = vmul.f32 %v1251, 0.01
        %v1288 = vmul.f32 %v1254, 0.01
        %v1289 = vmul.f32 %v1256, 0.01
        %v1290 = vsel %vm1258, %v1219, %v1274
        %v1291 = vsel %vm1259, %v1221, %v1275
        %v1292 = vsel %vm1260, %v1224, %v1276
        %v1293 = vsel %vm1261, %v1226, %v1277
        %v1294 = vsel %vm1262, %v1229, %v1278
        %v1295 = vsel %vm1263, %v1231, %v1279
        %v1296 = vsel %vm1264, %v1234, %v1280
        %v1297 = vsel %vm1265, %v1236, %v1281
        %v1298 = vsel %vm1266, %v1239, %v1282
        %v1299 = vsel %vm1267, %v1241, %v1283
        %v1300 = vsel %vm1268, %v1244, %v1284
        %v1301 = vsel %vm1269, %v1246, %v1285
        %v1302 = vsel %vm1270, %v1249, %v1286
        %v1303 = vsel %vm1271, %v1251, %v1287
        %v1304 = vsel %vm1272, %v1254, %v1288
        %v1305 = vsel %vm1273, %v1256, %v1289
        %v1306 = vpack.c.bf16 %v1290, %v1290
        %v1307 = vpack.c.bf16 %v1291, %v1291
        %v1308 = vpack.c.bf16 %v1292, %v1292
        %v1309 = vpack.c.bf16 %v1293, %v1293
        %v1310 = vpack.c.bf16 %v1294, %v1294
        %v1311 = vpack.c.bf16 %v1295, %v1295
        %v1312 = vpack.c.bf16 %v1296, %v1296
        %v1313 = vpack.c.bf16 %v1297, %v1297
        %v1314 = vpack.c.bf16 %v1298, %v1298
        %v1315 = vpack.c.bf16 %v1299, %v1299
        %v1316 = vpack.c.bf16 %v1300, %v1300
        %v1317 = vpack.c.bf16 %v1301, %v1301
        %v1318 = vpack.c.bf16 %v1302, %v1302
        %v1319 = vpack.c.bf16 %v1303, %v1303
        %v1320 = vpack.c.bf16 %v1304, %v1304
        %v1321 = vpack.c.bf16 %v1305, %v1305
        %v1322 = vpack.c.bf16 %v964, %v964
        %v1323 = vpack.c.bf16 %v965, %v965
        %v1324 = vpack.c.bf16 %v966, %v966
        %v1325 = vpack.c.bf16 %v967, %v967
        %v1326 = vpack.c.bf16 %v968, %v968
        %v1327 = vpack.c.bf16 %v969, %v969
        %v1328 = vpack.c.bf16 %v970, %v970
        %v1329 = vpack.c.bf16 %v971, %v971
        %v1330 = vpack.c.bf16 %v972, %v972
        %v1331 = vpack.c.bf16 %v973, %v973
        %v1332 = vpack.c.bf16 %v974, %v974
        %v1333 = vpack.c.bf16 %v975, %v975
        %v1334 = vpack.c.bf16 %v976, %v976
        %v1335 = vpack.c.bf16 %v977, %v977
        %v1336 = vpack.c.bf16 %v978, %v978
        %v1337 = vpack.c.bf16 %v979, %v979
        %v1354 = vunpack.c.l.b16 %v1306
        %v1355 = vunpack.c.l.b16 %v1307
        %v1356 = vunpack.c.l.b16 %v1308
        %v1357 = vunpack.c.l.b16 %v1309
        %v1358 = vunpack.c.l.b16 %v1310
        %v1359 = vunpack.c.l.b16 %v1311
        %v1360 = vunpack.c.l.b16 %v1312
        %v1361 = vunpack.c.l.b16 %v1313
        %v1362 = vunpack.c.l.b16 %v1314
        %v1363 = vunpack.c.l.b16 %v1315
        %v1364 = vunpack.c.l.b16 %v1316
        %v1365 = vunpack.c.l.b16 %v1317
        %v1366 = vunpack.c.l.b16 %v1318
        %v1367 = vunpack.c.l.b16 %v1319
        %v1368 = vunpack.c.l.b16 %v1320
        %v1369 = vunpack.c.l.b16 %v1321
        %v1370 = vpack.c.b16 %v1355, %v1354
        %v1371 = vpack.c.b16 %v1357, %v1356
        %v1372 = vpack.c.b16 %v1359, %v1358
        %v1373 = vpack.c.b16 %v1361, %v1360
        %v1374 = vpack.c.b16 %v1363, %v1362
        %v1375 = vpack.c.b16 %v1365, %v1364
        %v1376 = vpack.c.b16 %v1367, %v1366
        %v1377 = vpack.c.b16 %v1369, %v1368
        %v1402 = vunpack.c.l.b16 %v1322
        %v1403 = vunpack.c.l.b16 %v1323
        %v1404 = vunpack.c.l.b16 %v1324
        %v1405 = vunpack.c.l.b16 %v1325
        %v1406 = vunpack.c.l.b16 %v1326
        %v1407 = vunpack.c.l.b16 %v1327
        %v1408 = vunpack.c.l.b16 %v1328
        %v1409 = vunpack.c.l.b16 %v1329
        %v1410 = vunpack.c.l.b16 %v1330
        %v1411 = vunpack.c.l.b16 %v1331
        %v1412 = vunpack.c.l.b16 %v1332
        %v1413 = vunpack.c.l.b16 %v1333
        %v1414 = vunpack.c.l.b16 %v1334
        %v1415 = vunpack.c.l.b16 %v1335
        %v1416 = vunpack.c.l.b16 %v1336
        %v1417 = vunpack.c.l.b16 %v1337
        %v1418 = vpack.c.b16 %v1403, %v1402
        %v1419 = vpack.c.b16 %v1405, %v1404
        %v1420 = vpack.c.b16 %v1407, %v1406
        %v1421 = vpack.c.b16 %v1409, %v1408
        %v1422 = vpack.c.b16 %v1411, %v1410
        %v1423 = vpack.c.b16 %v1413, %v1412
        %v1424 = vpack.c.b16 %v1415, %v1414
        %v1425 = vpack.c.b16 %v1417, %v1416
        %v1434 = vld [vmem:[#allocation11] sm:$0xf]
        %v1435 = vld [vmem:[#allocation11 + $0x4] sm:$0xf]
        %v1436 = vld [vmem:[#allocation11 + $0x8] sm:$0xf]
        %v1437 = vld [vmem:[#allocation11 + $0xc] sm:$0xf]
        %v1438 = vld [vmem:[#allocation11 + $0x10] sm:$0xf]
        %v1439 = vld [vmem:[#allocation11 + $0x14] sm:$0xf]
        %v1440 = vld [vmem:[#allocation11 + $0x18] sm:$0xf]
        %v1441 = vld [vmem:[#allocation11 + $0x1c] sm:$0xf]
        %v1442 = vld [vmem:[#allocation11 + $0x20] sm:$0xf]
        %v1443 = vld [vmem:[#allocation11 + $0x24] sm:$0xf]
        %v1444 = vld [vmem:[#allocation11 + $0x28] sm:$0xf]
        %v1445 = vld [vmem:[#allocation11 + $0x2c] sm:$0xf]
        %v1446 = vld [vmem:[#allocation11 + $0x30] sm:$0xf]
        %v1447 = vld [vmem:[#allocation11 + $0x34] sm:$0xf]
        %v1448 = vld [vmem:[#allocation11 + $0x38] sm:$0xf]
        %v1449 = vld [vmem:[#allocation11 + $0x3c] sm:$0xf]
        %v1450 = vld [vmem:[#allocation11 + $0x40] sm:$0xf]
        %v1451 = vld [vmem:[#allocation11 + $0x44] sm:$0xf]
        %v1452 = vld [vmem:[#allocation11 + $0x48] sm:$0xf]
        %v1453 = vld [vmem:[#allocation11 + $0x4c] sm:$0xf]
        %v1454 = vld [vmem:[#allocation11 + $0x50] sm:$0xf]
        %v1455 = vld [vmem:[#allocation11 + $0x54] sm:$0xf]
        %v1456 = vld [vmem:[#allocation11 + $0x58] sm:$0xf]
        %v1457 = vld [vmem:[#allocation11 + $0x5c] sm:$0xf]
        %v1458 = vld [vmem:[#allocation11 + $0x60] sm:$0xf]
        %v1459 = vld [vmem:[#allocation11 + $0x64] sm:$0xf]
        %v1460 = vld [vmem:[#allocation11 + $0x68] sm:$0xf]
        %v1461 = vld [vmem:[#allocation11 + $0x6c] sm:$0xf]
        %v1462 = vld [vmem:[#allocation11 + $0x70] sm:$0xf]
        %v1463 = vld [vmem:[#allocation11 + $0x74] sm:$0xf]
        %v1464 = vld [vmem:[#allocation11 + $0x78] sm:$0xf]
        %v1465 = vld [vmem:[#allocation11 + $0x7c] sm:$0xf]
        %v1466 = vld [vmem:[%s7] sm:$0x1]
        %v1468 = vperm.slane %v1466, 0
        %v1502 = vunpack.c.l.b16 %v1434
        %v1503 = vunpack.c.l.b16 %v1435
        %v1504 = vunpack.c.l.b16 %v1436
        %v1505 = vunpack.c.l.b16 %v1437
        %v1506 = vunpack.c.l.b16 %v1438
        %v1507 = vunpack.c.l.b16 %v1439
        %v1508 = vunpack.c.l.b16 %v1440
        %v1509 = vunpack.c.l.b16 %v1441
        %v1510 = vunpack.c.l.b16 %v1442
        %v1511 = vunpack.c.l.b16 %v1443
        %v1512 = vunpack.c.l.b16 %v1444
        %v1513 = vunpack.c.l.b16 %v1445
        %v1514 = vunpack.c.l.b16 %v1446
        %v1515 = vunpack.c.l.b16 %v1447
        %v1516 = vunpack.c.l.b16 %v1448
        %v1517 = vunpack.c.l.b16 %v1449
        %v1518 = vunpack.c.l.b16 %v1450
        %v1519 = vunpack.c.l.b16 %v1451
        %v1520 = vunpack.c.l.b16 %v1452
        %v1521 = vunpack.c.l.b16 %v1453
        %v1522 = vunpack.c.l.b16 %v1454
        %v1523 = vunpack.c.l.b16 %v1455
        %v1524 = vunpack.c.l.b16 %v1456
        %v1525 = vunpack.c.l.b16 %v1457
        %v1526 = vunpack.c.l.b16 %v1458
        %v1527 = vunpack.c.l.b16 %v1459
        %v1528 = vunpack.c.l.b16 %v1460
        %v1529 = vunpack.c.l.b16 %v1461
        %v1530 = vunpack.c.l.b16 %v1462
        %v1531 = vunpack.c.l.b16 %v1463
        %v1532 = vunpack.c.l.b16 %v1464
        %v1533 = vunpack.c.l.b16 %v1465
        %v1534 = vpack.c.b16 %v1503, %v1502
        %v1535 = vpack.c.b16 %v1505, %v1504
        %v1536 = vpack.c.b16 %v1507, %v1506
        %v1537 = vpack.c.b16 %v1509, %v1508
        %v1538 = vpack.c.b16 %v1511, %v1510
        %v1539 = vpack.c.b16 %v1513, %v1512
        %v1540 = vpack.c.b16 %v1515, %v1514
        %v1541 = vpack.c.b16 %v1517, %v1516
        %v1542 = vpack.c.b16 %v1519, %v1518
        %v1543 = vpack.c.b16 %v1521, %v1520
        %v1544 = vpack.c.b16 %v1523, %v1522
        %v1545 = vpack.c.b16 %v1525, %v1524
        %v1546 = vpack.c.b16 %v1527, %v1526
        %v1547 = vpack.c.b16 %v1529, %v1528
        %v1548 = vpack.c.b16 %v1531, %v1530
        %v1549 = vpack.c.b16 %v1533, %v1532
        %1566 = vmatpush.bf16.msra.mxu0 %v1541
        %1567 = vmatpush.bf16.msra.mxu0 %v1540
        %1568 = vmatpush.bf16.msra.mxu0 %v1539
        %1569 = vmatpush.bf16.msra.mxu0 %v1538
        %1570 = vmatpush.bf16.msra.mxu0 %v1537
        %1571 = vmatpush.bf16.msra.mxu0 %v1536
        %1572 = vmatpush.bf16.msra.mxu0 %v1535
        %1573 = vmatpush.bf16.msra.mxu0 %v1534
        %1574 = vmatmul.bf16.gmra.mxu0 %v1370
        %v1575 = vpop.f32.mrf.mxu0
        %v1576 = vadd.f32 %v1468, %v1575
        %v1577 = vpop.f32.mrf.mxu0
        %v1578 = vadd.f32 %v1468, %v1577
        %1579 = vmatmul.bf16.gmra.mxu0 %v1371
        %v1580 = vpop.f32.mrf.mxu0
        %v1581 = vadd.f32 %v1468, %v1580
        %v1582 = vpop.f32.mrf.mxu0
        %v1583 = vadd.f32 %v1468, %v1582
        %1584 = vmatmul.bf16.gmra.mxu0 %v1372
        %v1585 = vpop.f32.mrf.mxu0
        %v1586 = vadd.f32 %v1468, %v1585
        %v1587 = vpop.f32.mrf.mxu0
        %v1588 = vadd.f32 %v1468, %v1587
        %1589 = vmatmul.bf16.gmra.mxu0 %v1373
        %v1590 = vpop.f32.mrf.mxu0
        %v1591 = vadd.f32 %v1468, %v1590
        %v1592 = vpop.f32.mrf.mxu0
        %v1593 = vadd.f32 %v1468, %v1592
        %1594 = vmatmul.bf16.gmra.mxu0 %v1374
        %v1595 = vpop.f32.mrf.mxu0
        %v1596 = vadd.f32 %v1468, %v1595
        %v1597 = vpop.f32.mrf.mxu0
        %v1598 = vadd.f32 %v1468, %v1597
        %1599 = vmatmul.bf16.gmra.mxu0 %v1375
        %v1600 = vpop.f32.mrf.mxu0
        %v1601 = vadd.f32 %v1468, %v1600
        %v1602 = vpop.f32.mrf.mxu0
        %v1603 = vadd.f32 %v1468, %v1602
        %1604 = vmatmul.bf16.gmra.mxu0 %v1376
        %v1605 = vpop.f32.mrf.mxu0
        %v1606 = vadd.f32 %v1468, %v1605
        %v1607 = vpop.f32.mrf.mxu0
        %v1608 = vadd.f32 %v1468, %v1607
        %1609 = vmatmul.bf16.gmra.mxu0 %v1377
        %v1610 = vpop.f32.mrf.mxu0
        %v1611 = vadd.f32 %v1468, %v1610
        %v1612 = vpop.f32.mrf.mxu0
        %v1613 = vadd.f32 %v1468, %v1612
        %1614 = vdwg.mxu0
        %1615 = vmatpush.bf16.msra.mxu0 %v1549
        %1616 = vmatpush.bf16.msra.mxu0 %v1548
        %1617 = vmatpush.bf16.msra.mxu0 %v1547
        %1618 = vmatpush.bf16.msra.mxu0 %v1546
        %1619 = vmatpush.bf16.msra.mxu0 %v1545
        %1620 = vmatpush.bf16.msra.mxu0 %v1544
        %1621 = vmatpush.bf16.msra.mxu0 %v1543
        %1622 = vmatpush.bf16.msra.mxu0 %v1542
        %1623 = vmatmul.bf16.gmra.mxu0 %v1418
        %v1624 = vpop.f32.mrf.mxu0
        %v1625 = vadd.f32 %v1576, %v1624
        %v1626 = vpop.f32.mrf.mxu0
        %v1627 = vadd.f32 %v1578, %v1626
        %1628 = vmatmul.bf16.gmra.mxu0 %v1419
        %v1629 = vpop.f32.mrf.mxu0
        %v1630 = vadd.f32 %v1581, %v1629
        %v1631 = vpop.f32.mrf.mxu0
        %v1632 = vadd.f32 %v1583, %v1631
        %1633 = vmatmul.bf16.gmra.mxu0 %v1420
        %v1634 = vpop.f32.mrf.mxu0
        %v1635 = vadd.f32 %v1586, %v1634
        %v1636 = vpop.f32.mrf.mxu0
        %v1637 = vadd.f32 %v1588, %v1636
        %1638 = vmatmul.bf16.gmra.mxu0 %v1421
        %v1639 = vpop.f32.mrf.mxu0
        %v1640 = vadd.f32 %v1591, %v1639
        %v1641 = vpop.f32.mrf.mxu0
        %v1642 = vadd.f32 %v1593, %v1641
        %1643 = vmatmul.bf16.gmra.mxu0 %v1422
        %v1644 = vpop.f32.mrf.mxu0
        %v1645 = vadd.f32 %v1596, %v1644
        %v1646 = vpop.f32.mrf.mxu0
        %v1647 = vadd.f32 %v1598, %v1646
        %1648 = vmatmul.bf16.gmra.mxu0 %v1423
        %v1649 = vpop.f32.mrf.mxu0
        %v1650 = vadd.f32 %v1601, %v1649
        %v1651 = vpop.f32.mrf.mxu0
        %v1652 = vadd.f32 %v1603, %v1651
        %1653 = vmatmul.bf16.gmra.mxu0 %v1424
        %v1654 = vpop.f32.mrf.mxu0
        %v1655 = vadd.f32 %v1606, %v1654
        %v1656 = vpop.f32.mrf.mxu0
        %v1657 = vadd.f32 %v1608, %v1656
        %1658 = vmatmul.bf16.gmra.mxu0 %v1425
        %v1659 = vpop.f32.mrf.mxu0
        %v1660 = vadd.f32 %v1611, %v1659
        %v1661 = vpop.f32.mrf.mxu0
        %v1662 = vadd.f32 %v1613, %v1661
        %1663 = vdwg.mxu0
        %vm1664 = vcmp.gt.f32.partialorder %v1625, 0.0
        %vm1665 = vcmp.gt.f32.partialorder %v1627, 0.0
        %vm1666 = vcmp.gt.f32.partialorder %v1630, 0.0
        %vm1667 = vcmp.gt.f32.partialorder %v1632, 0.0
        %vm1668 = vcmp.gt.f32.partialorder %v1635, 0.0
        %vm1669 = vcmp.gt.f32.partialorder %v1637, 0.0
        %vm1670 = vcmp.gt.f32.partialorder %v1640, 0.0
        %vm1671 = vcmp.gt.f32.partialorder %v1642, 0.0
        %vm1672 = vcmp.gt.f32.partialorder %v1645, 0.0
        %vm1673 = vcmp.gt.f32.partialorder %v1647, 0.0
        %vm1674 = vcmp.gt.f32.partialorder %v1650, 0.0
        %vm1675 = vcmp.gt.f32.partialorder %v1652, 0.0
        %vm1676 = vcmp.gt.f32.partialorder %v1655, 0.0
        %vm1677 = vcmp.gt.f32.partialorder %v1657, 0.0
        %vm1678 = vcmp.gt.f32.partialorder %v1660, 0.0
        %vm1679 = vcmp.gt.f32.partialorder %v1662, 0.0
        %v1680 = vmul.f32 %v1625, 0.01
        %v1681 = vmul.f32 %v1627, 0.01
        %v1682 = vmul.f32 %v1630, 0.01
        %v1683 = vmul.f32 %v1632, 0.01
        %v1684 = vmul.f32 %v1635, 0.01
        %v1685 = vmul.f32 %v1637, 0.01
        %v1686 = vmul.f32 %v1640, 0.01
        %v1687 = vmul.f32 %v1642, 0.01
        %v1688 = vmul.f32 %v1645, 0.01
        %v1689 = vmul.f32 %v1647, 0.01
        %v1690 = vmul.f32 %v1650, 0.01
        %v1691 = vmul.f32 %v1652, 0.01
        %v1692 = vmul.f32 %v1655, 0.01
        %v1693 = vmul.f32 %v1657, 0.01
        %v1694 = vmul.f32 %v1660, 0.01
        %v1695 = vmul.f32 %v1662, 0.01
        %v1696 = vsel %vm1664, %v1625, %v1680
        %v1697 = vsel %vm1665, %v1627, %v1681
        %v1698 = vsel %vm1666, %v1630, %v1682
        %v1699 = vsel %vm1667, %v1632, %v1683
        %v1700 = vsel %vm1668, %v1635, %v1684
        %v1701 = vsel %vm1669, %v1637, %v1685
        %v1702 = vsel %vm1670, %v1640, %v1686
        %v1703 = vsel %vm1671, %v1642, %v1687
        %v1704 = vsel %vm1672, %v1645, %v1688
        %v1705 = vsel %vm1673, %v1647, %v1689
        %v1706 = vsel %vm1674, %v1650, %v1690
        %v1707 = vsel %vm1675, %v1652, %v1691
        %v1708 = vsel %vm1676, %v1655, %v1692
        %v1709 = vsel %vm1677, %v1657, %v1693
        %v1710 = vsel %vm1678, %v1660, %v1694
        %v1711 = vsel %vm1679, %v1662, %v1695
        %v1712 = vpack.c.bf16 %v1696, %v1696
        %v1713 = vpack.c.bf16 %v1697, %v1697
        %v1714 = vpack.c.bf16 %v1698, %v1698
        %v1715 = vpack.c.bf16 %v1699, %v1699
        %v1716 = vpack.c.bf16 %v1700, %v1700
        %v1717 = vpack.c.bf16 %v1701, %v1701
        %v1718 = vpack.c.bf16 %v1702, %v1702
        %v1719 = vpack.c.bf16 %v1703, %v1703
        %v1720 = vpack.c.bf16 %v1704, %v1704
        %v1721 = vpack.c.bf16 %v1705, %v1705
        %v1722 = vpack.c.bf16 %v1706, %v1706
        %v1723 = vpack.c.bf16 %v1707, %v1707
        %v1724 = vpack.c.bf16 %v1708, %v1708
        %v1725 = vpack.c.bf16 %v1709, %v1709
        %v1726 = vpack.c.bf16 %v1710, %v1710
        %v1727 = vpack.c.bf16 %v1711, %v1711
        %v1728 = vpack.c.bf16 %v948, %v948
        %v1729 = vpack.c.bf16 %v949, %v949
        %v1730 = vpack.c.bf16 %v950, %v950
        %v1731 = vpack.c.bf16 %v951, %v951
        %v1732 = vpack.c.bf16 %v952, %v952
        %v1733 = vpack.c.bf16 %v953, %v953
        %v1734 = vpack.c.bf16 %v954, %v954
        %v1735 = vpack.c.bf16 %v955, %v955
        %v1736 = vpack.c.bf16 %v956, %v956
        %v1737 = vpack.c.bf16 %v957, %v957
        %v1738 = vpack.c.bf16 %v958, %v958
        %v1739 = vpack.c.bf16 %v959, %v959
        %v1740 = vpack.c.bf16 %v960, %v960
        %v1741 = vpack.c.bf16 %v961, %v961
        %v1742 = vpack.c.bf16 %v962, %v962
        %v1743 = vpack.c.bf16 %v963, %v963
        %v1760 = vunpack.c.l.b16 %v1712
        %v1761 = vunpack.c.l.b16 %v1713
        %v1762 = vunpack.c.l.b16 %v1714
        %v1763 = vunpack.c.l.b16 %v1715
        %v1764 = vunpack.c.l.b16 %v1716
        %v1765 = vunpack.c.l.b16 %v1717
        %v1766 = vunpack.c.l.b16 %v1718
        %v1767 = vunpack.c.l.b16 %v1719
        %v1768 = vunpack.c.l.b16 %v1720
        %v1769 = vunpack.c.l.b16 %v1721
        %v1770 = vunpack.c.l.b16 %v1722
        %v1771 = vunpack.c.l.b16 %v1723
        %v1772 = vunpack.c.l.b16 %v1724
        %v1773 = vunpack.c.l.b16 %v1725
        %v1774 = vunpack.c.l.b16 %v1726
        %v1775 = vunpack.c.l.b16 %v1727
        %v1776 = vpack.c.b16 %v1761, %v1760
        %v1777 = vpack.c.b16 %v1763, %v1762
        %v1778 = vpack.c.b16 %v1765, %v1764
        %v1779 = vpack.c.b16 %v1767, %v1766
        %v1780 = vpack.c.b16 %v1769, %v1768
        %v1781 = vpack.c.b16 %v1771, %v1770
        %v1782 = vpack.c.b16 %v1773, %v1772
        %v1783 = vpack.c.b16 %v1775, %v1774
        %v1808 = vunpack.c.l.b16 %v1728
        %v1809 = vunpack.c.l.b16 %v1729
        %v1810 = vunpack.c.l.b16 %v1730
        %v1811 = vunpack.c.l.b16 %v1731
        %v1812 = vunpack.c.l.b16 %v1732
        %v1813 = vunpack.c.l.b16 %v1733
        %v1814 = vunpack.c.l.b16 %v1734
        %v1815 = vunpack.c.l.b16 %v1735
        %v1816 = vunpack.c.l.b16 %v1736
        %v1817 = vunpack.c.l.b16 %v1737
        %v1818 = vunpack.c.l.b16 %v1738
        %v1819 = vunpack.c.l.b16 %v1739
        %v1820 = vunpack.c.l.b16 %v1740
        %v1821 = vunpack.c.l.b16 %v1741
        %v1822 = vunpack.c.l.b16 %v1742
        %v1823 = vunpack.c.l.b16 %v1743
        %v1824 = vpack.c.b16 %v1809, %v1808
        %v1825 = vpack.c.b16 %v1811, %v1810
        %v1826 = vpack.c.b16 %v1813, %v1812
        %v1827 = vpack.c.b16 %v1815, %v1814
        %v1828 = vpack.c.b16 %v1817, %v1816
        %v1829 = vpack.c.b16 %v1819, %v1818
        %v1830 = vpack.c.b16 %v1821, %v1820
        %v1831 = vpack.c.b16 %v1823, %v1822
        %v1840 = vld [vmem:[#allocation13] sm:$0xf]
        %v1841 = vld [vmem:[#allocation13 + $0x4] sm:$0xf]
        %v1842 = vld [vmem:[#allocation13 + $0x8] sm:$0xf]
        %v1843 = vld [vmem:[#allocation13 + $0xc] sm:$0xf]
        %v1844 = vld [vmem:[#allocation13 + $0x10] sm:$0xf]
        %v1845 = vld [vmem:[#allocation13 + $0x14] sm:$0xf]
        %v1846 = vld [vmem:[#allocation13 + $0x18] sm:$0xf]
        %v1847 = vld [vmem:[#allocation13 + $0x1c] sm:$0xf]
        %v1848 = vld [vmem:[#allocation13 + $0x20] sm:$0xf]
        %v1849 = vld [vmem:[#allocation13 + $0x24] sm:$0xf]
        %v1850 = vld [vmem:[#allocation13 + $0x28] sm:$0xf]
        %v1851 = vld [vmem:[#allocation13 + $0x2c] sm:$0xf]
        %v1852 = vld [vmem:[#allocation13 + $0x30] sm:$0xf]
        %v1853 = vld [vmem:[#allocation13 + $0x34] sm:$0xf]
        %v1854 = vld [vmem:[#allocation13 + $0x38] sm:$0xf]
        %v1855 = vld [vmem:[#allocation13 + $0x3c] sm:$0xf]
        %v1856 = vld [vmem:[#allocation13 + $0x40] sm:$0xf]
        %v1857 = vld [vmem:[#allocation13 + $0x44] sm:$0xf]
        %v1858 = vld [vmem:[#allocation13 + $0x48] sm:$0xf]
        %v1859 = vld [vmem:[#allocation13 + $0x4c] sm:$0xf]
        %v1860 = vld [vmem:[#allocation13 + $0x50] sm:$0xf]
        %v1861 = vld [vmem:[#allocation13 + $0x54] sm:$0xf]
        %v1862 = vld [vmem:[#allocation13 + $0x58] sm:$0xf]
        %v1863 = vld [vmem:[#allocation13 + $0x5c] sm:$0xf]
        %v1864 = vld [vmem:[#allocation13 + $0x60] sm:$0xf]
        %v1865 = vld [vmem:[#allocation13 + $0x64] sm:$0xf]
        %v1866 = vld [vmem:[#allocation13 + $0x68] sm:$0xf]
        %v1867 = vld [vmem:[#allocation13 + $0x6c] sm:$0xf]
        %v1868 = vld [vmem:[#allocation13 + $0x70] sm:$0xf]
        %v1869 = vld [vmem:[#allocation13 + $0x74] sm:$0xf]
        %v1870 = vld [vmem:[#allocation13 + $0x78] sm:$0xf]
        %v1871 = vld [vmem:[#allocation13 + $0x7c] sm:$0xf]
        %v1872 = vld [vmem:[%s9] sm:$0x1]
        %v1874 = vperm.slane %v1872, 0
        %v1908 = vunpack.c.l.b16 %v1840
        %v1909 = vunpack.c.l.b16 %v1841
        %v1910 = vunpack.c.l.b16 %v1842
        %v1911 = vunpack.c.l.b16 %v1843
        %v1912 = vunpack.c.l.b16 %v1844
        %v1913 = vunpack.c.l.b16 %v1845
        %v1914 = vunpack.c.l.b16 %v1846
        %v1915 = vunpack.c.l.b16 %v1847
        %v1916 = vunpack.c.l.b16 %v1848
        %v1917 = vunpack.c.l.b16 %v1849
        %v1918 = vunpack.c.l.b16 %v1850
        %v1919 = vunpack.c.l.b16 %v1851
        %v1920 = vunpack.c.l.b16 %v1852
        %v1921 = vunpack.c.l.b16 %v1853
        %v1922 = vunpack.c.l.b16 %v1854
        %v1923 = vunpack.c.l.b16 %v1855
        %v1924 = vunpack.c.l.b16 %v1856
        %v1925 = vunpack.c.l.b16 %v1857
        %v1926 = vunpack.c.l.b16 %v1858
        %v1927 = vunpack.c.l.b16 %v1859
        %v1928 = vunpack.c.l.b16 %v1860
        %v1929 = vunpack.c.l.b16 %v1861
        %v1930 = vunpack.c.l.b16 %v1862
        %v1931 = vunpack.c.l.b16 %v1863
        %v1932 = vunpack.c.l.b16 %v1864
        %v1933 = vunpack.c.l.b16 %v1865
        %v1934 = vunpack.c.l.b16 %v1866
        %v1935 = vunpack.c.l.b16 %v1867
        %v1936 = vunpack.c.l.b16 %v1868
        %v1937 = vunpack.c.l.b16 %v1869
        %v1938 = vunpack.c.l.b16 %v1870
        %v1939 = vunpack.c.l.b16 %v1871
        %v1940 = vpack.c.b16 %v1909, %v1908
        %v1941 = vpack.c.b16 %v1911, %v1910
        %v1942 = vpack.c.b16 %v1913, %v1912
        %v1943 = vpack.c.b16 %v1915, %v1914
        %v1944 = vpack.c.b16 %v1917, %v1916
        %v1945 = vpack.c.b16 %v1919, %v1918
        %v1946 = vpack.c.b16 %v1921, %v1920
        %v1947 = vpack.c.b16 %v1923, %v1922
        %v1948 = vpack.c.b16 %v1925, %v1924
        %v1949 = vpack.c.b16 %v1927, %v1926
        %v1950 = vpack.c.b16 %v1929, %v1928
        %v1951 = vpack.c.b16 %v1931, %v1930
        %v1952 = vpack.c.b16 %v1933, %v1932
        %v1953 = vpack.c.b16 %v1935, %v1934
        %v1954 = vpack.c.b16 %v1937, %v1936
        %v1955 = vpack.c.b16 %v1939, %v1938
        %1972 = vmatpush.bf16.msra.mxu0 %v1947
        %1973 = vmatpush.bf16.msra.mxu0 %v1946
        %1974 = vmatpush.bf16.msra.mxu0 %v1945
        %1975 = vmatpush.bf16.msra.mxu0 %v1944
        %1976 = vmatpush.bf16.msra.mxu0 %v1943
        %1977 = vmatpush.bf16.msra.mxu0 %v1942
        %1978 = vmatpush.bf16.msra.mxu0 %v1941
        %1979 = vmatpush.bf16.msra.mxu0 %v1940
        %1980 = vmatmul.bf16.gmra.mxu0 %v1776
        %v1981 = vpop.f32.mrf.mxu0
        %v1982 = vadd.f32 %v1874, %v1981
        %v1983 = vpop.f32.mrf.mxu0
        %v1984 = vadd.f32 %v1874, %v1983
        %1985 = vmatmul.bf16.gmra.mxu0 %v1777
        %v1986 = vpop.f32.mrf.mxu0
        %v1987 = vadd.f32 %v1874, %v1986
        %v1988 = vpop.f32.mrf.mxu0
        %v1989 = vadd.f32 %v1874, %v1988
        %1990 = vmatmul.bf16.gmra.mxu0 %v1778
        %v1991 = vpop.f32.mrf.mxu0
        %v1992 = vadd.f32 %v1874, %v1991
        %v1993 = vpop.f32.mrf.mxu0
        %v1994 = vadd.f32 %v1874, %v1993
        %1995 = vmatmul.bf16.gmra.mxu0 %v1779
        %v1996 = vpop.f32.mrf.mxu0
        %v1997 = vadd.f32 %v1874, %v1996
        %v1998 = vpop.f32.mrf.mxu0
        %v1999 = vadd.f32 %v1874, %v1998
        %2000 = vmatmul.bf16.gmra.mxu0 %v1780
        %v2001 = vpop.f32.mrf.mxu0
        %v2002 = vadd.f32 %v1874, %v2001
        %v2003 = vpop.f32.mrf.mxu0
        %v2004 = vadd.f32 %v1874, %v2003
        %2005 = vmatmul.bf16.gmra.mxu0 %v1781
        %v2006 = vpop.f32.mrf.mxu0
        %v2007 = vadd.f32 %v1874, %v2006
        %v2008 = vpop.f32.mrf.mxu0
        %v2009 = vadd.f32 %v1874, %v2008
        %2010 = vmatmul.bf16.gmra.mxu0 %v1782
        %v2011 = vpop.f32.mrf.mxu0
        %v2012 = vadd.f32 %v1874, %v2011
        %v2013 = vpop.f32.mrf.mxu0
        %v2014 = vadd.f32 %v1874, %v2013
        %2015 = vmatmul.bf16.gmra.mxu0 %v1783
        %v2016 = vpop.f32.mrf.mxu0
        %v2017 = vadd.f32 %v1874, %v2016
        %v2018 = vpop.f32.mrf.mxu0
        %v2019 = vadd.f32 %v1874, %v2018
        %2020 = vdwg.mxu0
        %2021 = vmatpush.bf16.msra.mxu0 %v1955
        %2022 = vmatpush.bf16.msra.mxu0 %v1954
        %2023 = vmatpush.bf16.msra.mxu0 %v1953
        %2024 = vmatpush.bf16.msra.mxu0 %v1952
        %2025 = vmatpush.bf16.msra.mxu0 %v1951
        %2026 = vmatpush.bf16.msra.mxu0 %v1950
        %2027 = vmatpush.bf16.msra.mxu0 %v1949
        %2028 = vmatpush.bf16.msra.mxu0 %v1948
        %2029 = vmatmul.bf16.gmra.mxu0 %v1824
        %v2030 = vpop.f32.mrf.mxu0
        %v2031 = vadd.f32 %v1982, %v2030
        %v2032 = vpop.f32.mrf.mxu0
        %v2033 = vadd.f32 %v1984, %v2032
        %2034 = vmatmul.bf16.gmra.mxu0 %v1825
        %v2035 = vpop.f32.mrf.mxu0
        %v2036 = vadd.f32 %v1987, %v2035
        %v2037 = vpop.f32.mrf.mxu0
        %v2038 = vadd.f32 %v1989, %v2037
        %2039 = vmatmul.bf16.gmra.mxu0 %v1826
        %v2040 = vpop.f32.mrf.mxu0
        %v2041 = vadd.f32 %v1992, %v2040
        %v2042 = vpop.f32.mrf.mxu0
        %v2043 = vadd.f32 %v1994, %v2042
        %2044 = vmatmul.bf16.gmra.mxu0 %v1827
        %v2045 = vpop.f32.mrf.mxu0
        %v2046 = vadd.f32 %v1997, %v2045
        %v2047 = vpop.f32.mrf.mxu0
        %v2048 = vadd.f32 %v1999, %v2047
        %2049 = vmatmul.bf16.gmra.mxu0 %v1828
        %v2050 = vpop.f32.mrf.mxu0
        %v2051 = vadd.f32 %v2002, %v2050
        %v2052 = vpop.f32.mrf.mxu0
        %v2053 = vadd.f32 %v2004, %v2052
        %2054 = vmatmul.bf16.gmra.mxu0 %v1829
        %v2055 = vpop.f32.mrf.mxu0
        %v2056 = vadd.f32 %v2007, %v2055
        %v2057 = vpop.f32.mrf.mxu0
        %v2058 = vadd.f32 %v2009, %v2057
        %2059 = vmatmul.bf16.gmra.mxu0 %v1830
        %v2060 = vpop.f32.mrf.mxu0
        %v2061 = vadd.f32 %v2012, %v2060
        %v2062 = vpop.f32.mrf.mxu0
        %v2063 = vadd.f32 %v2014, %v2062
        %2064 = vmatmul.bf16.gmra.mxu0 %v1831
        %v2065 = vpop.f32.mrf.mxu0
        %v2066 = vadd.f32 %v2017, %v2065
        %v2067 = vpop.f32.mrf.mxu0
        %v2068 = vadd.f32 %v2019, %v2067
        %2069 = vdwg.mxu0
        %vm2070 = vcmp.gt.f32.partialorder %v2031, 0.0
        %vm2071 = vcmp.gt.f32.partialorder %v2033, 0.0
        %vm2072 = vcmp.gt.f32.partialorder %v2036, 0.0
        %vm2073 = vcmp.gt.f32.partialorder %v2038, 0.0
        %vm2074 = vcmp.gt.f32.partialorder %v2041, 0.0
        %vm2075 = vcmp.gt.f32.partialorder %v2043, 0.0
        %vm2076 = vcmp.gt.f32.partialorder %v2046, 0.0
        %vm2077 = vcmp.gt.f32.partialorder %v2048, 0.0
        %vm2078 = vcmp.gt.f32.partialorder %v2051, 0.0
        %vm2079 = vcmp.gt.f32.partialorder %v2053, 0.0
        %vm2080 = vcmp.gt.f32.partialorder %v2056, 0.0
        %vm2081 = vcmp.gt.f32.partialorder %v2058, 0.0
        %vm2082 = vcmp.gt.f32.partialorder %v2061, 0.0
        %vm2083 = vcmp.gt.f32.partialorder %v2063, 0.0
        %vm2084 = vcmp.gt.f32.partialorder %v2066, 0.0
        %vm2085 = vcmp.gt.f32.partialorder %v2068, 0.0
        %v2086 = vmul.f32 %v2031, 0.01
        %v2087 = vmul.f32 %v2033, 0.01
        %v2088 = vmul.f32 %v2036, 0.01
        %v2089 = vmul.f32 %v2038, 0.01
        %v2090 = vmul.f32 %v2041, 0.01
        %v2091 = vmul.f32 %v2043, 0.01
        %v2092 = vmul.f32 %v2046, 0.01
        %v2093 = vmul.f32 %v2048, 0.01
        %v2094 = vmul.f32 %v2051, 0.01
        %v2095 = vmul.f32 %v2053, 0.01
        %v2096 = vmul.f32 %v2056, 0.01
        %v2097 = vmul.f32 %v2058, 0.01
        %v2098 = vmul.f32 %v2061, 0.01
        %v2099 = vmul.f32 %v2063, 0.01
        %v2100 = vmul.f32 %v2066, 0.01
        %v2101 = vmul.f32 %v2068, 0.01
        %v2102 = vsel %vm2070, %v2031, %v2086
        %v2103 = vsel %vm2071, %v2033, %v2087
        %v2104 = vsel %vm2072, %v2036, %v2088
        %v2105 = vsel %vm2073, %v2038, %v2089
        %v2106 = vsel %vm2074, %v2041, %v2090
        %v2107 = vsel %vm2075, %v2043, %v2091
        %v2108 = vsel %vm2076, %v2046, %v2092
        %v2109 = vsel %vm2077, %v2048, %v2093
        %v2110 = vsel %vm2078, %v2051, %v2094
        %v2111 = vsel %vm2079, %v2053, %v2095
        %v2112 = vsel %vm2080, %v2056, %v2096
        %v2113 = vsel %vm2081, %v2058, %v2097
        %v2114 = vsel %vm2082, %v2061, %v2098
        %v2115 = vsel %vm2083, %v2063, %v2099
        %v2116 = vsel %vm2084, %v2066, %v2100
        %v2117 = vsel %vm2085, %v2068, %v2101
        %v2118 = vpack.c.bf16 %v2103, %v2102
        %v2119 = vpack.c.bf16 %v2105, %v2104
        %v2120 = vpack.c.bf16 %v2107, %v2106
        %v2121 = vpack.c.bf16 %v2109, %v2108
        %v2122 = vpack.c.bf16 %v2111, %v2110
        %v2123 = vpack.c.bf16 %v2113, %v2112
        %v2124 = vpack.c.bf16 %v2115, %v2114
        %v2125 = vpack.c.bf16 %v2117, %v2116
        %v2126 = vld [vmem:[#allocation14] sm:$0xf]
        %v2127 = vld [vmem:[#allocation14 + $0x4] sm:$0xf]
        %v2128 = vld [vmem:[#allocation14 + $0x8] sm:$0xf]
        %v2129 = vld [vmem:[#allocation14 + $0xc] sm:$0xf]
        %v2130 = vld [vmem:[#allocation14 + $0x10] sm:$0xf]
        %v2131 = vld [vmem:[#allocation14 + $0x14] sm:$0xf]
        %v2132 = vld [vmem:[#allocation14 + $0x18] sm:$0xf]
        %v2133 = vld [vmem:[#allocation14 + $0x1c] sm:$0xf]
        %v2134 = vld [vmem:[#allocation14 + $0x20] sm:$0xf]
        %v2135 = vld [vmem:[#allocation14 + $0x24] sm:$0xf]
        %v2136 = vld [vmem:[#allocation14 + $0x28] sm:$0xf]
        %v2137 = vld [vmem:[#allocation14 + $0x2c] sm:$0xf]
        %v2138 = vld [vmem:[#allocation14 + $0x30] sm:$0xf]
        %v2139 = vld [vmem:[#allocation14 + $0x34] sm:$0xf]
        %v2140 = vld [vmem:[#allocation14 + $0x38] sm:$0xf]
        %v2141 = vld [vmem:[#allocation14 + $0x3c] sm:$0xf]
        %v2142 = vld [vmem:[%s11] sm:$0x1]
        %v2144 = vperm.slane %v2142, 0
        %v2162 = vunpack.c.l.b16 %v2126
        %v2163 = vunpack.c.l.b16 %v2127
        %v2164 = vunpack.c.l.b16 %v2128
        %v2165 = vunpack.c.l.b16 %v2129
        %v2166 = vunpack.c.l.b16 %v2130
        %v2167 = vunpack.c.l.b16 %v2131
        %v2168 = vunpack.c.l.b16 %v2132
        %v2169 = vunpack.c.l.b16 %v2133
        %v2170 = vunpack.c.l.b16 %v2134
        %v2171 = vunpack.c.l.b16 %v2135
        %v2172 = vunpack.c.l.b16 %v2136
        %v2173 = vunpack.c.l.b16 %v2137
        %v2174 = vunpack.c.l.b16 %v2138
        %v2175 = vunpack.c.l.b16 %v2139
        %v2176 = vunpack.c.l.b16 %v2140
        %v2177 = vunpack.c.l.b16 %v2141
        %v2178 = vpack.c.b16 %v2163, %v2162
        %v2179 = vpack.c.b16 %v2165, %v2164
        %v2180 = vpack.c.b16 %v2167, %v2166
        %v2181 = vpack.c.b16 %v2169, %v2168
        %v2182 = vpack.c.b16 %v2171, %v2170
        %v2183 = vpack.c.b16 %v2173, %v2172
        %v2184 = vpack.c.b16 %v2175, %v2174
        %v2185 = vpack.c.b16 %v2177, %v2176
        %2194 = vmatpush.bf16.msra.mxu0 %v2185
        %2195 = vmatpush.bf16.msra.mxu0 %v2184
        %2196 = vmatpush.bf16.msra.mxu0 %v2183
        %2197 = vmatpush.bf16.msra.mxu0 %v2182
        %2198 = vmatpush.bf16.msra.mxu0 %v2181
        %2199 = vmatpush.bf16.msra.mxu0 %v2180
        %2200 = vmatpush.bf16.msra.mxu0 %v2179
        %2201 = vmatpush.bf16.msra.mxu0 %v2178
        %2202 = vmatmul.bf16.gmra.mxu0 %v2118
        %v2203 = vpop.f32.mrf.mxu0
        %v2204 = vadd.f32 %v2144, %v2203
        %v2205 = vpop.f32.mrf.mxu0
        %v2206 = vadd.f32 %v2144, %v2205
        %2207 = vmatmul.bf16.gmra.mxu0 %v2119
        %v2208 = vpop.f32.mrf.mxu0
        %v2209 = vadd.f32 %v2144, %v2208
        %v2210 = vpop.f32.mrf.mxu0
        %v2211 = vadd.f32 %v2144, %v2210
        %2212 = vmatmul.bf16.gmra.mxu0 %v2120
        %v2213 = vpop.f32.mrf.mxu0
        %v2214 = vadd.f32 %v2144, %v2213
        %v2215 = vpop.f32.mrf.mxu0
        %v2216 = vadd.f32 %v2144, %v2215
        %2217 = vmatmul.bf16.gmra.mxu0 %v2121
        %v2218 = vpop.f32.mrf.mxu0
        %v2219 = vadd.f32 %v2144, %v2218
        %v2220 = vpop.f32.mrf.mxu0
        %v2221 = vadd.f32 %v2144, %v2220
        %2222 = vmatmul.bf16.gmra.mxu0 %v2122
        %v2223 = vpop.f32.mrf.mxu0
        %v2224 = vadd.f32 %v2144, %v2223
        %v2225 = vpop.f32.mrf.mxu0
        %v2226 = vadd.f32 %v2144, %v2225
        %2227 = vmatmul.bf16.gmra.mxu0 %v2123
        %v2228 = vpop.f32.mrf.mxu0
        %v2229 = vadd.f32 %v2144, %v2228
        %v2230 = vpop.f32.mrf.mxu0
        %v2231 = vadd.f32 %v2144, %v2230
        %2232 = vmatmul.bf16.gmra.mxu0 %v2124
        %v2233 = vpop.f32.mrf.mxu0
        %v2234 = vadd.f32 %v2144, %v2233
        %v2235 = vpop.f32.mrf.mxu0
        %v2236 = vadd.f32 %v2144, %v2235
        %2237 = vmatmul.bf16.gmra.mxu0 %v2125
        %v2238 = vpop.f32.mrf.mxu0
        %v2239 = vadd.f32 %v2144, %v2238
        %v2240 = vpop.f32.mrf.mxu0
        %v2241 = vadd.f32 %v2144, %v2240
        %2242 = vdwg.mxu0
        %v2243 = vld [vmem:[%s801] sm:$0xff]
        %v2244 = vld [vmem:[%s801 + $0x8] sm:$0xff]
        %v2245 = vld [vmem:[%s801 + $0x10] sm:$0xff]
        %v2246 = vld [vmem:[%s801 + $0x18] sm:$0xff]
        %v2247 = vld [vmem:[%s801 + $0x20] sm:$0xff]
        %v2248 = vld [vmem:[%s801 + $0x28] sm:$0xff]
        %v2249 = vld [vmem:[%s801 + $0x30] sm:$0xff]
        %v2250 = vld [vmem:[%s801 + $0x38] sm:$0xff]
        %v2251 = vld [vmem:[%s801 + $0x40] sm:$0xff]
        %v2252 = vld [vmem:[%s801 + $0x48] sm:$0xff]
        %v2253 = vld [vmem:[%s801 + $0x50] sm:$0xff]
        %v2254 = vld [vmem:[%s801 + $0x58] sm:$0xff]
        %v2255 = vld [vmem:[%s801 + $0x60] sm:$0xff]
        %v2256 = vld [vmem:[%s801 + $0x68] sm:$0xff]
        %v2257 = vld [vmem:[%s801 + $0x70] sm:$0xff]
        %v2258 = vld [vmem:[%s801 + $0x78] sm:$0xff]
        %v2259 = vadd.f32 %v2243, %v2204
        %v2260 = vadd.f32 %v2244, %v2206
        %v2261 = vadd.f32 %v2245, %v2209
        %v2262 = vadd.f32 %v2246, %v2211
        %v2263 = vadd.f32 %v2247, %v2214
        %v2264 = vadd.f32 %v2248, %v2216
        %v2265 = vadd.f32 %v2249, %v2219
        %v2266 = vadd.f32 %v2250, %v2221
        %v2267 = vadd.f32 %v2251, %v2224
        %v2268 = vadd.f32 %v2252, %v2226
        %v2269 = vadd.f32 %v2253, %v2229
        %v2270 = vadd.f32 %v2254, %v2231
        %v2271 = vadd.f32 %v2255, %v2234
        %v2272 = vadd.f32 %v2256, %v2236
        %v2273 = vadd.f32 %v2257, %v2239
        %v2274 = vadd.f32 %v2258, %v2241
        %v2275 = vld [vmem:[%s18] sm:$0x1]
        %v2276 = vld [vmem:[%s19] sm:$0x1]
        %2277 = vadd.xlane.f32.xlu0 %v2259
        %v2278 = vpop.xlane.xlu0 %2277
        %2279 = vadd.xlane.f32.xlu0 %v2260
        %v2280 = vpop.xlane.xlu0 %2279
        %2281 = vadd.xlane.f32.xlu0 %v2261
        %v2282 = vpop.xlane.xlu0 %2281
        %2283 = vadd.xlane.f32.xlu0 %v2262
        %v2284 = vpop.xlane.xlu0 %2283
        %2285 = vadd.xlane.f32.xlu0 %v2263
        %v2286 = vpop.xlane.xlu0 %2285
        %2287 = vadd.xlane.f32.xlu0 %v2264
        %v2288 = vpop.xlane.xlu0 %2287
        %2289 = vadd.xlane.f32.xlu0 %v2265
        %v2290 = vpop.xlane.xlu0 %2289
        %2291 = vadd.xlane.f32.xlu0 %v2266
        %v2292 = vpop.xlane.xlu0 %2291
        %2293 = vadd.xlane.f32.xlu0 %v2267
        %v2294 = vpop.xlane.xlu0 %2293
        %2295 = vadd.xlane.f32.xlu0 %v2268
        %v2296 = vpop.xlane.xlu0 %2295
        %2297 = vadd.xlane.f32.xlu0 %v2269
        %v2298 = vpop.xlane.xlu0 %2297
        %2299 = vadd.xlane.f32.xlu0 %v2270
        %v2300 = vpop.xlane.xlu0 %2299
        %2301 = vadd.xlane.f32.xlu0 %v2271
        %v2302 = vpop.xlane.xlu0 %2301
        %2303 = vadd.xlane.f32.xlu0 %v2272
        %v2304 = vpop.xlane.xlu0 %2303
        %2305 = vadd.xlane.f32.xlu0 %v2273
        %v2306 = vpop.xlane.xlu0 %2305
        %2307 = vadd.xlane.f32.xlu0 %v2274
        %v2308 = vpop.xlane.xlu0 %2307
        %v2309 = vrcp.pop 128.0
        %v2310 = vmul.f32 128.0, %v2309
        %v2311 = vsub.f32 1.0, %v2310
        %v2312 = vmul.f32 %v2309, %v2311
        %v2313 = vadd.f32 %v2309, %v2312
        %vm2314 = vweird.f32 %v2309
        %v2315 = vsel %vm2314, %v2309, %v2313
        %v2316 = vmul.f32 %v2278, %v2315
        %v2317 = vmul.f32 %v2280, %v2315
        %v2318 = vmul.f32 %v2282, %v2315
        %v2319 = vmul.f32 %v2284, %v2315
        %v2320 = vmul.f32 %v2286, %v2315
        %v2321 = vmul.f32 %v2288, %v2315
        %v2322 = vmul.f32 %v2290, %v2315
        %v2323 = vmul.f32 %v2292, %v2315
        %v2324 = vmul.f32 %v2294, %v2315
        %v2325 = vmul.f32 %v2296, %v2315
        %v2326 = vmul.f32 %v2298, %v2315
        %v2327 = vmul.f32 %v2300, %v2315
        %v2328 = vmul.f32 %v2302, %v2315
        %v2329 = vmul.f32 %v2304, %v2315
        %v2330 = vmul.f32 %v2306, %v2315
        %v2331 = vmul.f32 %v2308, %v2315
        %v2332 = vsub.f32 %v2259, %v2316
        %v2333 = vsub.f32 %v2260, %v2317
        %v2334 = vsub.f32 %v2261, %v2318
        %v2335 = vsub.f32 %v2262, %v2319
        %v2336 = vsub.f32 %v2263, %v2320
        %v2337 = vsub.f32 %v2264, %v2321
        %v2338 = vsub.f32 %v2265, %v2322
        %v2339 = vsub.f32 %v2266, %v2323
        %v2340 = vsub.f32 %v2267, %v2324
        %v2341 = vsub.f32 %v2268, %v2325
        %v2342 = vsub.f32 %v2269, %v2326
        %v2343 = vsub.f32 %v2270, %v2327
        %v2344 = vsub.f32 %v2271, %v2328
        %v2345 = vsub.f32 %v2272, %v2329
        %v2346 = vsub.f32 %v2273, %v2330
        %v2347 = vsub.f32 %v2274, %v2331
        %v2348 = vmul.f32 %v2332, %v2332
        %v2349 = vmul.f32 %v2333, %v2333
        %v2350 = vmul.f32 %v2334, %v2334
        %v2351 = vmul.f32 %v2335, %v2335
        %v2352 = vmul.f32 %v2336, %v2336
        %v2353 = vmul.f32 %v2337, %v2337
        %v2354 = vmul.f32 %v2338, %v2338
        %v2355 = vmul.f32 %v2339, %v2339
        %v2356 = vmul.f32 %v2340, %v2340
        %v2357 = vmul.f32 %v2341, %v2341
        %v2358 = vmul.f32 %v2342, %v2342
        %v2359 = vmul.f32 %v2343, %v2343
        %v2360 = vmul.f32 %v2344, %v2344
        %v2361 = vmul.f32 %v2345, %v2345
        %v2362 = vmul.f32 %v2346, %v2346
        %v2363 = vmul.f32 %v2347, %v2347
        %2364 = vadd.xlane.f32.xlu0 %v2348
        %v2365 = vpop.xlane.xlu0 %2364
        %2366 = vadd.xlane.f32.xlu0 %v2349
        %v2367 = vpop.xlane.xlu0 %2366
        %2368 = vadd.xlane.f32.xlu0 %v2350
        %v2369 = vpop.xlane.xlu0 %2368
        %2370 = vadd.xlane.f32.xlu0 %v2351
        %v2371 = vpop.xlane.xlu0 %2370
        %2372 = vadd.xlane.f32.xlu0 %v2352
        %v2373 = vpop.xlane.xlu0 %2372
        %2374 = vadd.xlane.f32.xlu0 %v2353
        %v2375 = vpop.xlane.xlu0 %2374
        %2376 = vadd.xlane.f32.xlu0 %v2354
        %v2377 = vpop.xlane.xlu0 %2376
        %2378 = vadd.xlane.f32.xlu0 %v2355
        %v2379 = vpop.xlane.xlu0 %2378
        %2380 = vadd.xlane.f32.xlu0 %v2356
        %v2381 = vpop.xlane.xlu0 %2380
        %2382 = vadd.xlane.f32.xlu0 %v2357
        %v2383 = vpop.xlane.xlu0 %2382
        %2384 = vadd.xlane.f32.xlu0 %v2358
        %v2385 = vpop.xlane.xlu0 %2384
        %2386 = vadd.xlane.f32.xlu0 %v2359
        %v2387 = vpop.xlane.xlu0 %2386
        %2388 = vadd.xlane.f32.xlu0 %v2360
        %v2389 = vpop.xlane.xlu0 %2388
        %2390 = vadd.xlane.f32.xlu0 %v2361
        %v2391 = vpop.xlane.xlu0 %2390
        %2392 = vadd.xlane.f32.xlu0 %v2362
        %v2393 = vpop.xlane.xlu0 %2392
        %2394 = vadd.xlane.f32.xlu0 %v2363
        %v2395 = vpop.xlane.xlu0 %2394
        %v2396 = vmul.f32 %v2365, %v2315
        %v2397 = vmul.f32 %v2367, %v2315
        %v2398 = vmul.f32 %v2369, %v2315
        %v2399 = vmul.f32 %v2371, %v2315
        %v2400 = vmul.f32 %v2373, %v2315
        %v2401 = vmul.f32 %v2375, %v2315
        %v2402 = vmul.f32 %v2377, %v2315
        %v2403 = vmul.f32 %v2379, %v2315
        %v2404 = vmul.f32 %v2381, %v2315
        %v2405 = vmul.f32 %v2383, %v2315
        %v2406 = vmul.f32 %v2385, %v2315
        %v2407 = vmul.f32 %v2387, %v2315
        %v2408 = vmul.f32 %v2389, %v2315
        %v2409 = vmul.f32 %v2391, %v2315
        %v2410 = vmul.f32 %v2393, %v2315
        %v2411 = vmul.f32 %v2395, %v2315
        %v2412 = vadd.f32 %v2396, 1e-05
        %v2413 = vadd.f32 %v2397, 1e-05
        %v2414 = vadd.f32 %v2398, 1e-05
        %v2415 = vadd.f32 %v2399, 1e-05
        %v2416 = vadd.f32 %v2400, 1e-05
        %v2417 = vadd.f32 %v2401, 1e-05
        %v2418 = vadd.f32 %v2402, 1e-05
        %v2419 = vadd.f32 %v2403, 1e-05
        %v2420 = vadd.f32 %v2404, 1e-05
        %v2421 = vadd.f32 %v2405, 1e-05
        %v2422 = vadd.f32 %v2406, 1e-05
        %v2423 = vadd.f32 %v2407, 1e-05
        %v2424 = vadd.f32 %v2408, 1e-05
        %v2425 = vadd.f32 %v2409, 1e-05
        %v2426 = vadd.f32 %v2410, 1e-05
        %v2427 = vadd.f32 %v2411, 1e-05
        %v2428 = vrsqrt.pop %v2412
        %v2429 = vmul.f32 %v2428, %v2412
        %v2430 = vmul.f32 %v2429, %v2428
        %v2431 = vmul.f32 0.5, %v2430
        %v2432 = vsub.f32 1.5, %v2431
        %v2433 = vmul.f32 %v2428, %v2432
        %vm2434 = vweird.f32 %v2412
        %vm2435 = vweird.f32 %v2428
        %vm2436 = vmor %vm2434, %vm2435
        %v2437 = vsel %vm2436, %v2428, %v2433
        %v2438 = vrsqrt.pop %v2413
        %v2439 = vmul.f32 %v2438, %v2413
        %v2440 = vmul.f32 %v2439, %v2438
        %v2441 = vmul.f32 0.5, %v2440
        %v2442 = vsub.f32 1.5, %v2441
        %v2443 = vmul.f32 %v2438, %v2442
        %vm2444 = vweird.f32 %v2413
        %vm2445 = vweird.f32 %v2438
        %vm2446 = vmor %vm2444, %vm2445
        %v2447 = vsel %vm2446, %v2438, %v2443
        %v2448 = vrsqrt.pop %v2414
        %v2449 = vmul.f32 %v2448, %v2414
        %v2450 = vmul.f32 %v2449, %v2448
        %v2451 = vmul.f32 0.5, %v2450
        %v2452 = vsub.f32 1.5, %v2451
        %v2453 = vmul.f32 %v2448, %v2452
        %vm2454 = vweird.f32 %v2414
        %vm2455 = vweird.f32 %v2448
        %vm2456 = vmor %vm2454, %vm2455
        %v2457 = vsel %vm2456, %v2448, %v2453
        %v2458 = vrsqrt.pop %v2415
        %v2459 = vmul.f32 %v2458, %v2415
        %v2460 = vmul.f32 %v2459, %v2458
        %v2461 = vmul.f32 0.5, %v2460
        %v2462 = vsub.f32 1.5, %v2461
        %v2463 = vmul.f32 %v2458, %v2462
        %vm2464 = vweird.f32 %v2415
        %vm2465 = vweird.f32 %v2458
        %vm2466 = vmor %vm2464, %vm2465
        %v2467 = vsel %vm2466, %v2458, %v2463
        %v2468 = vrsqrt.pop %v2416
        %v2469 = vmul.f32 %v2468, %v2416
        %v2470 = vmul.f32 %v2469, %v2468
        %v2471 = vmul.f32 0.5, %v2470
        %v2472 = vsub.f32 1.5, %v2471
        %v2473 = vmul.f32 %v2468, %v2472
        %vm2474 = vweird.f32 %v2416
        %vm2475 = vweird.f32 %v2468
        %vm2476 = vmor %vm2474, %vm2475
        %v2477 = vsel %vm2476, %v2468, %v2473
        %v2478 = vrsqrt.pop %v2417
        %v2479 = vmul.f32 %v2478, %v2417
        %v2480 = vmul.f32 %v2479, %v2478
        %v2481 = vmul.f32 0.5, %v2480
        %v2482 = vsub.f32 1.5, %v2481
        %v2483 = vmul.f32 %v2478, %v2482
        %vm2484 = vweird.f32 %v2417
        %vm2485 = vweird.f32 %v2478
        %vm2486 = vmor %vm2484, %vm2485
        %v2487 = vsel %vm2486, %v2478, %v2483
        %v2488 = vrsqrt.pop %v2418
        %v2489 = vmul.f32 %v2488, %v2418
        %v2490 = vmul.f32 %v2489, %v2488
        %v2491 = vmul.f32 0.5, %v2490
        %v2492 = vsub.f32 1.5, %v2491
        %v2493 = vmul.f32 %v2488, %v2492
        %vm2494 = vweird.f32 %v2418
        %vm2495 = vweird.f32 %v2488
        %vm2496 = vmor %vm2494, %vm2495
        %v2497 = vsel %vm2496, %v2488, %v2493
        %v2498 = vrsqrt.pop %v2419
        %v2499 = vmul.f32 %v2498, %v2419
        %v2500 = vmul.f32 %v2499, %v2498
        %v2501 = vmul.f32 0.5, %v2500
        %v2502 = vsub.f32 1.5, %v2501
        %v2503 = vmul.f32 %v2498, %v2502
        %vm2504 = vweird.f32 %v2419
        %vm2505 = vweird.f32 %v2498
        %vm2506 = vmor %vm2504, %vm2505
        %v2507 = vsel %vm2506, %v2498, %v2503
        %v2508 = vrsqrt.pop %v2420
        %v2509 = vmul.f32 %v2508, %v2420
        %v2510 = vmul.f32 %v2509, %v2508
        %v2511 = vmul.f32 0.5, %v2510
        %v2512 = vsub.f32 1.5, %v2511
        %v2513 = vmul.f32 %v2508, %v2512
        %vm2514 = vweird.f32 %v2420
        %vm2515 = vweird.f32 %v2508
        %vm2516 = vmor %vm2514, %vm2515
        %v2517 = vsel %vm2516, %v2508, %v2513
        %v2518 = vrsqrt.pop %v2421
        %v2519 = vmul.f32 %v2518, %v2421
        %v2520 = vmul.f32 %v2519, %v2518
        %v2521 = vmul.f32 0.5, %v2520
        %v2522 = vsub.f32 1.5, %v2521
        %v2523 = vmul.f32 %v2518, %v2522
        %vm2524 = vweird.f32 %v2421
        %vm2525 = vweird.f32 %v2518
        %vm2526 = vmor %vm2524, %vm2525
        %v2527 = vsel %vm2526, %v2518, %v2523
        %v2528 = vrsqrt.pop %v2422
        %v2529 = vmul.f32 %v2528, %v2422
        %v2530 = vmul.f32 %v2529, %v2528
        %v2531 = vmul.f32 0.5, %v2530
        %v2532 = vsub.f32 1.5, %v2531
        %v2533 = vmul.f32 %v2528, %v2532
        %vm2534 = vweird.f32 %v2422
        %vm2535 = vweird.f32 %v2528
        %vm2536 = vmor %vm2534, %vm2535
        %v2537 = vsel %vm2536, %v2528, %v2533
        %v2538 = vrsqrt.pop %v2423
        %v2539 = vmul.f32 %v2538, %v2423
        %v2540 = vmul.f32 %v2539, %v2538
        %v2541 = vmul.f32 0.5, %v2540
        %v2542 = vsub.f32 1.5, %v2541
        %v2543 = vmul.f32 %v2538, %v2542
        %vm2544 = vweird.f32 %v2423
        %vm2545 = vweird.f32 %v2538
        %vm2546 = vmor %vm2544, %vm2545
        %v2547 = vsel %vm2546, %v2538, %v2543
        %v2548 = vrsqrt.pop %v2424
        %v2549 = vmul.f32 %v2548, %v2424
        %v2550 = vmul.f32 %v2549, %v2548
        %v2551 = vmul.f32 0.5, %v2550
        %v2552 = vsub.f32 1.5, %v2551
        %v2553 = vmul.f32 %v2548, %v2552
        %vm2554 = vweird.f32 %v2424
        %vm2555 = vweird.f32 %v2548
        %vm2556 = vmor %vm2554, %vm2555
        %v2557 = vsel %vm2556, %v2548, %v2553
        %v2558 = vrsqrt.pop %v2425
        %v2559 = vmul.f32 %v2558, %v2425
        %v2560 = vmul.f32 %v2559, %v2558
        %v2561 = vmul.f32 0.5, %v2560
        %v2562 = vsub.f32 1.5, %v2561
        %v2563 = vmul.f32 %v2558, %v2562
        %vm2564 = vweird.f32 %v2425
        %vm2565 = vweird.f32 %v2558
        %vm2566 = vmor %vm2564, %vm2565
        %v2567 = vsel %vm2566, %v2558, %v2563
        %v2568 = vrsqrt.pop %v2426
        %v2569 = vmul.f32 %v2568, %v2426
        %v2570 = vmul.f32 %v2569, %v2568
        %v2571 = vmul.f32 0.5, %v2570
        %v2572 = vsub.f32 1.5, %v2571
        %v2573 = vmul.f32 %v2568, %v2572
        %vm2574 = vweird.f32 %v2426
        %vm2575 = vweird.f32 %v2568
        %vm2576 = vmor %vm2574, %vm2575
        %v2577 = vsel %vm2576, %v2568, %v2573
        %v2578 = vrsqrt.pop %v2427
        %v2579 = vmul.f32 %v2578, %v2427
        %v2580 = vmul.f32 %v2579, %v2578
        %v2581 = vmul.f32 0.5, %v2580
        %v2582 = vsub.f32 1.5, %v2581
        %v2583 = vmul.f32 %v2578, %v2582
        %vm2584 = vweird.f32 %v2427
        %vm2585 = vweird.f32 %v2578
        %vm2586 = vmor %vm2584, %vm2585
        %v2587 = vsel %vm2586, %v2578, %v2583
        %v2588 = vmul.f32 %v2332, %v2437
        %v2589 = vmul.f32 %v2333, %v2447
        %v2590 = vmul.f32 %v2334, %v2457
        %v2591 = vmul.f32 %v2335, %v2467
        %v2592 = vmul.f32 %v2336, %v2477
        %v2593 = vmul.f32 %v2337, %v2487
        %v2594 = vmul.f32 %v2338, %v2497
        %v2595 = vmul.f32 %v2339, %v2507
        %v2596 = vmul.f32 %v2340, %v2517
        %v2597 = vmul.f32 %v2341, %v2527
        %v2598 = vmul.f32 %v2342, %v2537
        %v2599 = vmul.f32 %v2343, %v2547
        %v2600 = vmul.f32 %v2344, %v2557
        %v2601 = vmul.f32 %v2345, %v2567
        %v2602 = vmul.f32 %v2346, %v2577
        %v2603 = vmul.f32 %v2347, %v2587
        %v2605 = vperm.slane %v2275, 0
        %v2607 = vmul.f32 %v2588, %v2605
        %v2608 = vmul.f32 %v2589, %v2605
        %v2609 = vmul.f32 %v2590, %v2605
        %v2610 = vmul.f32 %v2591, %v2605
        %v2611 = vmul.f32 %v2592, %v2605
        %v2612 = vmul.f32 %v2593, %v2605
        %v2613 = vmul.f32 %v2594, %v2605
        %v2614 = vmul.f32 %v2595, %v2605
        %v2615 = vmul.f32 %v2596, %v2605
        %v2616 = vmul.f32 %v2597, %v2605
        %v2617 = vmul.f32 %v2598, %v2605
        %v2618 = vmul.f32 %v2599, %v2605
        %v2619 = vmul.f32 %v2600, %v2605
        %v2620 = vmul.f32 %v2601, %v2605
        %v2621 = vmul.f32 %v2602, %v2605
        %v2622 = vmul.f32 %v2603, %v2605
        %v2624 = vperm.slane %v2276, 0
        %v2626 = vadd.f32 %v2607, %v2624
        %v2627 = vadd.f32 %v2608, %v2624
        %v2628 = vadd.f32 %v2609, %v2624
        %v2629 = vadd.f32 %v2610, %v2624
        %v2630 = vadd.f32 %v2611, %v2624
        %v2631 = vadd.f32 %v2612, %v2624
        %v2632 = vadd.f32 %v2613, %v2624
        %v2633 = vadd.f32 %v2614, %v2624
        %v2634 = vadd.f32 %v2615, %v2624
        %v2635 = vadd.f32 %v2616, %v2624
        %v2636 = vadd.f32 %v2617, %v2624
        %v2637 = vadd.f32 %v2618, %v2624
        %v2638 = vadd.f32 %v2619, %v2624
        %v2639 = vadd.f32 %v2620, %v2624
        %v2640 = vadd.f32 %v2621, %v2624
        %v2641 = vadd.f32 %v2622, %v2624
        %v2642 = vpack.c.bf16 %v2627, %v2626
        %v2643 = vpack.c.bf16 %v2629, %v2628
        %v2644 = vpack.c.bf16 %v2631, %v2630
        %v2645 = vpack.c.bf16 %v2633, %v2632
        %v2646 = vpack.c.bf16 %v2635, %v2634
        %v2647 = vpack.c.bf16 %v2637, %v2636
        %v2648 = vpack.c.bf16 %v2639, %v2638
        %v2649 = vpack.c.bf16 %v2641, %v2640
        %v2650 = vld [vmem:[#allocation16] sm:$0xf]
        %v2651 = vld [vmem:[#allocation16 + $0x4] sm:$0xf]
        %v2652 = vld [vmem:[#allocation16 + $0x8] sm:$0xf]
        %v2653 = vld [vmem:[#allocation16 + $0xc] sm:$0xf]
        %v2654 = vld [vmem:[#allocation16 + $0x10] sm:$0xf]
        %v2655 = vld [vmem:[#allocation16 + $0x14] sm:$0xf]
        %v2656 = vld [vmem:[#allocation16 + $0x18] sm:$0xf]
        %v2657 = vld [vmem:[#allocation16 + $0x1c] sm:$0xf]
        %v2658 = vld [vmem:[#allocation16 + $0x20] sm:$0xf]
        %v2659 = vld [vmem:[#allocation16 + $0x24] sm:$0xf]
        %v2660 = vld [vmem:[#allocation16 + $0x28] sm:$0xf]
        %v2661 = vld [vmem:[#allocation16 + $0x2c] sm:$0xf]
        %v2662 = vld [vmem:[#allocation16 + $0x30] sm:$0xf]
        %v2663 = vld [vmem:[#allocation16 + $0x34] sm:$0xf]
        %v2664 = vld [vmem:[#allocation16 + $0x38] sm:$0xf]
        %v2665 = vld [vmem:[#allocation16 + $0x3c] sm:$0xf]
        %v2666 = vld [vmem:[%s13] sm:$0x1]
        %v2668 = vperm.slane %v2666, 0
        %v2686 = vunpack.c.l.b16 %v2650
        %v2687 = vunpack.c.l.b16 %v2651
        %v2688 = vunpack.c.l.b16 %v2652
        %v2689 = vunpack.c.l.b16 %v2653
        %v2690 = vunpack.c.l.b16 %v2654
        %v2691 = vunpack.c.l.b16 %v2655
        %v2692 = vunpack.c.l.b16 %v2656
        %v2693 = vunpack.c.l.b16 %v2657
        %v2694 = vunpack.c.l.b16 %v2658
        %v2695 = vunpack.c.l.b16 %v2659
        %v2696 = vunpack.c.l.b16 %v2660
        %v2697 = vunpack.c.l.b16 %v2661
        %v2698 = vunpack.c.l.b16 %v2662
        %v2699 = vunpack.c.l.b16 %v2663
        %v2700 = vunpack.c.l.b16 %v2664
        %v2701 = vunpack.c.l.b16 %v2665
        %v2702 = vpack.c.b16 %v2687, %v2686
        %v2703 = vpack.c.b16 %v2689, %v2688
        %v2704 = vpack.c.b16 %v2691, %v2690
        %v2705 = vpack.c.b16 %v2693, %v2692
        %v2706 = vpack.c.b16 %v2695, %v2694
        %v2707 = vpack.c.b16 %v2697, %v2696
        %v2708 = vpack.c.b16 %v2699, %v2698
        %v2709 = vpack.c.b16 %v2701, %v2700
        %2718 = vmatpush.bf16.msra.mxu0 %v2709
        %2719 = vmatpush.bf16.msra.mxu0 %v2708
        %2720 = vmatpush.bf16.msra.mxu0 %v2707
        %2721 = vmatpush.bf16.msra.mxu0 %v2706
        %2722 = vmatpush.bf16.msra.mxu0 %v2705
        %2723 = vmatpush.bf16.msra.mxu0 %v2704
        %2724 = vmatpush.bf16.msra.mxu0 %v2703
        %2725 = vmatpush.bf16.msra.mxu0 %v2702
        %2726 = vmatmul.bf16.gmra.mxu0 %v2642
        %v2727 = vpop.f32.mrf.mxu0
        %v2728 = vadd.f32 %v2668, %v2727
        %v2729 = vpop.f32.mrf.mxu0
        %v2730 = vadd.f32 %v2668, %v2729
        %2731 = vmatmul.bf16.gmra.mxu0 %v2643
        %v2732 = vpop.f32.mrf.mxu0
        %v2733 = vadd.f32 %v2668, %v2732
        %v2734 = vpop.f32.mrf.mxu0
        %v2735 = vadd.f32 %v2668, %v2734
        %2736 = vmatmul.bf16.gmra.mxu0 %v2644
        %v2737 = vpop.f32.mrf.mxu0
        %v2738 = vadd.f32 %v2668, %v2737
        %v2739 = vpop.f32.mrf.mxu0
        %v2740 = vadd.f32 %v2668, %v2739
        %2741 = vmatmul.bf16.gmra.mxu0 %v2645
        %v2742 = vpop.f32.mrf.mxu0
        %v2743 = vadd.f32 %v2668, %v2742
        %v2744 = vpop.f32.mrf.mxu0
        %v2745 = vadd.f32 %v2668, %v2744
        %2746 = vmatmul.bf16.gmra.mxu0 %v2646
        %v2747 = vpop.f32.mrf.mxu0
        %v2748 = vadd.f32 %v2668, %v2747
        %v2749 = vpop.f32.mrf.mxu0
        %v2750 = vadd.f32 %v2668, %v2749
        %2751 = vmatmul.bf16.gmra.mxu0 %v2647
        %v2752 = vpop.f32.mrf.mxu0
        %v2753 = vadd.f32 %v2668, %v2752
        %v2754 = vpop.f32.mrf.mxu0
        %v2755 = vadd.f32 %v2668, %v2754
        %2756 = vmatmul.bf16.gmra.mxu0 %v2648
        %v2757 = vpop.f32.mrf.mxu0
        %v2758 = vadd.f32 %v2668, %v2757
        %v2759 = vpop.f32.mrf.mxu0
        %v2760 = vadd.f32 %v2668, %v2759
        %2761 = vmatmul.bf16.gmra.mxu0 %v2649
        %v2762 = vpop.f32.mrf.mxu0
        %v2763 = vadd.f32 %v2668, %v2762
        %v2764 = vpop.f32.mrf.mxu0
        %v2765 = vadd.f32 %v2668, %v2764
        %2766 = vdwg.mxu0
        %vm2767 = vcmp.gt.f32.partialorder %v2728, 0.0
        %vm2768 = vcmp.gt.f32.partialorder %v2730, 0.0
        %vm2769 = vcmp.gt.f32.partialorder %v2733, 0.0
        %vm2770 = vcmp.gt.f32.partialorder %v2735, 0.0
        %vm2771 = vcmp.gt.f32.partialorder %v2738, 0.0
        %vm2772 = vcmp.gt.f32.partialorder %v2740, 0.0
        %vm2773 = vcmp.gt.f32.partialorder %v2743, 0.0
        %vm2774 = vcmp.gt.f32.partialorder %v2745, 0.0
        %vm2775 = vcmp.gt.f32.partialorder %v2748, 0.0
        %vm2776 = vcmp.gt.f32.partialorder %v2750, 0.0
        %vm2777 = vcmp.gt.f32.partialorder %v2753, 0.0
        %vm2778 = vcmp.gt.f32.partialorder %v2755, 0.0
        %vm2779 = vcmp.gt.f32.partialorder %v2758, 0.0
        %vm2780 = vcmp.gt.f32.partialorder %v2760, 0.0
        %vm2781 = vcmp.gt.f32.partialorder %v2763, 0.0
        %vm2782 = vcmp.gt.f32.partialorder %v2765, 0.0
        %v2783 = vmul.f32 %v2728, 0.01
        %v2784 = vmul.f32 %v2730, 0.01
        %v2785 = vmul.f32 %v2733, 0.01
        %v2786 = vmul.f32 %v2735, 0.01
        %v2787 = vmul.f32 %v2738, 0.01
        %v2788 = vmul.f32 %v2740, 0.01
        %v2789 = vmul.f32 %v2743, 0.01
        %v2790 = vmul.f32 %v2745, 0.01
        %v2791 = vmul.f32 %v2748, 0.01
        %v2792 = vmul.f32 %v2750, 0.01
        %v2793 = vmul.f32 %v2753, 0.01
        %v2794 = vmul.f32 %v2755, 0.01
        %v2795 = vmul.f32 %v2758, 0.01
        %v2796 = vmul.f32 %v2760, 0.01
        %v2797 = vmul.f32 %v2763, 0.01
        %v2798 = vmul.f32 %v2765, 0.01
        %v2799 = vsel %vm2767, %v2728, %v2783
        %v2800 = vsel %vm2768, %v2730, %v2784
        %v2801 = vsel %vm2769, %v2733, %v2785
        %v2802 = vsel %vm2770, %v2735, %v2786
        %v2803 = vsel %vm2771, %v2738, %v2787
        %v2804 = vsel %vm2772, %v2740, %v2788
        %v2805 = vsel %vm2773, %v2743, %v2789
        %v2806 = vsel %vm2774, %v2745, %v2790
        %v2807 = vsel %vm2775, %v2748, %v2791
        %v2808 = vsel %vm2776, %v2750, %v2792
        %v2809 = vsel %vm2777, %v2753, %v2793
        %v2810 = vsel %vm2778, %v2755, %v2794
        %v2811 = vsel %vm2779, %v2758, %v2795
        %v2812 = vsel %vm2780, %v2760, %v2796
        %v2813 = vsel %vm2781, %v2763, %v2797
        %v2814 = vsel %vm2782, %v2765, %v2798
        %v2815 = vpack.c.bf16 %v2800, %v2799
        %v2816 = vpack.c.bf16 %v2802, %v2801
        %v2817 = vpack.c.bf16 %v2804, %v2803
        %v2818 = vpack.c.bf16 %v2806, %v2805
        %v2819 = vpack.c.bf16 %v2808, %v2807
        %v2820 = vpack.c.bf16 %v2810, %v2809
        %v2821 = vpack.c.bf16 %v2812, %v2811
        %v2822 = vpack.c.bf16 %v2814, %v2813
        %v2823 = vld [vmem:[#allocation17] sm:$0xf]
        %v2824 = vld [vmem:[#allocation17 + $0x4] sm:$0xf]
        %v2825 = vld [vmem:[#allocation17 + $0x8] sm:$0xf]
        %v2826 = vld [vmem:[#allocation17 + $0xc] sm:$0xf]
        %v2827 = vld [vmem:[#allocation17 + $0x10] sm:$0xf]
        %v2828 = vld [vmem:[#allocation17 + $0x14] sm:$0xf]
        %v2829 = vld [vmem:[#allocation17 + $0x18] sm:$0xf]
        %v2830 = vld [vmem:[#allocation17 + $0x1c] sm:$0xf]
        %v2831 = vld [vmem:[#allocation17 + $0x20] sm:$0xf]
        %v2832 = vld [vmem:[#allocation17 + $0x24] sm:$0xf]
        %v2833 = vld [vmem:[#allocation17 + $0x28] sm:$0xf]
        %v2834 = vld [vmem:[#allocation17 + $0x2c] sm:$0xf]
        %v2835 = vld [vmem:[#allocation17 + $0x30] sm:$0xf]
        %v2836 = vld [vmem:[#allocation17 + $0x34] sm:$0xf]
        %v2837 = vld [vmem:[#allocation17 + $0x38] sm:$0xf]
        %v2838 = vld [vmem:[#allocation17 + $0x3c] sm:$0xf]
        %v2839 = vld [vmem:[%s15] sm:$0x1]
        %v2841 = vperm.slane %v2839, 0
        %v2859 = vunpack.c.l.b16 %v2823
        %v2860 = vunpack.c.l.b16 %v2824
        %v2861 = vunpack.c.l.b16 %v2825
        %v2862 = vunpack.c.l.b16 %v2826
        %v2863 = vunpack.c.l.b16 %v2827
        %v2864 = vunpack.c.l.b16 %v2828
        %v2865 = vunpack.c.l.b16 %v2829
        %v2866 = vunpack.c.l.b16 %v2830
        %v2867 = vunpack.c.l.b16 %v2831
        %v2868 = vunpack.c.l.b16 %v2832
        %v2869 = vunpack.c.l.b16 %v2833
        %v2870 = vunpack.c.l.b16 %v2834
        %v2871 = vunpack.c.l.b16 %v2835
        %v2872 = vunpack.c.l.b16 %v2836
        %v2873 = vunpack.c.l.b16 %v2837
        %v2874 = vunpack.c.l.b16 %v2838
        %v2875 = vpack.c.b16 %v2860, %v2859
        %v2876 = vpack.c.b16 %v2862, %v2861
        %v2877 = vpack.c.b16 %v2864, %v2863
        %v2878 = vpack.c.b16 %v2866, %v2865
        %v2879 = vpack.c.b16 %v2868, %v2867
        %v2880 = vpack.c.b16 %v2870, %v2869
        %v2881 = vpack.c.b16 %v2872, %v2871
        %v2882 = vpack.c.b16 %v2874, %v2873
        %2891 = vmatpush.bf16.msra.mxu0 %v2882
        %2892 = vmatpush.bf16.msra.mxu0 %v2881
        %2893 = vmatpush.bf16.msra.mxu0 %v2880
        %2894 = vmatpush.bf16.msra.mxu0 %v2879
        %2895 = vmatpush.bf16.msra.mxu0 %v2878
        %2896 = vmatpush.bf16.msra.mxu0 %v2877
        %2897 = vmatpush.bf16.msra.mxu0 %v2876
        %2898 = vmatpush.bf16.msra.mxu0 %v2875
        %2899 = vmatmul.bf16.gmra.mxu0 %v2815
        %v2900 = vpop.f32.mrf.mxu0
        %v2901 = vadd.f32 %v2841, %v2900
        %v2902 = vpop.f32.mrf.mxu0
        %v2903 = vadd.f32 %v2841, %v2902
        %2904 = vmatmul.bf16.gmra.mxu0 %v2816
        %v2905 = vpop.f32.mrf.mxu0
        %v2906 = vadd.f32 %v2841, %v2905
        %v2907 = vpop.f32.mrf.mxu0
        %v2908 = vadd.f32 %v2841, %v2907
        %2909 = vmatmul.bf16.gmra.mxu0 %v2817
        %v2910 = vpop.f32.mrf.mxu0
        %v2911 = vadd.f32 %v2841, %v2910
        %v2912 = vpop.f32.mrf.mxu0
        %v2913 = vadd.f32 %v2841, %v2912
        %2914 = vmatmul.bf16.gmra.mxu0 %v2818
        %v2915 = vpop.f32.mrf.mxu0
        %v2916 = vadd.f32 %v2841, %v2915
        %v2917 = vpop.f32.mrf.mxu0
        %v2918 = vadd.f32 %v2841, %v2917
        %2919 = vmatmul.bf16.gmra.mxu0 %v2819
        %v2920 = vpop.f32.mrf.mxu0
        %v2921 = vadd.f32 %v2841, %v2920
        %v2922 = vpop.f32.mrf.mxu0
        %v2923 = vadd.f32 %v2841, %v2922
        %2924 = vmatmul.bf16.gmra.mxu0 %v2820
        %v2925 = vpop.f32.mrf.mxu0
        %v2926 = vadd.f32 %v2841, %v2925
        %v2927 = vpop.f32.mrf.mxu0
        %v2928 = vadd.f32 %v2841, %v2927
        %2929 = vmatmul.bf16.gmra.mxu0 %v2821
        %v2930 = vpop.f32.mrf.mxu0
        %v2931 = vadd.f32 %v2841, %v2930
        %v2932 = vpop.f32.mrf.mxu0
        %v2933 = vadd.f32 %v2841, %v2932
        %2934 = vmatmul.bf16.gmra.mxu0 %v2822
        %v2935 = vpop.f32.mrf.mxu0
        %v2936 = vadd.f32 %v2841, %v2935
        %v2937 = vpop.f32.mrf.mxu0
        %v2938 = vadd.f32 %v2841, %v2937
        %2939 = vdwg.mxu0
        %vm2940 = vcmp.gt.f32.partialorder %v2901, 0.0
        %vm2941 = vcmp.gt.f32.partialorder %v2903, 0.0
        %vm2942 = vcmp.gt.f32.partialorder %v2906, 0.0
        %vm2943 = vcmp.gt.f32.partialorder %v2908, 0.0
        %vm2944 = vcmp.gt.f32.partialorder %v2911, 0.0
        %vm2945 = vcmp.gt.f32.partialorder %v2913, 0.0
        %vm2946 = vcmp.gt.f32.partialorder %v2916, 0.0
        %vm2947 = vcmp.gt.f32.partialorder %v2918, 0.0
        %vm2948 = vcmp.gt.f32.partialorder %v2921, 0.0
        %vm2949 = vcmp.gt.f32.partialorder %v2923, 0.0
        %vm2950 = vcmp.gt.f32.partialorder %v2926, 0.0
        %vm2951 = vcmp.gt.f32.partialorder %v2928, 0.0
        %vm2952 = vcmp.gt.f32.partialorder %v2931, 0.0
        %vm2953 = vcmp.gt.f32.partialorder %v2933, 0.0
        %vm2954 = vcmp.gt.f32.partialorder %v2936, 0.0
        %vm2955 = vcmp.gt.f32.partialorder %v2938, 0.0
        %v2956 = vmul.f32 %v2901, 0.01
        %v2957 = vmul.f32 %v2903, 0.01
        %v2958 = vmul.f32 %v2906, 0.01
        %v2959 = vmul.f32 %v2908, 0.01
        %v2960 = vmul.f32 %v2911, 0.01
        %v2961 = vmul.f32 %v2913, 0.01
        %v2962 = vmul.f32 %v2916, 0.01
        %v2963 = vmul.f32 %v2918, 0.01
        %v2964 = vmul.f32 %v2921, 0.01
        %v2965 = vmul.f32 %v2923, 0.01
        %v2966 = vmul.f32 %v2926, 0.01
        %v2967 = vmul.f32 %v2928, 0.01
        %v2968 = vmul.f32 %v2931, 0.01
        %v2969 = vmul.f32 %v2933, 0.01
        %v2970 = vmul.f32 %v2936, 0.01
        %v2971 = vmul.f32 %v2938, 0.01
        %v2972 = vsel %vm2940, %v2901, %v2956
        %v2973 = vsel %vm2941, %v2903, %v2957
        %v2974 = vsel %vm2942, %v2906, %v2958
        %v2975 = vsel %vm2943, %v2908, %v2959
        %v2976 = vsel %vm2944, %v2911, %v2960
        %v2977 = vsel %vm2945, %v2913, %v2961
        %v2978 = vsel %vm2946, %v2916, %v2962
        %v2979 = vsel %vm2947, %v2918, %v2963
        %v2980 = vsel %vm2948, %v2921, %v2964
        %v2981 = vsel %vm2949, %v2923, %v2965
        %v2982 = vsel %vm2950, %v2926, %v2966
        %v2983 = vsel %vm2951, %v2928, %v2967
        %v2984 = vsel %vm2952, %v2931, %v2968
        %v2985 = vsel %vm2953, %v2933, %v2969
        %v2986 = vsel %vm2954, %v2936, %v2970
        %v2987 = vsel %vm2955, %v2938, %v2971
        %v2988 = vpack.c.bf16 %v2973, %v2972
        %v2989 = vpack.c.bf16 %v2975, %v2974
        %v2990 = vpack.c.bf16 %v2977, %v2976
        %v2991 = vpack.c.bf16 %v2979, %v2978
        %v2992 = vpack.c.bf16 %v2981, %v2980
        %v2993 = vpack.c.bf16 %v2983, %v2982
        %v2994 = vpack.c.bf16 %v2985, %v2984
        %v2995 = vpack.c.bf16 %v2987, %v2986
        %v2996 = vld [vmem:[#allocation19] sm:$0xf]
        %v2997 = vld [vmem:[#allocation19 + $0x4] sm:$0xf]
        %v2998 = vld [vmem:[#allocation19 + $0x8] sm:$0xf]
        %v2999 = vld [vmem:[#allocation19 + $0xc] sm:$0xf]
        %v3000 = vld [vmem:[#allocation19 + $0x10] sm:$0xf]
        %v3001 = vld [vmem:[#allocation19 + $0x14] sm:$0xf]
        %v3002 = vld [vmem:[#allocation19 + $0x18] sm:$0xf]
        %v3003 = vld [vmem:[#allocation19 + $0x1c] sm:$0xf]
        %v3004 = vld [vmem:[#allocation19 + $0x20] sm:$0xf]
        %v3005 = vld [vmem:[#allocation19 + $0x24] sm:$0xf]
        %v3006 = vld [vmem:[#allocation19 + $0x28] sm:$0xf]
        %v3007 = vld [vmem:[#allocation19 + $0x2c] sm:$0xf]
        %v3008 = vld [vmem:[#allocation19 + $0x30] sm:$0xf]
        %v3009 = vld [vmem:[#allocation19 + $0x34] sm:$0xf]
        %v3010 = vld [vmem:[#allocation19 + $0x38] sm:$0xf]
        %v3011 = vld [vmem:[#allocation19 + $0x3c] sm:$0xf]
        %v3012 = vld [vmem:[%s17] sm:$0x1]
        %v3014 = vperm.slane %v3012, 0
        %v3032 = vunpack.c.l.b16 %v2996
        %v3033 = vunpack.c.l.b16 %v2997
        %v3034 = vunpack.c.l.b16 %v2998
        %v3035 = vunpack.c.l.b16 %v2999
        %v3036 = vunpack.c.l.b16 %v3000
        %v3037 = vunpack.c.l.b16 %v3001
        %v3038 = vunpack.c.l.b16 %v3002
        %v3039 = vunpack.c.l.b16 %v3003
        %v3040 = vunpack.c.l.b16 %v3004
        %v3041 = vunpack.c.l.b16 %v3005
        %v3042 = vunpack.c.l.b16 %v3006
        %v3043 = vunpack.c.l.b16 %v3007
        %v3044 = vunpack.c.l.b16 %v3008
        %v3045 = vunpack.c.l.b16 %v3009
        %v3046 = vunpack.c.l.b16 %v3010
        %v3047 = vunpack.c.l.b16 %v3011
        %v3048 = vpack.c.b16 %v3033, %v3032
        %v3049 = vpack.c.b16 %v3035, %v3034
        %v3050 = vpack.c.b16 %v3037, %v3036
        %v3051 = vpack.c.b16 %v3039, %v3038
        %v3052 = vpack.c.b16 %v3041, %v3040
        %v3053 = vpack.c.b16 %v3043, %v3042
        %v3054 = vpack.c.b16 %v3045, %v3044
        %v3055 = vpack.c.b16 %v3047, %v3046
        %3064 = vmatpush.bf16.msra.mxu0 %v3055
        %3065 = vmatpush.bf16.msra.mxu0 %v3054
        %3066 = vmatpush.bf16.msra.mxu0 %v3053
        %3067 = vmatpush.bf16.msra.mxu0 %v3052
        %3068 = vmatpush.bf16.msra.mxu0 %v3051
        %3069 = vmatpush.bf16.msra.mxu0 %v3050
        %3070 = vmatpush.bf16.msra.mxu0 %v3049
        %3071 = vmatpush.bf16.msra.mxu0 %v3048
        %3072 = vmatmul.bf16.gmra.mxu0 %v2988
        %v3073 = vpop.f32.mrf.mxu0
        %v3074 = vadd.f32 %v3014, %v3073
        %v3075 = vpop.f32.mrf.mxu0
        %v3076 = vadd.f32 %v3014, %v3075
        %3077 = vmatmul.bf16.gmra.mxu0 %v2989
        %v3078 = vpop.f32.mrf.mxu0
        %v3079 = vadd.f32 %v3014, %v3078
        %v3080 = vpop.f32.mrf.mxu0
        %v3081 = vadd.f32 %v3014, %v3080
        %3082 = vmatmul.bf16.gmra.mxu0 %v2990
        %v3083 = vpop.f32.mrf.mxu0
        %v3084 = vadd.f32 %v3014, %v3083
        %v3085 = vpop.f32.mrf.mxu0
        %v3086 = vadd.f32 %v3014, %v3085
        %3087 = vmatmul.bf16.gmra.mxu0 %v2991
        %v3088 = vpop.f32.mrf.mxu0
        %v3089 = vadd.f32 %v3014, %v3088
        %v3090 = vpop.f32.mrf.mxu0
        %v3091 = vadd.f32 %v3014, %v3090
        %3092 = vmatmul.bf16.gmra.mxu0 %v2992
        %v3093 = vpop.f32.mrf.mxu0
        %v3094 = vadd.f32 %v3014, %v3093
        %v3095 = vpop.f32.mrf.mxu0
        %v3096 = vadd.f32 %v3014, %v3095
        %3097 = vmatmul.bf16.gmra.mxu0 %v2993
        %v3098 = vpop.f32.mrf.mxu0
        %v3099 = vadd.f32 %v3014, %v3098
        %v3100 = vpop.f32.mrf.mxu0
        %v3101 = vadd.f32 %v3014, %v3100
        %3102 = vmatmul.bf16.gmra.mxu0 %v2994
        %v3103 = vpop.f32.mrf.mxu0
        %v3104 = vadd.f32 %v3014, %v3103
        %v3105 = vpop.f32.mrf.mxu0
        %v3106 = vadd.f32 %v3014, %v3105
        %3107 = vmatmul.bf16.gmra.mxu0 %v2995
        %v3108 = vpop.f32.mrf.mxu0
        %v3109 = vadd.f32 %v3014, %v3108
        %v3110 = vpop.f32.mrf.mxu0
        %v3111 = vadd.f32 %v3014, %v3110
        %3112 = vdwg.mxu0
        %v3113 = vadd.f32 %v2626, %v3074
        %v3114 = vadd.f32 %v2627, %v3076
        %v3115 = vadd.f32 %v2628, %v3079
        %v3116 = vadd.f32 %v2629, %v3081
        %v3117 = vadd.f32 %v2630, %v3084
        %v3118 = vadd.f32 %v2631, %v3086
        %v3119 = vadd.f32 %v2632, %v3089
        %v3120 = vadd.f32 %v2633, %v3091
        %v3121 = vadd.f32 %v2634, %v3094
        %v3122 = vadd.f32 %v2635, %v3096
        %v3123 = vadd.f32 %v2636, %v3099
        %v3124 = vadd.f32 %v2637, %v3101
        %v3125 = vadd.f32 %v2638, %v3104
        %v3126 = vadd.f32 %v2639, %v3106
        %v3127 = vadd.f32 %v2640, %v3109
        %v3128 = vadd.f32 %v2641, %v3111
        %v3129 = vld [vmem:[%s20] sm:$0x1]
        %v3130 = vld [vmem:[%s21] sm:$0x1]
        %3131 = vadd.xlane.f32.xlu0 %v3113
        %v3132 = vpop.xlane.xlu0 %3131
        %3133 = vadd.xlane.f32.xlu0 %v3114
        %v3134 = vpop.xlane.xlu0 %3133
        %3135 = vadd.xlane.f32.xlu0 %v3115
        %v3136 = vpop.xlane.xlu0 %3135
        %3137 = vadd.xlane.f32.xlu0 %v3116
        %v3138 = vpop.xlane.xlu0 %3137
        %3139 = vadd.xlane.f32.xlu0 %v3117
        %v3140 = vpop.xlane.xlu0 %3139
        %3141 = vadd.xlane.f32.xlu0 %v3118
        %v3142 = vpop.xlane.xlu0 %3141
        %3143 = vadd.xlane.f32.xlu0 %v3119
        %v3144 = vpop.xlane.xlu0 %3143
        %3145 = vadd.xlane.f32.xlu0 %v3120
        %v3146 = vpop.xlane.xlu0 %3145
        %3147 = vadd.xlane.f32.xlu0 %v3121
        %v3148 = vpop.xlane.xlu0 %3147
        %3149 = vadd.xlane.f32.xlu0 %v3122
        %v3150 = vpop.xlane.xlu0 %3149
        %3151 = vadd.xlane.f32.xlu0 %v3123
        %v3152 = vpop.xlane.xlu0 %3151
        %3153 = vadd.xlane.f32.xlu0 %v3124
        %v3154 = vpop.xlane.xlu0 %3153
        %3155 = vadd.xlane.f32.xlu0 %v3125
        %v3156 = vpop.xlane.xlu0 %3155
        %3157 = vadd.xlane.f32.xlu0 %v3126
        %v3158 = vpop.xlane.xlu0 %3157
        %3159 = vadd.xlane.f32.xlu0 %v3127
        %v3160 = vpop.xlane.xlu0 %3159
        %3161 = vadd.xlane.f32.xlu0 %v3128
        %v3162 = vpop.xlane.xlu0 %3161
        %v3163 = vmul.f32 %v3132, %v2315
        %v3164 = vmul.f32 %v3134, %v2315
        %v3165 = vmul.f32 %v3136, %v2315
        %v3166 = vmul.f32 %v3138, %v2315
        %v3167 = vmul.f32 %v3140, %v2315
        %v3168 = vmul.f32 %v3142, %v2315
        %v3169 = vmul.f32 %v3144, %v2315
        %v3170 = vmul.f32 %v3146, %v2315
        %v3171 = vmul.f32 %v3148, %v2315
        %v3172 = vmul.f32 %v3150, %v2315
        %v3173 = vmul.f32 %v3152, %v2315
        %v3174 = vmul.f32 %v3154, %v2315
        %v3175 = vmul.f32 %v3156, %v2315
        %v3176 = vmul.f32 %v3158, %v2315
        %v3177 = vmul.f32 %v3160, %v2315
        %v3178 = vmul.f32 %v3162, %v2315
        %v3179 = vsub.f32 %v3113, %v3163
        %v3180 = vsub.f32 %v3114, %v3164
        %v3181 = vsub.f32 %v3115, %v3165
        %v3182 = vsub.f32 %v3116, %v3166
        %v3183 = vsub.f32 %v3117, %v3167
        %v3184 = vsub.f32 %v3118, %v3168
        %v3185 = vsub.f32 %v3119, %v3169
        %v3186 = vsub.f32 %v3120, %v3170
        %v3187 = vsub.f32 %v3121, %v3171
        %v3188 = vsub.f32 %v3122, %v3172
        %v3189 = vsub.f32 %v3123, %v3173
        %v3190 = vsub.f32 %v3124, %v3174
        %v3191 = vsub.f32 %v3125, %v3175
        %v3192 = vsub.f32 %v3126, %v3176
        %v3193 = vsub.f32 %v3127, %v3177
        %v3194 = vsub.f32 %v3128, %v3178
        %v3195 = vmul.f32 %v3179, %v3179
        %v3196 = vmul.f32 %v3180, %v3180
        %v3197 = vmul.f32 %v3181, %v3181
        %v3198 = vmul.f32 %v3182, %v3182
        %v3199 = vmul.f32 %v3183, %v3183
        %v3200 = vmul.f32 %v3184, %v3184
        %v3201 = vmul.f32 %v3185, %v3185
        %v3202 = vmul.f32 %v3186, %v3186
        %v3203 = vmul.f32 %v3187, %v3187
        %v3204 = vmul.f32 %v3188, %v3188
        %v3205 = vmul.f32 %v3189, %v3189
        %v3206 = vmul.f32 %v3190, %v3190
        %v3207 = vmul.f32 %v3191, %v3191
        %v3208 = vmul.f32 %v3192, %v3192
        %v3209 = vmul.f32 %v3193, %v3193
        %v3210 = vmul.f32 %v3194, %v3194
        %3211 = vadd.xlane.f32.xlu0 %v3195
        %v3212 = vpop.xlane.xlu0 %3211
        %3213 = vadd.xlane.f32.xlu0 %v3196
        %v3214 = vpop.xlane.xlu0 %3213
        %3215 = vadd.xlane.f32.xlu0 %v3197
        %v3216 = vpop.xlane.xlu0 %3215
        %3217 = vadd.xlane.f32.xlu0 %v3198
        %v3218 = vpop.xlane.xlu0 %3217
        %3219 = vadd.xlane.f32.xlu0 %v3199
        %v3220 = vpop.xlane.xlu0 %3219
        %3221 = vadd.xlane.f32.xlu0 %v3200
        %v3222 = vpop.xlane.xlu0 %3221
        %3223 = vadd.xlane.f32.xlu0 %v3201
        %v3224 = vpop.xlane.xlu0 %3223
        %3225 = vadd.xlane.f32.xlu0 %v3202
        %v3226 = vpop.xlane.xlu0 %3225
        %3227 = vadd.xlane.f32.xlu0 %v3203
        %v3228 = vpop.xlane.xlu0 %3227
        %3229 = vadd.xlane.f32.xlu0 %v3204
        %v3230 = vpop.xlane.xlu0 %3229
        %3231 = vadd.xlane.f32.xlu0 %v3205
        %v3232 = vpop.xlane.xlu0 %3231
        %3233 = vadd.xlane.f32.xlu0 %v3206
        %v3234 = vpop.xlane.xlu0 %3233
        %3235 = vadd.xlane.f32.xlu0 %v3207
        %v3236 = vpop.xlane.xlu0 %3235
        %3237 = vadd.xlane.f32.xlu0 %v3208
        %v3238 = vpop.xlane.xlu0 %3237
        %3239 = vadd.xlane.f32.xlu0 %v3209
        %v3240 = vpop.xlane.xlu0 %3239
        %3241 = vadd.xlane.f32.xlu0 %v3210
        %v3242 = vpop.xlane.xlu0 %3241
        %v3243 = vmul.f32 %v3212, %v2315
        %v3244 = vmul.f32 %v3214, %v2315
        %v3245 = vmul.f32 %v3216, %v2315
        %v3246 = vmul.f32 %v3218, %v2315
        %v3247 = vmul.f32 %v3220, %v2315
        %v3248 = vmul.f32 %v3222, %v2315
        %v3249 = vmul.f32 %v3224, %v2315
        %v3250 = vmul.f32 %v3226, %v2315
        %v3251 = vmul.f32 %v3228, %v2315
        %v3252 = vmul.f32 %v3230, %v2315
        %v3253 = vmul.f32 %v3232, %v2315
        %v3254 = vmul.f32 %v3234, %v2315
        %v3255 = vmul.f32 %v3236, %v2315
        %v3256 = vmul.f32 %v3238, %v2315
        %v3257 = vmul.f32 %v3240, %v2315
        %v3258 = vmul.f32 %v3242, %v2315
        %v3259 = vadd.f32 %v3243, 1e-05
        %v3260 = vadd.f32 %v3244, 1e-05
        %v3261 = vadd.f32 %v3245, 1e-05
        %v3262 = vadd.f32 %v3246, 1e-05
        %v3263 = vadd.f32 %v3247, 1e-05
        %v3264 = vadd.f32 %v3248, 1e-05
        %v3265 = vadd.f32 %v3249, 1e-05
        %v3266 = vadd.f32 %v3250, 1e-05
        %v3267 = vadd.f32 %v3251, 1e-05
        %v3268 = vadd.f32 %v3252, 1e-05
        %v3269 = vadd.f32 %v3253, 1e-05
        %v3270 = vadd.f32 %v3254, 1e-05
        %v3271 = vadd.f32 %v3255, 1e-05
        %v3272 = vadd.f32 %v3256, 1e-05
        %v3273 = vadd.f32 %v3257, 1e-05
        %v3274 = vadd.f32 %v3258, 1e-05
        %v3275 = vrsqrt.pop %v3259
        %v3276 = vmul.f32 %v3275, %v3259
        %v3277 = vmul.f32 %v3276, %v3275
        %v3278 = vmul.f32 0.5, %v3277
        %v3279 = vsub.f32 1.5, %v3278
        %v3280 = vmul.f32 %v3275, %v3279
        %vm3281 = vweird.f32 %v3259
        %vm3282 = vweird.f32 %v3275
        %vm3283 = vmor %vm3281, %vm3282
        %v3284 = vsel %vm3283, %v3275, %v3280
        %v3285 = vrsqrt.pop %v3260
        %v3286 = vmul.f32 %v3285, %v3260
        %v3287 = vmul.f32 %v3286, %v3285
        %v3288 = vmul.f32 0.5, %v3287
        %v3289 = vsub.f32 1.5, %v3288
        %v3290 = vmul.f32 %v3285, %v3289
        %vm3291 = vweird.f32 %v3260
        %vm3292 = vweird.f32 %v3285
        %vm3293 = vmor %vm3291, %vm3292
        %v3294 = vsel %vm3293, %v3285, %v3290
        %v3295 = vrsqrt.pop %v3261
        %v3296 = vmul.f32 %v3295, %v3261
        %v3297 = vmul.f32 %v3296, %v3295
        %v3298 = vmul.f32 0.5, %v3297
        %v3299 = vsub.f32 1.5, %v3298
        %v3300 = vmul.f32 %v3295, %v3299
        %vm3301 = vweird.f32 %v3261
        %vm3302 = vweird.f32 %v3295
        %vm3303 = vmor %vm3301, %vm3302
        %v3304 = vsel %vm3303, %v3295, %v3300
        %v3305 = vrsqrt.pop %v3262
        %v3306 = vmul.f32 %v3305, %v3262
        %v3307 = vmul.f32 %v3306, %v3305
        %v3308 = vmul.f32 0.5, %v3307
        %v3309 = vsub.f32 1.5, %v3308
        %v3310 = vmul.f32 %v3305, %v3309
        %vm3311 = vweird.f32 %v3262
        %vm3312 = vweird.f32 %v3305
        %vm3313 = vmor %vm3311, %vm3312
        %v3314 = vsel %vm3313, %v3305, %v3310
        %v3315 = vrsqrt.pop %v3263
        %v3316 = vmul.f32 %v3315, %v3263
        %v3317 = vmul.f32 %v3316, %v3315
        %v3318 = vmul.f32 0.5, %v3317
        %v3319 = vsub.f32 1.5, %v3318
        %v3320 = vmul.f32 %v3315, %v3319
        %vm3321 = vweird.f32 %v3263
        %vm3322 = vweird.f32 %v3315
        %vm3323 = vmor %vm3321, %vm3322
        %v3324 = vsel %vm3323, %v3315, %v3320
        %v3325 = vrsqrt.pop %v3264
        %v3326 = vmul.f32 %v3325, %v3264
        %v3327 = vmul.f32 %v3326, %v3325
        %v3328 = vmul.f32 0.5, %v3327
        %v3329 = vsub.f32 1.5, %v3328
        %v3330 = vmul.f32 %v3325, %v3329
        %vm3331 = vweird.f32 %v3264
        %vm3332 = vweird.f32 %v3325
        %vm3333 = vmor %vm3331, %vm3332
        %v3334 = vsel %vm3333, %v3325, %v3330
        %v3335 = vrsqrt.pop %v3265
        %v3336 = vmul.f32 %v3335, %v3265
        %v3337 = vmul.f32 %v3336, %v3335
        %v3338 = vmul.f32 0.5, %v3337
        %v3339 = vsub.f32 1.5, %v3338
        %v3340 = vmul.f32 %v3335, %v3339
        %vm3341 = vweird.f32 %v3265
        %vm3342 = vweird.f32 %v3335
        %vm3343 = vmor %vm3341, %vm3342
        %v3344 = vsel %vm3343, %v3335, %v3340
        %v3345 = vrsqrt.pop %v3266
        %v3346 = vmul.f32 %v3345, %v3266
        %v3347 = vmul.f32 %v3346, %v3345
        %v3348 = vmul.f32 0.5, %v3347
        %v3349 = vsub.f32 1.5, %v3348
        %v3350 = vmul.f32 %v3345, %v3349
        %vm3351 = vweird.f32 %v3266
        %vm3352 = vweird.f32 %v3345
        %vm3353 = vmor %vm3351, %vm3352
        %v3354 = vsel %vm3353, %v3345, %v3350
        %v3355 = vrsqrt.pop %v3267
        %v3356 = vmul.f32 %v3355, %v3267
        %v3357 = vmul.f32 %v3356, %v3355
        %v3358 = vmul.f32 0.5, %v3357
        %v3359 = vsub.f32 1.5, %v3358
        %v3360 = vmul.f32 %v3355, %v3359
        %vm3361 = vweird.f32 %v3267
        %vm3362 = vweird.f32 %v3355
        %vm3363 = vmor %vm3361, %vm3362
        %v3364 = vsel %vm3363, %v3355, %v3360
        %v3365 = vrsqrt.pop %v3268
        %v3366 = vmul.f32 %v3365, %v3268
        %v3367 = vmul.f32 %v3366, %v3365
        %v3368 = vmul.f32 0.5, %v3367
        %v3369 = vsub.f32 1.5, %v3368
        %v3370 = vmul.f32 %v3365, %v3369
        %vm3371 = vweird.f32 %v3268
        %vm3372 = vweird.f32 %v3365
        %vm3373 = vmor %vm3371, %vm3372
        %v3374 = vsel %vm3373, %v3365, %v3370
        %v3375 = vrsqrt.pop %v3269
        %v3376 = vmul.f32 %v3375, %v3269
        %v3377 = vmul.f32 %v3376, %v3375
        %v3378 = vmul.f32 0.5, %v3377
        %v3379 = vsub.f32 1.5, %v3378
        %v3380 = vmul.f32 %v3375, %v3379
        %vm3381 = vweird.f32 %v3269
        %vm3382 = vweird.f32 %v3375
        %vm3383 = vmor %vm3381, %vm3382
        %v3384 = vsel %vm3383, %v3375, %v3380
        %v3385 = vrsqrt.pop %v3270
        %v3386 = vmul.f32 %v3385, %v3270
        %v3387 = vmul.f32 %v3386, %v3385
        %v3388 = vmul.f32 0.5, %v3387
        %v3389 = vsub.f32 1.5, %v3388
        %v3390 = vmul.f32 %v3385, %v3389
        %vm3391 = vweird.f32 %v3270
        %vm3392 = vweird.f32 %v3385
        %vm3393 = vmor %vm3391, %vm3392
        %v3394 = vsel %vm3393, %v3385, %v3390
        %v3395 = vrsqrt.pop %v3271
        %v3396 = vmul.f32 %v3395, %v3271
        %v3397 = vmul.f32 %v3396, %v3395
        %v3398 = vmul.f32 0.5, %v3397
        %v3399 = vsub.f32 1.5, %v3398
        %v3400 = vmul.f32 %v3395, %v3399
        %vm3401 = vweird.f32 %v3271
        %vm3402 = vweird.f32 %v3395
        %vm3403 = vmor %vm3401, %vm3402
        %v3404 = vsel %vm3403, %v3395, %v3400
        %v3405 = vrsqrt.pop %v3272
        %v3406 = vmul.f32 %v3405, %v3272
        %v3407 = vmul.f32 %v3406, %v3405
        %v3408 = vmul.f32 0.5, %v3407
        %v3409 = vsub.f32 1.5, %v3408
        %v3410 = vmul.f32 %v3405, %v3409
        %vm3411 = vweird.f32 %v3272
        %vm3412 = vweird.f32 %v3405
        %vm3413 = vmor %vm3411, %vm3412
        %v3414 = vsel %vm3413, %v3405, %v3410
        %v3415 = vrsqrt.pop %v3273
        %v3416 = vmul.f32 %v3415, %v3273
        %v3417 = vmul.f32 %v3416, %v3415
        %v3418 = vmul.f32 0.5, %v3417
        %v3419 = vsub.f32 1.5, %v3418
        %v3420 = vmul.f32 %v3415, %v3419
        %vm3421 = vweird.f32 %v3273
        %vm3422 = vweird.f32 %v3415
        %vm3423 = vmor %vm3421, %vm3422
        %v3424 = vsel %vm3423, %v3415, %v3420
        %v3425 = vrsqrt.pop %v3274
        %v3426 = vmul.f32 %v3425, %v3274
        %v3427 = vmul.f32 %v3426, %v3425
        %v3428 = vmul.f32 0.5, %v3427
        %v3429 = vsub.f32 1.5, %v3428
        %v3430 = vmul.f32 %v3425, %v3429
        %vm3431 = vweird.f32 %v3274
        %vm3432 = vweird.f32 %v3425
        %vm3433 = vmor %vm3431, %vm3432
        %v3434 = vsel %vm3433, %v3425, %v3430
        %v3435 = vmul.f32 %v3179, %v3284
        %v3436 = vmul.f32 %v3180, %v3294
        %v3437 = vmul.f32 %v3181, %v3304
        %v3438 = vmul.f32 %v3182, %v3314
        %v3439 = vmul.f32 %v3183, %v3324
        %v3440 = vmul.f32 %v3184, %v3334
        %v3441 = vmul.f32 %v3185, %v3344
        %v3442 = vmul.f32 %v3186, %v3354
        %v3443 = vmul.f32 %v3187, %v3364
        %v3444 = vmul.f32 %v3188, %v3374
        %v3445 = vmul.f32 %v3189, %v3384
        %v3446 = vmul.f32 %v3190, %v3394
        %v3447 = vmul.f32 %v3191, %v3404
        %v3448 = vmul.f32 %v3192, %v3414
        %v3449 = vmul.f32 %v3193, %v3424
        %v3450 = vmul.f32 %v3194, %v3434
        %v3452 = vperm.slane %v3129, 0
        %v3454 = vmul.f32 %v3435, %v3452
        %v3455 = vmul.f32 %v3436, %v3452
        %v3456 = vmul.f32 %v3437, %v3452
        %v3457 = vmul.f32 %v3438, %v3452
        %v3458 = vmul.f32 %v3439, %v3452
        %v3459 = vmul.f32 %v3440, %v3452
        %v3460 = vmul.f32 %v3441, %v3452
        %v3461 = vmul.f32 %v3442, %v3452
        %v3462 = vmul.f32 %v3443, %v3452
        %v3463 = vmul.f32 %v3444, %v3452
        %v3464 = vmul.f32 %v3445, %v3452
        %v3465 = vmul.f32 %v3446, %v3452
        %v3466 = vmul.f32 %v3447, %v3452
        %v3467 = vmul.f32 %v3448, %v3452
        %v3468 = vmul.f32 %v3449, %v3452
        %v3469 = vmul.f32 %v3450, %v3452
        %v3471 = vperm.slane %v3130, 0
        %v3473 = vadd.f32 %v3454, %v3471
        %v3474 = vadd.f32 %v3455, %v3471
        %v3475 = vadd.f32 %v3456, %v3471
        %v3476 = vadd.f32 %v3457, %v3471
        %v3477 = vadd.f32 %v3458, %v3471
        %v3478 = vadd.f32 %v3459, %v3471
        %v3479 = vadd.f32 %v3460, %v3471
        %v3480 = vadd.f32 %v3461, %v3471
        %v3481 = vadd.f32 %v3462, %v3471
        %v3482 = vadd.f32 %v3463, %v3471
        %v3483 = vadd.f32 %v3464, %v3471
        %v3484 = vadd.f32 %v3465, %v3471
        %v3485 = vadd.f32 %v3466, %v3471
        %v3486 = vadd.f32 %v3467, %v3471
        %v3487 = vadd.f32 %v3468, %v3471
        %v3488 = vadd.f32 %v3469, %v3471
        %3489 = vst [vmem:[%s942] sm:$0xff] %v3473
        %3490 = vst [vmem:[%s942 + $0x8] sm:$0xff] %v3474
        %3491 = vst [vmem:[%s942 + $0x10] sm:$0xff] %v3475
        %3492 = vst [vmem:[%s942 + $0x18] sm:$0xff] %v3476
        %3493 = vst [vmem:[%s942 + $0x20] sm:$0xff] %v3477
        %3494 = vst [vmem:[%s942 + $0x28] sm:$0xff] %v3478
        %3495 = vst [vmem:[%s942 + $0x30] sm:$0xff] %v3479
        %3496 = vst [vmem:[%s942 + $0x38] sm:$0xff] %v3480
        %3497 = vst [vmem:[%s942 + $0x40] sm:$0xff] %v3481
        %3498 = vst [vmem:[%s942 + $0x48] sm:$0xff] %v3482
        %3499 = vst [vmem:[%s942 + $0x50] sm:$0xff] %v3483
        %3500 = vst [vmem:[%s942 + $0x58] sm:$0xff] %v3484
        %3501 = vst [vmem:[%s942 + $0x60] sm:$0xff] %v3485
        %3502 = vst [vmem:[%s942 + $0x68] sm:$0xff] %v3486
        %3503 = vst [vmem:[%s942 + $0x70] sm:$0xff] %v3487
        %3504 = vst [vmem:[%s942 + $0x78] sm:$0xff] %v3488
        %s3505 = sand.u32 %s538, 1
        %s3506 = scalar_lea.sflag [#allocation4], %s3505
        %s3507 = sand.u32 %s538, 1
        %s3508 = smul.addr %s3507, 128
        %s3509 = scalar_lea.vmem [#allocation20], %s3508
        // Predicated region
        $region153: #{tpu_custom_call.1} parent=107 // pred_check
          %p3510 = pneg %p548
        $region154: #{tpu_custom_call.1} parent=107 // pred_check_branch
          %3512 = sbr.rel (%p3510) target = $region156
        $region155: #{tpu_custom_call.1} parent=107 // pred_region
          %s3513 = smul.u32 16, %s48
          %3515 = vsyncadd %s3506, 0
          %s3516 = smul.addr %s3513, 8
          %s3517 = scalar_lea.hbm %s22, %s3516
          %s3518 = sshll.u32 %s3509, 4
          %s3519 = int_to_ptr.vmem [resolvable:$true] %s3518
          %s3520 = sshll.u32 %s3517, 4
          %s3521 = int_to_ptr.hbm [resolvable:$true] %s3520
          %3526 = dma.vmem_to_hbm [thread:$0]  %s3519, 2048, %s3521, %s3506, 128, 128, 8
        $region156: #{tpu_custom_call.1} parent=107 // pred_fallthru
          _
      $region108: #{tpu_custom_call.1} parent=5 // pred_fallthru
        _
      %p3527 = scmp.le.s32.totalorder 2, %s43
      // Predicated region
      $region157: #{tpu_custom_call.1} parent=5 // pred_check
        %p3528 = pneg %p3527
      $region158: #{tpu_custom_call.1} parent=5 // pred_check_branch
        %3530 = sbr.rel (%p3528) target = $region160
      $region159: #{tpu_custom_call.1} parent=5 // pred_region
        %s3531 = ssub.s32 %s43, 2
        // Predicated region
        $region161: #{tpu_custom_call.1} parent=159 // pred_check
          %p3532 = pneg %p554
        $region162: #{tpu_custom_call.1} parent=159 // pred_check_branch
          %3534 = sbr.rel (%p3532) target = $region164
        $region163: #{tpu_custom_call.1} parent=159 // pred_region
          %s3535 = sand.u32 %s539, 1
          %s3536 = scalar_lea.sflag [#allocation4], %s3535
          %s3537 = sand.u32 %s539, 1
          %s3538 = smul.addr %s3537, 128
          %s3539 = scalar_lea.vmem [#allocation20], %s3538
          %3541 = dma.done %s3536, 2048
        $region164: #{tpu_custom_call.1} parent=159 // pred_fallthru
          _
      $region160: #{tpu_custom_call.1} parent=5 // pred_fallthru
        _
    $region6: #{tpu_custom_call.1} parent=1 // loop_footer
      %s47 = sadd.s32 1, %s43
    $region7: #{tpu_custom_call.1} parent=1 // loop_footer_branch
      %42 = sbr.rel target = $region3
    $region8: #{tpu_custom_call.1} parent=1 // loop_exit
      _
    %3542 = vsyncpa [#allocation3], 1
    %s3543 = scalar_lea.sflag [#allocation3], 1
    %3544 = vsyncpa %s3543, 1
    %3545 = vsyncpa [#allocation6], 1
    %s3546 = scalar_lea.sflag [#allocation6], 1
    %3547 = vsyncpa %s3546, 1
    %3548 = vsyncpa [#allocation9], 1
    %s3549 = scalar_lea.sflag [#allocation9], 1
    %3550 = vsyncpa %s3549, 1
    %3551 = vsyncpa [#allocation12], 1
    %3552 = vsyncpa [#allocation15], 1
    %3553 = vsyncpa [#allocation18], 1
    %3554 = vsyncpa [#allocation4], 1
    %s3555 = scalar_lea.sflag [#allocation4], 1
    %3556 = vsyncpa %s3555, 1

</llo_original>
